<compile_context>
chip_gen: v7x
topology: tpu7x:2x2x1
jax: 0.10.0
libtpu: 0.0.40
codegen_flags: <defaults>
</compile_context>

<pallas_src>
import math
import functools

import jax
import jax.numpy as jnp
from jax import lax
from jax.experimental import pallas as pl
from jax.experimental.pallas import tpu as pltpu


# ---------------------------------------------------------------------------
# Pallas kernel: one grid step = M = row_block*A agent rows (M = n_sub * 128)
# ---------------------------------------------------------------------------
def _maen_kernel(
    obs_ref,          # (M, D)      f32
    w_enc_ref,        # (D, H)      bf16
    w_qkv_ref,        # (H, 3H)     bf16   (q/k/v linear fused with MHA in_proj;
                      #                      q columns pre-scaled by 1/sqrt(hd))
    b_qkv_ref,        # (1, 3H)     f32
    w_out_ref,        # (H, H)      bf16   MHA out_proj
    vecs_ref,         # (6, H)      f32    [b_enc, ln1_g, ln1_b, b_out, ln2_g, ln2_b]
    bias_ref,         # (SUB, SUB)  f32    additive block-diagonal mask (0 / -1e30)
    o_ref,            # (M, H)      f32
    xn_scr,           # VMEM (M, H)   f32
    qkv_scr,          # VMEM (M, 3H)  f32
    head_scr,         # VMEM (M, H)   f32
    *,
    n_heads: int,
    head_dim: int,
    n_sub: int,
    sub: int,
):
    f32 = jnp.float32
    bf16 = jnp.bfloat16
    H = w_enc_ref.shape[1]

    vecs = vecs_ref[...]
    b_enc = vecs[0:1, :]
    ln1_g = vecs[1:2, :]
    ln1_b = vecs[2:3, :]
    b_out = vecs[3:4, :]
    ln2_g = vecs[4:5, :]
    ln2_b = vecs[5:6, :]

    def layer_norm(v, g, b):
        mu = jnp.mean(v, axis=-1, keepdims=True)
        var = jnp.mean(v * v, axis=-1, keepdims=True) - mu * mu   # one-pass E[x^2]-mu^2
        return (v - mu) * lax.rsqrt(var + 1e-5) * g + b

    # --- StatesEncoder: Linear + LeakyReLU(0.01) (bf16 MXU, f32 accumulate) ---
    x = obs_ref[...]
    h = jnp.dot(x.astype(bf16), w_enc_ref[...], preferred_element_type=f32) + b_enc
    h = jnp.where(h >= 0.0, h, 0.01 * h)                          # (M, H)

    # --- RSA input LayerNorm (kept for the residual via VMEM scratch) ---
    xn = layer_norm(h, ln1_g, ln1_b)
    xn_scr[...] = xn

    # --- fused q/k/v + MHA in_proj: one (M,H)@(H,3H) matmul on the full block ---
    qkv_scr[...] = (
        jnp.dot(xn.astype(bf16), w_qkv_ref[...], preferred_element_type=f32)
        + b_qkv_ref[...]
    )

    # --- attention: per 128-row diagonal sub-tile, per head; softmax in f32 ---
    for s_i in range(n_sub):
        r0 = s_i * sub
        for hh in range(n_heads):
            lo = hh * head_dim
            qh = qkv_scr[r0:r0 + sub, lo:lo + head_dim].astype(bf16)
            kh = qkv_scr[r0:r0 + sub, H + lo:H + lo + head_dim].astype(bf16)
            vh = qkv_scr[r0:r0 + sub, 2 * H + lo:2 * H + lo + head_dim].astype(bf16)

            # scores (scale already folded into the q weights); no transpose op
            s = lax.dot_general(qh, kh, (((1,), (1,)), ((), ())),
                                preferred_element_type=f32)        # (sub, sub)
            s = s + bias_ref[...]                                  # block-diag mask
            s = s - jnp.max(s, axis=-1, keepdims=True)
            p = jnp.exp(s)
            p = p * pl.reciprocal(jnp.sum(p, axis=-1, keepdims=True), approx=True)

            oh = jnp.dot(p.astype(bf16), vh, preferred_element_type=f32)  # (sub, hd)
            head_scr[r0:r0 + sub, lo:lo + head_dim] = oh

    # --- single K=128 out_proj matmul over all heads ---
    attn_out = jnp.dot(head_scr[...].astype(bf16), w_out_ref[...],
                       preferred_element_type=f32) + b_out

    # --- residual + output LayerNorm ---
    y = layer_norm(xn_scr[...] + attn_out, ln2_g, ln2_b)
    o_ref[...] = y.astype(o_ref.dtype)


# ---------------------------------------------------------------------------
# Offline parameter fusion / packing (done once in the wrapper)
# ---------------------------------------------------------------------------
def _fuse_params(p, heads):
    H = p["w_enc"].shape[1]
    head_dim = H // heads
    scale = 1.0 / math.sqrt(head_dim)

    wq_eff = (p["wq"] @ p["wiq"]) * scale           # scale folded into q weights
    wk_eff = p["wk"] @ p["wik"]
    wv_eff = p["wv"] @ p["wiv"]
    bq_eff = (p["bq"] @ p["wiq"] + p["biq"]) * scale
    bk_eff = p["bk"] @ p["wik"] + p["bik"]
    bv_eff = p["bv"] @ p["wiv"] + p["biv"]

    return {
        "w_enc": p["w_enc"].astype(jnp.bfloat16),                               # (D, H)
        "w_qkv": jnp.concatenate([wq_eff, wk_eff, wv_eff], 1).astype(jnp.bfloat16),  # (H,3H)
        "b_qkv": jnp.concatenate([bq_eff, bk_eff, bv_eff], 1),                  # (1, 3H) f32
        "w_out": p["w_out"].astype(jnp.bfloat16),                               # (H, H)
        "vecs": jnp.concatenate([p["b_enc"], p["ln1_g"], p["ln1_b"],
                                 p["b_out"], p["ln2_g"], p["ln2_b"]], 0),        # (6, H) f32
    }


# ---------------------------------------------------------------------------
# Wrapper: BlockSpecs + pallas_call
# ---------------------------------------------------------------------------
def multi_agent_embedding_forward(obs, params, *, heads, row_block=None, sub=128):
    S, E, A, D = obs.shape
    H = params["w_enc"].shape[1]
    assert H % heads == 0
    head_dim = H // heads
    B = S * E

    assert sub % A == 0, "attention sub-tile must hold whole batch items"
    if row_block is None:
        row_block = sub // A
        if B % (2 * row_block) == 0:
            row_block *= 2                      # 2 x 128-row sub-tiles per step
    M = row_block * A                           # agent rows per grid step
    assert B % row_block == 0, "batch (S*E) must be divisible by row_block"
    assert M % sub == 0, "rows per step must be a multiple of the 128-row sub-tile"
    n_sub = M // sub

    # Flatten to (B*A, D): batch-major, agent-minor -> groups of A consecutive
    # rows belong to one batch item (matches the block-diagonal mask bias).
    obs_flat = obs.reshape(B * A, D)

    fused = _fuse_params(params, heads)

    # Additive block-diagonal mask bias for one 128x128 sub-tile (same pattern
    # for every sub-tile since sub % A == 0).
    grp = jnp.arange(sub, dtype=jnp.int32) // A
    mask_bias = jnp.where(grp[:, None] == grp[None, :], 0.0, -1e30).astype(jnp.float32)

    def const_spec(arr):
        nd = arr.ndim
        return pl.BlockSpec(arr.shape, lambda b: (0,) * nd)

    kernel = functools.partial(_maen_kernel, n_heads=heads, head_dim=head_dim,
                               n_sub=n_sub, sub=sub)

    out_flat = pl.pallas_call(
        kernel,
        grid=(B // row_block,),
        in_specs=[
            pl.BlockSpec((M, D), lambda b: (b, 0)),
            const_spec(fused["w_enc"]),
            const_spec(fused["w_qkv"]),
            const_spec(fused["b_qkv"]),
            const_spec(fused["w_out"]),
            const_spec(fused["vecs"]),
            const_spec(mask_bias),
        ],
        out_specs=pl.BlockSpec((M, H), lambda b: (b, 0)),
        out_shape=jax.ShapeDtypeStruct((B * A, H), jnp.float32),
        scratch_shapes=[
            pltpu.VMEM((M, H), jnp.float32),       # xn (residual)
            pltpu.VMEM((M, 3 * H), jnp.float32),   # fused qkv
            pltpu.VMEM((M, H), jnp.float32),       # per-head attention outputs
        ],
        compiler_params=pltpu.CompilerParams(
            dimension_semantics=("parallel",),
        ),
    )(obs_flat, fused["w_enc"], fused["w_qkv"], fused["b_qkv"],
      fused["w_out"], fused["vecs"], mask_bias)

    return out_flat.reshape(S, E, A, H)


# ---------------------------------------------------------------------------
# Deterministic parameter init (shapes follow the PyTorch module __init__)
# ---------------------------------------------------------------------------
def init_params(key, obs_dim, H):
    keys = jax.random.split(key, 16)
    ki = iter(keys)

    def kaiming_normal_t(k, fan_in, fan_out):
        std = math.sqrt(2.0 / fan_in)
        return jax.random.normal(k, (fan_in, fan_out), jnp.float32) * std

    def linear_bias(k, fan_in, fan_out):
        bound = 1.0 / math.sqrt(fan_in)
        return jax.random.uniform(k, (1, fan_out), jnp.float32, -bound, bound)

    def xavier_uniform_t(k, fan_in, fan_out):
        bound = math.sqrt(6.0 / (fan_in + fan_out))
        return jax.random.uniform(k, (fan_in, fan_out), jnp.float32, -bound, bound)

    p = {}
    # StatesEncoder (agent_obs_encoder)
    p["w_enc"] = kaiming_normal_t(next(ki), obs_dim, H)
    p["b_enc"] = linear_bias(next(ki), obs_dim, H)

    # RSA LayerNorms
    p["ln1_g"] = jnp.ones((1, H), jnp.float32)
    p["ln1_b"] = jnp.zeros((1, H), jnp.float32)
    p["ln2_g"] = jnp.ones((1, H), jnp.float32)
    p["ln2_b"] = jnp.zeros((1, H), jnp.float32)

    # RSA q/k/v embedding linears
    p["wq"] = kaiming_normal_t(next(ki), H, H)
    p["bq"] = linear_bias(next(ki), H, H)
    p["wk"] = kaiming_normal_t(next(ki), H, H)
    p["bk"] = linear_bias(next(ki), H, H)
    p["wv"] = kaiming_normal_t(next(ki), H, H)
    p["bv"] = linear_bias(next(ki), H, H)

    # nn.MultiheadAttention in_proj / out_proj
    p["wiq"] = xavier_uniform_t(next(ki), H, H)
    p["biq"] = jnp.zeros((1, H), jnp.float32)
    p["wik"] = xavier_uniform_t(next(ki), H, H)
    p["bik"] = jnp.zeros((1, H), jnp.float32)
    p["wiv"] = xavier_uniform_t(next(ki), H, H)
    p["biv"] = jnp.zeros((1, H), jnp.float32)

    bound = 1.0 / math.sqrt(H)
    p["w_out"] = jax.random.uniform(next(ki), (H, H), jnp.float32, -bound, bound)
    p["b_out"] = jnp.zeros((1, H), jnp.float32)

    # TODO(synk): agent_embedding_encoder / obs_action_encoder and the split_*
    # helper methods exist in the module but are not used by forward(); omitted.
    return p


# ---------------------------------------------------------------------------
# Reference 1: pure-JAX f32 forward of the ORIGINAL (unfused) module math
# ---------------------------------------------------------------------------
def _reference_forward(obs, p, heads):
    S, E, A, D = obs.shape
    H = p["w_enc"].shape[1]
    hd = H // heads
    B = S * E
    x = obs.reshape(B, A, D)

    h = x @ p["w_enc"] + p["b_enc"]
    h = jnp.where(h >= 0, h, 0.01 * h)

    def ln(v, g, b):
        mu = v.mean(-1, keepdims=True)
        var = ((v - mu) ** 2).mean(-1, keepdims=True)
        return (v - mu) / jnp.sqrt(var + 1e-5) * g + b

    xn = ln(h, p["ln1_g"], p["ln1_b"])
    q = xn @ p["wq"] + p["bq"]
    k = xn @ p["wk"] + p["bk"]
    v = xn @ p["wv"] + p["bv"]
    qp = q @ p["wiq"] + p["biq"]
    kp = k @ p["wik"] + p["bik"]
    vp = v @ p["wiv"] + p["biv"]

    qh = qp.reshape(B, A, heads, hd).transpose(0, 2, 1, 3)
    kh = kp.reshape(B, A, heads, hd).transpose(0, 2, 1, 3)
    vh = vp.reshape(B, A, heads, hd).transpose(0, 2, 1, 3)
    s = jnp.einsum("bhqd,bhkd->bhqk", qh, kh) / math.sqrt(hd)
    pr = jax.nn.softmax(s, axis=-1)
    o = jnp.einsum("bhqk,bhkd->bhqd", pr, vh)
    o = o.transpose(0, 2, 1, 3).reshape(B, A, H)

    attn = o @ p["w_out"] + p["b_out"]
    y = ln(xn + attn, p["ln2_g"], p["ln2_b"])
    return y.reshape(S, E, A, H)


# ---------------------------------------------------------------------------
# Reference 2: fused params, bf16 at the same MXU boundaries as the kernel
# (tight numerical check of the kernel implementation itself)
# ---------------------------------------------------------------------------
def _fused_bf16_reference(obs, fused, heads):
    f32, bf16 = jnp.float32, jnp.bfloat16
    S, E, A, D = obs.shape
    H = fused["w_out"].shape[0]
    hd = H // heads
    B = S * E
    vecs = fused["vecs"]
    b_enc, ln1_g, ln1_b, b_out, ln2_g, ln2_b = (vecs[i] for i in range(6))

    def ln(v, g, b):
        mu = v.mean(-1, keepdims=True)
        var = (v * v).mean(-1, keepdims=True) - mu * mu
        return (v - mu) * lax.rsqrt(var + 1e-5) * g + b

    x = obs.reshape(B * A, D)
    h = jnp.dot(x.astype(bf16), fused["w_enc"], preferred_element_type=f32) + b_enc
    h = jnp.where(h >= 0, h, 0.01 * h)
    xn = ln(h, ln1_g, ln1_b)
    qkv = jnp.dot(xn.astype(bf16), fused["w_qkv"], preferred_element_type=f32) + fused["b_qkv"]

    q = qkv[:, :H].reshape(B, A, heads, hd).astype(bf16)
    k = qkv[:, H:2 * H].reshape(B, A, heads, hd).astype(bf16)
    v = qkv[:, 2 * H:].reshape(B, A, heads, hd).astype(bf16)
    s = jnp.einsum("bqhd,bkhd->bhqk", q, k, preferred_element_type=f32)  # scale folded
    pr = jax.nn.softmax(s, axis=-1).astype(bf16)
    o = jnp.einsum("bhqk,bkhd->bqhd", pr, v, preferred_element_type=f32)
    o = o.reshape(B * A, H).astype(bf16)

    attn = jnp.dot(o, fused["w_out"], preferred_element_type=f32) + b_out
    y = ln(xn + attn, ln2_g, ln2_b)
    return y.reshape(S, E, A, H)


if __name__ == "__main__":
    # Small shapes consistent with the module: obs (S, E, A, obs_dim)
    S, E, A = 8, 16, 4
    OBS_DIM, H, HEADS = 16, 128, 4

    root = jax.random.PRNGKey(0)
    k_params, k_obs = jax.random.split(root)

    params = init_params(k_params, OBS_DIM, H)
    obs = jax.random.normal(k_obs, (S, E, A, OBS_DIM), jnp.float32)

    # row_block=64 -> M=256 rows/step (2 diagonal 128x128 sub-tiles), grid=2.
    out = multi_agent_embedding_forward(obs, params, heads=HEADS, row_block=64)
    out = jax.block_until_ready(out)

    assert out.shape == (S, E, A, H), out.shape
    assert bool(jnp.all(jnp.isfinite(out)))

    # Tight check: same fused params and bf16 MXU boundaries as the kernel.
    fused = _fuse_params(params, HEADS)
    ref_tight = _fused_bf16_reference(obs, fused, HEADS)
    err_tight = float(jnp.max(jnp.abs(out - ref_tight)))
    assert err_tight < 1e-2, f"kernel deviates from bf16-matched reference: {err_tight}"

    # Semantic check vs the original f32, unfused module math (tolerance covers
    # the intentional bf16-at-MXU-boundary precision of the optimized kernel).
    ref_full = _reference_forward(obs, params, HEADS)
    err_max = float(jnp.max(jnp.abs(out - ref_full)))
    err_mean = float(jnp.mean(jnp.abs(out - ref_full)))
    assert err_max < 2e-1 and err_mean < 4e-2, (err_max, err_mean)

    print("KERNEL_OK")
</pallas_src>

<mosaic_0001>
module attributes {stable_mosaic.version = 11 : i64} {
  func.func @_maen_kernel(%arg0: i32, %arg1: memref<256x16xf32, #tpu.memory_space<vmem>>, %arg2: memref<16x128xbf16, #tpu.memory_space<vmem>>, %arg3: memref<128x384xbf16, #tpu.memory_space<vmem>>, %arg4: memref<1x384xf32, #tpu.memory_space<vmem>>, %arg5: memref<128x128xbf16, #tpu.memory_space<vmem>>, %arg6: memref<6x128xf32, #tpu.memory_space<vmem>>, %arg7: memref<128x128xf32, #tpu.memory_space<vmem>>, %arg8: memref<256x128xf32, #tpu.memory_space<vmem>>, %arg9: memref<256x128xf32, #tpu.memory_space<vmem>>, %arg10: memref<256x384xf32, #tpu.memory_space<vmem>>, %arg11: memref<256x128xf32, #tpu.memory_space<vmem>>) attributes {dimension_semantics = [#tpu.dimension_semantics<parallel>], iteration_bounds = array<i64: 2>, scalar_prefetch = 0 : i64, scratch_operands = 3 : i64, tpu.core_type = #tpu.core_type<tc>, window_params = [{transform_indices = @transform_0, window_bounds = array<i64: 256, 16>}, {pipeline_mode = #tpu.pipeline_mode<synchronous>, transform_indices = @transform_1, window_bounds = array<i64: 16, 128>}, {pipeline_mode = #tpu.pipeline_mode<synchronous>, transform_indices = @transform_2, window_bounds = array<i64: 128, 384>}, {pipeline_mode = #tpu.pipeline_mode<synchronous>, transform_indices = @transform_3, window_bounds = array<i64: 1, 384>}, {pipeline_mode = #tpu.pipeline_mode<synchronous>, transform_indices = @transform_4, window_bounds = array<i64: 128, 128>}, {pipeline_mode = #tpu.pipeline_mode<synchronous>, transform_indices = @transform_5, window_bounds = array<i64: 6, 128>}, {pipeline_mode = #tpu.pipeline_mode<synchronous>, transform_indices = @transform_6, window_bounds = array<i64: 128, 128>}, {transform_indices = @transform_7, window_bounds = array<i64: 256, 128>}]} {
    %c0 = arith.constant 0 : index
    %c0_0 = arith.constant 0 : index
    %0 = vector.load %arg6[%c0, %c0_0] : memref<6x128xf32, #tpu.memory_space<vmem>>, vector<6x128xf32>
    %1 = vector.extract_strided_slice %0 {offsets = [0, 0], sizes = [1, 128], strides = [1, 1]} : vector<6x128xf32> to vector<1x128xf32>
    %2 = vector.extract_strided_slice %0 {offsets = [1, 0], sizes = [1, 128], strides = [1, 1]} : vector<6x128xf32> to vector<1x128xf32>
    %3 = vector.extract_strided_slice %0 {offsets = [2, 0], sizes = [1, 128], strides = [1, 1]} : vector<6x128xf32> to vector<1x128xf32>
    %4 = vector.extract_strided_slice %0 {offsets = [3, 0], sizes = [1, 128], strides = [1, 1]} : vector<6x128xf32> to vector<1x128xf32>
    %5 = vector.extract_strided_slice %0 {offsets = [4, 0], sizes = [1, 128], strides = [1, 1]} : vector<6x128xf32> to vector<1x128xf32>
    %6 = vector.extract_strided_slice %0 {offsets = [5, 0], sizes = [1, 128], strides = [1, 1]} : vector<6x128xf32> to vector<1x128xf32>
    %c0_1 = arith.constant 0 : index
    %c0_2 = arith.constant 0 : index
    %7 = vector.load %arg1[%c0_1, %c0_2] : memref<256x16xf32, #tpu.memory_space<vmem>>, vector<256x16xf32>
    %8 = arith.truncf %7 : vector<256x16xf32> to vector<256x16xbf16>
    %c0_3 = arith.constant 0 : index
    %c0_4 = arith.constant 0 : index
    %9 = vector.load %arg2[%c0_3, %c0_4] : memref<16x128xbf16, #tpu.memory_space<vmem>>, vector<16x128xbf16>
    %cst = arith.constant dense<0.000000e+00> : vector<256x128xf32>
    %10 = tpu.matmul %8, %9, %cst {dimension_numbers = #tpu.dot_dimension_numbers<[1], [0], [0], [1], [0, 0, 1, 1], [], []>} : vector<256x16xbf16>, vector<16x128xbf16>, vector<256x128xf32> -> vector<256x128xf32>
    %11 = vector.broadcast %1 : vector<1x128xf32> to vector<256x128xf32>
    %12 = arith.addf %10, %11 : vector<256x128xf32>
    %cst_5 = arith.constant 0.000000e+00 : f32
    %13 = vector.broadcast %cst_5 : f32 to vector<256x128xf32>
    %14 = arith.cmpf oge, %12, %13 : vector<256x128xf32>
    %cst_6 = arith.constant 0.00999999977 : f32
    %15 = vector.broadcast %cst_6 : f32 to vector<256x128xf32>
    %16 = arith.mulf %15, %12 : vector<256x128xf32>
    %17 = arith.select %14, %12, %16 : vector<256x128xi1>, vector<256x128xf32>
    %cst_7 = arith.constant dense<0.000000e+00> : vector<256xf32>
    %18 = vector.multi_reduction <add>, %17, %cst_7 [1] : vector<256x128xf32> to vector<256xf32>
    %19 = vector.shape_cast %18 : vector<256xf32> to vector<256x1xf32>
    %cst_8 = arith.constant 1.280000e+02 : f32
    %20 = vector.broadcast %cst_8 : f32 to vector<256x1xf32>
    %21 = arith.divf %19, %20 : vector<256x1xf32>
    %22 = arith.mulf %17, %17 : vector<256x128xf32>
    %cst_9 = arith.constant dense<0.000000e+00> : vector<256xf32>
    %23 = vector.multi_reduction <add>, %22, %cst_9 [1] : vector<256x128xf32> to vector<256xf32>
    %24 = vector.shape_cast %23 : vector<256xf32> to vector<256x1xf32>
    %cst_10 = arith.constant 1.280000e+02 : f32
    %25 = vector.broadcast %cst_10 : f32 to vector<256x1xf32>
    %26 = arith.divf %24, %25 : vector<256x1xf32>
    %27 = arith.mulf %21, %21 : vector<256x1xf32>
    %28 = arith.subf %26, %27 : vector<256x1xf32>
    %29 = vector.broadcast %21 : vector<256x1xf32> to vector<256x128xf32>
    %30 = arith.subf %17, %29 : vector<256x128xf32>
    %cst_11 = arith.constant 9.99999974E-6 : f32
    %31 = vector.broadcast %cst_11 : f32 to vector<256x1xf32>
    %32 = arith.addf %28, %31 : vector<256x1xf32>
    %33 = math.rsqrt %32 : vector<256x1xf32>
    %34 = vector.broadcast %33 : vector<256x1xf32> to vector<256x128xf32>
    %35 = arith.mulf %30, %34 : vector<256x128xf32>
    %36 = vector.broadcast %2 : vector<1x128xf32> to vector<256x128xf32>
    %37 = arith.mulf %35, %36 : vector<256x128xf32>
    %38 = vector.broadcast %3 : vector<1x128xf32> to vector<256x128xf32>
    %39 = arith.addf %37, %38 : vector<256x128xf32>
    %c0_12 = arith.constant 0 : index
    %c0_13 = arith.constant 0 : index
    %40 = vector.load %arg9[%c0_12, %c0_13] : memref<256x128xf32, #tpu.memory_space<vmem>>, vector<256x128xf32>
    tpu.vector_store %arg9[%c0_12, %c0_13], %39 {strides = array<i32>} : memref<256x128xf32, #tpu.memory_space<vmem>>, vector<256x128xf32>,
    %41 = arith.truncf %39 : vector<256x128xf32> to vector<256x128xbf16>
    %c0_14 = arith.constant 0 : index
    %c0_15 = arith.constant 0 : index
    %42 = vector.load %arg3[%c0_14, %c0_15] : memref<128x384xbf16, #tpu.memory_space<vmem>>, vector<128x384xbf16>
    %cst_16 = arith.constant dense<0.000000e+00> : vector<256x384xf32>
    %43 = tpu.matmul %41, %42, %cst_16 {dimension_numbers = #tpu.dot_dimension_numbers<[1], [0], [0], [1], [0, 0, 1, 1], [], []>} : vector<256x128xbf16>, vector<128x384xbf16>, vector<256x384xf32> -> vector<256x384xf32>
    %c0_17 = arith.constant 0 : index
    %c0_18 = arith.constant 0 : index
    %44 = vector.load %arg4[%c0_17, %c0_18] : memref<1x384xf32, #tpu.memory_space<vmem>>, vector<1x384xf32>
    %45 = vector.broadcast %44 : vector<1x384xf32> to vector<256x384xf32>
    %46 = arith.addf %43, %45 : vector<256x384xf32>
    %c0_19 = arith.constant 0 : index
    %c0_20 = arith.constant 0 : index
    %47 = vector.load %arg10[%c0_19, %c0_20] : memref<256x384xf32, #tpu.memory_space<vmem>>, vector<256x384xf32>
    tpu.vector_store %arg10[%c0_19, %c0_20], %46 {strides = array<i32>} : memref<256x384xf32, #tpu.memory_space<vmem>>, vector<256x384xf32>,
    %c0_21 = arith.constant 0 : index
    %c0_22 = arith.constant 0 : index
    %48 = vector.load %arg10[%c0_21, %c0_22] : memref<256x384xf32, #tpu.memory_space<vmem>>, vector<128x32xf32>
    %49 = arith.truncf %48 : vector<128x32xf32> to vector<128x32xbf16>
    %c0_23 = arith.constant 0 : index
    %c128 = arith.constant 128 : index
    %50 = vector.load %arg10[%c0_23, %c128] : memref<256x384xf32, #tpu.memory_space<vmem>>, vector<128x32xf32>
    %51 = arith.truncf %50 : vector<128x32xf32> to vector<128x32xbf16>
    %c0_24 = arith.constant 0 : index
    %c256 = arith.constant 256 : index
    %52 = vector.load %arg10[%c0_24, %c256] : memref<256x384xf32, #tpu.memory_space<vmem>>, vector<128x32xf32>
    %53 = arith.truncf %52 : vector<128x32xf32> to vector<128x32xbf16>
    %cst_25 = arith.constant dense<0.000000e+00> : vector<128x128xf32>
    %54 = tpu.matmul %49, %51, %cst_25 {dimension_numbers = #tpu.dot_dimension_numbers<[1], [1], [0], [0], [0, 0, 1, 0], [], []>} : vector<128x32xbf16>, vector<128x32xbf16>, vector<128x128xf32> -> vector<128x128xf32>
    %c0_26 = arith.constant 0 : index
    %c0_27 = arith.constant 0 : index
    %55 = vector.load %arg7[%c0_26, %c0_27] : memref<128x128xf32, #tpu.memory_space<vmem>>, vector<128x128xf32>
    %56 = arith.addf %54, %55 : vector<128x128xf32>
    %cst_28 = arith.constant dense<0xFF800000> : vector<128xf32>
    %57 = vector.multi_reduction <maximumf>, %56, %cst_28 [1] : vector<128x128xf32> to vector<128xf32>
    %58 = vector.shape_cast %57 : vector<128xf32> to vector<128x1xf32>
    %59 = vector.broadcast %58 : vector<128x1xf32> to vector<128x128xf32>
    %60 = arith.subf %56, %59 : vector<128x128xf32>
    %61 = math.exp %60 : vector<128x128xf32>
    %cst_29 = arith.constant dense<0.000000e+00> : vector<128xf32>
    %62 = vector.multi_reduction <add>, %61, %cst_29 [1] : vector<128x128xf32> to vector<128xf32>
    %63 = vector.shape_cast %62 : vector<128xf32> to vector<128x1xf32>
    %64 = tpu.reciprocal %63 {approx = true} : vector<128x1xf32> -> vector<128x1xf32>
    %65 = vector.broadcast %64 : vector<128x1xf32> to vector<128x128xf32>
    %66 = arith.mulf %61, %65 : vector<128x128xf32>
    %67 = arith.truncf %66 : vector<128x128xf32> to vector<128x128xbf16>
    %cst_30 = arith.constant dense<0.000000e+00> : vector<128x32xf32>
    %68 = tpu.matmul %67, %53, %cst_30 {dimension_numbers = #tpu.dot_dimension_numbers<[1], [0], [0], [1], [0, 0, 1, 1], [], []>} : vector<128x128xbf16>, vector<128x32xbf16>, vector<128x32xf32> -> vector<128x32xf32>
    %c0_31 = arith.constant 0 : index
    %c0_32 = arith.constant 0 : index
    %69 = vector.load %arg11[%c0_31, %c0_32] : memref<256x128xf32, #tpu.memory_space<vmem>>, vector<128x32xf32>
    tpu.vector_store %arg11[%c0_31, %c0_32], %68 {strides = array<i32>} : memref<256x128xf32, #tpu.memory_space<vmem>>, vector<128x32xf32>,
    %c0_33 = arith.constant 0 : index
    %c32 = arith.constant 32 : index
    %70 = vector.load %arg10[%c0_33, %c32] : memref<256x384xf32, #tpu.memory_space<vmem>>, vector<128x32xf32>
    %71 = arith.truncf %70 : vector<128x32xf32> to vector<128x32xbf16>
    %c0_34 = arith.constant 0 : index
    %c160 = arith.constant 160 : index
    %72 = vector.load %arg10[%c0_34, %c160] : memref<256x384xf32, #tpu.memory_space<vmem>>, vector<128x32xf32>
    %73 = arith.truncf %72 : vector<128x32xf32> to vector<128x32xbf16>
    %c0_35 = arith.constant 0 : index
    %c288 = arith.constant 288 : index
    %74 = vector.load %arg10[%c0_35, %c288] : memref<256x384xf32, #tpu.memory_space<vmem>>, vector<128x32xf32>
    %75 = arith.truncf %74 : vector<128x32xf32> to vector<128x32xbf16>
    %cst_36 = arith.constant dense<0.000000e+00> : vector<128x128xf32>
    %76 = tpu.matmul %71, %73, %cst_36 {dimension_numbers = #tpu.dot_dimension_numbers<[1], [1], [0], [0], [0, 0, 1, 0], [], []>} : vector<128x32xbf16>, vector<128x32xbf16>, vector<128x128xf32> -> vector<128x128xf32>
    %c0_37 = arith.constant 0 : index
    %c0_38 = arith.constant 0 : index
    %77 = vector.load %arg7[%c0_37, %c0_38] : memref<128x128xf32, #tpu.memory_space<vmem>>, vector<128x128xf32>
    %78 = arith.addf %76, %77 : vector<128x128xf32>
    %cst_39 = arith.constant dense<0xFF800000> : vector<128xf32>
    %79 = vector.multi_reduction <maximumf>, %78, %cst_39 [1] : vector<128x128xf32> to vector<128xf32>
    %80 = vector.shape_cast %79 : vector<128xf32> to vector<128x1xf32>
    %81 = vector.broadcast %80 : vector<128x1xf32> to vector<128x128xf32>
    %82 = arith.subf %78, %81 : vector<128x128xf32>
    %83 = math.exp %82 : vector<128x128xf32>
    %cst_40 = arith.constant dense<0.000000e+00> : vector<128xf32>
    %84 = vector.multi_reduction <add>, %83, %cst_40 [1] : vector<128x128xf32> to vector<128xf32>
    %85 = vector.shape_cast %84 : vector<128xf32> to vector<128x1xf32>
    %86 = tpu.reciprocal %85 {approx = true} : vector<128x1xf32> -> vector<128x1xf32>
    %87 = vector.broadcast %86 : vector<128x1xf32> to vector<128x128xf32>
    %88 = arith.mulf %83, %87 : vector<128x128xf32>
    %89 = arith.truncf %88 : vector<128x128xf32> to vector<128x128xbf16>
    %cst_41 = arith.constant dense<0.000000e+00> : vector<128x32xf32>
    %90 = tpu.matmul %89, %75, %cst_41 {dimension_numbers = #tpu.dot_dimension_numbers<[1], [0], [0], [1], [0, 0, 1, 1], [], []>} : vector<128x128xbf16>, vector<128x32xbf16>, vector<128x32xf32> -> vector<128x32xf32>
    %c0_42 = arith.constant 0 : index
    %c32_43 = arith.constant 32 : index
    %91 = vector.load %arg11[%c0_42, %c32_43] : memref<256x128xf32, #tpu.memory_space<vmem>>, vector<128x32xf32>
    tpu.vector_store %arg11[%c0_42, %c32_43], %90 {strides = array<i32>} : memref<256x128xf32, #tpu.memory_space<vmem>>, vector<128x32xf32>,
    %c0_44 = arith.constant 0 : index
    %c64 = arith.constant 64 : index
    %92 = vector.load %arg10[%c0_44, %c64] : memref<256x384xf32, #tpu.memory_space<vmem>>, vector<128x32xf32>
    %93 = arith.truncf %92 : vector<128x32xf32> to vector<128x32xbf16>
    %c0_45 = arith.constant 0 : index
    %c192 = arith.constant 192 : index
    %94 = vector.load %arg10[%c0_45, %c192] : memref<256x384xf32, #tpu.memory_space<vmem>>, vector<128x32xf32>
    %95 = arith.truncf %94 : vector<128x32xf32> to vector<128x32xbf16>
    %c0_46 = arith.constant 0 : index
    %c320 = arith.constant 320 : index
    %96 = vector.load %arg10[%c0_46, %c320] : memref<256x384xf32, #tpu.memory_space<vmem>>, vector<128x32xf32>
    %97 = arith.truncf %96 : vector<128x32xf32> to vector<128x32xbf16>
    %cst_47 = arith.constant dense<0.000000e+00> : vector<128x128xf32>
    %98 = tpu.matmul %93, %95, %cst_47 {dimension_numbers = #tpu.dot_dimension_numbers<[1], [1], [0], [0], [0, 0, 1, 0], [], []>} : vector<128x32xbf16>, vector<128x32xbf16>, vector<128x128xf32> -> vector<128x128xf32>
    %c0_48 = arith.constant 0 : index
    %c0_49 = arith.constant 0 : index
    %99 = vector.load %arg7[%c0_48, %c0_49] : memref<128x128xf32, #tpu.memory_space<vmem>>, vector<128x128xf32>
    %100 = arith.addf %98, %99 : vector<128x128xf32>
    %cst_50 = arith.constant dense<0xFF800000> : vector<128xf32>
    %101 = vector.multi_reduction <maximumf>, %100, %cst_50 [1] : vector<128x128xf32> to vector<128xf32>
    %102 = vector.shape_cast %101 : vector<128xf32> to vector<128x1xf32>
    %103 = vector.broadcast %102 : vector<128x1xf32> to vector<128x128xf32>
    %104 = arith.subf %100, %103 : vector<128x128xf32>
    %105 = math.exp %104 : vector<128x128xf32>
    %cst_51 = arith.constant dense<0.000000e+00> : vector<128xf32>
    %106 = vector.multi_reduction <add>, %105, %cst_51 [1] : vector<128x128xf32> to vector<128xf32>
    %107 = vector.shape_cast %106 : vector<128xf32> to vector<128x1xf32>
    %108 = tpu.reciprocal %107 {approx = true} : vector<128x1xf32> -> vector<128x1xf32>
    %109 = vector.broadcast %108 : vector<128x1xf32> to vector<128x128xf32>
    %110 = arith.mulf %105, %109 : vector<128x128xf32>
    %111 = arith.truncf %110 : vector<128x128xf32> to vector<128x128xbf16>
    %cst_52 = arith.constant dense<0.000000e+00> : vector<128x32xf32>
    %112 = tpu.matmul %111, %97, %cst_52 {dimension_numbers = #tpu.dot_dimension_numbers<[1], [0], [0], [1], [0, 0, 1, 1], [], []>} : vector<128x128xbf16>, vector<128x32xbf16>, vector<128x32xf32> -> vector<128x32xf32>
    %c0_53 = arith.constant 0 : index
    %c64_54 = arith.constant 64 : index
    %113 = vector.load %arg11[%c0_53, %c64_54] : memref<256x128xf32, #tpu.memory_space<vmem>>, vector<128x32xf32>
    tpu.vector_store %arg11[%c0_53, %c64_54], %112 {strides = array<i32>} : memref<256x128xf32, #tpu.memory_space<vmem>>, vector<128x32xf32>,
    %c0_55 = arith.constant 0 : index
    %c96 = arith.constant 96 : index
    %114 = vector.load %arg10[%c0_55, %c96] : memref<256x384xf32, #tpu.memory_space<vmem>>, vector<128x32xf32>
    %115 = arith.truncf %114 : vector<128x32xf32> to vector<128x32xbf16>
    %c0_56 = arith.constant 0 : index
    %c224 = arith.constant 224 : index
    %116 = vector.load %arg10[%c0_56, %c224] : memref<256x384xf32, #tpu.memory_space<vmem>>, vector<128x32xf32>
    %117 = arith.truncf %116 : vector<128x32xf32> to vector<128x32xbf16>
    %c0_57 = arith.constant 0 : index
    %c352 = arith.constant 352 : index
    %118 = vector.load %arg10[%c0_57, %c352] : memref<256x384xf32, #tpu.memory_space<vmem>>, vector<128x32xf32>
    %119 = arith.truncf %118 : vector<128x32xf32> to vector<128x32xbf16>
    %cst_58 = arith.constant dense<0.000000e+00> : vector<128x128xf32>
    %120 = tpu.matmul %115, %117, %cst_58 {dimension_numbers = #tpu.dot_dimension_numbers<[1], [1], [0], [0], [0, 0, 1, 0], [], []>} : vector<128x32xbf16>, vector<128x32xbf16>, vector<128x128xf32> -> vector<128x128xf32>
    %c0_59 = arith.constant 0 : index
    %c0_60 = arith.constant 0 : index
    %121 = vector.load %arg7[%c0_59, %c0_60] : memref<128x128xf32, #tpu.memory_space<vmem>>, vector<128x128xf32>
    %122 = arith.addf %120, %121 : vector<128x128xf32>
    %cst_61 = arith.constant dense<0xFF800000> : vector<128xf32>
    %123 = vector.multi_reduction <maximumf>, %122, %cst_61 [1] : vector<128x128xf32> to vector<128xf32>
    %124 = vector.shape_cast %123 : vector<128xf32> to vector<128x1xf32>
    %125 = vector.broadcast %124 : vector<128x1xf32> to vector<128x128xf32>
    %126 = arith.subf %122, %125 : vector<128x128xf32>
    %127 = math.exp %126 : vector<128x128xf32>
    %cst_62 = arith.constant dense<0.000000e+00> : vector<128xf32>
    %128 = vector.multi_reduction <add>, %127, %cst_62 [1] : vector<128x128xf32> to vector<128xf32>
    %129 = vector.shape_cast %128 : vector<128xf32> to vector<128x1xf32>
    %130 = tpu.reciprocal %129 {approx = true} : vector<128x1xf32> -> vector<128x1xf32>
    %131 = vector.broadcast %130 : vector<128x1xf32> to vector<128x128xf32>
    %132 = arith.mulf %127, %131 : vector<128x128xf32>
    %133 = arith.truncf %132 : vector<128x128xf32> to vector<128x128xbf16>
    %cst_63 = arith.constant dense<0.000000e+00> : vector<128x32xf32>
    %134 = tpu.matmul %133, %119, %cst_63 {dimension_numbers = #tpu.dot_dimension_numbers<[1], [0], [0], [1], [0, 0, 1, 1], [], []>} : vector<128x128xbf16>, vector<128x32xbf16>, vector<128x32xf32> -> vector<128x32xf32>
    %c0_64 = arith.constant 0 : index
    %c96_65 = arith.constant 96 : index
    %135 = vector.load %arg11[%c0_64, %c96_65] : memref<256x128xf32, #tpu.memory_space<vmem>>, vector<128x32xf32>
    tpu.vector_store %arg11[%c0_64, %c96_65], %134 {strides = array<i32>} : memref<256x128xf32, #tpu.memory_space<vmem>>, vector<128x32xf32>,
    %c128_66 = arith.constant 128 : index
    %c0_67 = arith.constant 0 : index
    %136 = vector.load %arg10[%c128_66, %c0_67] : memref<256x384xf32, #tpu.memory_space<vmem>>, vector<128x32xf32>
    %137 = arith.truncf %136 : vector<128x32xf32> to vector<128x32xbf16>
    %c128_68 = arith.constant 128 : index
    %c128_69 = arith.constant 128 : index
    %138 = vector.load %arg10[%c128_68, %c128_69] : memref<256x384xf32, #tpu.memory_space<vmem>>, vector<128x32xf32>
    %139 = arith.truncf %138 : vector<128x32xf32> to vector<128x32xbf16>
    %c128_70 = arith.constant 128 : index
    %c256_71 = arith.constant 256 : index
    %140 = vector.load %arg10[%c128_70, %c256_71] : memref<256x384xf32, #tpu.memory_space<vmem>>, vector<128x32xf32>
    %141 = arith.truncf %140 : vector<128x32xf32> to vector<128x32xbf16>
    %cst_72 = arith.constant dense<0.000000e+00> : vector<128x128xf32>
    %142 = tpu.matmul %137, %139, %cst_72 {dimension_numbers = #tpu.dot_dimension_numbers<[1], [1], [0], [0], [0, 0, 1, 0], [], []>} : vector<128x32xbf16>, vector<128x32xbf16>, vector<128x128xf32> -> vector<128x128xf32>
    %c0_73 = arith.constant 0 : index
    %c0_74 = arith.constant 0 : index
    %143 = vector.load %arg7[%c0_73, %c0_74] : memref<128x128xf32, #tpu.memory_space<vmem>>, vector<128x128xf32>
    %144 = arith.addf %142, %143 : vector<128x128xf32>
    %cst_75 = arith.constant dense<0xFF800000> : vector<128xf32>
    %145 = vector.multi_reduction <maximumf>, %144, %cst_75 [1] : vector<128x128xf32> to vector<128xf32>
    %146 = vector.shape_cast %145 : vector<128xf32> to vector<128x1xf32>
    %147 = vector.broadcast %146 : vector<128x1xf32> to vector<128x128xf32>
    %148 = arith.subf %144, %147 : vector<128x128xf32>
    %149 = math.exp %148 : vector<128x128xf32>
    %cst_76 = arith.constant dense<0.000000e+00> : vector<128xf32>
    %150 = vector.multi_reduction <add>, %149, %cst_76 [1] : vector<128x128xf32> to vector<128xf32>
    %151 = vector.shape_cast %150 : vector<128xf32> to vector<128x1xf32>
    %152 = tpu.reciprocal %151 {approx = true} : vector<128x1xf32> -> vector<128x1xf32>
    %153 = vector.broadcast %152 : vector<128x1xf32> to vector<128x128xf32>
    %154 = arith.mulf %149, %153 : vector<128x128xf32>
    %155 = arith.truncf %154 : vector<128x128xf32> to vector<128x128xbf16>
    %cst_77 = arith.constant dense<0.000000e+00> : vector<128x32xf32>
    %156 = tpu.matmul %155, %141, %cst_77 {dimension_numbers = #tpu.dot_dimension_numbers<[1], [0], [0], [1], [0, 0, 1, 1], [], []>} : vector<128x128xbf16>, vector<128x32xbf16>, vector<128x32xf32> -> vector<128x32xf32>
    %c128_78 = arith.constant 128 : index
    %c0_79 = arith.constant 0 : index
    %157 = vector.load %arg11[%c128_78, %c0_79] : memref<256x128xf32, #tpu.memory_space<vmem>>, vector<128x32xf32>
    tpu.vector_store %arg11[%c128_78, %c0_79], %156 {strides = array<i32>} : memref<256x128xf32, #tpu.memory_space<vmem>>, vector<128x32xf32>,
    %c128_80 = arith.constant 128 : index
    %c32_81 = arith.constant 32 : index
    %158 = vector.load %arg10[%c128_80, %c32_81] : memref<256x384xf32, #tpu.memory_space<vmem>>, vector<128x32xf32>
    %159 = arith.truncf %158 : vector<128x32xf32> to vector<128x32xbf16>
    %c128_82 = arith.constant 128 : index
    %c160_83 = arith.constant 160 : index
    %160 = vector.load %arg10[%c128_82, %c160_83] : memref<256x384xf32, #tpu.memory_space<vmem>>, vector<128x32xf32>
    %161 = arith.truncf %160 : vector<128x32xf32> to vector<128x32xbf16>
    %c128_84 = arith.constant 128 : index
    %c288_85 = arith.constant 288 : index
    %162 = vector.load %arg10[%c128_84, %c288_85] : memref<256x384xf32, #tpu.memory_space<vmem>>, vector<128x32xf32>
    %163 = arith.truncf %162 : vector<128x32xf32> to vector<128x32xbf16>
    %cst_86 = arith.constant dense<0.000000e+00> : vector<128x128xf32>
    %164 = tpu.matmul %159, %161, %cst_86 {dimension_numbers = #tpu.dot_dimension_numbers<[1], [1], [0], [0], [0, 0, 1, 0], [], []>} : vector<128x32xbf16>, vector<128x32xbf16>, vector<128x128xf32> -> vector<128x128xf32>
    %c0_87 = arith.constant 0 : index
    %c0_88 = arith.constant 0 : index
    %165 = vector.load %arg7[%c0_87, %c0_88] : memref<128x128xf32, #tpu.memory_space<vmem>>, vector<128x128xf32>
    %166 = arith.addf %164, %165 : vector<128x128xf32>
    %cst_89 = arith.constant dense<0xFF800000> : vector<128xf32>
    %167 = vector.multi_reduction <maximumf>, %166, %cst_89 [1] : vector<128x128xf32> to vector<128xf32>
    %168 = vector.shape_cast %167 : vector<128xf32> to vector<128x1xf32>
    %169 = vector.broadcast %168 : vector<128x1xf32> to vector<128x128xf32>
    %170 = arith.subf %166, %169 : vector<128x128xf32>
    %171 = math.exp %170 : vector<128x128xf32>
    %cst_90 = arith.constant dense<0.000000e+00> : vector<128xf32>
    %172 = vector.multi_reduction <add>, %171, %cst_90 [1] : vector<128x128xf32> to vector<128xf32>
    %173 = vector.shape_cast %172 : vector<128xf32> to vector<128x1xf32>
    %174 = tpu.reciprocal %173 {approx = true} : vector<128x1xf32> -> vector<128x1xf32>
    %175 = vector.broadcast %174 : vector<128x1xf32> to vector<128x128xf32>
    %176 = arith.mulf %171, %175 : vector<128x128xf32>
    %177 = arith.truncf %176 : vector<128x128xf32> to vector<128x128xbf16>
    %cst_91 = arith.constant dense<0.000000e+00> : vector<128x32xf32>
    %178 = tpu.matmul %177, %163, %cst_91 {dimension_numbers = #tpu.dot_dimension_numbers<[1], [0], [0], [1], [0, 0, 1, 1], [], []>} : vector<128x128xbf16>, vector<128x32xbf16>, vector<128x32xf32> -> vector<128x32xf32>
    %c128_92 = arith.constant 128 : index
    %c32_93 = arith.constant 32 : index
    %179 = vector.load %arg11[%c128_92, %c32_93] : memref<256x128xf32, #tpu.memory_space<vmem>>, vector<128x32xf32>
    tpu.vector_store %arg11[%c128_92, %c32_93], %178 {strides = array<i32>} : memref<256x128xf32, #tpu.memory_space<vmem>>, vector<128x32xf32>,
    %c128_94 = arith.constant 128 : index
    %c64_95 = arith.constant 64 : index
    %180 = vector.load %arg10[%c128_94, %c64_95] : memref<256x384xf32, #tpu.memory_space<vmem>>, vector<128x32xf32>
    %181 = arith.truncf %180 : vector<128x32xf32> to vector<128x32xbf16>
    %c128_96 = arith.constant 128 : index
    %c192_97 = arith.constant 192 : index
    %182 = vector.load %arg10[%c128_96, %c192_97] : memref<256x384xf32, #tpu.memory_space<vmem>>, vector<128x32xf32>
    %183 = arith.truncf %182 : vector<128x32xf32> to vector<128x32xbf16>
    %c128_98 = arith.constant 128 : index
    %c320_99 = arith.constant 320 : index
    %184 = vector.load %arg10[%c128_98, %c320_99] : memref<256x384xf32, #tpu.memory_space<vmem>>, vector<128x32xf32>
    %185 = arith.truncf %184 : vector<128x32xf32> to vector<128x32xbf16>
    %cst_100 = arith.constant dense<0.000000e+00> : vector<128x128xf32>
    %186 = tpu.matmul %181, %183, %cst_100 {dimension_numbers = #tpu.dot_dimension_numbers<[1], [1], [0], [0], [0, 0, 1, 0], [], []>} : vector<128x32xbf16>, vector<128x32xbf16>, vector<128x128xf32> -> vector<128x128xf32>
    %c0_101 = arith.constant 0 : index
    %c0_102 = arith.constant 0 : index
    %187 = vector.load %arg7[%c0_101, %c0_102] : memref<128x128xf32, #tpu.memory_space<vmem>>, vector<128x128xf32>
    %188 = arith.addf %186, %187 : vector<128x128xf32>
    %cst_103 = arith.constant dense<0xFF800000> : vector<128xf32>
    %189 = vector.multi_reduction <maximumf>, %188, %cst_103 [1] : vector<128x128xf32> to vector<128xf32>
    %190 = vector.shape_cast %189 : vector<128xf32> to vector<128x1xf32>
    %191 = vector.broadcast %190 : vector<128x1xf32> to vector<128x128xf32>
    %192 = arith.subf %188, %191 : vector<128x128xf32>
    %193 = math.exp %192 : vector<128x128xf32>
    %cst_104 = arith.constant dense<0.000000e+00> : vector<128xf32>
    %194 = vector.multi_reduction <add>, %193, %cst_104 [1] : vector<128x128xf32> to vector<128xf32>
    %195 = vector.shape_cast %194 : vector<128xf32> to vector<128x1xf32>
    %196 = tpu.reciprocal %195 {approx = true} : vector<128x1xf32> -> vector<128x1xf32>
    %197 = vector.broadcast %196 : vector<128x1xf32> to vector<128x128xf32>
    %198 = arith.mulf %193, %197 : vector<128x128xf32>
    %199 = arith.truncf %198 : vector<128x128xf32> to vector<128x128xbf16>
    %cst_105 = arith.constant dense<0.000000e+00> : vector<128x32xf32>
    %200 = tpu.matmul %199, %185, %cst_105 {dimension_numbers = #tpu.dot_dimension_numbers<[1], [0], [0], [1], [0, 0, 1, 1], [], []>} : vector<128x128xbf16>, vector<128x32xbf16>, vector<128x32xf32> -> vector<128x32xf32>
    %c128_106 = arith.constant 128 : index
    %c64_107 = arith.constant 64 : index
    %201 = vector.load %arg11[%c128_106, %c64_107] : memref<256x128xf32, #tpu.memory_space<vmem>>, vector<128x32xf32>
    tpu.vector_store %arg11[%c128_106, %c64_107], %200 {strides = array<i32>} : memref<256x128xf32, #tpu.memory_space<vmem>>, vector<128x32xf32>,
    %c128_108 = arith.constant 128 : index
    %c96_109 = arith.constant 96 : index
    %202 = vector.load %arg10[%c128_108, %c96_109] : memref<256x384xf32, #tpu.memory_space<vmem>>, vector<128x32xf32>
    %203 = arith.truncf %202 : vector<128x32xf32> to vector<128x32xbf16>
    %c128_110 = arith.constant 128 : index
    %c224_111 = arith.constant 224 : index
    %204 = vector.load %arg10[%c128_110, %c224_111] : memref<256x384xf32, #tpu.memory_space<vmem>>, vector<128x32xf32>
    %205 = arith.truncf %204 : vector<128x32xf32> to vector<128x32xbf16>
    %c128_112 = arith.constant 128 : index
    %c352_113 = arith.constant 352 : index
    %206 = vector.load %arg10[%c128_112, %c352_113] : memref<256x384xf32, #tpu.memory_space<vmem>>, vector<128x32xf32>
    %207 = arith.truncf %206 : vector<128x32xf32> to vector<128x32xbf16>
    %cst_114 = arith.constant dense<0.000000e+00> : vector<128x128xf32>
    %208 = tpu.matmul %203, %205, %cst_114 {dimension_numbers = #tpu.dot_dimension_numbers<[1], [1], [0], [0], [0, 0, 1, 0], [], []>} : vector<128x32xbf16>, vector<128x32xbf16>, vector<128x128xf32> -> vector<128x128xf32>
    %c0_115 = arith.constant 0 : index
    %c0_116 = arith.constant 0 : index
    %209 = vector.load %arg7[%c0_115, %c0_116] : memref<128x128xf32, #tpu.memory_space<vmem>>, vector<128x128xf32>
    %210 = arith.addf %208, %209 : vector<128x128xf32>
    %cst_117 = arith.constant dense<0xFF800000> : vector<128xf32>
    %211 = vector.multi_reduction <maximumf>, %210, %cst_117 [1] : vector<128x128xf32> to vector<128xf32>
    %212 = vector.shape_cast %211 : vector<128xf32> to vector<128x1xf32>
    %213 = vector.broadcast %212 : vector<128x1xf32> to vector<128x128xf32>
    %214 = arith.subf %210, %213 : vector<128x128xf32>
    %215 = math.exp %214 : vector<128x128xf32>
    %cst_118 = arith.constant dense<0.000000e+00> : vector<128xf32>
    %216 = vector.multi_reduction <add>, %215, %cst_118 [1] : vector<128x128xf32> to vector<128xf32>
    %217 = vector.shape_cast %216 : vector<128xf32> to vector<128x1xf32>
    %218 = tpu.reciprocal %217 {approx = true} : vector<128x1xf32> -> vector<128x1xf32>
    %219 = vector.broadcast %218 : vector<128x1xf32> to vector<128x128xf32>
    %220 = arith.mulf %215, %219 : vector<128x128xf32>
    %221 = arith.truncf %220 : vector<128x128xf32> to vector<128x128xbf16>
    %cst_119 = arith.constant dense<0.000000e+00> : vector<128x32xf32>
    %222 = tpu.matmul %221, %207, %cst_119 {dimension_numbers = #tpu.dot_dimension_numbers<[1], [0], [0], [1], [0, 0, 1, 1], [], []>} : vector<128x128xbf16>, vector<128x32xbf16>, vector<128x32xf32> -> vector<128x32xf32>
    %c128_120 = arith.constant 128 : index
    %c96_121 = arith.constant 96 : index
    %223 = vector.load %arg11[%c128_120, %c96_121] : memref<256x128xf32, #tpu.memory_space<vmem>>, vector<128x32xf32>
    tpu.vector_store %arg11[%c128_120, %c96_121], %222 {strides = array<i32>} : memref<256x128xf32, #tpu.memory_space<vmem>>, vector<128x32xf32>,
    %c0_122 = arith.constant 0 : index
    %c0_123 = arith.constant 0 : index
    %224 = vector.load %arg11[%c0_122, %c0_123] : memref<256x128xf32, #tpu.memory_space<vmem>>, vector<256x128xf32>
    %225 = arith.truncf %224 : vector<256x128xf32> to vector<256x128xbf16>
    %c0_124 = arith.constant 0 : index
    %c0_125 = arith.constant 0 : index
    %226 = vector.load %arg5[%c0_124, %c0_125] : memref<128x128xbf16, #tpu.memory_space<vmem>>, vector<128x128xbf16>
    %cst_126 = arith.constant dense<0.000000e+00> : vector<256x128xf32>
    %227 = tpu.matmul %225, %226, %cst_126 {dimension_numbers = #tpu.dot_dimension_numbers<[1], [0], [0], [1], [0, 0, 1, 1], [], []>} : vector<256x128xbf16>, vector<128x128xbf16>, vector<256x128xf32> -> vector<256x128xf32>
    %228 = vector.broadcast %4 : vector<1x128xf32> to vector<256x128xf32>
    %229 = arith.addf %227, %228 : vector<256x128xf32>
    %c0_127 = arith.constant 0 : index
    %c0_128 = arith.constant 0 : index
    %230 = vector.load %arg9[%c0_127, %c0_128] : memref<256x128xf32, #tpu.memory_space<vmem>>, vector<256x128xf32>
    %231 = arith.addf %230, %229 : vector<256x128xf32>
    %cst_129 = arith.constant dense<0.000000e+00> : vector<256xf32>
    %232 = vector.multi_reduction <add>, %231, %cst_129 [1] : vector<256x128xf32> to vector<256xf32>
    %233 = vector.shape_cast %232 : vector<256xf32> to vector<256x1xf32>
    %cst_130 = arith.constant 1.280000e+02 : f32
    %234 = vector.broadcast %cst_130 : f32 to vector<256x1xf32>
    %235 = arith.divf %233, %234 : vector<256x1xf32>
    %236 = arith.mulf %231, %231 : vector<256x128xf32>
    %cst_131 = arith.constant dense<0.000000e+00> : vector<256xf32>
    %237 = vector.multi_reduction <add>, %236, %cst_131 [1] : vector<256x128xf32> to vector<256xf32>
    %238 = vector.shape_cast %237 : vector<256xf32> to vector<256x1xf32>
    %cst_132 = arith.constant 1.280000e+02 : f32
    %239 = vector.broadcast %cst_132 : f32 to vector<256x1xf32>
    %240 = arith.divf %238, %239 : vector<256x1xf32>
    %241 = arith.mulf %235, %235 : vector<256x1xf32>
    %242 = arith.subf %240, %241 : vector<256x1xf32>
    %243 = vector.broadcast %235 : vector<256x1xf32> to vector<256x128xf32>
    %244 = arith.subf %231, %243 : vector<256x128xf32>
    %cst_133 = arith.constant 9.99999974E-6 : f32
    %245 = vector.broadcast %cst_133 : f32 to vector<256x1xf32>
    %246 = arith.addf %242, %245 : vector<256x1xf32>
    %247 = math.rsqrt %246 : vector<256x1xf32>
    %248 = vector.broadcast %247 : vector<256x1xf32> to vector<256x128xf32>
    %249 = arith.mulf %244, %248 : vector<256x128xf32>
    %250 = vector.broadcast %5 : vector<1x128xf32> to vector<256x128xf32>
    %251 = arith.mulf %249, %250 : vector<256x128xf32>
    %252 = vector.broadcast %6 : vector<1x128xf32> to vector<256x128xf32>
    %253 = arith.addf %251, %252 : vector<256x128xf32>
    %c0_134 = arith.constant 0 : index
    %c0_135 = arith.constant 0 : index
    %254 = vector.load %arg8[%c0_134, %c0_135] : memref<256x128xf32, #tpu.memory_space<vmem>>, vector<256x128xf32>
    tpu.vector_store %arg8[%c0_134, %c0_135], %253 {strides = array<i32>} : memref<256x128xf32, #tpu.memory_space<vmem>>, vector<256x128xf32>,
    return
  }
  func.func @transform_0(%arg0: i32) -> (i32, i32) {
    %c0_i32 = arith.constant 0 : i32
    %c0_i32_0 = arith.constant 0 : i32
    return %arg0, %c0_i32 : i32, i32
  }
  func.func @transform_1(%arg0: i32) -> (i32, i32) {
    %c0_i32 = arith.constant 0 : i32
    %c0_i32_0 = arith.constant 0 : i32
    %c0_i32_1 = arith.constant 0 : i32
    return %c0_i32, %c0_i32_0 : i32, i32
  }
  func.func @transform_2(%arg0: i32) -> (i32, i32) {
    %c0_i32 = arith.constant 0 : i32
    %c0_i32_0 = arith.constant 0 : i32
    %c0_i32_1 = arith.constant 0 : i32
    return %c0_i32, %c0_i32_0 : i32, i32
  }
  func.func @transform_3(%arg0: i32) -> (i32, i32) {
    %c0_i32 = arith.constant 0 : i32
    %c0_i32_0 = arith.constant 0 : i32
    %c0_i32_1 = arith.constant 0 : i32
    return %c0_i32, %c0_i32_0 : i32, i32
  }
  func.func @transform_4(%arg0: i32) -> (i32, i32) {
    %c0_i32 = arith.constant 0 : i32
    %c0_i32_0 = arith.constant 0 : i32
    %c0_i32_1 = arith.constant 0 : i32
    return %c0_i32, %c0_i32_0 : i32, i32
  }
  func.func @transform_5(%arg0: i32) -> (i32, i32) {
    %c0_i32 = arith.constant 0 : i32
    %c0_i32_0 = arith.constant 0 : i32
    %c0_i32_1 = arith.constant 0 : i32
    return %c0_i32, %c0_i32_0 : i32, i32
  }
  func.func @transform_6(%arg0: i32) -> (i32, i32) {
    %c0_i32 = arith.constant 0 : i32
    %c0_i32_0 = arith.constant 0 : i32
    %c0_i32_1 = arith.constant 0 : i32
    return %c0_i32, %c0_i32_0 : i32, i32
  }
  func.func @transform_7(%arg0: i32) -> (i32, i32) {
    %c0_i32 = arith.constant 0 : i32
    %c0_i32_0 = arith.constant 0 : i32
    return %arg0, %c0_i32 : i32, i32
  }
}

</mosaic_0001>

<llo_original>
// kernel: tpu_custom_call.1
$region0: #{tpu_custom_call.1}
  #allocation0 [shape = 'u32[]', space=smem, size = 0x4, offset = 0x4, fixed_abs, tag = 'smem constant byte address 0x4 - core index']
  #allocation1 [shape = 'u32[144,128]{1,0:T(1,128)}', space=vmem, size = 0x12000, scoped, tag = 'internal scratch']
  #allocation2 [shape = 'f32[256,128]{1,0:T(8,128)}', space=vmem, size = 0x20000, scoped, tag = 'scratch operand']
  #allocation3 [shape = 'f32[256,384]{1,0:T(8,128)}', space=vmem, size = 0x60000, scoped, tag = 'scratch operand']
  #allocation4 [shape = 'f32[256,128]{1,0:T(8,128)}', space=vmem, size = 0x20000, scoped, tag = 'scratch operand']
  %s0 = inlined_call_operand.vmem [shape: f32[512,16], index: 0, kind: input, shape index: {}]
  %s1 = inlined_call_operand.vmem [shape: bf16[16,128], index: 1, kind: input, shape index: {}]
  %s2 = inlined_call_operand.vmem [shape: bf16[128,384], index: 2, kind: input, shape index: {}]
  %s3 = inlined_call_operand.vmem [shape: f32[1,384], index: 3, kind: input, shape index: {}]
  %s4 = inlined_call_operand.vmem [shape: bf16[128,128], index: 4, kind: input, shape index: {}]
  %s5 = inlined_call_operand.vmem [shape: f32[6,128], index: 5, kind: input, shape index: {}]
  %s6 = inlined_call_operand.vmem [shape: f32[128,128], index: 6, kind: input, shape index: {}]
  %s7 = inlined_call_operand.hbm [shape: f32[512,128], index: 7, kind: output, shape index: {}]
  %s8 = sld [smem:[#allocation0]]
  $region61: #{tpu_custom_call.1} parent=0
    _
  %s10 = ssub.s32 1, %s8
  %s11 = scalar_select 0, %s10, %s8
  $region1: #{tpu_custom_call.1} parent=0
    #allocation5 [shape = 'u8[262144]{0}', space=vmem, size = 0x40000, scoped, tag = 'output window, operand 0']
    #allocation6 [shape = 's32[2]{0}', space=sflag, size = 0x8, scoped, tag = 'scoped memory for tpu_custom_call.1']
    %12 = vsyncpa [#allocation6], 0
    %s13 = scalar_lea.sflag [#allocation6], 1
    %14 = vsyncpa %s13, 0
    loop: start=0, step=1, limit=4
    $region2: #{tpu_custom_call.1} parent=1 // loop_pre_header
      _
    $region3: #{tpu_custom_call.1} parent=1 // loop_header
      %s16 = sphi 0, %s20
      %p17 = scmp.ge.s32.totalorder %s16, 4
      %s26 = sphi 0, %s28
      %s29 = sphi 0, %s26
      %s30 = sphi 0, %s29
      %s46 = sphi 0, %s30
      %s50 = sphi 0, %s50
      %s52 = sphi 0, %s50
      %s53 = sphi 0, %s52
      %s67 = sphi 0, %s53
      %s71 = sphi 0, %s71
      %s73 = sphi 0, %s71
      %s74 = sphi 0, %s73
      %s88 = sphi 0, %s74
      %s92 = sphi 0, %s92
      %s94 = sphi 0, %s92
      %s95 = sphi 0, %s94
      %s109 = sphi 0, %s95
      %s113 = sphi 0, %s113
      %s115 = sphi 0, %s113
      %s116 = sphi 0, %s115
      %s130 = sphi 0, %s116
      %s134 = sphi 0, %s134
      %s136 = sphi 0, %s134
      %s137 = sphi 0, %s136
      %s151 = sphi 0, %s137
      %s155 = sphi 0, %s155
      %s157 = sphi 0, %s155
      %s158 = sphi 0, %s157
      %s172 = sphi 0, %s158
      %s178 = sphi 0, %s180
      %s181 = sphi 0, %s178
      %s182 = sphi 0, %s181
      %s198 = sphi 0, %s182
    $region4: #{tpu_custom_call.1} parent=1 // loop_header_branch
      %19 = sbr.rel (%p17) target = $region8
    $region5: #{tpu_custom_call.1} parent=1 // loop_body
      %s21 = ssub.s32 %s16, 1
      %s22 = ssub.s32 %s16, 2
      %s23 = sadd.s32 %s16, 1
      %s24 = ssub.s32 %s16, %s23
      %p25 = scmp.eq.s32.totalorder %s24, 0
      %s27 = sadd.s32 %s26, 1
      %s28 = scalar_select %p25, %s26, %s27
      %p31 = pneg %p25
      %p32 = scmp.eq.s32.totalorder %s16, 1
      %p33 = por %p31, %p32
      %p34 = scmp.ne.s32.totalorder %s26, %s29
      %p35 = scmp.eq.s32.totalorder %s16, 0
      %p36 = por %p34, %p35
      %p37 = scmp.ne.s32.totalorder %s26, %s29
      %p38 = scmp.eq.s32.totalorder %s21, 1
      %p39 = por %p37, %p38
      %p40 = scmp.ne.s32.totalorder %s29, %s30
      %p41 = scmp.eq.s32.totalorder %s21, 0
      %p42 = por %p40, %p41
      %p43 = scmp.ne.s32.totalorder %s29, %s30
      %p44 = scmp.eq.s32.totalorder %s22, 1
      %p45 = por %p43, %p44
      %p47 = scmp.ne.s32.totalorder %s30, %s46
      %p48 = scmp.eq.s32.totalorder %s22, 0
      %p49 = por %p47, %p48
      %s51 = sadd.s32 %s50, 1
      %p54 = scmp.eq.s32.totalorder %s16, 1
      %p55 = scmp.ne.s32.totalorder %s50, %s52
      %p56 = scmp.eq.s32.totalorder %s16, 0
      %p57 = por %p55, %p56
      %p58 = scmp.ne.s32.totalorder %s50, %s52
      %p59 = scmp.eq.s32.totalorder %s21, 1
      %p60 = por %p58, %p59
      %p61 = scmp.ne.s32.totalorder %s52, %s53
      %p62 = scmp.eq.s32.totalorder %s21, 0
      %p63 = por %p61, %p62
      %p64 = scmp.ne.s32.totalorder %s52, %s53
      %p65 = scmp.eq.s32.totalorder %s22, 1
      %p66 = por %p64, %p65
      %p68 = scmp.ne.s32.totalorder %s53, %s67
      %p69 = scmp.eq.s32.totalorder %s22, 0
      %p70 = por %p68, %p69
      %s72 = sadd.s32 %s71, 1
      %p75 = scmp.eq.s32.totalorder %s16, 1
      %p76 = scmp.ne.s32.totalorder %s71, %s73
      %p77 = scmp.eq.s32.totalorder %s16, 0
      %p78 = por %p76, %p77
      %p79 = scmp.ne.s32.totalorder %s71, %s73
      %p80 = scmp.eq.s32.totalorder %s21, 1
      %p81 = por %p79, %p80
      %p82 = scmp.ne.s32.totalorder %s73, %s74
      %p83 = scmp.eq.s32.totalorder %s21, 0
      %p84 = por %p82, %p83
      %p85 = scmp.ne.s32.totalorder %s73, %s74
      %p86 = scmp.eq.s32.totalorder %s22, 1
      %p87 = por %p85, %p86
      %p89 = scmp.ne.s32.totalorder %s74, %s88
      %p90 = scmp.eq.s32.totalorder %s22, 0
      %p91 = por %p89, %p90
      %s93 = sadd.s32 %s92, 1
      %p96 = scmp.eq.s32.totalorder %s16, 1
      %p97 = scmp.ne.s32.totalorder %s92, %s94
      %p98 = scmp.eq.s32.totalorder %s16, 0
      %p99 = por %p97, %p98
      %p100 = scmp.ne.s32.totalorder %s92, %s94
      %p101 = scmp.eq.s32.totalorder %s21, 1
      %p102 = por %p100, %p101
      %p103 = scmp.ne.s32.totalorder %s94, %s95
      %p104 = scmp.eq.s32.totalorder %s21, 0
      %p105 = por %p103, %p104
      %p106 = scmp.ne.s32.totalorder %s94, %s95
      %p107 = scmp.eq.s32.totalorder %s22, 1
      %p108 = por %p106, %p107
      %p110 = scmp.ne.s32.totalorder %s95, %s109
      %p111 = scmp.eq.s32.totalorder %s22, 0
      %p112 = por %p110, %p111
      %s114 = sadd.s32 %s113, 1
      %p117 = scmp.eq.s32.totalorder %s16, 1
      %p118 = scmp.ne.s32.totalorder %s113, %s115
      %p119 = scmp.eq.s32.totalorder %s16, 0
      %p120 = por %p118, %p119
      %p121 = scmp.ne.s32.totalorder %s113, %s115
      %p122 = scmp.eq.s32.totalorder %s21, 1
      %p123 = por %p121, %p122
      %p124 = scmp.ne.s32.totalorder %s115, %s116
      %p125 = scmp.eq.s32.totalorder %s21, 0
      %p126 = por %p124, %p125
      %p127 = scmp.ne.s32.totalorder %s115, %s116
      %p128 = scmp.eq.s32.totalorder %s22, 1
      %p129 = por %p127, %p128
      %p131 = scmp.ne.s32.totalorder %s116, %s130
      %p132 = scmp.eq.s32.totalorder %s22, 0
      %p133 = por %p131, %p132
      %s135 = sadd.s32 %s134, 1
      %p138 = scmp.eq.s32.totalorder %s16, 1
      %p139 = scmp.ne.s32.totalorder %s134, %s136
      %p140 = scmp.eq.s32.totalorder %s16, 0
      %p141 = por %p139, %p140
      %p142 = scmp.ne.s32.totalorder %s134, %s136
      %p143 = scmp.eq.s32.totalorder %s21, 1
      %p144 = por %p142, %p143
      %p145 = scmp.ne.s32.totalorder %s136, %s137
      %p146 = scmp.eq.s32.totalorder %s21, 0
      %p147 = por %p145, %p146
      %p148 = scmp.ne.s32.totalorder %s136, %s137
      %p149 = scmp.eq.s32.totalorder %s22, 1
      %p150 = por %p148, %p149
      %p152 = scmp.ne.s32.totalorder %s137, %s151
      %p153 = scmp.eq.s32.totalorder %s22, 0
      %p154 = por %p152, %p153
      %s156 = sadd.s32 %s155, 1
      %p159 = scmp.eq.s32.totalorder %s16, 1
      %p160 = scmp.ne.s32.totalorder %s155, %s157
      %p161 = scmp.eq.s32.totalorder %s16, 0
      %p162 = por %p160, %p161
      %p163 = scmp.ne.s32.totalorder %s155, %s157
      %p164 = scmp.eq.s32.totalorder %s21, 1
      %p165 = por %p163, %p164
      %p166 = scmp.ne.s32.totalorder %s157, %s158
      %p167 = scmp.eq.s32.totalorder %s21, 0
      %p168 = por %p166, %p167
      %p169 = scmp.ne.s32.totalorder %s157, %s158
      %p170 = scmp.eq.s32.totalorder %s22, 1
      %p171 = por %p169, %p170
      %p173 = scmp.ne.s32.totalorder %s158, %s172
      %p174 = scmp.eq.s32.totalorder %s22, 0
      %p175 = por %p173, %p174
      %s176 = ssub.s32 %s16, %s23
      %p177 = scmp.eq.s32.totalorder %s176, 0
      %s179 = sadd.s32 %s178, 1
      %s180 = scalar_select %p177, %s178, %s179
      %p183 = pneg %p177
      %p184 = scmp.eq.s32.totalorder %s16, 1
      %p185 = por %p183, %p184
      %p186 = scmp.ne.s32.totalorder %s178, %s181
      %p187 = scmp.eq.s32.totalorder %s16, 0
      %p188 = por %p186, %p187
      %p189 = scmp.ne.s32.totalorder %s178, %s181
      %p190 = scmp.eq.s32.totalorder %s21, 1
      %p191 = por %p189, %p190
      %p192 = scmp.ne.s32.totalorder %s181, %s182
      %p193 = scmp.eq.s32.totalorder %s21, 0
      %p194 = por %p192, %p193
      %p195 = scmp.ne.s32.totalorder %s181, %s182
      %p196 = scmp.eq.s32.totalorder %s22, 1
      %p197 = por %p195, %p196
      %p199 = scmp.ne.s32.totalorder %s182, %s198
      %p200 = scmp.eq.s32.totalorder %s22, 0
      %p201 = por %p199, %p200
      %p202 = scmp.le.s32.totalorder 1, %s16
      %p203 = scmp.lt.s32.totalorder %s16, 3
      %p204 = pnand %p202, %p203
      %p205 = pneg %p204
      // Predicated region
      $region9: #{tpu_custom_call.1} parent=5 // pred_check
        _
      $region10: #{tpu_custom_call.1} parent=5 // pred_check_branch
        %207 = sbr.rel (%p204) target = $region12
      $region11: #{tpu_custom_call.1} parent=5 // pred_region
        %s208 = ssub.s32 %s16, 1
        // Predicated region
        $region13: #{tpu_custom_call.1} parent=11 // pred_check
          %p209 = pneg %p63
        $region14: #{tpu_custom_call.1} parent=11 // pred_check_branch
          %211 = sbr.rel (%p209) target = $region16
        $region15: #{tpu_custom_call.1} parent=11 // pred_region
          _
        $region16: #{tpu_custom_call.1} parent=11 // pred_fallthru
          _
        // Predicated region
        $region17: #{tpu_custom_call.1} parent=11 // pred_check
          %p212 = pneg %p84
        $region18: #{tpu_custom_call.1} parent=11 // pred_check_branch
          %214 = sbr.rel (%p212) target = $region20
        $region19: #{tpu_custom_call.1} parent=11 // pred_region
          _
        $region20: #{tpu_custom_call.1} parent=11 // pred_fallthru
          _
        // Predicated region
        $region21: #{tpu_custom_call.1} parent=11 // pred_check
          %p215 = pneg %p105
        $region22: #{tpu_custom_call.1} parent=11 // pred_check_branch
          %217 = sbr.rel (%p215) target = $region24
        $region23: #{tpu_custom_call.1} parent=11 // pred_region
          _
        $region24: #{tpu_custom_call.1} parent=11 // pred_fallthru
          _
        // Predicated region
        $region25: #{tpu_custom_call.1} parent=11 // pred_check
          %p218 = pneg %p126
        $region26: #{tpu_custom_call.1} parent=11 // pred_check_branch
          %220 = sbr.rel (%p218) target = $region28
        $region27: #{tpu_custom_call.1} parent=11 // pred_region
          _
        $region28: #{tpu_custom_call.1} parent=11 // pred_fallthru
          _
        // Predicated region
        $region29: #{tpu_custom_call.1} parent=11 // pred_check
          %p221 = pneg %p147
        $region30: #{tpu_custom_call.1} parent=11 // pred_check_branch
          %223 = sbr.rel (%p221) target = $region32
        $region31: #{tpu_custom_call.1} parent=11 // pred_region
          _
        $region32: #{tpu_custom_call.1} parent=11 // pred_fallthru
          _
        // Predicated region
        $region33: #{tpu_custom_call.1} parent=11 // pred_check
          %p224 = pneg %p168
        $region34: #{tpu_custom_call.1} parent=11 // pred_check_branch
          %226 = sbr.rel (%p224) target = $region36
        $region35: #{tpu_custom_call.1} parent=11 // pred_region
          _
        $region36: #{tpu_custom_call.1} parent=11 // pred_fallthru
          _
      $region12: #{tpu_custom_call.1} parent=5 // pred_fallthru
        _
      %p227 = scmp.lt.s32.totalorder %s16, 2
      // Predicated region
      $region37: #{tpu_custom_call.1} parent=5 // pred_check
        %p228 = pneg %p227
      $region38: #{tpu_custom_call.1} parent=5 // pred_check_branch
        %230 = sbr.rel (%p228) target = $region40
      $region39: #{tpu_custom_call.1} parent=5 // pred_region
        // Predicated region
        $region41: #{tpu_custom_call.1} parent=39 // pred_check
          %p231 = pneg %p36
        $region42: #{tpu_custom_call.1} parent=39 // pred_check_branch
          %233 = sbr.rel (%p231) target = $region44
        $region43: #{tpu_custom_call.1} parent=39 // pred_region
          %s234 = smul.u32 32, %s16
          %p235 = scmp.lt.s32.totalorder %s234, 63
          %s236 = scalar_select %p235, %s234, 63
          %s237 = smul.addr %s236, 8
          %s238 = scalar_lea.vmem %s0, %s237
          %s239 = smul.u32 32, %s16
        $region44: #{tpu_custom_call.1} parent=39 // pred_fallthru
          _
      $region40: #{tpu_custom_call.1} parent=5 // pred_fallthru
        _
      %p240 = scmp.le.s32.totalorder 1, %s16
      %p241 = scmp.lt.s32.totalorder %s16, 3
      %p242 = pnand %p240, %p241
      %p243 = pneg %p242
      // Predicated region
      $region45: #{tpu_custom_call.1} parent=5 // pred_check
        _
      $region46: #{tpu_custom_call.1} parent=5 // pred_check_branch
        %245 = sbr.rel (%p242) target = $region48
      $region47: #{tpu_custom_call.1} parent=5 // pred_region
        %s246 = ssub.s32 %s16, 1
        %s247 = smul.u32 32, %s21
        %p248 = scmp.lt.s32.totalorder %s247, 63
        %s249 = scalar_select %p248, %s247, 63
        %s250 = smul.addr %s249, 8
        %s251 = scalar_lea.vmem %s0, %s250
        %p252 = pneg %p42
        %p253 = pneg %p39
        %p254 = pneg %p63
        %p255 = pneg %p60
        %p256 = pneg %p84
        %p257 = pneg %p81
        %p258 = pneg %p105
        %p259 = pneg %p102
        %p260 = pneg %p126
        %p261 = pneg %p123
        %p262 = pneg %p147
        %p263 = pneg %p144
        %p264 = pneg %p168
        %p265 = pneg %p165
        %p266 = pneg %p194
        %p267 = pneg %p191
        %s268 = sand.u32 %s181, 1
        %s269 = scalar_lea.sflag [#allocation6], %s268
        %s270 = sand.u32 %s181, 1
        %s271 = smul.addr %s270, 256
        %s272 = scalar_lea.vmem [#allocation5], %s271
        %s273 = smul.u32 32, %s21
        %p274 = scmp.lt.s32.totalorder %s273, 63
        %s275 = scalar_select %p274, %s273, 63
        %s276 = smul.addr %s275, 8
        %s277 = scalar_lea.vmem %s0, %s276
        %s278 = smul.u32 32, %s21
        %s279 = smul.u32 32, %s21
        %v281 = vld [vmem:[%s5] sm:$0x3f]
        %v282 = vld [vmem:[%s277] sm:$0xff]
        %v283 = vld [vmem:[%s277 + $0x8] sm:$0xff]
        %v284 = vld [vmem:[%s277 + $0x10] sm:$0xff]
        %v285 = vld [vmem:[%s277 + $0x18] sm:$0xff]
        %v286 = vld [vmem:[%s277 + $0x20] sm:$0xff]
        %v287 = vld [vmem:[%s277 + $0x28] sm:$0xff]
        %v288 = vld [vmem:[%s277 + $0x30] sm:$0xff]
        %v289 = vld [vmem:[%s277 + $0x38] sm:$0xff]
        %v290 = vld [vmem:[%s277 + $0x40] sm:$0xff]
        %v291 = vld [vmem:[%s277 + $0x48] sm:$0xff]
        %v292 = vld [vmem:[%s277 + $0x50] sm:$0xff]
        %v293 = vld [vmem:[%s277 + $0x58] sm:$0xff]
        %v294 = vld [vmem:[%s277 + $0x60] sm:$0xff]
        %v295 = vld [vmem:[%s277 + $0x68] sm:$0xff]
        %v296 = vld [vmem:[%s277 + $0x70] sm:$0xff]
        %v297 = vld [vmem:[%s277 + $0x78] sm:$0xff]
        %v298 = vld [vmem:[%s277 + $0x80] sm:$0xff]
        %v299 = vld [vmem:[%s277 + $0x88] sm:$0xff]
        %v300 = vld [vmem:[%s277 + $0x90] sm:$0xff]
        %v301 = vld [vmem:[%s277 + $0x98] sm:$0xff]
        %v302 = vld [vmem:[%s277 + $0xa0] sm:$0xff]
        %v303 = vld [vmem:[%s277 + $0xa8] sm:$0xff]
        %v304 = vld [vmem:[%s277 + $0xb0] sm:$0xff]
        %v305 = vld [vmem:[%s277 + $0xb8] sm:$0xff]
        %v306 = vld [vmem:[%s277 + $0xc0] sm:$0xff]
        %v307 = vld [vmem:[%s277 + $0xc8] sm:$0xff]
        %v308 = vld [vmem:[%s277 + $0xd0] sm:$0xff]
        %v309 = vld [vmem:[%s277 + $0xd8] sm:$0xff]
        %v310 = vld [vmem:[%s277 + $0xe0] sm:$0xff]
        %v311 = vld [vmem:[%s277 + $0xe8] sm:$0xff]
        %v312 = vld [vmem:[%s277 + $0xf0] sm:$0xff]
        %v313 = vld [vmem:[%s277 + $0xf8] sm:$0xff]
        %v314 = vpack.c.bf16 %v283, %v282
        %v315 = vpack.c.bf16 %v285, %v284
        %v316 = vpack.c.bf16 %v287, %v286
        %v317 = vpack.c.bf16 %v289, %v288
        %v318 = vpack.c.bf16 %v291, %v290
        %v319 = vpack.c.bf16 %v293, %v292
        %v320 = vpack.c.bf16 %v295, %v294
        %v321 = vpack.c.bf16 %v297, %v296
        %v322 = vpack.c.bf16 %v299, %v298
        %v323 = vpack.c.bf16 %v301, %v300
        %v324 = vpack.c.bf16 %v303, %v302
        %v325 = vpack.c.bf16 %v305, %v304
        %v326 = vpack.c.bf16 %v307, %v306
        %v327 = vpack.c.bf16 %v309, %v308
        %v328 = vpack.c.bf16 %v311, %v310
        %v329 = vpack.c.bf16 %v313, %v312
        %v330 = vld [vmem:[%s1] sm:$0xf]
        %v331 = vld [vmem:[%s1 + $0x4] sm:$0xf]
        %v332 = vlaneseq
        %v333 = vshrl.u32 %v332, 7
        %v334 = vsub.s32 0, %v333
        %v335 = vrot.slane %v281, %v334
        %v338 = vunpack.c.l.b16 %v330
        %v339 = vunpack.c.l.b16 %v331
        %v340 = vpack.c.b16 %v339, %v338
        %vm342 = vcmask 130048
        %v344 = vsel %vm342, %v314, 0
        %v347 = vsel %vm342, %v315, 0
        %v350 = vsel %vm342, %v316, 0
        %v353 = vsel %vm342, %v317, 0
        %v356 = vsel %vm342, %v318, 0
        %v359 = vsel %vm342, %v319, 0
        %v362 = vsel %vm342, %v320, 0
        %v365 = vsel %vm342, %v321, 0
        %v368 = vsel %vm342, %v322, 0
        %v371 = vsel %vm342, %v323, 0
        %v374 = vsel %vm342, %v324, 0
        %v377 = vsel %vm342, %v325, 0
        %v380 = vsel %vm342, %v326, 0
        %v383 = vsel %vm342, %v327, 0
        %v386 = vsel %vm342, %v328, 0
        %v389 = vsel %vm342, %v329, 0
        %391 = vmatprep.subr.bf16.mxu0 0
        %392 = vmatpush1.bf16.msra.mxu0 %v340
        %393 = vmatprep.subr.bf16.mxu0 0
        %394 = vmatpush1.bf16.msra.mxu0 0
        %395 = vmatprep.subr.bf16.mxu0 0
        %396 = vmatpush1.bf16.msra.mxu0 0
        %397 = vmatprep.subr.bf16.mxu0 0
        %398 = vmatpush1.bf16.msra.mxu0 0
        %399 = vmatprep.subr.bf16.mxu0 0
        %400 = vmatpush1.bf16.msra.mxu0 0
        %401 = vmatprep.subr.bf16.mxu0 0
        %402 = vmatpush1.bf16.msra.mxu0 0
        %403 = vmatprep.subr.bf16.mxu0 0
        %404 = vmatpush1.bf16.msra.mxu0 0
        %405 = vmatprep.subr.bf16.mxu0 0
        %406 = vmatpush1.bf16.msra.mxu0 0
        %407 = vmatprep.subr.bf16.mxu0 0
        %408 = vmatpush1.bf16.msra.mxu0 0
        %409 = vmatprep.subr.bf16.mxu0 0
        %410 = vmatpush1.bf16.msra.mxu0 0
        %411 = vmatprep.subr.bf16.mxu0 0
        %412 = vmatpush1.bf16.msra.mxu0 0
        %413 = vmatprep.subr.bf16.mxu0 0
        %414 = vmatpush1.bf16.msra.mxu0 0
        %415 = vmatprep.subr.bf16.mxu0 0
        %416 = vmatpush1.bf16.msra.mxu0 0
        %417 = vmatprep.subr.bf16.mxu0 0
        %418 = vmatpush1.bf16.msra.mxu0 0
        %419 = vmatprep.subr.bf16.mxu0 0
        %420 = vmatpush1.bf16.msra.mxu0 0
        %421 = vmatprep.subr.bf16.mxu0 0
        %422 = vmatpush1.bf16.msra.mxu0 0
        %423 = vmatprep.mubr.bf16.mxu0 0
        %424 = vmatmul.mubr.bf16.gmra.mrb[0].mxu0 %v344
        %v425 = vpop.f32.mrb[0].mxu0
        %v426 = vadd.f32 %v335, %v425
        %v427 = vpop.f32.mrb[0].mxu0
        %v428 = vpop.f32.mrb[0].mxu0
        %v429 = vadd.f32 %v335, %v428
        %v430 = vpop.f32.mrb[0].mxu0
        %431 = vmatprep.mubr.bf16.mxu0 0
        %432 = vmatmul.mubr.bf16.gmra.mrb[0].mxu0 %v347
        %v433 = vpop.f32.mrb[0].mxu0
        %v434 = vadd.f32 %v335, %v433
        %v435 = vpop.f32.mrb[0].mxu0
        %v436 = vpop.f32.mrb[0].mxu0
        %v437 = vadd.f32 %v335, %v436
        %v438 = vpop.f32.mrb[0].mxu0
        %439 = vmatprep.mubr.bf16.mxu0 0
        %440 = vmatmul.mubr.bf16.gmra.mrb[0].mxu0 %v350
        %v441 = vpop.f32.mrb[0].mxu0
        %v442 = vadd.f32 %v335, %v441
        %v443 = vpop.f32.mrb[0].mxu0
        %v444 = vpop.f32.mrb[0].mxu0
        %v445 = vadd.f32 %v335, %v444
        %v446 = vpop.f32.mrb[0].mxu0
        %447 = vmatprep.mubr.bf16.mxu0 0
        %448 = vmatmul.mubr.bf16.gmra.mrb[0].mxu0 %v353
        %v449 = vpop.f32.mrb[0].mxu0
        %v450 = vadd.f32 %v335, %v449
        %v451 = vpop.f32.mrb[0].mxu0
        %v452 = vpop.f32.mrb[0].mxu0
        %v453 = vadd.f32 %v335, %v452
        %v454 = vpop.f32.mrb[0].mxu0
        %455 = vmatprep.mubr.bf16.mxu0 0
        %456 = vmatmul.mubr.bf16.gmra.mrb[0].mxu0 %v356
        %v457 = vpop.f32.mrb[0].mxu0
        %v458 = vadd.f32 %v335, %v457
        %v459 = vpop.f32.mrb[0].mxu0
        %v460 = vpop.f32.mrb[0].mxu0
        %v461 = vadd.f32 %v335, %v460
        %v462 = vpop.f32.mrb[0].mxu0
        %463 = vmatprep.mubr.bf16.mxu0 0
        %464 = vmatmul.mubr.bf16.gmra.mrb[0].mxu0 %v359
        %v465 = vpop.f32.mrb[0].mxu0
        %v466 = vadd.f32 %v335, %v465
        %v467 = vpop.f32.mrb[0].mxu0
        %v468 = vpop.f32.mrb[0].mxu0
        %v469 = vadd.f32 %v335, %v468
        %v470 = vpop.f32.mrb[0].mxu0
        %471 = vmatprep.mubr.bf16.mxu0 0
        %472 = vmatmul.mubr.bf16.gmra.mrb[0].mxu0 %v362
        %v473 = vpop.f32.mrb[0].mxu0
        %v474 = vadd.f32 %v335, %v473
        %v475 = vpop.f32.mrb[0].mxu0
        %v476 = vpop.f32.mrb[0].mxu0
        %v477 = vadd.f32 %v335, %v476
        %v478 = vpop.f32.mrb[0].mxu0
        %479 = vmatprep.mubr.bf16.mxu0 0
        %480 = vmatmul.mubr.bf16.gmra.mrb[0].mxu0 %v365
        %v481 = vpop.f32.mrb[0].mxu0
        %v482 = vadd.f32 %v335, %v481
        %v483 = vpop.f32.mrb[0].mxu0
        %v484 = vpop.f32.mrb[0].mxu0
        %v485 = vadd.f32 %v335, %v484
        %v486 = vpop.f32.mrb[0].mxu0
        %487 = vmatprep.mubr.bf16.mxu0 0
        %488 = vmatmul.mubr.bf16.gmra.mrb[0].mxu0 %v368
        %v489 = vpop.f32.mrb[0].mxu0
        %v490 = vadd.f32 %v335, %v489
        %v491 = vpop.f32.mrb[0].mxu0
        %v492 = vpop.f32.mrb[0].mxu0
        %v493 = vadd.f32 %v335, %v492
        %v494 = vpop.f32.mrb[0].mxu0
        %495 = vmatprep.mubr.bf16.mxu0 0
        %496 = vmatmul.mubr.bf16.gmra.mrb[0].mxu0 %v371
        %v497 = vpop.f32.mrb[0].mxu0
        %v498 = vadd.f32 %v335, %v497
        %v499 = vpop.f32.mrb[0].mxu0
        %v500 = vpop.f32.mrb[0].mxu0
        %v501 = vadd.f32 %v335, %v500
        %v502 = vpop.f32.mrb[0].mxu0
        %503 = vmatprep.mubr.bf16.mxu0 0
        %504 = vmatmul.mubr.bf16.gmra.mrb[0].mxu0 %v374
        %v505 = vpop.f32.mrb[0].mxu0
        %v506 = vadd.f32 %v335, %v505
        %v507 = vpop.f32.mrb[0].mxu0
        %v508 = vpop.f32.mrb[0].mxu0
        %v509 = vadd.f32 %v335, %v508
        %v510 = vpop.f32.mrb[0].mxu0
        %511 = vmatprep.mubr.bf16.mxu0 0
        %512 = vmatmul.mubr.bf16.gmra.mrb[0].mxu0 %v377
        %v513 = vpop.f32.mrb[0].mxu0
        %v514 = vadd.f32 %v335, %v513
        %v515 = vpop.f32.mrb[0].mxu0
        %v516 = vpop.f32.mrb[0].mxu0
        %v517 = vadd.f32 %v335, %v516
        %v518 = vpop.f32.mrb[0].mxu0
        %519 = vmatprep.mubr.bf16.mxu0 0
        %520 = vmatmul.mubr.bf16.gmra.mrb[0].mxu0 %v380
        %v521 = vpop.f32.mrb[0].mxu0
        %v522 = vadd.f32 %v335, %v521
        %v523 = vpop.f32.mrb[0].mxu0
        %v524 = vpop.f32.mrb[0].mxu0
        %v525 = vadd.f32 %v335, %v524
        %v526 = vpop.f32.mrb[0].mxu0
        %527 = vmatprep.mubr.bf16.mxu0 0
        %528 = vmatmul.mubr.bf16.gmra.mrb[0].mxu0 %v383
        %v529 = vpop.f32.mrb[0].mxu0
        %v530 = vadd.f32 %v335, %v529
        %v531 = vpop.f32.mrb[0].mxu0
        %v532 = vpop.f32.mrb[0].mxu0
        %v533 = vadd.f32 %v335, %v532
        %v534 = vpop.f32.mrb[0].mxu0
        %535 = vmatprep.mubr.bf16.mxu0 0
        %536 = vmatmul.mubr.bf16.gmra.mrb[0].mxu0 %v386
        %v537 = vpop.f32.mrb[0].mxu0
        %v538 = vadd.f32 %v335, %v537
        %v539 = vpop.f32.mrb[0].mxu0
        %v540 = vpop.f32.mrb[0].mxu0
        %v541 = vadd.f32 %v335, %v540
        %v542 = vpop.f32.mrb[0].mxu0
        %543 = vmatprep.mubr.bf16.mxu0 0
        %544 = vmatmul.mubr.bf16.gmra.mrb[0].mxu0 %v389
        %v545 = vpop.f32.mrb[0].mxu0
        %v546 = vadd.f32 %v335, %v545
        %v547 = vpop.f32.mrb[0].mxu0
        %v548 = vpop.f32.mrb[0].mxu0
        %v549 = vadd.f32 %v335, %v548
        %v550 = vpop.f32.mrb[0].mxu0
        %551 = vdwg.mxu0
        %vm552 = vcmp.ge.f32.partialorder %v426, 0.0
        %vm553 = vcmp.ge.f32.partialorder %v429, 0.0
        %vm554 = vcmp.ge.f32.partialorder %v434, 0.0
        %vm555 = vcmp.ge.f32.partialorder %v437, 0.0
        %vm556 = vcmp.ge.f32.partialorder %v442, 0.0
        %vm557 = vcmp.ge.f32.partialorder %v445, 0.0
        %vm558 = vcmp.ge.f32.partialorder %v450, 0.0
        %vm559 = vcmp.ge.f32.partialorder %v453, 0.0
        %vm560 = vcmp.ge.f32.partialorder %v458, 0.0
        %vm561 = vcmp.ge.f32.partialorder %v461, 0.0
        %vm562 = vcmp.ge.f32.partialorder %v466, 0.0
        %vm563 = vcmp.ge.f32.partialorder %v469, 0.0
        %vm564 = vcmp.ge.f32.partialorder %v474, 0.0
        %vm565 = vcmp.ge.f32.partialorder %v477, 0.0
        %vm566 = vcmp.ge.f32.partialorder %v482, 0.0
        %vm567 = vcmp.ge.f32.partialorder %v485, 0.0
        %vm568 = vcmp.ge.f32.partialorder %v490, 0.0
        %vm569 = vcmp.ge.f32.partialorder %v493, 0.0
        %vm570 = vcmp.ge.f32.partialorder %v498, 0.0
        %vm571 = vcmp.ge.f32.partialorder %v501, 0.0
        %vm572 = vcmp.ge.f32.partialorder %v506, 0.0
        %vm573 = vcmp.ge.f32.partialorder %v509, 0.0
        %vm574 = vcmp.ge.f32.partialorder %v514, 0.0
        %vm575 = vcmp.ge.f32.partialorder %v517, 0.0
        %vm576 = vcmp.ge.f32.partialorder %v522, 0.0
        %vm577 = vcmp.ge.f32.partialorder %v525, 0.0
        %vm578 = vcmp.ge.f32.partialorder %v530, 0.0
        %vm579 = vcmp.ge.f32.partialorder %v533, 0.0
        %vm580 = vcmp.ge.f32.partialorder %v538, 0.0
        %vm581 = vcmp.ge.f32.partialorder %v541, 0.0
        %vm582 = vcmp.ge.f32.partialorder %v546, 0.0
        %vm583 = vcmp.ge.f32.partialorder %v549, 0.0
        %v584 = vmul.f32 %v426, 0.01
        %v585 = vmul.f32 %v429, 0.01
        %v586 = vmul.f32 %v434, 0.01
        %v587 = vmul.f32 %v437, 0.01
        %v588 = vmul.f32 %v442, 0.01
        %v589 = vmul.f32 %v445, 0.01
        %v590 = vmul.f32 %v450, 0.01
        %v591 = vmul.f32 %v453, 0.01
        %v592 = vmul.f32 %v458, 0.01
        %v593 = vmul.f32 %v461, 0.01
        %v594 = vmul.f32 %v466, 0.01
        %v595 = vmul.f32 %v469, 0.01
        %v596 = vmul.f32 %v474, 0.01
        %v597 = vmul.f32 %v477, 0.01
        %v598 = vmul.f32 %v482, 0.01
        %v599 = vmul.f32 %v485, 0.01
        %v600 = vmul.f32 %v490, 0.01
        %v601 = vmul.f32 %v493, 0.01
        %v602 = vmul.f32 %v498, 0.01
        %v603 = vmul.f32 %v501, 0.01
        %v604 = vmul.f32 %v506, 0.01
        %v605 = vmul.f32 %v509, 0.01
        %v606 = vmul.f32 %v514, 0.01
        %v607 = vmul.f32 %v517, 0.01
        %v608 = vmul.f32 %v522, 0.01
        %v609 = vmul.f32 %v525, 0.01
        %v610 = vmul.f32 %v530, 0.01
        %v611 = vmul.f32 %v533, 0.01
        %v612 = vmul.f32 %v538, 0.01
        %v613 = vmul.f32 %v541, 0.01
        %v614 = vmul.f32 %v546, 0.01
        %v615 = vmul.f32 %v549, 0.01
        %v616 = vsel %vm552, %v426, %v584
        %v617 = vsel %vm553, %v429, %v585
        %v618 = vsel %vm554, %v434, %v586
        %v619 = vsel %vm555, %v437, %v587
        %v620 = vsel %vm556, %v442, %v588
        %v621 = vsel %vm557, %v445, %v589
        %v622 = vsel %vm558, %v450, %v590
        %v623 = vsel %vm559, %v453, %v591
        %v624 = vsel %vm560, %v458, %v592
        %v625 = vsel %vm561, %v461, %v593
        %v626 = vsel %vm562, %v466, %v594
        %v627 = vsel %vm563, %v469, %v595
        %v628 = vsel %vm564, %v474, %v596
        %v629 = vsel %vm565, %v477, %v597
        %v630 = vsel %vm566, %v482, %v598
        %v631 = vsel %vm567, %v485, %v599
        %v632 = vsel %vm568, %v490, %v600
        %v633 = vsel %vm569, %v493, %v601
        %v634 = vsel %vm570, %v498, %v602
        %v635 = vsel %vm571, %v501, %v603
        %v636 = vsel %vm572, %v506, %v604
        %v637 = vsel %vm573, %v509, %v605
        %v638 = vsel %vm574, %v514, %v606
        %v639 = vsel %vm575, %v517, %v607
        %v640 = vsel %vm576, %v522, %v608
        %v641 = vsel %vm577, %v525, %v609
        %v642 = vsel %vm578, %v530, %v610
        %v643 = vsel %vm579, %v533, %v611
        %v644 = vsel %vm580, %v538, %v612
        %v645 = vsel %vm581, %v541, %v613
        %v646 = vsel %vm582, %v546, %v614
        %v647 = vsel %vm583, %v549, %v615
        %648 = vadd.xlane.f32.xlu0 %v616
        %v649 = vpop.xlane.xlu0 %648
        %650 = vadd.xlane.f32.xlu0 %v617
        %v651 = vpop.xlane.xlu0 %650
        %652 = vadd.xlane.f32.xlu0 %v618
        %v653 = vpop.xlane.xlu0 %652
        %654 = vadd.xlane.f32.xlu0 %v619
        %v655 = vpop.xlane.xlu0 %654
        %656 = vadd.xlane.f32.xlu0 %v620
        %v657 = vpop.xlane.xlu0 %656
        %658 = vadd.xlane.f32.xlu0 %v621
        %v659 = vpop.xlane.xlu0 %658
        %660 = vadd.xlane.f32.xlu0 %v622
        %v661 = vpop.xlane.xlu0 %660
        %662 = vadd.xlane.f32.xlu0 %v623
        %v663 = vpop.xlane.xlu0 %662
        %664 = vadd.xlane.f32.xlu0 %v624
        %v665 = vpop.xlane.xlu0 %664
        %666 = vadd.xlane.f32.xlu0 %v625
        %v667 = vpop.xlane.xlu0 %666
        %668 = vadd.xlane.f32.xlu0 %v626
        %v669 = vpop.xlane.xlu0 %668
        %670 = vadd.xlane.f32.xlu0 %v627
        %v671 = vpop.xlane.xlu0 %670
        %672 = vadd.xlane.f32.xlu0 %v628
        %v673 = vpop.xlane.xlu0 %672
        %674 = vadd.xlane.f32.xlu0 %v629
        %v675 = vpop.xlane.xlu0 %674
        %676 = vadd.xlane.f32.xlu0 %v630
        %v677 = vpop.xlane.xlu0 %676
        %678 = vadd.xlane.f32.xlu0 %v631
        %v679 = vpop.xlane.xlu0 %678
        %680 = vadd.xlane.f32.xlu0 %v632
        %v681 = vpop.xlane.xlu0 %680
        %682 = vadd.xlane.f32.xlu0 %v633
        %v683 = vpop.xlane.xlu0 %682
        %684 = vadd.xlane.f32.xlu0 %v634
        %v685 = vpop.xlane.xlu0 %684
        %686 = vadd.xlane.f32.xlu0 %v635
        %v687 = vpop.xlane.xlu0 %686
        %688 = vadd.xlane.f32.xlu0 %v636
        %v689 = vpop.xlane.xlu0 %688
        %690 = vadd.xlane.f32.xlu0 %v637
        %v691 = vpop.xlane.xlu0 %690
        %692 = vadd.xlane.f32.xlu0 %v638
        %v693 = vpop.xlane.xlu0 %692
        %694 = vadd.xlane.f32.xlu0 %v639
        %v695 = vpop.xlane.xlu0 %694
        %696 = vadd.xlane.f32.xlu0 %v640
        %v697 = vpop.xlane.xlu0 %696
        %698 = vadd.xlane.f32.xlu0 %v641
        %v699 = vpop.xlane.xlu0 %698
        %700 = vadd.xlane.f32.xlu0 %v642
        %v701 = vpop.xlane.xlu0 %700
        %702 = vadd.xlane.f32.xlu0 %v643
        %v703 = vpop.xlane.xlu0 %702
        %704 = vadd.xlane.f32.xlu0 %v644
        %v705 = vpop.xlane.xlu0 %704
        %706 = vadd.xlane.f32.xlu0 %v645
        %v707 = vpop.xlane.xlu0 %706
        %708 = vadd.xlane.f32.xlu0 %v646
        %v709 = vpop.xlane.xlu0 %708
        %710 = vadd.xlane.f32.xlu0 %v647
        %v711 = vpop.xlane.xlu0 %710
        %v712 = vrcp.pop 128.0
        %v713 = vmul.f32 %v649, %v712
        %v714 = vmul.f32 %v651, %v712
        %v715 = vmul.f32 %v653, %v712
        %v716 = vmul.f32 %v655, %v712
        %v717 = vmul.f32 %v657, %v712
        %v718 = vmul.f32 %v659, %v712
        %v719 = vmul.f32 %v661, %v712
        %v720 = vmul.f32 %v663, %v712
        %v721 = vmul.f32 %v665, %v712
        %v722 = vmul.f32 %v667, %v712
        %v723 = vmul.f32 %v669, %v712
        %v724 = vmul.f32 %v671, %v712
        %v725 = vmul.f32 %v673, %v712
        %v726 = vmul.f32 %v675, %v712
        %v727 = vmul.f32 %v677, %v712
        %v728 = vmul.f32 %v679, %v712
        %v729 = vmul.f32 %v681, %v712
        %v730 = vmul.f32 %v683, %v712
        %v731 = vmul.f32 %v685, %v712
        %v732 = vmul.f32 %v687, %v712
        %v733 = vmul.f32 %v689, %v712
        %v734 = vmul.f32 %v691, %v712
        %v735 = vmul.f32 %v693, %v712
        %v736 = vmul.f32 %v695, %v712
        %v737 = vmul.f32 %v697, %v712
        %v738 = vmul.f32 %v699, %v712
        %v739 = vmul.f32 %v701, %v712
        %v740 = vmul.f32 %v703, %v712
        %v741 = vmul.f32 %v705, %v712
        %v742 = vmul.f32 %v707, %v712
        %v743 = vmul.f32 %v709, %v712
        %v744 = vmul.f32 %v711, %v712
        %v745 = vmul.f32 %v616, %v616
        %v746 = vmul.f32 %v617, %v617
        %v747 = vmul.f32 %v618, %v618
        %v748 = vmul.f32 %v619, %v619
        %v749 = vmul.f32 %v620, %v620
        %v750 = vmul.f32 %v621, %v621
        %v751 = vmul.f32 %v622, %v622
        %v752 = vmul.f32 %v623, %v623
        %v753 = vmul.f32 %v624, %v624
        %v754 = vmul.f32 %v625, %v625
        %v755 = vmul.f32 %v626, %v626
        %v756 = vmul.f32 %v627, %v627
        %v757 = vmul.f32 %v628, %v628
        %v758 = vmul.f32 %v629, %v629
        %v759 = vmul.f32 %v630, %v630
        %v760 = vmul.f32 %v631, %v631
        %v761 = vmul.f32 %v632, %v632
        %v762 = vmul.f32 %v633, %v633
        %v763 = vmul.f32 %v634, %v634
        %v764 = vmul.f32 %v635, %v635
        %v765 = vmul.f32 %v636, %v636
        %v766 = vmul.f32 %v637, %v637
        %v767 = vmul.f32 %v638, %v638
        %v768 = vmul.f32 %v639, %v639
        %v769 = vmul.f32 %v640, %v640
        %v770 = vmul.f32 %v641, %v641
        %v771 = vmul.f32 %v642, %v642
        %v772 = vmul.f32 %v643, %v643
        %v773 = vmul.f32 %v644, %v644
        %v774 = vmul.f32 %v645, %v645
        %v775 = vmul.f32 %v646, %v646
        %v776 = vmul.f32 %v647, %v647
        %777 = vadd.xlane.f32.xlu0 %v745
        %v778 = vpop.xlane.xlu0 %777
        %779 = vadd.xlane.f32.xlu0 %v746
        %v780 = vpop.xlane.xlu0 %779
        %781 = vadd.xlane.f32.xlu0 %v747
        %v782 = vpop.xlane.xlu0 %781
        %783 = vadd.xlane.f32.xlu0 %v748
        %v784 = vpop.xlane.xlu0 %783
        %785 = vadd.xlane.f32.xlu0 %v749
        %v786 = vpop.xlane.xlu0 %785
        %787 = vadd.xlane.f32.xlu0 %v750
        %v788 = vpop.xlane.xlu0 %787
        %789 = vadd.xlane.f32.xlu0 %v751
        %v790 = vpop.xlane.xlu0 %789
        %791 = vadd.xlane.f32.xlu0 %v752
        %v792 = vpop.xlane.xlu0 %791
        %793 = vadd.xlane.f32.xlu0 %v753
        %v794 = vpop.xlane.xlu0 %793
        %795 = vadd.xlane.f32.xlu0 %v754
        %v796 = vpop.xlane.xlu0 %795
        %797 = vadd.xlane.f32.xlu0 %v755
        %v798 = vpop.xlane.xlu0 %797
        %799 = vadd.xlane.f32.xlu0 %v756
        %v800 = vpop.xlane.xlu0 %799
        %801 = vadd.xlane.f32.xlu0 %v757
        %v802 = vpop.xlane.xlu0 %801
        %803 = vadd.xlane.f32.xlu0 %v758
        %v804 = vpop.xlane.xlu0 %803
        %805 = vadd.xlane.f32.xlu0 %v759
        %v806 = vpop.xlane.xlu0 %805
        %807 = vadd.xlane.f32.xlu0 %v760
        %v808 = vpop.xlane.xlu0 %807
        %809 = vadd.xlane.f32.xlu0 %v761
        %v810 = vpop.xlane.xlu0 %809
        %811 = vadd.xlane.f32.xlu0 %v762
        %v812 = vpop.xlane.xlu0 %811
        %813 = vadd.xlane.f32.xlu0 %v763
        %v814 = vpop.xlane.xlu0 %813
        %815 = vadd.xlane.f32.xlu0 %v764
        %v816 = vpop.xlane.xlu0 %815
        %817 = vadd.xlane.f32.xlu0 %v765
        %v818 = vpop.xlane.xlu0 %817
        %819 = vadd.xlane.f32.xlu0 %v766
        %v820 = vpop.xlane.xlu0 %819
        %821 = vadd.xlane.f32.xlu0 %v767
        %v822 = vpop.xlane.xlu0 %821
        %823 = vadd.xlane.f32.xlu0 %v768
        %v824 = vpop.xlane.xlu0 %823
        %825 = vadd.xlane.f32.xlu0 %v769
        %v826 = vpop.xlane.xlu0 %825
        %827 = vadd.xlane.f32.xlu0 %v770
        %v828 = vpop.xlane.xlu0 %827
        %829 = vadd.xlane.f32.xlu0 %v771
        %v830 = vpop.xlane.xlu0 %829
        %831 = vadd.xlane.f32.xlu0 %v772
        %v832 = vpop.xlane.xlu0 %831
        %833 = vadd.xlane.f32.xlu0 %v773
        %v834 = vpop.xlane.xlu0 %833
        %835 = vadd.xlane.f32.xlu0 %v774
        %v836 = vpop.xlane.xlu0 %835
        %837 = vadd.xlane.f32.xlu0 %v775
        %v838 = vpop.xlane.xlu0 %837
        %839 = vadd.xlane.f32.xlu0 %v776
        %v840 = vpop.xlane.xlu0 %839
        %v841 = vmul.f32 %v778, %v712
        %v842 = vmul.f32 %v780, %v712
        %v843 = vmul.f32 %v782, %v712
        %v844 = vmul.f32 %v784, %v712
        %v845 = vmul.f32 %v786, %v712
        %v846 = vmul.f32 %v788, %v712
        %v847 = vmul.f32 %v790, %v712
        %v848 = vmul.f32 %v792, %v712
        %v849 = vmul.f32 %v794, %v712
        %v850 = vmul.f32 %v796, %v712
        %v851 = vmul.f32 %v798, %v712
        %v852 = vmul.f32 %v800, %v712
        %v853 = vmul.f32 %v802, %v712
        %v854 = vmul.f32 %v804, %v712
        %v855 = vmul.f32 %v806, %v712
        %v856 = vmul.f32 %v808, %v712
        %v857 = vmul.f32 %v810, %v712
        %v858 = vmul.f32 %v812, %v712
        %v859 = vmul.f32 %v814, %v712
        %v860 = vmul.f32 %v816, %v712
        %v861 = vmul.f32 %v818, %v712
        %v862 = vmul.f32 %v820, %v712
        %v863 = vmul.f32 %v822, %v712
        %v864 = vmul.f32 %v824, %v712
        %v865 = vmul.f32 %v826, %v712
        %v866 = vmul.f32 %v828, %v712
        %v867 = vmul.f32 %v830, %v712
        %v868 = vmul.f32 %v832, %v712
        %v869 = vmul.f32 %v834, %v712
        %v870 = vmul.f32 %v836, %v712
        %v871 = vmul.f32 %v838, %v712
        %v872 = vmul.f32 %v840, %v712
        %v873 = vmul.f32 %v713, %v713
        %v874 = vmul.f32 %v714, %v714
        %v875 = vmul.f32 %v715, %v715
        %v876 = vmul.f32 %v716, %v716
        %v877 = vmul.f32 %v717, %v717
        %v878 = vmul.f32 %v718, %v718
        %v879 = vmul.f32 %v719, %v719
        %v880 = vmul.f32 %v720, %v720
        %v881 = vmul.f32 %v721, %v721
        %v882 = vmul.f32 %v722, %v722
        %v883 = vmul.f32 %v723, %v723
        %v884 = vmul.f32 %v724, %v724
        %v885 = vmul.f32 %v725, %v725
        %v886 = vmul.f32 %v726, %v726
        %v887 = vmul.f32 %v727, %v727
        %v888 = vmul.f32 %v728, %v728
        %v889 = vmul.f32 %v729, %v729
        %v890 = vmul.f32 %v730, %v730
        %v891 = vmul.f32 %v731, %v731
        %v892 = vmul.f32 %v732, %v732
        %v893 = vmul.f32 %v733, %v733
        %v894 = vmul.f32 %v734, %v734
        %v895 = vmul.f32 %v735, %v735
        %v896 = vmul.f32 %v736, %v736
        %v897 = vmul.f32 %v737, %v737
        %v898 = vmul.f32 %v738, %v738
        %v899 = vmul.f32 %v739, %v739
        %v900 = vmul.f32 %v740, %v740
        %v901 = vmul.f32 %v741, %v741
        %v902 = vmul.f32 %v742, %v742
        %v903 = vmul.f32 %v743, %v743
        %v904 = vmul.f32 %v744, %v744
        %v905 = vsub.f32 %v841, %v873
        %v906 = vsub.f32 %v842, %v874
        %v907 = vsub.f32 %v843, %v875
        %v908 = vsub.f32 %v844, %v876
        %v909 = vsub.f32 %v845, %v877
        %v910 = vsub.f32 %v846, %v878
        %v911 = vsub.f32 %v847, %v879
        %v912 = vsub.f32 %v848, %v880
        %v913 = vsub.f32 %v849, %v881
        %v914 = vsub.f32 %v850, %v882
        %v915 = vsub.f32 %v851, %v883
        %v916 = vsub.f32 %v852, %v884
        %v917 = vsub.f32 %v853, %v885
        %v918 = vsub.f32 %v854, %v886
        %v919 = vsub.f32 %v855, %v887
        %v920 = vsub.f32 %v856, %v888
        %v921 = vsub.f32 %v857, %v889
        %v922 = vsub.f32 %v858, %v890
        %v923 = vsub.f32 %v859, %v891
        %v924 = vsub.f32 %v860, %v892
        %v925 = vsub.f32 %v861, %v893
        %v926 = vsub.f32 %v862, %v894
        %v927 = vsub.f32 %v863, %v895
        %v928 = vsub.f32 %v864, %v896
        %v929 = vsub.f32 %v865, %v897
        %v930 = vsub.f32 %v866, %v898
        %v931 = vsub.f32 %v867, %v899
        %v932 = vsub.f32 %v868, %v900
        %v933 = vsub.f32 %v869, %v901
        %v934 = vsub.f32 %v870, %v902
        %v935 = vsub.f32 %v871, %v903
        %v936 = vsub.f32 %v872, %v904
        %v937 = vsub.f32 %v616, %v713
        %v938 = vsub.f32 %v617, %v714
        %v939 = vsub.f32 %v618, %v715
        %v940 = vsub.f32 %v619, %v716
        %v941 = vsub.f32 %v620, %v717
        %v942 = vsub.f32 %v621, %v718
        %v943 = vsub.f32 %v622, %v719
        %v944 = vsub.f32 %v623, %v720
        %v945 = vsub.f32 %v624, %v721
        %v946 = vsub.f32 %v625, %v722
        %v947 = vsub.f32 %v626, %v723
        %v948 = vsub.f32 %v627, %v724
        %v949 = vsub.f32 %v628, %v725
        %v950 = vsub.f32 %v629, %v726
        %v951 = vsub.f32 %v630, %v727
        %v952 = vsub.f32 %v631, %v728
        %v953 = vsub.f32 %v632, %v729
        %v954 = vsub.f32 %v633, %v730
        %v955 = vsub.f32 %v634, %v731
        %v956 = vsub.f32 %v635, %v732
        %v957 = vsub.f32 %v636, %v733
        %v958 = vsub.f32 %v637, %v734
        %v959 = vsub.f32 %v638, %v735
        %v960 = vsub.f32 %v639, %v736
        %v961 = vsub.f32 %v640, %v737
        %v962 = vsub.f32 %v641, %v738
        %v963 = vsub.f32 %v642, %v739
        %v964 = vsub.f32 %v643, %v740
        %v965 = vsub.f32 %v644, %v741
        %v966 = vsub.f32 %v645, %v742
        %v967 = vsub.f32 %v646, %v743
        %v968 = vsub.f32 %v647, %v744
        %v969 = vadd.f32 %v905, 1e-05
        %v970 = vadd.f32 %v906, 1e-05
        %v971 = vadd.f32 %v907, 1e-05
        %v972 = vadd.f32 %v908, 1e-05
        %v973 = vadd.f32 %v909, 1e-05
        %v974 = vadd.f32 %v910, 1e-05
        %v975 = vadd.f32 %v911, 1e-05
        %v976 = vadd.f32 %v912, 1e-05
        %v977 = vadd.f32 %v913, 1e-05
        %v978 = vadd.f32 %v914, 1e-05
        %v979 = vadd.f32 %v915, 1e-05
        %v980 = vadd.f32 %v916, 1e-05
        %v981 = vadd.f32 %v917, 1e-05
        %v982 = vadd.f32 %v918, 1e-05
        %v983 = vadd.f32 %v919, 1e-05
        %v984 = vadd.f32 %v920, 1e-05
        %v985 = vadd.f32 %v921, 1e-05
        %v986 = vadd.f32 %v922, 1e-05
        %v987 = vadd.f32 %v923, 1e-05
        %v988 = vadd.f32 %v924, 1e-05
        %v989 = vadd.f32 %v925, 1e-05
        %v990 = vadd.f32 %v926, 1e-05
        %v991 = vadd.f32 %v927, 1e-05
        %v992 = vadd.f32 %v928, 1e-05
        %v993 = vadd.f32 %v929, 1e-05
        %v994 = vadd.f32 %v930, 1e-05
        %v995 = vadd.f32 %v931, 1e-05
        %v996 = vadd.f32 %v932, 1e-05
        %v997 = vadd.f32 %v933, 1e-05
        %v998 = vadd.f32 %v934, 1e-05
        %v999 = vadd.f32 %v935, 1e-05
        %v1000 = vadd.f32 %v936, 1e-05
        %v1001 = vrsqrt.pop %v969
        %v1002 = vrsqrt.pop %v970
        %v1003 = vrsqrt.pop %v971
        %v1004 = vrsqrt.pop %v972
        %v1005 = vrsqrt.pop %v973
        %v1006 = vrsqrt.pop %v974
        %v1007 = vrsqrt.pop %v975
        %v1008 = vrsqrt.pop %v976
        %v1009 = vrsqrt.pop %v977
        %v1010 = vrsqrt.pop %v978
        %v1011 = vrsqrt.pop %v979
        %v1012 = vrsqrt.pop %v980
        %v1013 = vrsqrt.pop %v981
        %v1014 = vrsqrt.pop %v982
        %v1015 = vrsqrt.pop %v983
        %v1016 = vrsqrt.pop %v984
        %v1017 = vrsqrt.pop %v985
        %v1018 = vrsqrt.pop %v986
        %v1019 = vrsqrt.pop %v987
        %v1020 = vrsqrt.pop %v988
        %v1021 = vrsqrt.pop %v989
        %v1022 = vrsqrt.pop %v990
        %v1023 = vrsqrt.pop %v991
        %v1024 = vrsqrt.pop %v992
        %v1025 = vrsqrt.pop %v993
        %v1026 = vrsqrt.pop %v994
        %v1027 = vrsqrt.pop %v995
        %v1028 = vrsqrt.pop %v996
        %v1029 = vrsqrt.pop %v997
        %v1030 = vrsqrt.pop %v998
        %v1031 = vrsqrt.pop %v999
        %v1032 = vrsqrt.pop %v1000
        %v1033 = vmul.f32 %v937, %v1001
        %v1034 = vmul.f32 %v938, %v1002
        %v1035 = vmul.f32 %v939, %v1003
        %v1036 = vmul.f32 %v940, %v1004
        %v1037 = vmul.f32 %v941, %v1005
        %v1038 = vmul.f32 %v942, %v1006
        %v1039 = vmul.f32 %v943, %v1007
        %v1040 = vmul.f32 %v944, %v1008
        %v1041 = vmul.f32 %v945, %v1009
        %v1042 = vmul.f32 %v946, %v1010
        %v1043 = vmul.f32 %v947, %v1011
        %v1044 = vmul.f32 %v948, %v1012
        %v1045 = vmul.f32 %v949, %v1013
        %v1046 = vmul.f32 %v950, %v1014
        %v1047 = vmul.f32 %v951, %v1015
        %v1048 = vmul.f32 %v952, %v1016
        %v1049 = vmul.f32 %v953, %v1017
        %v1050 = vmul.f32 %v954, %v1018
        %v1051 = vmul.f32 %v955, %v1019
        %v1052 = vmul.f32 %v956, %v1020
        %v1053 = vmul.f32 %v957, %v1021
        %v1054 = vmul.f32 %v958, %v1022
        %v1055 = vmul.f32 %v959, %v1023
        %v1056 = vmul.f32 %v960, %v1024
        %v1057 = vmul.f32 %v961, %v1025
        %v1058 = vmul.f32 %v962, %v1026
        %v1059 = vmul.f32 %v963, %v1027
        %v1060 = vmul.f32 %v964, %v1028
        %v1061 = vmul.f32 %v965, %v1029
        %v1062 = vmul.f32 %v966, %v1030
        %v1063 = vmul.f32 %v967, %v1031
        %v1064 = vmul.f32 %v968, %v1032
        %v1065 = vlaneseq
        %v1066 = vshrl.u32 %v1065, 7
        %v1067 = vsub.s32 1, %v1066
        %v1068 = vrot.slane %v281, %v1067
        %v1069 = vmul.f32 %v1033, %v1068
        %v1070 = vmul.f32 %v1034, %v1068
        %v1071 = vmul.f32 %v1035, %v1068
        %v1072 = vmul.f32 %v1036, %v1068
        %v1073 = vmul.f32 %v1037, %v1068
        %v1074 = vmul.f32 %v1038, %v1068
        %v1075 = vmul.f32 %v1039, %v1068
        %v1076 = vmul.f32 %v1040, %v1068
        %v1077 = vmul.f32 %v1041, %v1068
        %v1078 = vmul.f32 %v1042, %v1068
        %v1079 = vmul.f32 %v1043, %v1068
        %v1080 = vmul.f32 %v1044, %v1068
        %v1081 = vmul.f32 %v1045, %v1068
        %v1082 = vmul.f32 %v1046, %v1068
        %v1083 = vmul.f32 %v1047, %v1068
        %v1084 = vmul.f32 %v1048, %v1068
        %v1085 = vmul.f32 %v1049, %v1068
        %v1086 = vmul.f32 %v1050, %v1068
        %v1087 = vmul.f32 %v1051, %v1068
        %v1088 = vmul.f32 %v1052, %v1068
        %v1089 = vmul.f32 %v1053, %v1068
        %v1090 = vmul.f32 %v1054, %v1068
        %v1091 = vmul.f32 %v1055, %v1068
        %v1092 = vmul.f32 %v1056, %v1068
        %v1093 = vmul.f32 %v1057, %v1068
        %v1094 = vmul.f32 %v1058, %v1068
        %v1095 = vmul.f32 %v1059, %v1068
        %v1096 = vmul.f32 %v1060, %v1068
        %v1097 = vmul.f32 %v1061, %v1068
        %v1098 = vmul.f32 %v1062, %v1068
        %v1099 = vmul.f32 %v1063, %v1068
        %v1100 = vmul.f32 %v1064, %v1068
        %v1101 = vlaneseq
        %v1102 = vshrl.u32 %v1101, 7
        %v1103 = vsub.s32 2, %v1102
        %v1104 = vrot.slane %v281, %v1103
        %v1105 = vadd.f32 %v1069, %v1104
        %v1106 = vadd.f32 %v1070, %v1104
        %v1107 = vadd.f32 %v1071, %v1104
        %v1108 = vadd.f32 %v1072, %v1104
        %v1109 = vadd.f32 %v1073, %v1104
        %v1110 = vadd.f32 %v1074, %v1104
        %v1111 = vadd.f32 %v1075, %v1104
        %v1112 = vadd.f32 %v1076, %v1104
        %v1113 = vadd.f32 %v1077, %v1104
        %v1114 = vadd.f32 %v1078, %v1104
        %v1115 = vadd.f32 %v1079, %v1104
        %v1116 = vadd.f32 %v1080, %v1104
        %v1117 = vadd.f32 %v1081, %v1104
        %v1118 = vadd.f32 %v1082, %v1104
        %v1119 = vadd.f32 %v1083, %v1104
        %v1120 = vadd.f32 %v1084, %v1104
        %v1121 = vadd.f32 %v1085, %v1104
        %v1122 = vadd.f32 %v1086, %v1104
        %v1123 = vadd.f32 %v1087, %v1104
        %v1124 = vadd.f32 %v1088, %v1104
        %v1125 = vadd.f32 %v1089, %v1104
        %v1126 = vadd.f32 %v1090, %v1104
        %v1127 = vadd.f32 %v1091, %v1104
        %v1128 = vadd.f32 %v1092, %v1104
        %v1129 = vadd.f32 %v1093, %v1104
        %v1130 = vadd.f32 %v1094, %v1104
        %v1131 = vadd.f32 %v1095, %v1104
        %v1132 = vadd.f32 %v1096, %v1104
        %v1133 = vadd.f32 %v1097, %v1104
        %v1134 = vadd.f32 %v1098, %v1104
        %v1135 = vadd.f32 %v1099, %v1104
        %v1136 = vadd.f32 %v1100, %v1104
        %1137 = vst [vmem:[#allocation2] sm:$0xff] %v1105
        %1138 = vst [vmem:[#allocation2 + $0x8] sm:$0xff] %v1106
        %1139 = vst [vmem:[#allocation2 + $0x10] sm:$0xff] %v1107
        %1140 = vst [vmem:[#allocation2 + $0x18] sm:$0xff] %v1108
        %1141 = vst [vmem:[#allocation2 + $0x20] sm:$0xff] %v1109
        %1142 = vst [vmem:[#allocation2 + $0x28] sm:$0xff] %v1110
        %1143 = vst [vmem:[#allocation2 + $0x30] sm:$0xff] %v1111
        %1144 = vst [vmem:[#allocation2 + $0x38] sm:$0xff] %v1112
        %1145 = vst [vmem:[#allocation2 + $0x40] sm:$0xff] %v1113
        %1146 = vst [vmem:[#allocation2 + $0x48] sm:$0xff] %v1114
        %1147 = vst [vmem:[#allocation2 + $0x50] sm:$0xff] %v1115
        %1148 = vst [vmem:[#allocation2 + $0x58] sm:$0xff] %v1116
        %1149 = vst [vmem:[#allocation2 + $0x60] sm:$0xff] %v1117
        %1150 = vst [vmem:[#allocation2 + $0x68] sm:$0xff] %v1118
        %1151 = vst [vmem:[#allocation2 + $0x70] sm:$0xff] %v1119
        %1152 = vst [vmem:[#allocation2 + $0x78] sm:$0xff] %v1120
        %1153 = vst [vmem:[#allocation2 + $0x80] sm:$0xff] %v1121
        %1154 = vst [vmem:[#allocation2 + $0x88] sm:$0xff] %v1122
        %1155 = vst [vmem:[#allocation2 + $0x90] sm:$0xff] %v1123
        %1156 = vst [vmem:[#allocation2 + $0x98] sm:$0xff] %v1124
        %1157 = vst [vmem:[#allocation2 + $0xa0] sm:$0xff] %v1125
        %1158 = vst [vmem:[#allocation2 + $0xa8] sm:$0xff] %v1126
        %1159 = vst [vmem:[#allocation2 + $0xb0] sm:$0xff] %v1127
        %1160 = vst [vmem:[#allocation2 + $0xb8] sm:$0xff] %v1128
        %1161 = vst [vmem:[#allocation2 + $0xc0] sm:$0xff] %v1129
        %1162 = vst [vmem:[#allocation2 + $0xc8] sm:$0xff] %v1130
        %1163 = vst [vmem:[#allocation2 + $0xd0] sm:$0xff] %v1131
        %1164 = vst [vmem:[#allocation2 + $0xd8] sm:$0xff] %v1132
        %1165 = vst [vmem:[#allocation2 + $0xe0] sm:$0xff] %v1133
        %1166 = vst [vmem:[#allocation2 + $0xe8] sm:$0xff] %v1134
        %1167 = vst [vmem:[#allocation2 + $0xf0] sm:$0xff] %v1135
        %1168 = vst [vmem:[#allocation2 + $0xf8] sm:$0xff] %v1136
        %v1169 = vpack.c.bf16 %v1106, %v1105
        %v1170 = vpack.c.bf16 %v1108, %v1107
        %v1171 = vpack.c.bf16 %v1110, %v1109
        %v1172 = vpack.c.bf16 %v1112, %v1111
        %v1173 = vpack.c.bf16 %v1114, %v1113
        %v1174 = vpack.c.bf16 %v1116, %v1115
        %v1175 = vpack.c.bf16 %v1118, %v1117
        %v1176 = vpack.c.bf16 %v1120, %v1119
        %v1177 = vpack.c.bf16 %v1122, %v1121
        %v1178 = vpack.c.bf16 %v1124, %v1123
        %v1179 = vpack.c.bf16 %v1126, %v1125
        %v1180 = vpack.c.bf16 %v1128, %v1127
        %v1181 = vpack.c.bf16 %v1130, %v1129
        %v1182 = vpack.c.bf16 %v1132, %v1131
        %v1183 = vpack.c.bf16 %v1134, %v1133
        %v1184 = vpack.c.bf16 %v1136, %v1135
        %v1185 = vld [vmem:[%s2] sm:$0xff]
        %v1186 = vld [vmem:[%s2 + $0x8] sm:$0xf]
        %v1187 = vld [vmem:[%s2 + $0xc] sm:$0xff]
        %v1188 = vld [vmem:[%s2 + $0x14] sm:$0xf]
        %v1189 = vld [vmem:[%s2 + $0x18] sm:$0xff]
        %v1190 = vld [vmem:[%s2 + $0x20] sm:$0xf]
        %v1191 = vld [vmem:[%s2 + $0x24] sm:$0xff]
        %v1192 = vld [vmem:[%s2 + $0x2c] sm:$0xf]
        %v1193 = vld [vmem:[%s2 + $0x30] sm:$0xff]
        %v1194 = vld [vmem:[%s2 + $0x38] sm:$0xf]
        %v1195 = vld [vmem:[%s2 + $0x3c] sm:$0xff]
        %v1196 = vld [vmem:[%s2 + $0x44] sm:$0xf]
        %v1197 = vld [vmem:[%s2 + $0x48] sm:$0xff]
        %v1198 = vld [vmem:[%s2 + $0x50] sm:$0xf]
        %v1199 = vld [vmem:[%s2 + $0x54] sm:$0xff]
        %v1200 = vld [vmem:[%s2 + $0x5c] sm:$0xf]
        %v1201 = vld [vmem:[%s2 + $0x60] sm:$0xff]
        %v1202 = vld [vmem:[%s2 + $0x68] sm:$0xf]
        %v1203 = vld [vmem:[%s2 + $0x6c] sm:$0xff]
        %v1204 = vld [vmem:[%s2 + $0x74] sm:$0xf]
        %v1205 = vld [vmem:[%s2 + $0x78] sm:$0xff]
        %v1206 = vld [vmem:[%s2 + $0x80] sm:$0xf]
        %v1207 = vld [vmem:[%s2 + $0x84] sm:$0xff]
        %v1208 = vld [vmem:[%s2 + $0x8c] sm:$0xf]
        %v1209 = vld [vmem:[%s2 + $0x90] sm:$0xff]
        %v1210 = vld [vmem:[%s2 + $0x98] sm:$0xf]
        %v1211 = vld [vmem:[%s2 + $0x9c] sm:$0xff]
        %v1212 = vld [vmem:[%s2 + $0xa4] sm:$0xf]
        %v1213 = vld [vmem:[%s2 + $0xa8] sm:$0xff]
        %v1214 = vld [vmem:[%s2 + $0xb0] sm:$0xf]
        %v1215 = vld [vmem:[%s2 + $0xb4] sm:$0xff]
        %v1216 = vld [vmem:[%s2 + $0xbc] sm:$0xf]
        %v1217 = vld [vmem:[%s3] sm:$0x7]
        %v1219 = vlaneseq
        %v1220 = vshrl.u32 %v1219, 7
        %v1221 = vsub.s32 0, %v1220
        %v1222 = vrot.slane %v1217, %v1221
        %v1223 = vlaneseq
        %v1224 = vshrl.u32 %v1223, 7
        %v1225 = vsub.s32 1, %v1224
        %v1226 = vrot.slane %v1217, %v1225
        %v1227 = vlaneseq
        %v1228 = vshrl.u32 %v1227, 7
        %v1229 = vsub.s32 2, %v1228
        %v1230 = vrot.slane %v1217, %v1229
        %v1266 = vunpack.c.l.b16 %v1185
        %v1267 = vunpack.c.h.b16 %v1185
        %v1268 = vunpack.c.l.b16 %v1186
        %v1269 = vunpack.c.l.b16 %v1187
        %v1270 = vunpack.c.h.b16 %v1187
        %v1271 = vunpack.c.l.b16 %v1188
        %v1272 = vunpack.c.l.b16 %v1189
        %v1273 = vunpack.c.h.b16 %v1189
        %v1274 = vunpack.c.l.b16 %v1190
        %v1275 = vunpack.c.l.b16 %v1191
        %v1276 = vunpack.c.h.b16 %v1191
        %v1277 = vunpack.c.l.b16 %v1192
        %v1278 = vunpack.c.l.b16 %v1193
        %v1279 = vunpack.c.h.b16 %v1193
        %v1280 = vunpack.c.l.b16 %v1194
        %v1281 = vunpack.c.l.b16 %v1195
        %v1282 = vunpack.c.h.b16 %v1195
        %v1283 = vunpack.c.l.b16 %v1196
        %v1284 = vunpack.c.l.b16 %v1197
        %v1285 = vunpack.c.h.b16 %v1197
        %v1286 = vunpack.c.l.b16 %v1198
        %v1287 = vunpack.c.l.b16 %v1199
        %v1288 = vunpack.c.h.b16 %v1199
        %v1289 = vunpack.c.l.b16 %v1200
        %v1290 = vunpack.c.l.b16 %v1201
        %v1291 = vunpack.c.h.b16 %v1201
        %v1292 = vunpack.c.l.b16 %v1202
        %v1293 = vunpack.c.l.b16 %v1203
        %v1294 = vunpack.c.h.b16 %v1203
        %v1295 = vunpack.c.l.b16 %v1204
        %v1296 = vunpack.c.l.b16 %v1205
        %v1297 = vunpack.c.h.b16 %v1205
        %v1298 = vunpack.c.l.b16 %v1206
        %v1299 = vunpack.c.l.b16 %v1207
        %v1300 = vunpack.c.h.b16 %v1207
        %v1301 = vunpack.c.l.b16 %v1208
        %v1302 = vunpack.c.l.b16 %v1209
        %v1303 = vunpack.c.h.b16 %v1209
        %v1304 = vunpack.c.l.b16 %v1210
        %v1305 = vunpack.c.l.b16 %v1211
        %v1306 = vunpack.c.h.b16 %v1211
        %v1307 = vunpack.c.l.b16 %v1212
        %v1308 = vunpack.c.l.b16 %v1213
        %v1309 = vunpack.c.h.b16 %v1213
        %v1310 = vunpack.c.l.b16 %v1214
        %v1311 = vunpack.c.l.b16 %v1215
        %v1312 = vunpack.c.h.b16 %v1215
        %v1313 = vunpack.c.l.b16 %v1216
        %v1314 = vpack.c.b16 %v1269, %v1266
        %v1315 = vpack.c.b16 %v1270, %v1267
        %v1316 = vpack.c.b16 %v1271, %v1268
        %v1317 = vpack.c.b16 %v1275, %v1272
        %v1318 = vpack.c.b16 %v1276, %v1273
        %v1319 = vpack.c.b16 %v1277, %v1274
        %v1320 = vpack.c.b16 %v1281, %v1278
        %v1321 = vpack.c.b16 %v1282, %v1279
        %v1322 = vpack.c.b16 %v1283, %v1280
        %v1323 = vpack.c.b16 %v1287, %v1284
        %v1324 = vpack.c.b16 %v1288, %v1285
        %v1325 = vpack.c.b16 %v1289, %v1286
        %v1326 = vpack.c.b16 %v1293, %v1290
        %v1327 = vpack.c.b16 %v1294, %v1291
        %v1328 = vpack.c.b16 %v1295, %v1292
        %v1329 = vpack.c.b16 %v1299, %v1296
        %v1330 = vpack.c.b16 %v1300, %v1297
        %v1331 = vpack.c.b16 %v1301, %v1298
        %v1332 = vpack.c.b16 %v1305, %v1302
        %v1333 = vpack.c.b16 %v1306, %v1303
        %v1334 = vpack.c.b16 %v1307, %v1304
        %v1335 = vpack.c.b16 %v1311, %v1308
        %v1336 = vpack.c.b16 %v1312, %v1309
        %v1337 = vpack.c.b16 %v1313, %v1310
        %1362 = vmatprep.subr.bf16.mxu0 %v1315
        %1363 = vmatpush1.bf16.msra.mxu0 %v1314
        %1364 = vmatprep.subr.bf16.mxu0 %v1318
        %1365 = vmatpush1.bf16.msra.mxu0 %v1317
        %1366 = vmatprep.subr.bf16.mxu0 %v1321
        %1367 = vmatpush1.bf16.msra.mxu0 %v1320
        %1368 = vmatprep.subr.bf16.mxu0 %v1324
        %1369 = vmatpush1.bf16.msra.mxu0 %v1323
        %1370 = vmatprep.subr.bf16.mxu0 %v1327
        %1371 = vmatpush1.bf16.msra.mxu0 %v1326
        %1372 = vmatprep.subr.bf16.mxu0 %v1330
        %1373 = vmatpush1.bf16.msra.mxu0 %v1329
        %1374 = vmatprep.subr.bf16.mxu0 %v1333
        %1375 = vmatpush1.bf16.msra.mxu0 %v1332
        %1376 = vmatprep.subr.bf16.mxu0 %v1336
        %1377 = vmatpush1.bf16.msra.mxu0 %v1335
        %1378 = vmatprep.subr.bf16.mxu0 0
        %1379 = vmatpush1.bf16.msra.mxu0 0
        %1380 = vmatprep.subr.bf16.mxu0 0
        %1381 = vmatpush1.bf16.msra.mxu0 0
        %1382 = vmatprep.subr.bf16.mxu0 0
        %1383 = vmatpush1.bf16.msra.mxu0 0
        %1384 = vmatprep.subr.bf16.mxu0 0
        %1385 = vmatpush1.bf16.msra.mxu0 0
        %1386 = vmatprep.subr.bf16.mxu0 0
        %1387 = vmatpush1.bf16.msra.mxu0 0
        %1388 = vmatprep.subr.bf16.mxu0 0
        %1389 = vmatpush1.bf16.msra.mxu0 0
        %1390 = vmatprep.subr.bf16.mxu0 0
        %1391 = vmatpush1.bf16.msra.mxu0 0
        %1392 = vmatprep.subr.bf16.mxu0 0
        %1393 = vmatpush1.bf16.msra.mxu0 0
        %1394 = vmatprep.mubr.bf16.mxu0 0
        %1395 = vmatmul.mubr.bf16.gmra.mrb[0].mxu0 %v1169
        %v1396 = vpop.f32.mrb[0].mxu0
        %v1397 = vadd.f32 %v1222, %v1396
        %v1398 = vpop.f32.mrb[0].mxu0
        %v1399 = vadd.f32 %v1226, %v1398
        %v1400 = vpop.f32.mrb[0].mxu0
        %v1401 = vadd.f32 %v1222, %v1400
        %v1402 = vpop.f32.mrb[0].mxu0
        %v1403 = vadd.f32 %v1226, %v1402
        %1404 = vmatprep.mubr.bf16.mxu0 0
        %1405 = vmatmul.mubr.bf16.gmra.mrb[0].mxu0 %v1170
        %v1406 = vpop.f32.mrb[0].mxu0
        %v1407 = vadd.f32 %v1222, %v1406
        %v1408 = vpop.f32.mrb[0].mxu0
        %v1409 = vadd.f32 %v1226, %v1408
        %v1410 = vpop.f32.mrb[0].mxu0
        %v1411 = vadd.f32 %v1222, %v1410
        %v1412 = vpop.f32.mrb[0].mxu0
        %v1413 = vadd.f32 %v1226, %v1412
        %1414 = vmatprep.mubr.bf16.mxu0 0
        %1415 = vmatmul.mubr.bf16.gmra.mrb[0].mxu0 %v1171
        %v1416 = vpop.f32.mrb[0].mxu0
        %v1417 = vadd.f32 %v1222, %v1416
        %v1418 = vpop.f32.mrb[0].mxu0
        %v1419 = vadd.f32 %v1226, %v1418
        %v1420 = vpop.f32.mrb[0].mxu0
        %v1421 = vadd.f32 %v1222, %v1420
        %v1422 = vpop.f32.mrb[0].mxu0
        %v1423 = vadd.f32 %v1226, %v1422
        %1424 = vmatprep.mubr.bf16.mxu0 0
        %1425 = vmatmul.mubr.bf16.gmra.mrb[0].mxu0 %v1172
        %v1426 = vpop.f32.mrb[0].mxu0
        %v1427 = vadd.f32 %v1222, %v1426
        %v1428 = vpop.f32.mrb[0].mxu0
        %v1429 = vadd.f32 %v1226, %v1428
        %v1430 = vpop.f32.mrb[0].mxu0
        %v1431 = vadd.f32 %v1222, %v1430
        %v1432 = vpop.f32.mrb[0].mxu0
        %v1433 = vadd.f32 %v1226, %v1432
        %1434 = vmatprep.mubr.bf16.mxu0 0
        %1435 = vmatmul.mubr.bf16.gmra.mrb[0].mxu0 %v1173
        %v1436 = vpop.f32.mrb[0].mxu0
        %v1437 = vadd.f32 %v1222, %v1436
        %v1438 = vpop.f32.mrb[0].mxu0
        %v1439 = vadd.f32 %v1226, %v1438
        %v1440 = vpop.f32.mrb[0].mxu0
        %v1441 = vadd.f32 %v1222, %v1440
        %v1442 = vpop.f32.mrb[0].mxu0
        %v1443 = vadd.f32 %v1226, %v1442
        %1444 = vmatprep.mubr.bf16.mxu0 0
        %1445 = vmatmul.mubr.bf16.gmra.mrb[0].mxu0 %v1174
        %v1446 = vpop.f32.mrb[0].mxu0
        %v1447 = vadd.f32 %v1222, %v1446
        %v1448 = vpop.f32.mrb[0].mxu0
        %v1449 = vadd.f32 %v1226, %v1448
        %v1450 = vpop.f32.mrb[0].mxu0
        %v1451 = vadd.f32 %v1222, %v1450
        %v1452 = vpop.f32.mrb[0].mxu0
        %v1453 = vadd.f32 %v1226, %v1452
        %1454 = vmatprep.mubr.bf16.mxu0 0
        %1455 = vmatmul.mubr.bf16.gmra.mrb[0].mxu0 %v1175
        %v1456 = vpop.f32.mrb[0].mxu0
        %v1457 = vadd.f32 %v1222, %v1456
        %v1458 = vpop.f32.mrb[0].mxu0
        %v1459 = vadd.f32 %v1226, %v1458
        %v1460 = vpop.f32.mrb[0].mxu0
        %v1461 = vadd.f32 %v1222, %v1460
        %v1462 = vpop.f32.mrb[0].mxu0
        %v1463 = vadd.f32 %v1226, %v1462
        %1464 = vmatprep.mubr.bf16.mxu0 0
        %1465 = vmatmul.mubr.bf16.gmra.mrb[0].mxu0 %v1176
        %v1466 = vpop.f32.mrb[0].mxu0
        %v1467 = vadd.f32 %v1222, %v1466
        %v1468 = vpop.f32.mrb[0].mxu0
        %v1469 = vadd.f32 %v1226, %v1468
        %v1470 = vpop.f32.mrb[0].mxu0
        %v1471 = vadd.f32 %v1222, %v1470
        %v1472 = vpop.f32.mrb[0].mxu0
        %v1473 = vadd.f32 %v1226, %v1472
        %1474 = vmatprep.mubr.bf16.mxu0 0
        %1475 = vmatmul.mubr.bf16.gmra.mrb[0].mxu0 %v1177
        %v1476 = vpop.f32.mrb[0].mxu0
        %v1477 = vadd.f32 %v1222, %v1476
        %v1478 = vpop.f32.mrb[0].mxu0
        %v1479 = vadd.f32 %v1226, %v1478
        %v1480 = vpop.f32.mrb[0].mxu0
        %v1481 = vadd.f32 %v1222, %v1480
        %v1482 = vpop.f32.mrb[0].mxu0
        %v1483 = vadd.f32 %v1226, %v1482
        %1484 = vmatprep.mubr.bf16.mxu0 0
        %1485 = vmatmul.mubr.bf16.gmra.mrb[0].mxu0 %v1178
        %v1486 = vpop.f32.mrb[0].mxu0
        %v1487 = vadd.f32 %v1222, %v1486
        %v1488 = vpop.f32.mrb[0].mxu0
        %v1489 = vadd.f32 %v1226, %v1488
        %v1490 = vpop.f32.mrb[0].mxu0
        %v1491 = vadd.f32 %v1222, %v1490
        %v1492 = vpop.f32.mrb[0].mxu0
        %v1493 = vadd.f32 %v1226, %v1492
        %1494 = vmatprep.mubr.bf16.mxu0 0
        %1495 = vmatmul.mubr.bf16.gmra.mrb[0].mxu0 %v1179
        %v1496 = vpop.f32.mrb[0].mxu0
        %v1497 = vadd.f32 %v1222, %v1496
        %v1498 = vpop.f32.mrb[0].mxu0
        %v1499 = vadd.f32 %v1226, %v1498
        %v1500 = vpop.f32.mrb[0].mxu0
        %v1501 = vadd.f32 %v1222, %v1500
        %v1502 = vpop.f32.mrb[0].mxu0
        %v1503 = vadd.f32 %v1226, %v1502
        %1504 = vmatprep.mubr.bf16.mxu0 0
        %1505 = vmatmul.mubr.bf16.gmra.mrb[0].mxu0 %v1180
        %v1506 = vpop.f32.mrb[0].mxu0
        %v1507 = vadd.f32 %v1222, %v1506
        %v1508 = vpop.f32.mrb[0].mxu0
        %v1509 = vadd.f32 %v1226, %v1508
        %v1510 = vpop.f32.mrb[0].mxu0
        %v1511 = vadd.f32 %v1222, %v1510
        %v1512 = vpop.f32.mrb[0].mxu0
        %v1513 = vadd.f32 %v1226, %v1512
        %1514 = vmatprep.mubr.bf16.mxu0 0
        %1515 = vmatmul.mubr.bf16.gmra.mrb[0].mxu0 %v1181
        %v1516 = vpop.f32.mrb[0].mxu0
        %v1517 = vadd.f32 %v1222, %v1516
        %v1518 = vpop.f32.mrb[0].mxu0
        %v1519 = vadd.f32 %v1226, %v1518
        %v1520 = vpop.f32.mrb[0].mxu0
        %v1521 = vadd.f32 %v1222, %v1520
        %v1522 = vpop.f32.mrb[0].mxu0
        %v1523 = vadd.f32 %v1226, %v1522
        %1524 = vmatprep.mubr.bf16.mxu0 0
        %1525 = vmatmul.mubr.bf16.gmra.mrb[0].mxu0 %v1182
        %v1526 = vpop.f32.mrb[0].mxu0
        %v1527 = vadd.f32 %v1222, %v1526
        %v1528 = vpop.f32.mrb[0].mxu0
        %v1529 = vadd.f32 %v1226, %v1528
        %v1530 = vpop.f32.mrb[0].mxu0
        %v1531 = vadd.f32 %v1222, %v1530
        %v1532 = vpop.f32.mrb[0].mxu0
        %v1533 = vadd.f32 %v1226, %v1532
        %1534 = vmatprep.mubr.bf16.mxu0 0
        %1535 = vmatmul.mubr.bf16.gmra.mrb[0].mxu0 %v1183
        %v1536 = vpop.f32.mrb[0].mxu0
        %v1537 = vadd.f32 %v1222, %v1536
        %v1538 = vpop.f32.mrb[0].mxu0
        %v1539 = vadd.f32 %v1226, %v1538
        %v1540 = vpop.f32.mrb[0].mxu0
        %v1541 = vadd.f32 %v1222, %v1540
        %v1542 = vpop.f32.mrb[0].mxu0
        %v1543 = vadd.f32 %v1226, %v1542
        %1544 = vmatprep.mubr.bf16.mxu0 0
        %1545 = vmatmul.mubr.bf16.gmra.mrb[0].mxu0 %v1184
        %v1546 = vpop.f32.mrb[0].mxu0
        %v1547 = vadd.f32 %v1222, %v1546
        %v1548 = vpop.f32.mrb[0].mxu0
        %v1549 = vadd.f32 %v1226, %v1548
        %v1550 = vpop.f32.mrb[0].mxu0
        %v1551 = vadd.f32 %v1222, %v1550
        %v1552 = vpop.f32.mrb[0].mxu0
        %v1553 = vadd.f32 %v1226, %v1552
        %1554 = vdwg.mxu0
        %1555 = vmatprep.subr.bf16.mxu0 0
        %1556 = vmatpush1.bf16.msra.mxu0 %v1316
        %1557 = vmatprep.subr.bf16.mxu0 0
        %1558 = vmatpush1.bf16.msra.mxu0 %v1319
        %1559 = vmatprep.subr.bf16.mxu0 0
        %1560 = vmatpush1.bf16.msra.mxu0 %v1322
        %1561 = vmatprep.subr.bf16.mxu0 0
        %1562 = vmatpush1.bf16.msra.mxu0 %v1325
        %1563 = vmatprep.subr.bf16.mxu0 0
        %1564 = vmatpush1.bf16.msra.mxu0 %v1328
        %1565 = vmatprep.subr.bf16.mxu0 0
        %1566 = vmatpush1.bf16.msra.mxu0 %v1331
        %1567 = vmatprep.subr.bf16.mxu0 0
        %1568 = vmatpush1.bf16.msra.mxu0 %v1334
        %1569 = vmatprep.subr.bf16.mxu0 0
        %1570 = vmatpush1.bf16.msra.mxu0 %v1337
        %1571 = vmatprep.subr.bf16.mxu0 0
        %1572 = vmatpush1.bf16.msra.mxu0 0
        %1573 = vmatprep.subr.bf16.mxu0 0
        %1574 = vmatpush1.bf16.msra.mxu0 0
        %1575 = vmatprep.subr.bf16.mxu0 0
        %1576 = vmatpush1.bf16.msra.mxu0 0
        %1577 = vmatprep.subr.bf16.mxu0 0
        %1578 = vmatpush1.bf16.msra.mxu0 0
        %1579 = vmatprep.subr.bf16.mxu0 0
        %1580 = vmatpush1.bf16.msra.mxu0 0
        %1581 = vmatprep.subr.bf16.mxu0 0
        %1582 = vmatpush1.bf16.msra.mxu0 0
        %1583 = vmatprep.subr.bf16.mxu0 0
        %1584 = vmatpush1.bf16.msra.mxu0 0
        %1585 = vmatprep.subr.bf16.mxu0 0
        %1586 = vmatpush1.bf16.msra.mxu0 0
        %1587 = vmatprep.mubr.bf16.mxu0 0
        %1588 = vmatmul.mubr.bf16.gmra.mrb[0].mxu0 %v1169
        %v1589 = vpop.f32.mrb[0].mxu0
        %v1590 = vadd.f32 %v1230, %v1589
        %v1591 = vpop.f32.mrb[0].mxu0
        %v1592 = vpop.f32.mrb[0].mxu0
        %v1593 = vadd.f32 %v1230, %v1592
        %v1594 = vpop.f32.mrb[0].mxu0
        %1595 = vmatprep.mubr.bf16.mxu0 0
        %1596 = vmatmul.mubr.bf16.gmra.mrb[0].mxu0 %v1170
        %v1597 = vpop.f32.mrb[0].mxu0
        %v1598 = vadd.f32 %v1230, %v1597
        %v1599 = vpop.f32.mrb[0].mxu0
        %v1600 = vpop.f32.mrb[0].mxu0
        %v1601 = vadd.f32 %v1230, %v1600
        %v1602 = vpop.f32.mrb[0].mxu0
        %1603 = vmatprep.mubr.bf16.mxu0 0
        %1604 = vmatmul.mubr.bf16.gmra.mrb[0].mxu0 %v1171
        %v1605 = vpop.f32.mrb[0].mxu0
        %v1606 = vadd.f32 %v1230, %v1605
        %v1607 = vpop.f32.mrb[0].mxu0
        %v1608 = vpop.f32.mrb[0].mxu0
        %v1609 = vadd.f32 %v1230, %v1608
        %v1610 = vpop.f32.mrb[0].mxu0
        %1611 = vmatprep.mubr.bf16.mxu0 0
        %1612 = vmatmul.mubr.bf16.gmra.mrb[0].mxu0 %v1172
        %v1613 = vpop.f32.mrb[0].mxu0
        %v1614 = vadd.f32 %v1230, %v1613
        %v1615 = vpop.f32.mrb[0].mxu0
        %v1616 = vpop.f32.mrb[0].mxu0
        %v1617 = vadd.f32 %v1230, %v1616
        %v1618 = vpop.f32.mrb[0].mxu0
        %1619 = vmatprep.mubr.bf16.mxu0 0
        %1620 = vmatmul.mubr.bf16.gmra.mrb[0].mxu0 %v1173
        %v1621 = vpop.f32.mrb[0].mxu0
        %v1622 = vadd.f32 %v1230, %v1621
        %v1623 = vpop.f32.mrb[0].mxu0
        %v1624 = vpop.f32.mrb[0].mxu0
        %v1625 = vadd.f32 %v1230, %v1624
        %v1626 = vpop.f32.mrb[0].mxu0
        %1627 = vmatprep.mubr.bf16.mxu0 0
        %1628 = vmatmul.mubr.bf16.gmra.mrb[0].mxu0 %v1174
        %v1629 = vpop.f32.mrb[0].mxu0
        %v1630 = vadd.f32 %v1230, %v1629
        %v1631 = vpop.f32.mrb[0].mxu0
        %v1632 = vpop.f32.mrb[0].mxu0
        %v1633 = vadd.f32 %v1230, %v1632
        %v1634 = vpop.f32.mrb[0].mxu0
        %1635 = vmatprep.mubr.bf16.mxu0 0
        %1636 = vmatmul.mubr.bf16.gmra.mrb[0].mxu0 %v1175
        %v1637 = vpop.f32.mrb[0].mxu0
        %v1638 = vadd.f32 %v1230, %v1637
        %v1639 = vpop.f32.mrb[0].mxu0
        %v1640 = vpop.f32.mrb[0].mxu0
        %v1641 = vadd.f32 %v1230, %v1640
        %v1642 = vpop.f32.mrb[0].mxu0
        %1643 = vmatprep.mubr.bf16.mxu0 0
        %1644 = vmatmul.mubr.bf16.gmra.mrb[0].mxu0 %v1176
        %v1645 = vpop.f32.mrb[0].mxu0
        %v1646 = vadd.f32 %v1230, %v1645
        %v1647 = vpop.f32.mrb[0].mxu0
        %v1648 = vpop.f32.mrb[0].mxu0
        %v1649 = vadd.f32 %v1230, %v1648
        %v1650 = vpop.f32.mrb[0].mxu0
        %1651 = vmatprep.mubr.bf16.mxu0 0
        %1652 = vmatmul.mubr.bf16.gmra.mrb[0].mxu0 %v1177
        %v1653 = vpop.f32.mrb[0].mxu0
        %v1654 = vadd.f32 %v1230, %v1653
        %v1655 = vpop.f32.mrb[0].mxu0
        %v1656 = vpop.f32.mrb[0].mxu0
        %v1657 = vadd.f32 %v1230, %v1656
        %v1658 = vpop.f32.mrb[0].mxu0
        %1659 = vmatprep.mubr.bf16.mxu0 0
        %1660 = vmatmul.mubr.bf16.gmra.mrb[0].mxu0 %v1178
        %v1661 = vpop.f32.mrb[0].mxu0
        %v1662 = vadd.f32 %v1230, %v1661
        %v1663 = vpop.f32.mrb[0].mxu0
        %v1664 = vpop.f32.mrb[0].mxu0
        %v1665 = vadd.f32 %v1230, %v1664
        %v1666 = vpop.f32.mrb[0].mxu0
        %1667 = vmatprep.mubr.bf16.mxu0 0
        %1668 = vmatmul.mubr.bf16.gmra.mrb[0].mxu0 %v1179
        %v1669 = vpop.f32.mrb[0].mxu0
        %v1670 = vadd.f32 %v1230, %v1669
        %v1671 = vpop.f32.mrb[0].mxu0
        %v1672 = vpop.f32.mrb[0].mxu0
        %v1673 = vadd.f32 %v1230, %v1672
        %v1674 = vpop.f32.mrb[0].mxu0
        %1675 = vmatprep.mubr.bf16.mxu0 0
        %1676 = vmatmul.mubr.bf16.gmra.mrb[0].mxu0 %v1180
        %v1677 = vpop.f32.mrb[0].mxu0
        %v1678 = vadd.f32 %v1230, %v1677
        %v1679 = vpop.f32.mrb[0].mxu0
        %v1680 = vpop.f32.mrb[0].mxu0
        %v1681 = vadd.f32 %v1230, %v1680
        %v1682 = vpop.f32.mrb[0].mxu0
        %1683 = vmatprep.mubr.bf16.mxu0 0
        %1684 = vmatmul.mubr.bf16.gmra.mrb[0].mxu0 %v1181
        %v1685 = vpop.f32.mrb[0].mxu0
        %v1686 = vadd.f32 %v1230, %v1685
        %v1687 = vpop.f32.mrb[0].mxu0
        %v1688 = vpop.f32.mrb[0].mxu0
        %v1689 = vadd.f32 %v1230, %v1688
        %v1690 = vpop.f32.mrb[0].mxu0
        %1691 = vmatprep.mubr.bf16.mxu0 0
        %1692 = vmatmul.mubr.bf16.gmra.mrb[0].mxu0 %v1182
        %v1693 = vpop.f32.mrb[0].mxu0
        %v1694 = vadd.f32 %v1230, %v1693
        %v1695 = vpop.f32.mrb[0].mxu0
        %v1696 = vpop.f32.mrb[0].mxu0
        %v1697 = vadd.f32 %v1230, %v1696
        %v1698 = vpop.f32.mrb[0].mxu0
        %1699 = vmatprep.mubr.bf16.mxu0 0
        %1700 = vmatmul.mubr.bf16.gmra.mrb[0].mxu0 %v1183
        %v1701 = vpop.f32.mrb[0].mxu0
        %v1702 = vadd.f32 %v1230, %v1701
        %v1703 = vpop.f32.mrb[0].mxu0
        %v1704 = vpop.f32.mrb[0].mxu0
        %v1705 = vadd.f32 %v1230, %v1704
        %v1706 = vpop.f32.mrb[0].mxu0
        %1707 = vmatprep.mubr.bf16.mxu0 0
        %1708 = vmatmul.mubr.bf16.gmra.mrb[0].mxu0 %v1184
        %v1709 = vpop.f32.mrb[0].mxu0
        %v1710 = vadd.f32 %v1230, %v1709
        %v1711 = vpop.f32.mrb[0].mxu0
        %v1712 = vpop.f32.mrb[0].mxu0
        %v1713 = vadd.f32 %v1230, %v1712
        %v1714 = vpop.f32.mrb[0].mxu0
        %1715 = vdwg.mxu0
        %1716 = vst [vmem:[#allocation3] sm:$0xff] %v1397
        %1717 = vst [vmem:[#allocation3 + $0x8] sm:$0xff] %v1399
        %1718 = vst [vmem:[#allocation3 + $0x10] sm:$0xff] %v1590
        %1719 = vst [vmem:[#allocation3 + $0x18] sm:$0xff] %v1401
        %1720 = vst [vmem:[#allocation3 + $0x20] sm:$0xff] %v1403
        %1721 = vst [vmem:[#allocation3 + $0x28] sm:$0xff] %v1593
        %1722 = vst [vmem:[#allocation3 + $0x30] sm:$0xff] %v1407
        %1723 = vst [vmem:[#allocation3 + $0x38] sm:$0xff] %v1409
        %1724 = vst [vmem:[#allocation3 + $0x40] sm:$0xff] %v1598
        %1725 = vst [vmem:[#allocation3 + $0x48] sm:$0xff] %v1411
        %1726 = vst [vmem:[#allocation3 + $0x50] sm:$0xff] %v1413
        %1727 = vst [vmem:[#allocation3 + $0x58] sm:$0xff] %v1601
        %1728 = vst [vmem:[#allocation3 + $0x60] sm:$0xff] %v1417
        %1729 = vst [vmem:[#allocation3 + $0x68] sm:$0xff] %v1419
        %1730 = vst [vmem:[#allocation3 + $0x70] sm:$0xff] %v1606
        %1731 = vst [vmem:[#allocation3 + $0x78] sm:$0xff] %v1421
        %1732 = vst [vmem:[#allocation3 + $0x80] sm:$0xff] %v1423
        %1733 = vst [vmem:[#allocation3 + $0x88] sm:$0xff] %v1609
        %1734 = vst [vmem:[#allocation3 + $0x90] sm:$0xff] %v1427
        %1735 = vst [vmem:[#allocation3 + $0x98] sm:$0xff] %v1429
        %1736 = vst [vmem:[#allocation3 + $0xa0] sm:$0xff] %v1614
        %1737 = vst [vmem:[#allocation3 + $0xa8] sm:$0xff] %v1431
        %1738 = vst [vmem:[#allocation3 + $0xb0] sm:$0xff] %v1433
        %1739 = vst [vmem:[#allocation3 + $0xb8] sm:$0xff] %v1617
        %1740 = vst [vmem:[#allocation3 + $0xc0] sm:$0xff] %v1437
        %1741 = vst [vmem:[#allocation3 + $0xc8] sm:$0xff] %v1439
        %1742 = vst [vmem:[#allocation3 + $0xd0] sm:$0xff] %v1622
        %1743 = vst [vmem:[#allocation3 + $0xd8] sm:$0xff] %v1441
        %1744 = vst [vmem:[#allocation3 + $0xe0] sm:$0xff] %v1443
        %1745 = vst [vmem:[#allocation3 + $0xe8] sm:$0xff] %v1625
        %1746 = vst [vmem:[#allocation3 + $0xf0] sm:$0xff] %v1447
        %1747 = vst [vmem:[#allocation3 + $0xf8] sm:$0xff] %v1449
        %1748 = vst [vmem:[#allocation3 + $0x100] sm:$0xff] %v1630
        %1749 = vst [vmem:[#allocation3 + $0x108] sm:$0xff] %v1451
        %1750 = vst [vmem:[#allocation3 + $0x110] sm:$0xff] %v1453
        %1751 = vst [vmem:[#allocation3 + $0x118] sm:$0xff] %v1633
        %1752 = vst [vmem:[#allocation3 + $0x120] sm:$0xff] %v1457
        %1753 = vst [vmem:[#allocation3 + $0x128] sm:$0xff] %v1459
        %1754 = vst [vmem:[#allocation3 + $0x130] sm:$0xff] %v1638
        %1755 = vst [vmem:[#allocation3 + $0x138] sm:$0xff] %v1461
        %1756 = vst [vmem:[#allocation3 + $0x140] sm:$0xff] %v1463
        %1757 = vst [vmem:[#allocation3 + $0x148] sm:$0xff] %v1641
        %1758 = vst [vmem:[#allocation3 + $0x150] sm:$0xff] %v1467
        %1759 = vst [vmem:[#allocation3 + $0x158] sm:$0xff] %v1469
        %1760 = vst [vmem:[#allocation3 + $0x160] sm:$0xff] %v1646
        %1761 = vst [vmem:[#allocation3 + $0x168] sm:$0xff] %v1471
        %1762 = vst [vmem:[#allocation3 + $0x170] sm:$0xff] %v1473
        %1763 = vst [vmem:[#allocation3 + $0x178] sm:$0xff] %v1649
        %1764 = vst [vmem:[#allocation3 + $0x180] sm:$0xff] %v1477
        %1765 = vst [vmem:[#allocation3 + $0x188] sm:$0xff] %v1479
        %1766 = vst [vmem:[#allocation3 + $0x190] sm:$0xff] %v1654
        %1767 = vst [vmem:[#allocation3 + $0x198] sm:$0xff] %v1481
        %1768 = vst [vmem:[#allocation3 + $0x1a0] sm:$0xff] %v1483
        %1769 = vst [vmem:[#allocation3 + $0x1a8] sm:$0xff] %v1657
        %1770 = vst [vmem:[#allocation3 + $0x1b0] sm:$0xff] %v1487
        %1771 = vst [vmem:[#allocation3 + $0x1b8] sm:$0xff] %v1489
        %1772 = vst [vmem:[#allocation3 + $0x1c0] sm:$0xff] %v1662
        %1773 = vst [vmem:[#allocation3 + $0x1c8] sm:$0xff] %v1491
        %1774 = vst [vmem:[#allocation3 + $0x1d0] sm:$0xff] %v1493
        %1775 = vst [vmem:[#allocation3 + $0x1d8] sm:$0xff] %v1665
        %1776 = vst [vmem:[#allocation3 + $0x1e0] sm:$0xff] %v1497
        %1777 = vst [vmem:[#allocation3 + $0x1e8] sm:$0xff] %v1499
        %1778 = vst [vmem:[#allocation3 + $0x1f0] sm:$0xff] %v1670
        %1779 = vst [vmem:[#allocation3 + $0x1f8] sm:$0xff] %v1501
        %1780 = vst [vmem:[#allocation3 + $0x200] sm:$0xff] %v1503
        %1781 = vst [vmem:[#allocation3 + $0x208] sm:$0xff] %v1673
        %1782 = vst [vmem:[#allocation3 + $0x210] sm:$0xff] %v1507
        %1783 = vst [vmem:[#allocation3 + $0x218] sm:$0xff] %v1509
        %1784 = vst [vmem:[#allocation3 + $0x220] sm:$0xff] %v1678
        %1785 = vst [vmem:[#allocation3 + $0x228] sm:$0xff] %v1511
        %1786 = vst [vmem:[#allocation3 + $0x230] sm:$0xff] %v1513
        %1787 = vst [vmem:[#allocation3 + $0x238] sm:$0xff] %v1681
        %1788 = vst [vmem:[#allocation3 + $0x240] sm:$0xff] %v1517
        %1789 = vst [vmem:[#allocation3 + $0x248] sm:$0xff] %v1519
        %1790 = vst [vmem:[#allocation3 + $0x250] sm:$0xff] %v1686
        %1791 = vst [vmem:[#allocation3 + $0x258] sm:$0xff] %v1521
        %1792 = vst [vmem:[#allocation3 + $0x260] sm:$0xff] %v1523
        %1793 = vst [vmem:[#allocation3 + $0x268] sm:$0xff] %v1689
        %1794 = vst [vmem:[#allocation3 + $0x270] sm:$0xff] %v1527
        %1795 = vst [vmem:[#allocation3 + $0x278] sm:$0xff] %v1529
        %1796 = vst [vmem:[#allocation3 + $0x280] sm:$0xff] %v1694
        %1797 = vst [vmem:[#allocation3 + $0x288] sm:$0xff] %v1531
        %1798 = vst [vmem:[#allocation3 + $0x290] sm:$0xff] %v1533
        %1799 = vst [vmem:[#allocation3 + $0x298] sm:$0xff] %v1697
        %1800 = vst [vmem:[#allocation3 + $0x2a0] sm:$0xff] %v1537
        %1801 = vst [vmem:[#allocation3 + $0x2a8] sm:$0xff] %v1539
        %1802 = vst [vmem:[#allocation3 + $0x2b0] sm:$0xff] %v1702
        %1803 = vst [vmem:[#allocation3 + $0x2b8] sm:$0xff] %v1541
        %1804 = vst [vmem:[#allocation3 + $0x2c0] sm:$0xff] %v1543
        %1805 = vst [vmem:[#allocation3 + $0x2c8] sm:$0xff] %v1705
        %1806 = vst [vmem:[#allocation3 + $0x2d0] sm:$0xff] %v1547
        %1807 = vst [vmem:[#allocation3 + $0x2d8] sm:$0xff] %v1549
        %1808 = vst [vmem:[#allocation3 + $0x2e0] sm:$0xff] %v1710
        %1809 = vst [vmem:[#allocation3 + $0x2e8] sm:$0xff] %v1551
        %1810 = vst [vmem:[#allocation3 + $0x2f0] sm:$0xff] %v1553
        %1811 = vst [vmem:[#allocation3 + $0x2f8] sm:$0xff] %v1713
        %v1812 = vld [vmem:[#allocation3] sm:$0xff]
        %v1813 = vld [vmem:[#allocation3 + $0x18] sm:$0xff]
        %v1814 = vld [vmem:[#allocation3 + $0x30] sm:$0xff]
        %v1815 = vld [vmem:[#allocation3 + $0x48] sm:$0xff]
        %v1816 = vld [vmem:[#allocation3 + $0x60] sm:$0xff]
        %v1817 = vld [vmem:[#allocation3 + $0x78] sm:$0xff]
        %v1818 = vld [vmem:[#allocation3 + $0x90] sm:$0xff]
        %v1819 = vld [vmem:[#allocation3 + $0xa8] sm:$0xff]
        %v1820 = vld [vmem:[#allocation3 + $0xc0] sm:$0xff]
        %v1821 = vld [vmem:[#allocation3 + $0xd8] sm:$0xff]
        %v1822 = vld [vmem:[#allocation3 + $0xf0] sm:$0xff]
        %v1823 = vld [vmem:[#allocation3 + $0x108] sm:$0xff]
        %v1824 = vld [vmem:[#allocation3 + $0x120] sm:$0xff]
        %v1825 = vld [vmem:[#allocation3 + $0x138] sm:$0xff]
        %v1826 = vld [vmem:[#allocation3 + $0x150] sm:$0xff]
        %v1827 = vld [vmem:[#allocation3 + $0x168] sm:$0xff]
        %v1828 = vpack.c.bf16 %v1813, %v1812
        %v1829 = vpack.c.bf16 %v1815, %v1814
        %v1830 = vpack.c.bf16 %v1817, %v1816
        %v1831 = vpack.c.bf16 %v1819, %v1818
        %v1832 = vpack.c.bf16 %v1821, %v1820
        %v1833 = vpack.c.bf16 %v1823, %v1822
        %v1834 = vpack.c.bf16 %v1825, %v1824
        %v1835 = vpack.c.bf16 %v1827, %v1826
        %v1836 = vld [vmem:[#allocation3 + $0x8] sm:$0xff]
        %v1837 = vld [vmem:[#allocation3 + $0x20] sm:$0xff]
        %v1838 = vld [vmem:[#allocation3 + $0x38] sm:$0xff]
        %v1839 = vld [vmem:[#allocation3 + $0x50] sm:$0xff]
        %v1840 = vld [vmem:[#allocation3 + $0x68] sm:$0xff]
        %v1841 = vld [vmem:[#allocation3 + $0x80] sm:$0xff]
        %v1842 = vld [vmem:[#allocation3 + $0x98] sm:$0xff]
        %v1843 = vld [vmem:[#allocation3 + $0xb0] sm:$0xff]
        %v1844 = vld [vmem:[#allocation3 + $0xc8] sm:$0xff]
        %v1845 = vld [vmem:[#allocation3 + $0xe0] sm:$0xff]
        %v1846 = vld [vmem:[#allocation3 + $0xf8] sm:$0xff]
        %v1847 = vld [vmem:[#allocation3 + $0x110] sm:$0xff]
        %v1848 = vld [vmem:[#allocation3 + $0x128] sm:$0xff]
        %v1849 = vld [vmem:[#allocation3 + $0x140] sm:$0xff]
        %v1850 = vld [vmem:[#allocation3 + $0x158] sm:$0xff]
        %v1851 = vld [vmem:[#allocation3 + $0x170] sm:$0xff]
        %v1852 = vpack.c.bf16 %v1837, %v1836
        %v1853 = vpack.c.bf16 %v1839, %v1838
        %v1854 = vpack.c.bf16 %v1841, %v1840
        %v1855 = vpack.c.bf16 %v1843, %v1842
        %v1856 = vpack.c.bf16 %v1845, %v1844
        %v1857 = vpack.c.bf16 %v1847, %v1846
        %v1858 = vpack.c.bf16 %v1849, %v1848
        %v1859 = vpack.c.bf16 %v1851, %v1850
        %v1860 = vld [vmem:[#allocation3 + $0x10] sm:$0xff]
        %v1861 = vld [vmem:[#allocation3 + $0x28] sm:$0xff]
        %v1862 = vld [vmem:[#allocation3 + $0x40] sm:$0xff]
        %v1863 = vld [vmem:[#allocation3 + $0x58] sm:$0xff]
        %v1864 = vld [vmem:[#allocation3 + $0x70] sm:$0xff]
        %v1865 = vld [vmem:[#allocation3 + $0x88] sm:$0xff]
        %v1866 = vld [vmem:[#allocation3 + $0xa0] sm:$0xff]
        %v1867 = vld [vmem:[#allocation3 + $0xb8] sm:$0xff]
        %v1868 = vld [vmem:[#allocation3 + $0xd0] sm:$0xff]
        %v1869 = vld [vmem:[#allocation3 + $0xe8] sm:$0xff]
        %v1870 = vld [vmem:[#allocation3 + $0x100] sm:$0xff]
        %v1871 = vld [vmem:[#allocation3 + $0x118] sm:$0xff]
        %v1872 = vld [vmem:[#allocation3 + $0x130] sm:$0xff]
        %v1873 = vld [vmem:[#allocation3 + $0x148] sm:$0xff]
        %v1874 = vld [vmem:[#allocation3 + $0x160] sm:$0xff]
        %v1875 = vld [vmem:[#allocation3 + $0x178] sm:$0xff]
        %v1876 = vpack.c.bf16 %v1861, %v1860
        %v1877 = vpack.c.bf16 %v1863, %v1862
        %v1878 = vpack.c.bf16 %v1865, %v1864
        %v1879 = vpack.c.bf16 %v1867, %v1866
        %v1880 = vpack.c.bf16 %v1869, %v1868
        %v1881 = vpack.c.bf16 %v1871, %v1870
        %v1882 = vpack.c.bf16 %v1873, %v1872
        %v1883 = vpack.c.bf16 %v1875, %v1874
        %v1884 = vld [vmem:[%s6] sm:$0xff]
        %v1885 = vld [vmem:[%s6 + $0x8] sm:$0xff]
        %v1886 = vld [vmem:[%s6 + $0x10] sm:$0xff]
        %v1887 = vld [vmem:[%s6 + $0x18] sm:$0xff]
        %v1888 = vld [vmem:[%s6 + $0x20] sm:$0xff]
        %v1889 = vld [vmem:[%s6 + $0x28] sm:$0xff]
        %v1890 = vld [vmem:[%s6 + $0x30] sm:$0xff]
        %v1891 = vld [vmem:[%s6 + $0x38] sm:$0xff]
        %v1892 = vld [vmem:[%s6 + $0x40] sm:$0xff]
        %v1893 = vld [vmem:[%s6 + $0x48] sm:$0xff]
        %v1894 = vld [vmem:[%s6 + $0x50] sm:$0xff]
        %v1895 = vld [vmem:[%s6 + $0x58] sm:$0xff]
        %v1896 = vld [vmem:[%s6 + $0x60] sm:$0xff]
        %v1897 = vld [vmem:[%s6 + $0x68] sm:$0xff]
        %v1898 = vld [vmem:[%s6 + $0x70] sm:$0xff]
        %v1899 = vld [vmem:[%s6 + $0x78] sm:$0xff]
        %vm1900 = vcmask 261120
        %v1902 = vsel %vm1900, %v1828, 0
        %v1905 = vsel %vm1900, %v1829, 0
        %v1908 = vsel %vm1900, %v1830, 0
        %v1911 = vsel %vm1900, %v1831, 0
        %v1914 = vsel %vm1900, %v1832, 0
        %v1917 = vsel %vm1900, %v1833, 0
        %v1920 = vsel %vm1900, %v1834, 0
        %v1923 = vsel %vm1900, %v1835, 0
        %v1926 = vsel %vm1900, %v1852, 0
        %v1929 = vsel %vm1900, %v1853, 0
        %v1932 = vsel %vm1900, %v1854, 0
        %v1935 = vsel %vm1900, %v1855, 0
        %v1938 = vsel %vm1900, %v1856, 0
        %v1941 = vsel %vm1900, %v1857, 0
        %v1944 = vsel %vm1900, %v1858, 0
        %v1947 = vsel %vm1900, %v1859, 0
        %1949 = vmatprep.subr.bf16.mxu0 0
        %1950 = vmatpush1.bf16.xpose.msra.mxu0 %v1926
        %1951 = vmatprep.subr.bf16.mxu0 0
        %1952 = vmatpush1.bf16.xpose.msra.mxu0 %v1929
        %1953 = vmatprep.subr.bf16.mxu0 0
        %1954 = vmatpush1.bf16.xpose.msra.mxu0 %v1932
        %1955 = vmatprep.subr.bf16.mxu0 0
        %1956 = vmatpush1.bf16.xpose.msra.mxu0 %v1935
        %1957 = vmatprep.subr.bf16.mxu0 0
        %1958 = vmatpush1.bf16.xpose.msra.mxu0 %v1938
        %1959 = vmatprep.subr.bf16.mxu0 0
        %1960 = vmatpush1.bf16.xpose.msra.mxu0 %v1941
        %1961 = vmatprep.subr.bf16.mxu0 0
        %1962 = vmatpush1.bf16.xpose.msra.mxu0 %v1944
        %1963 = vmatprep.subr.bf16.mxu0 0
        %1964 = vmatpush1.bf16.xpose.msra.mxu0 %v1947
        %1965 = vmatprep.subr.bf16.mxu0 0
        %1966 = vmatpush1.bf16.xpose.msra.mxu0 0
        %1967 = vmatprep.subr.bf16.mxu0 0
        %1968 = vmatpush1.bf16.xpose.msra.mxu0 0
        %1969 = vmatprep.subr.bf16.mxu0 0
        %1970 = vmatpush1.bf16.xpose.msra.mxu0 0
        %1971 = vmatprep.subr.bf16.mxu0 0
        %1972 = vmatpush1.bf16.xpose.msra.mxu0 0
        %1973 = vmatprep.subr.bf16.mxu0 0
        %1974 = vmatpush1.bf16.xpose.msra.mxu0 0
        %1975 = vmatprep.subr.bf16.mxu0 0
        %1976 = vmatpush1.bf16.xpose.msra.mxu0 0
        %1977 = vmatprep.subr.bf16.mxu0 0
        %1978 = vmatpush1.bf16.xpose.msra.mxu0 0
        %1979 = vmatprep.subr.bf16.mxu0 0
        %1980 = vmatpush1.bf16.xpose.msra.mxu0 0
        %1981 = vmatprep.mubr.bf16.mxu0 0
        %1982 = vmatmul.mubr.bf16.gmra.mrb[0].mxu0 %v1902
        %v1983 = vpop.f32.mrb[0].mxu0
        %v1984 = vadd.f32 %v1884, %v1983
        %v1985 = vpop.f32.mrb[0].mxu0
        %v1986 = vpop.f32.mrb[0].mxu0
        %v1987 = vadd.f32 %v1885, %v1986
        %v1988 = vpop.f32.mrb[0].mxu0
        %1989 = vmatprep.mubr.bf16.mxu0 0
        %1990 = vmatmul.mubr.bf16.gmra.mrb[0].mxu0 %v1905
        %v1991 = vpop.f32.mrb[0].mxu0
        %v1992 = vadd.f32 %v1886, %v1991
        %v1993 = vpop.f32.mrb[0].mxu0
        %v1994 = vpop.f32.mrb[0].mxu0
        %v1995 = vadd.f32 %v1887, %v1994
        %v1996 = vpop.f32.mrb[0].mxu0
        %1997 = vmatprep.mubr.bf16.mxu0 0
        %1998 = vmatmul.mubr.bf16.gmra.mrb[0].mxu0 %v1908
        %v1999 = vpop.f32.mrb[0].mxu0
        %v2000 = vadd.f32 %v1888, %v1999
        %v2001 = vpop.f32.mrb[0].mxu0
        %v2002 = vpop.f32.mrb[0].mxu0
        %v2003 = vadd.f32 %v1889, %v2002
        %v2004 = vpop.f32.mrb[0].mxu0
        %2005 = vmatprep.mubr.bf16.mxu0 0
        %2006 = vmatmul.mubr.bf16.gmra.mrb[0].mxu0 %v1911
        %v2007 = vpop.f32.mrb[0].mxu0
        %v2008 = vadd.f32 %v1890, %v2007
        %v2009 = vpop.f32.mrb[0].mxu0
        %v2010 = vpop.f32.mrb[0].mxu0
        %v2011 = vadd.f32 %v1891, %v2010
        %v2012 = vpop.f32.mrb[0].mxu0
        %2013 = vmatprep.mubr.bf16.mxu0 0
        %2014 = vmatmul.mubr.bf16.gmra.mrb[0].mxu0 %v1914
        %v2015 = vpop.f32.mrb[0].mxu0
        %v2016 = vadd.f32 %v1892, %v2015
        %v2017 = vpop.f32.mrb[0].mxu0
        %v2018 = vpop.f32.mrb[0].mxu0
        %v2019 = vadd.f32 %v1893, %v2018
        %v2020 = vpop.f32.mrb[0].mxu0
        %2021 = vmatprep.mubr.bf16.mxu0 0
        %2022 = vmatmul.mubr.bf16.gmra.mrb[0].mxu0 %v1917
        %v2023 = vpop.f32.mrb[0].mxu0
        %v2024 = vadd.f32 %v1894, %v2023
        %v2025 = vpop.f32.mrb[0].mxu0
        %v2026 = vpop.f32.mrb[0].mxu0
        %v2027 = vadd.f32 %v1895, %v2026
        %v2028 = vpop.f32.mrb[0].mxu0
        %2029 = vmatprep.mubr.bf16.mxu0 0
        %2030 = vmatmul.mubr.bf16.gmra.mrb[0].mxu0 %v1920
        %v2031 = vpop.f32.mrb[0].mxu0
        %v2032 = vadd.f32 %v1896, %v2031
        %v2033 = vpop.f32.mrb[0].mxu0
        %v2034 = vpop.f32.mrb[0].mxu0
        %v2035 = vadd.f32 %v1897, %v2034
        %v2036 = vpop.f32.mrb[0].mxu0
        %2037 = vmatprep.mubr.bf16.mxu0 0
        %2038 = vmatmul.mubr.bf16.gmra.mrb[0].mxu0 %v1923
        %v2039 = vpop.f32.mrb[0].mxu0
        %v2040 = vadd.f32 %v1898, %v2039
        %v2041 = vpop.f32.mrb[0].mxu0
        %v2042 = vpop.f32.mrb[0].mxu0
        %v2043 = vadd.f32 %v1899, %v2042
        %v2044 = vpop.f32.mrb[0].mxu0
        %2045 = vdwg.mxu0
        %2046 = vmax.xlane.f32.xlu0 %v1984
        %v2047 = vpop.xlane.xlu0 %2046
        %2048 = vmax.xlane.f32.xlu0 %v1987
        %v2049 = vpop.xlane.xlu0 %2048
        %2050 = vmax.xlane.f32.xlu0 %v1992
        %v2051 = vpop.xlane.xlu0 %2050
        %2052 = vmax.xlane.f32.xlu0 %v1995
        %v2053 = vpop.xlane.xlu0 %2052
        %2054 = vmax.xlane.f32.xlu0 %v2000
        %v2055 = vpop.xlane.xlu0 %2054
        %2056 = vmax.xlane.f32.xlu0 %v2003
        %v2057 = vpop.xlane.xlu0 %2056
        %2058 = vmax.xlane.f32.xlu0 %v2008
        %v2059 = vpop.xlane.xlu0 %2058
        %2060 = vmax.xlane.f32.xlu0 %v2011
        %v2061 = vpop.xlane.xlu0 %2060
        %2062 = vmax.xlane.f32.xlu0 %v2016
        %v2063 = vpop.xlane.xlu0 %2062
        %2064 = vmax.xlane.f32.xlu0 %v2019
        %v2065 = vpop.xlane.xlu0 %2064
        %2066 = vmax.xlane.f32.xlu0 %v2024
        %v2067 = vpop.xlane.xlu0 %2066
        %2068 = vmax.xlane.f32.xlu0 %v2027
        %v2069 = vpop.xlane.xlu0 %2068
        %2070 = vmax.xlane.f32.xlu0 %v2032
        %v2071 = vpop.xlane.xlu0 %2070
        %2072 = vmax.xlane.f32.xlu0 %v2035
        %v2073 = vpop.xlane.xlu0 %2072
        %2074 = vmax.xlane.f32.xlu0 %v2040
        %v2075 = vpop.xlane.xlu0 %2074
        %2076 = vmax.xlane.f32.xlu0 %v2043
        %v2077 = vpop.xlane.xlu0 %2076
        %v2078 = vsub.f32 %v1984, %v2047
        %v2079 = vsub.f32 %v1987, %v2049
        %v2080 = vsub.f32 %v1992, %v2051
        %v2081 = vsub.f32 %v1995, %v2053
        %v2082 = vsub.f32 %v2000, %v2055
        %v2083 = vsub.f32 %v2003, %v2057
        %v2084 = vsub.f32 %v2008, %v2059
        %v2085 = vsub.f32 %v2011, %v2061
        %v2086 = vsub.f32 %v2016, %v2063
        %v2087 = vsub.f32 %v2019, %v2065
        %v2088 = vsub.f32 %v2024, %v2067
        %v2089 = vsub.f32 %v2027, %v2069
        %v2090 = vsub.f32 %v2032, %v2071
        %v2091 = vsub.f32 %v2035, %v2073
        %v2092 = vsub.f32 %v2040, %v2075
        %v2093 = vsub.f32 %v2043, %v2077
        %v2094 = vmul.f32 %v2078, 1.442695
        %v2095 = vpow.pop %v2094
        %v2096 = vmul.f32 %v2079, 1.442695
        %v2097 = vpow.pop %v2096
        %v2098 = vmul.f32 %v2080, 1.442695
        %v2099 = vpow.pop %v2098
        %v2100 = vmul.f32 %v2081, 1.442695
        %v2101 = vpow.pop %v2100
        %v2102 = vmul.f32 %v2082, 1.442695
        %v2103 = vpow.pop %v2102
        %v2104 = vmul.f32 %v2083, 1.442695
        %v2105 = vpow.pop %v2104
        %v2106 = vmul.f32 %v2084, 1.442695
        %v2107 = vpow.pop %v2106
        %v2108 = vmul.f32 %v2085, 1.442695
        %v2109 = vpow.pop %v2108
        %v2110 = vmul.f32 %v2086, 1.442695
        %v2111 = vpow.pop %v2110
        %v2112 = vmul.f32 %v2087, 1.442695
        %v2113 = vpow.pop %v2112
        %v2114 = vmul.f32 %v2088, 1.442695
        %v2115 = vpow.pop %v2114
        %v2116 = vmul.f32 %v2089, 1.442695
        %v2117 = vpow.pop %v2116
        %v2118 = vmul.f32 %v2090, 1.442695
        %v2119 = vpow.pop %v2118
        %v2120 = vmul.f32 %v2091, 1.442695
        %v2121 = vpow.pop %v2120
        %v2122 = vmul.f32 %v2092, 1.442695
        %v2123 = vpow.pop %v2122
        %v2124 = vmul.f32 %v2093, 1.442695
        %v2125 = vpow.pop %v2124
        %2126 = vadd.xlane.f32.xlu0 %v2095
        %v2127 = vpop.xlane.xlu0 %2126
        %2128 = vadd.xlane.f32.xlu0 %v2097
        %v2129 = vpop.xlane.xlu0 %2128
        %2130 = vadd.xlane.f32.xlu0 %v2099
        %v2131 = vpop.xlane.xlu0 %2130
        %2132 = vadd.xlane.f32.xlu0 %v2101
        %v2133 = vpop.xlane.xlu0 %2132
        %2134 = vadd.xlane.f32.xlu0 %v2103
        %v2135 = vpop.xlane.xlu0 %2134
        %2136 = vadd.xlane.f32.xlu0 %v2105
        %v2137 = vpop.xlane.xlu0 %2136
        %2138 = vadd.xlane.f32.xlu0 %v2107
        %v2139 = vpop.xlane.xlu0 %2138
        %2140 = vadd.xlane.f32.xlu0 %v2109
        %v2141 = vpop.xlane.xlu0 %2140
        %2142 = vadd.xlane.f32.xlu0 %v2111
        %v2143 = vpop.xlane.xlu0 %2142
        %2144 = vadd.xlane.f32.xlu0 %v2113
        %v2145 = vpop.xlane.xlu0 %2144
        %2146 = vadd.xlane.f32.xlu0 %v2115
        %v2147 = vpop.xlane.xlu0 %2146
        %2148 = vadd.xlane.f32.xlu0 %v2117
        %v2149 = vpop.xlane.xlu0 %2148
        %2150 = vadd.xlane.f32.xlu0 %v2119
        %v2151 = vpop.xlane.xlu0 %2150
        %2152 = vadd.xlane.f32.xlu0 %v2121
        %v2153 = vpop.xlane.xlu0 %2152
        %2154 = vadd.xlane.f32.xlu0 %v2123
        %v2155 = vpop.xlane.xlu0 %2154
        %2156 = vadd.xlane.f32.xlu0 %v2125
        %v2157 = vpop.xlane.xlu0 %2156
        %v2158 = vrcp.pop %v2127
        %v2159 = vrcp.pop %v2129
        %v2160 = vrcp.pop %v2131
        %v2161 = vrcp.pop %v2133
        %v2162 = vrcp.pop %v2135
        %v2163 = vrcp.pop %v2137
        %v2164 = vrcp.pop %v2139
        %v2165 = vrcp.pop %v2141
        %v2166 = vrcp.pop %v2143
        %v2167 = vrcp.pop %v2145
        %v2168 = vrcp.pop %v2147
        %v2169 = vrcp.pop %v2149
        %v2170 = vrcp.pop %v2151
        %v2171 = vrcp.pop %v2153
        %v2172 = vrcp.pop %v2155
        %v2173 = vrcp.pop %v2157
        %v2174 = vmul.f32 %v2095, %v2158
        %v2175 = vmul.f32 %v2097, %v2159
        %v2176 = vmul.f32 %v2099, %v2160
        %v2177 = vmul.f32 %v2101, %v2161
        %v2178 = vmul.f32 %v2103, %v2162
        %v2179 = vmul.f32 %v2105, %v2163
        %v2180 = vmul.f32 %v2107, %v2164
        %v2181 = vmul.f32 %v2109, %v2165
        %v2182 = vmul.f32 %v2111, %v2166
        %v2183 = vmul.f32 %v2113, %v2167
        %v2184 = vmul.f32 %v2115, %v2168
        %v2185 = vmul.f32 %v2117, %v2169
        %v2186 = vmul.f32 %v2119, %v2170
        %v2187 = vmul.f32 %v2121, %v2171
        %v2188 = vmul.f32 %v2123, %v2172
        %v2189 = vmul.f32 %v2125, %v2173
        %v2190 = vpack.c.bf16 %v2175, %v2174
        %v2191 = vpack.c.bf16 %v2177, %v2176
        %v2192 = vpack.c.bf16 %v2179, %v2178
        %v2193 = vpack.c.bf16 %v2181, %v2180
        %v2194 = vpack.c.bf16 %v2183, %v2182
        %v2195 = vpack.c.bf16 %v2185, %v2184
        %v2196 = vpack.c.bf16 %v2187, %v2186
        %v2197 = vpack.c.bf16 %v2189, %v2188
        %2198 = vmatprep.subr.bf16.mxu0 0
        %2199 = vmatpush1.bf16.msra.mxu0 %v1876
        %2200 = vmatprep.subr.bf16.mxu0 0
        %2201 = vmatpush1.bf16.msra.mxu0 %v1877
        %2202 = vmatprep.subr.bf16.mxu0 0
        %2203 = vmatpush1.bf16.msra.mxu0 %v1878
        %2204 = vmatprep.subr.bf16.mxu0 0
        %2205 = vmatpush1.bf16.msra.mxu0 %v1879
        %2206 = vmatprep.subr.bf16.mxu0 0
        %2207 = vmatpush1.bf16.msra.mxu0 %v1880
        %2208 = vmatprep.subr.bf16.mxu0 0
        %2209 = vmatpush1.bf16.msra.mxu0 %v1881
        %2210 = vmatprep.subr.bf16.mxu0 0
        %2211 = vmatpush1.bf16.msra.mxu0 %v1882
        %2212 = vmatprep.subr.bf16.mxu0 0
        %2213 = vmatpush1.bf16.msra.mxu0 %v1883
        %2214 = vmatprep.subr.bf16.mxu0 0
        %2215 = vmatpush1.bf16.msra.mxu0 0
        %2216 = vmatprep.subr.bf16.mxu0 0
        %2217 = vmatpush1.bf16.msra.mxu0 0
        %2218 = vmatprep.subr.bf16.mxu0 0
        %2219 = vmatpush1.bf16.msra.mxu0 0
        %2220 = vmatprep.subr.bf16.mxu0 0
        %2221 = vmatpush1.bf16.msra.mxu0 0
        %2222 = vmatprep.subr.bf16.mxu0 0
        %2223 = vmatpush1.bf16.msra.mxu0 0
        %2224 = vmatprep.subr.bf16.mxu0 0
        %2225 = vmatpush1.bf16.msra.mxu0 0
        %2226 = vmatprep.subr.bf16.mxu0 0
        %2227 = vmatpush1.bf16.msra.mxu0 0
        %2228 = vmatprep.subr.bf16.mxu0 0
        %2229 = vmatpush1.bf16.msra.mxu0 0
        %2230 = vmatprep.mubr.bf16.mxu0 0
        %2231 = vmatmul.mubr.bf16.gmra.mrb[0].mxu0 %v2190
        %v2232 = vpop.f32.mrb[0].mxu0
        %v2233 = vadd.f32 0.0, %v2232
        %v2234 = vpop.f32.mrb[0].mxu0
        %v2235 = vpop.f32.mrb[0].mxu0
        %v2236 = vadd.f32 0.0, %v2235
        %v2237 = vpop.f32.mrb[0].mxu0
        %2238 = vmatprep.mubr.bf16.mxu0 0
        %2239 = vmatmul.mubr.bf16.gmra.mrb[0].mxu0 %v2191
        %v2240 = vpop.f32.mrb[0].mxu0
        %v2241 = vadd.f32 0.0, %v2240
        %v2242 = vpop.f32.mrb[0].mxu0
        %v2243 = vpop.f32.mrb[0].mxu0
        %v2244 = vadd.f32 0.0, %v2243
        %v2245 = vpop.f32.mrb[0].mxu0
        %2246 = vmatprep.mubr.bf16.mxu0 0
        %2247 = vmatmul.mubr.bf16.gmra.mrb[0].mxu0 %v2192
        %v2248 = vpop.f32.mrb[0].mxu0
        %v2249 = vadd.f32 0.0, %v2248
        %v2250 = vpop.f32.mrb[0].mxu0
        %v2251 = vpop.f32.mrb[0].mxu0
        %v2252 = vadd.f32 0.0, %v2251
        %v2253 = vpop.f32.mrb[0].mxu0
        %2254 = vmatprep.mubr.bf16.mxu0 0
        %2255 = vmatmul.mubr.bf16.gmra.mrb[0].mxu0 %v2193
        %v2256 = vpop.f32.mrb[0].mxu0
        %v2257 = vadd.f32 0.0, %v2256
        %v2258 = vpop.f32.mrb[0].mxu0
        %v2259 = vpop.f32.mrb[0].mxu0
        %v2260 = vadd.f32 0.0, %v2259
        %v2261 = vpop.f32.mrb[0].mxu0
        %2262 = vmatprep.mubr.bf16.mxu0 0
        %2263 = vmatmul.mubr.bf16.gmra.mrb[0].mxu0 %v2194
        %v2264 = vpop.f32.mrb[0].mxu0
        %v2265 = vadd.f32 0.0, %v2264
        %v2266 = vpop.f32.mrb[0].mxu0
        %v2267 = vpop.f32.mrb[0].mxu0
        %v2268 = vadd.f32 0.0, %v2267
        %v2269 = vpop.f32.mrb[0].mxu0
        %2270 = vmatprep.mubr.bf16.mxu0 0
        %2271 = vmatmul.mubr.bf16.gmra.mrb[0].mxu0 %v2195
        %v2272 = vpop.f32.mrb[0].mxu0
        %v2273 = vadd.f32 0.0, %v2272
        %v2274 = vpop.f32.mrb[0].mxu0
        %v2275 = vpop.f32.mrb[0].mxu0
        %v2276 = vadd.f32 0.0, %v2275
        %v2277 = vpop.f32.mrb[0].mxu0
        %2278 = vmatprep.mubr.bf16.mxu0 0
        %2279 = vmatmul.mubr.bf16.gmra.mrb[0].mxu0 %v2196
        %v2280 = vpop.f32.mrb[0].mxu0
        %v2281 = vadd.f32 0.0, %v2280
        %v2282 = vpop.f32.mrb[0].mxu0
        %v2283 = vpop.f32.mrb[0].mxu0
        %v2284 = vadd.f32 0.0, %v2283
        %v2285 = vpop.f32.mrb[0].mxu0
        %2286 = vmatprep.mubr.bf16.mxu0 0
        %2287 = vmatmul.mubr.bf16.gmra.mrb[0].mxu0 %v2197
        %v2288 = vpop.f32.mrb[0].mxu0
        %v2289 = vadd.f32 0.0, %v2288
        %v2290 = vpop.f32.mrb[0].mxu0
        %v2291 = vpop.f32.mrb[0].mxu0
        %v2292 = vadd.f32 0.0, %v2291
        %v2293 = vpop.f32.mrb[0].mxu0
        %2294 = vdwg.mxu0
        %2295 = vst.msk [vmem:[#allocation4] sm:$0xff] %vm1900, %v2233
        %2296 = vst.msk [vmem:[#allocation4 + $0x8] sm:$0xff] %vm1900, %v2236
        %2297 = vst.msk [vmem:[#allocation4 + $0x10] sm:$0xff] %vm1900, %v2241
        %2298 = vst.msk [vmem:[#allocation4 + $0x18] sm:$0xff] %vm1900, %v2244
        %2299 = vst.msk [vmem:[#allocation4 + $0x20] sm:$0xff] %vm1900, %v2249
        %2300 = vst.msk [vmem:[#allocation4 + $0x28] sm:$0xff] %vm1900, %v2252
        %2301 = vst.msk [vmem:[#allocation4 + $0x30] sm:$0xff] %vm1900, %v2257
        %2302 = vst.msk [vmem:[#allocation4 + $0x38] sm:$0xff] %vm1900, %v2260
        %2303 = vst.msk [vmem:[#allocation4 + $0x40] sm:$0xff] %vm1900, %v2265
        %2304 = vst.msk [vmem:[#allocation4 + $0x48] sm:$0xff] %vm1900, %v2268
        %2305 = vst.msk [vmem:[#allocation4 + $0x50] sm:$0xff] %vm1900, %v2273
        %2306 = vst.msk [vmem:[#allocation4 + $0x58] sm:$0xff] %vm1900, %v2276
        %2307 = vst.msk [vmem:[#allocation4 + $0x60] sm:$0xff] %vm1900, %v2281
        %2308 = vst.msk [vmem:[#allocation4 + $0x68] sm:$0xff] %vm1900, %v2284
        %2309 = vst.msk [vmem:[#allocation4 + $0x70] sm:$0xff] %vm1900, %v2289
        %2310 = vst.msk [vmem:[#allocation4 + $0x78] sm:$0xff] %vm1900, %v2292
        %v2311 = vld [vmem:[#allocation3] sm:$0xff]
        %v2312 = vld [vmem:[#allocation3 + $0x18] sm:$0xff]
        %v2313 = vld [vmem:[#allocation3 + $0x30] sm:$0xff]
        %v2314 = vld [vmem:[#allocation3 + $0x48] sm:$0xff]
        %v2315 = vld [vmem:[#allocation3 + $0x60] sm:$0xff]
        %v2316 = vld [vmem:[#allocation3 + $0x78] sm:$0xff]
        %v2317 = vld [vmem:[#allocation3 + $0x90] sm:$0xff]
        %v2318 = vld [vmem:[#allocation3 + $0xa8] sm:$0xff]
        %v2319 = vld [vmem:[#allocation3 + $0xc0] sm:$0xff]
        %v2320 = vld [vmem:[#allocation3 + $0xd8] sm:$0xff]
        %v2321 = vld [vmem:[#allocation3 + $0xf0] sm:$0xff]
        %v2322 = vld [vmem:[#allocation3 + $0x108] sm:$0xff]
        %v2323 = vld [vmem:[#allocation3 + $0x120] sm:$0xff]
        %v2324 = vld [vmem:[#allocation3 + $0x138] sm:$0xff]
        %v2325 = vld [vmem:[#allocation3 + $0x150] sm:$0xff]
        %v2326 = vld [vmem:[#allocation3 + $0x168] sm:$0xff]
        %v2327 = vpack.c.bf16 %v2312, %v2311
        %v2328 = vpack.c.bf16 %v2314, %v2313
        %v2329 = vpack.c.bf16 %v2316, %v2315
        %v2330 = vpack.c.bf16 %v2318, %v2317
        %v2331 = vpack.c.bf16 %v2320, %v2319
        %v2332 = vpack.c.bf16 %v2322, %v2321
        %v2333 = vpack.c.bf16 %v2324, %v2323
        %v2334 = vpack.c.bf16 %v2326, %v2325
        %v2335 = vld [vmem:[#allocation3 + $0x8] sm:$0xff]
        %v2336 = vld [vmem:[#allocation3 + $0x20] sm:$0xff]
        %v2337 = vld [vmem:[#allocation3 + $0x38] sm:$0xff]
        %v2338 = vld [vmem:[#allocation3 + $0x50] sm:$0xff]
        %v2339 = vld [vmem:[#allocation3 + $0x68] sm:$0xff]
        %v2340 = vld [vmem:[#allocation3 + $0x80] sm:$0xff]
        %v2341 = vld [vmem:[#allocation3 + $0x98] sm:$0xff]
        %v2342 = vld [vmem:[#allocation3 + $0xb0] sm:$0xff]
        %v2343 = vld [vmem:[#allocation3 + $0xc8] sm:$0xff]
        %v2344 = vld [vmem:[#allocation3 + $0xe0] sm:$0xff]
        %v2345 = vld [vmem:[#allocation3 + $0xf8] sm:$0xff]
        %v2346 = vld [vmem:[#allocation3 + $0x110] sm:$0xff]
        %v2347 = vld [vmem:[#allocation3 + $0x128] sm:$0xff]
        %v2348 = vld [vmem:[#allocation3 + $0x140] sm:$0xff]
        %v2349 = vld [vmem:[#allocation3 + $0x158] sm:$0xff]
        %v2350 = vld [vmem:[#allocation3 + $0x170] sm:$0xff]
        %v2351 = vpack.c.bf16 %v2336, %v2335
        %v2352 = vpack.c.bf16 %v2338, %v2337
        %v2353 = vpack.c.bf16 %v2340, %v2339
        %v2354 = vpack.c.bf16 %v2342, %v2341
        %v2355 = vpack.c.bf16 %v2344, %v2343
        %v2356 = vpack.c.bf16 %v2346, %v2345
        %v2357 = vpack.c.bf16 %v2348, %v2347
        %v2358 = vpack.c.bf16 %v2350, %v2349
        %v2359 = vld [vmem:[#allocation3 + $0x10] sm:$0xff]
        %v2360 = vld [vmem:[#allocation3 + $0x28] sm:$0xff]
        %v2361 = vld [vmem:[#allocation3 + $0x40] sm:$0xff]
        %v2362 = vld [vmem:[#allocation3 + $0x58] sm:$0xff]
        %v2363 = vld [vmem:[#allocation3 + $0x70] sm:$0xff]
        %v2364 = vld [vmem:[#allocation3 + $0x88] sm:$0xff]
        %v2365 = vld [vmem:[#allocation3 + $0xa0] sm:$0xff]
        %v2366 = vld [vmem:[#allocation3 + $0xb8] sm:$0xff]
        %v2367 = vld [vmem:[#allocation3 + $0xd0] sm:$0xff]
        %v2368 = vld [vmem:[#allocation3 + $0xe8] sm:$0xff]
        %v2369 = vld [vmem:[#allocation3 + $0x100] sm:$0xff]
        %v2370 = vld [vmem:[#allocation3 + $0x118] sm:$0xff]
        %v2371 = vld [vmem:[#allocation3 + $0x130] sm:$0xff]
        %v2372 = vld [vmem:[#allocation3 + $0x148] sm:$0xff]
        %v2373 = vld [vmem:[#allocation3 + $0x160] sm:$0xff]
        %v2374 = vld [vmem:[#allocation3 + $0x178] sm:$0xff]
        %v2375 = vpack.c.bf16 %v2360, %v2359
        %v2376 = vpack.c.bf16 %v2362, %v2361
        %v2377 = vpack.c.bf16 %v2364, %v2363
        %v2378 = vpack.c.bf16 %v2366, %v2365
        %v2379 = vpack.c.bf16 %v2368, %v2367
        %v2380 = vpack.c.bf16 %v2370, %v2369
        %v2381 = vpack.c.bf16 %v2372, %v2371
        %v2382 = vpack.c.bf16 %v2374, %v2373
        %v2383 = vld [vmem:[%s6] sm:$0xff]
        %v2384 = vld [vmem:[%s6 + $0x8] sm:$0xff]
        %v2385 = vld [vmem:[%s6 + $0x10] sm:$0xff]
        %v2386 = vld [vmem:[%s6 + $0x18] sm:$0xff]
        %v2387 = vld [vmem:[%s6 + $0x20] sm:$0xff]
        %v2388 = vld [vmem:[%s6 + $0x28] sm:$0xff]
        %v2389 = vld [vmem:[%s6 + $0x30] sm:$0xff]
        %v2390 = vld [vmem:[%s6 + $0x38] sm:$0xff]
        %v2391 = vld [vmem:[%s6 + $0x40] sm:$0xff]
        %v2392 = vld [vmem:[%s6 + $0x48] sm:$0xff]
        %v2393 = vld [vmem:[%s6 + $0x50] sm:$0xff]
        %v2394 = vld [vmem:[%s6 + $0x58] sm:$0xff]
        %v2395 = vld [vmem:[%s6 + $0x60] sm:$0xff]
        %v2396 = vld [vmem:[%s6 + $0x68] sm:$0xff]
        %v2397 = vld [vmem:[%s6 + $0x70] sm:$0xff]
        %v2398 = vld [vmem:[%s6 + $0x78] sm:$0xff]
        %2407 = vrot.lane.b32.xlu0 %v2327, 96
        %v2408 = vpop.permute.xlu0 %2407
        %2409 = vrot.lane.b32.xlu0 %v2328, 96
        %v2410 = vpop.permute.xlu0 %2409
        %2411 = vrot.lane.b32.xlu0 %v2329, 96
        %v2412 = vpop.permute.xlu0 %2411
        %2413 = vrot.lane.b32.xlu0 %v2330, 96
        %v2414 = vpop.permute.xlu0 %2413
        %2415 = vrot.lane.b32.xlu0 %v2331, 96
        %v2416 = vpop.permute.xlu0 %2415
        %2417 = vrot.lane.b32.xlu0 %v2332, 96
        %v2418 = vpop.permute.xlu0 %2417
        %2419 = vrot.lane.b32.xlu0 %v2333, 96
        %v2420 = vpop.permute.xlu0 %2419
        %2421 = vrot.lane.b32.xlu0 %v2334, 96
        %v2422 = vpop.permute.xlu0 %2421
        %2431 = vrot.lane.b32.xlu0 %v2351, 96
        %v2432 = vpop.permute.xlu0 %2431
        %2433 = vrot.lane.b32.xlu0 %v2352, 96
        %v2434 = vpop.permute.xlu0 %2433
        %2435 = vrot.lane.b32.xlu0 %v2353, 96
        %v2436 = vpop.permute.xlu0 %2435
        %2437 = vrot.lane.b32.xlu0 %v2354, 96
        %v2438 = vpop.permute.xlu0 %2437
        %2439 = vrot.lane.b32.xlu0 %v2355, 96
        %v2440 = vpop.permute.xlu0 %2439
        %2441 = vrot.lane.b32.xlu0 %v2356, 96
        %v2442 = vpop.permute.xlu0 %2441
        %2443 = vrot.lane.b32.xlu0 %v2357, 96
        %v2444 = vpop.permute.xlu0 %2443
        %2445 = vrot.lane.b32.xlu0 %v2358, 96
        %v2446 = vpop.permute.xlu0 %2445
        %v2448 = vsel %vm1900, %v2408, 0
        %v2451 = vsel %vm1900, %v2410, 0
        %v2454 = vsel %vm1900, %v2412, 0
        %v2457 = vsel %vm1900, %v2414, 0
        %v2460 = vsel %vm1900, %v2416, 0
        %v2463 = vsel %vm1900, %v2418, 0
        %v2466 = vsel %vm1900, %v2420, 0
        %v2469 = vsel %vm1900, %v2422, 0
        %v2472 = vsel %vm1900, %v2432, 0
        %v2475 = vsel %vm1900, %v2434, 0
        %v2478 = vsel %vm1900, %v2436, 0
        %v2481 = vsel %vm1900, %v2438, 0
        %v2484 = vsel %vm1900, %v2440, 0
        %v2487 = vsel %vm1900, %v2442, 0
        %v2490 = vsel %vm1900, %v2444, 0
        %v2493 = vsel %vm1900, %v2446, 0
        %2495 = vmatprep.subr.bf16.mxu0 0
        %2496 = vmatpush1.bf16.xpose.msra.mxu0 %v2472
        %2497 = vmatprep.subr.bf16.mxu0 0
        %2498 = vmatpush1.bf16.xpose.msra.mxu0 %v2475
        %2499 = vmatprep.subr.bf16.mxu0 0
        %2500 = vmatpush1.bf16.xpose.msra.mxu0 %v2478
        %2501 = vmatprep.subr.bf16.mxu0 0
        %2502 = vmatpush1.bf16.xpose.msra.mxu0 %v2481
        %2503 = vmatprep.subr.bf16.mxu0 0
        %2504 = vmatpush1.bf16.xpose.msra.mxu0 %v2484
        %2505 = vmatprep.subr.bf16.mxu0 0
        %2506 = vmatpush1.bf16.xpose.msra.mxu0 %v2487
        %2507 = vmatprep.subr.bf16.mxu0 0
        %2508 = vmatpush1.bf16.xpose.msra.mxu0 %v2490
        %2509 = vmatprep.subr.bf16.mxu0 0
        %2510 = vmatpush1.bf16.xpose.msra.mxu0 %v2493
        %2511 = vmatprep.subr.bf16.mxu0 0
        %2512 = vmatpush1.bf16.xpose.msra.mxu0 0
        %2513 = vmatprep.subr.bf16.mxu0 0
        %2514 = vmatpush1.bf16.xpose.msra.mxu0 0
        %2515 = vmatprep.subr.bf16.mxu0 0
        %2516 = vmatpush1.bf16.xpose.msra.mxu0 0
        %2517 = vmatprep.subr.bf16.mxu0 0
        %2518 = vmatpush1.bf16.xpose.msra.mxu0 0
        %2519 = vmatprep.subr.bf16.mxu0 0
        %2520 = vmatpush1.bf16.xpose.msra.mxu0 0
        %2521 = vmatprep.subr.bf16.mxu0 0
        %2522 = vmatpush1.bf16.xpose.msra.mxu0 0
        %2523 = vmatprep.subr.bf16.mxu0 0
        %2524 = vmatpush1.bf16.xpose.msra.mxu0 0
        %2525 = vmatprep.subr.bf16.mxu0 0
        %2526 = vmatpush1.bf16.xpose.msra.mxu0 0
        %2527 = vmatprep.mubr.bf16.mxu0 0
        %2528 = vmatmul.mubr.bf16.gmra.mrb[0].mxu0 %v2448
        %v2529 = vpop.f32.mrb[0].mxu0
        %v2530 = vadd.f32 %v2383, %v2529
        %v2531 = vpop.f32.mrb[0].mxu0
        %v2532 = vpop.f32.mrb[0].mxu0
        %v2533 = vadd.f32 %v2384, %v2532
        %v2534 = vpop.f32.mrb[0].mxu0
        %2535 = vmatprep.mubr.bf16.mxu0 0
        %2536 = vmatmul.mubr.bf16.gmra.mrb[0].mxu0 %v2451
        %v2537 = vpop.f32.mrb[0].mxu0
        %v2538 = vadd.f32 %v2385, %v2537
        %v2539 = vpop.f32.mrb[0].mxu0
        %v2540 = vpop.f32.mrb[0].mxu0
        %v2541 = vadd.f32 %v2386, %v2540
        %v2542 = vpop.f32.mrb[0].mxu0
        %2543 = vmatprep.mubr.bf16.mxu0 0
        %2544 = vmatmul.mubr.bf16.gmra.mrb[0].mxu0 %v2454
        %v2545 = vpop.f32.mrb[0].mxu0
        %v2546 = vadd.f32 %v2387, %v2545
        %v2547 = vpop.f32.mrb[0].mxu0
        %v2548 = vpop.f32.mrb[0].mxu0
        %v2549 = vadd.f32 %v2388, %v2548
        %v2550 = vpop.f32.mrb[0].mxu0
        %2551 = vmatprep.mubr.bf16.mxu0 0
        %2552 = vmatmul.mubr.bf16.gmra.mrb[0].mxu0 %v2457
        %v2553 = vpop.f32.mrb[0].mxu0
        %v2554 = vadd.f32 %v2389, %v2553
        %v2555 = vpop.f32.mrb[0].mxu0
        %v2556 = vpop.f32.mrb[0].mxu0
        %v2557 = vadd.f32 %v2390, %v2556
        %v2558 = vpop.f32.mrb[0].mxu0
        %2559 = vmatprep.mubr.bf16.mxu0 0
        %2560 = vmatmul.mubr.bf16.gmra.mrb[0].mxu0 %v2460
        %v2561 = vpop.f32.mrb[0].mxu0
        %v2562 = vadd.f32 %v2391, %v2561
        %v2563 = vpop.f32.mrb[0].mxu0
        %v2564 = vpop.f32.mrb[0].mxu0
        %v2565 = vadd.f32 %v2392, %v2564
        %v2566 = vpop.f32.mrb[0].mxu0
        %2567 = vmatprep.mubr.bf16.mxu0 0
        %2568 = vmatmul.mubr.bf16.gmra.mrb[0].mxu0 %v2463
        %v2569 = vpop.f32.mrb[0].mxu0
        %v2570 = vadd.f32 %v2393, %v2569
        %v2571 = vpop.f32.mrb[0].mxu0
        %v2572 = vpop.f32.mrb[0].mxu0
        %v2573 = vadd.f32 %v2394, %v2572
        %v2574 = vpop.f32.mrb[0].mxu0
        %2575 = vmatprep.mubr.bf16.mxu0 0
        %2576 = vmatmul.mubr.bf16.gmra.mrb[0].mxu0 %v2466
        %v2577 = vpop.f32.mrb[0].mxu0
        %v2578 = vadd.f32 %v2395, %v2577
        %v2579 = vpop.f32.mrb[0].mxu0
        %v2580 = vpop.f32.mrb[0].mxu0
        %v2581 = vadd.f32 %v2396, %v2580
        %v2582 = vpop.f32.mrb[0].mxu0
        %2583 = vmatprep.mubr.bf16.mxu0 0
        %2584 = vmatmul.mubr.bf16.gmra.mrb[0].mxu0 %v2469
        %v2585 = vpop.f32.mrb[0].mxu0
        %v2586 = vadd.f32 %v2397, %v2585
        %v2587 = vpop.f32.mrb[0].mxu0
        %v2588 = vpop.f32.mrb[0].mxu0
        %v2589 = vadd.f32 %v2398, %v2588
        %v2590 = vpop.f32.mrb[0].mxu0
        %2591 = vdwg.mxu0
        %2592 = vmax.xlane.f32.xlu0 %v2530
        %v2593 = vpop.xlane.xlu0 %2592
        %2594 = vmax.xlane.f32.xlu0 %v2533
        %v2595 = vpop.xlane.xlu0 %2594
        %2596 = vmax.xlane.f32.xlu0 %v2538
        %v2597 = vpop.xlane.xlu0 %2596
        %2598 = vmax.xlane.f32.xlu0 %v2541
        %v2599 = vpop.xlane.xlu0 %2598
        %2600 = vmax.xlane.f32.xlu0 %v2546
        %v2601 = vpop.xlane.xlu0 %2600
        %2602 = vmax.xlane.f32.xlu0 %v2549
        %v2603 = vpop.xlane.xlu0 %2602
        %2604 = vmax.xlane.f32.xlu0 %v2554
        %v2605 = vpop.xlane.xlu0 %2604
        %2606 = vmax.xlane.f32.xlu0 %v2557
        %v2607 = vpop.xlane.xlu0 %2606
        %2608 = vmax.xlane.f32.xlu0 %v2562
        %v2609 = vpop.xlane.xlu0 %2608
        %2610 = vmax.xlane.f32.xlu0 %v2565
        %v2611 = vpop.xlane.xlu0 %2610
        %2612 = vmax.xlane.f32.xlu0 %v2570
        %v2613 = vpop.xlane.xlu0 %2612
        %2614 = vmax.xlane.f32.xlu0 %v2573
        %v2615 = vpop.xlane.xlu0 %2614
        %2616 = vmax.xlane.f32.xlu0 %v2578
        %v2617 = vpop.xlane.xlu0 %2616
        %2618 = vmax.xlane.f32.xlu0 %v2581
        %v2619 = vpop.xlane.xlu0 %2618
        %2620 = vmax.xlane.f32.xlu0 %v2586
        %v2621 = vpop.xlane.xlu0 %2620
        %2622 = vmax.xlane.f32.xlu0 %v2589
        %v2623 = vpop.xlane.xlu0 %2622
        %v2624 = vsub.f32 %v2530, %v2593
        %v2625 = vsub.f32 %v2533, %v2595
        %v2626 = vsub.f32 %v2538, %v2597
        %v2627 = vsub.f32 %v2541, %v2599
        %v2628 = vsub.f32 %v2546, %v2601
        %v2629 = vsub.f32 %v2549, %v2603
        %v2630 = vsub.f32 %v2554, %v2605
        %v2631 = vsub.f32 %v2557, %v2607
        %v2632 = vsub.f32 %v2562, %v2609
        %v2633 = vsub.f32 %v2565, %v2611
        %v2634 = vsub.f32 %v2570, %v2613
        %v2635 = vsub.f32 %v2573, %v2615
        %v2636 = vsub.f32 %v2578, %v2617
        %v2637 = vsub.f32 %v2581, %v2619
        %v2638 = vsub.f32 %v2586, %v2621
        %v2639 = vsub.f32 %v2589, %v2623
        %v2640 = vmul.f32 %v2624, 1.442695
        %v2641 = vpow.pop %v2640
        %v2642 = vmul.f32 %v2625, 1.442695
        %v2643 = vpow.pop %v2642
        %v2644 = vmul.f32 %v2626, 1.442695
        %v2645 = vpow.pop %v2644
        %v2646 = vmul.f32 %v2627, 1.442695
        %v2647 = vpow.pop %v2646
        %v2648 = vmul.f32 %v2628, 1.442695
        %v2649 = vpow.pop %v2648
        %v2650 = vmul.f32 %v2629, 1.442695
        %v2651 = vpow.pop %v2650
        %v2652 = vmul.f32 %v2630, 1.442695
        %v2653 = vpow.pop %v2652
        %v2654 = vmul.f32 %v2631, 1.442695
        %v2655 = vpow.pop %v2654
        %v2656 = vmul.f32 %v2632, 1.442695
        %v2657 = vpow.pop %v2656
        %v2658 = vmul.f32 %v2633, 1.442695
        %v2659 = vpow.pop %v2658
        %v2660 = vmul.f32 %v2634, 1.442695
        %v2661 = vpow.pop %v2660
        %v2662 = vmul.f32 %v2635, 1.442695
        %v2663 = vpow.pop %v2662
        %v2664 = vmul.f32 %v2636, 1.442695
        %v2665 = vpow.pop %v2664
        %v2666 = vmul.f32 %v2637, 1.442695
        %v2667 = vpow.pop %v2666
        %v2668 = vmul.f32 %v2638, 1.442695
        %v2669 = vpow.pop %v2668
        %v2670 = vmul.f32 %v2639, 1.442695
        %v2671 = vpow.pop %v2670
        %2672 = vadd.xlane.f32.xlu0 %v2641
        %v2673 = vpop.xlane.xlu0 %2672
        %2674 = vadd.xlane.f32.xlu0 %v2643
        %v2675 = vpop.xlane.xlu0 %2674
        %2676 = vadd.xlane.f32.xlu0 %v2645
        %v2677 = vpop.xlane.xlu0 %2676
        %2678 = vadd.xlane.f32.xlu0 %v2647
        %v2679 = vpop.xlane.xlu0 %2678
        %2680 = vadd.xlane.f32.xlu0 %v2649
        %v2681 = vpop.xlane.xlu0 %2680
        %2682 = vadd.xlane.f32.xlu0 %v2651
        %v2683 = vpop.xlane.xlu0 %2682
        %2684 = vadd.xlane.f32.xlu0 %v2653
        %v2685 = vpop.xlane.xlu0 %2684
        %2686 = vadd.xlane.f32.xlu0 %v2655
        %v2687 = vpop.xlane.xlu0 %2686
        %2688 = vadd.xlane.f32.xlu0 %v2657
        %v2689 = vpop.xlane.xlu0 %2688
        %2690 = vadd.xlane.f32.xlu0 %v2659
        %v2691 = vpop.xlane.xlu0 %2690
        %2692 = vadd.xlane.f32.xlu0 %v2661
        %v2693 = vpop.xlane.xlu0 %2692
        %2694 = vadd.xlane.f32.xlu0 %v2663
        %v2695 = vpop.xlane.xlu0 %2694
        %2696 = vadd.xlane.f32.xlu0 %v2665
        %v2697 = vpop.xlane.xlu0 %2696
        %2698 = vadd.xlane.f32.xlu0 %v2667
        %v2699 = vpop.xlane.xlu0 %2698
        %2700 = vadd.xlane.f32.xlu0 %v2669
        %v2701 = vpop.xlane.xlu0 %2700
        %2702 = vadd.xlane.f32.xlu0 %v2671
        %v2703 = vpop.xlane.xlu0 %2702
        %v2704 = vrcp.pop %v2673
        %v2705 = vrcp.pop %v2675
        %v2706 = vrcp.pop %v2677
        %v2707 = vrcp.pop %v2679
        %v2708 = vrcp.pop %v2681
        %v2709 = vrcp.pop %v2683
        %v2710 = vrcp.pop %v2685
        %v2711 = vrcp.pop %v2687
        %v2712 = vrcp.pop %v2689
        %v2713 = vrcp.pop %v2691
        %v2714 = vrcp.pop %v2693
        %v2715 = vrcp.pop %v2695
        %v2716 = vrcp.pop %v2697
        %v2717 = vrcp.pop %v2699
        %v2718 = vrcp.pop %v2701
        %v2719 = vrcp.pop %v2703
        %v2720 = vmul.f32 %v2641, %v2704
        %v2721 = vmul.f32 %v2643, %v2705
        %v2722 = vmul.f32 %v2645, %v2706
        %v2723 = vmul.f32 %v2647, %v2707
        %v2724 = vmul.f32 %v2649, %v2708
        %v2725 = vmul.f32 %v2651, %v2709
        %v2726 = vmul.f32 %v2653, %v2710
        %v2727 = vmul.f32 %v2655, %v2711
        %v2728 = vmul.f32 %v2657, %v2712
        %v2729 = vmul.f32 %v2659, %v2713
        %v2730 = vmul.f32 %v2661, %v2714
        %v2731 = vmul.f32 %v2663, %v2715
        %v2732 = vmul.f32 %v2665, %v2716
        %v2733 = vmul.f32 %v2667, %v2717
        %v2734 = vmul.f32 %v2669, %v2718
        %v2735 = vmul.f32 %v2671, %v2719
        %v2736 = vpack.c.bf16 %v2721, %v2720
        %v2737 = vpack.c.bf16 %v2723, %v2722
        %v2738 = vpack.c.bf16 %v2725, %v2724
        %v2739 = vpack.c.bf16 %v2727, %v2726
        %v2740 = vpack.c.bf16 %v2729, %v2728
        %v2741 = vpack.c.bf16 %v2731, %v2730
        %v2742 = vpack.c.bf16 %v2733, %v2732
        %v2743 = vpack.c.bf16 %v2735, %v2734
        %2752 = vrot.lane.b32.xlu0 %v2375, 96
        %v2753 = vpop.permute.xlu0 %2752
        %2754 = vrot.lane.b32.xlu0 %v2376, 96
        %v2755 = vpop.permute.xlu0 %2754
        %2756 = vrot.lane.b32.xlu0 %v2377, 96
        %v2757 = vpop.permute.xlu0 %2756
        %2758 = vrot.lane.b32.xlu0 %v2378, 96
        %v2759 = vpop.permute.xlu0 %2758
        %2760 = vrot.lane.b32.xlu0 %v2379, 96
        %v2761 = vpop.permute.xlu0 %2760
        %2762 = vrot.lane.b32.xlu0 %v2380, 96
        %v2763 = vpop.permute.xlu0 %2762
        %2764 = vrot.lane.b32.xlu0 %v2381, 96
        %v2765 = vpop.permute.xlu0 %2764
        %2766 = vrot.lane.b32.xlu0 %v2382, 96
        %v2767 = vpop.permute.xlu0 %2766
        %2776 = vmatprep.subr.bf16.mxu0 0
        %2777 = vmatpush1.bf16.msra.mxu0 %v2753
        %2778 = vmatprep.subr.bf16.mxu0 0
        %2779 = vmatpush1.bf16.msra.mxu0 %v2755
        %2780 = vmatprep.subr.bf16.mxu0 0
        %2781 = vmatpush1.bf16.msra.mxu0 %v2757
        %2782 = vmatprep.subr.bf16.mxu0 0
        %2783 = vmatpush1.bf16.msra.mxu0 %v2759
        %2784 = vmatprep.subr.bf16.mxu0 0
        %2785 = vmatpush1.bf16.msra.mxu0 %v2761
        %2786 = vmatprep.subr.bf16.mxu0 0
        %2787 = vmatpush1.bf16.msra.mxu0 %v2763
        %2788 = vmatprep.subr.bf16.mxu0 0
        %2789 = vmatpush1.bf16.msra.mxu0 %v2765
        %2790 = vmatprep.subr.bf16.mxu0 0
        %2791 = vmatpush1.bf16.msra.mxu0 %v2767
        %2792 = vmatprep.subr.bf16.mxu0 0
        %2793 = vmatpush1.bf16.msra.mxu0 0
        %2794 = vmatprep.subr.bf16.mxu0 0
        %2795 = vmatpush1.bf16.msra.mxu0 0
        %2796 = vmatprep.subr.bf16.mxu0 0
        %2797 = vmatpush1.bf16.msra.mxu0 0
        %2798 = vmatprep.subr.bf16.mxu0 0
        %2799 = vmatpush1.bf16.msra.mxu0 0
        %2800 = vmatprep.subr.bf16.mxu0 0
        %2801 = vmatpush1.bf16.msra.mxu0 0
        %2802 = vmatprep.subr.bf16.mxu0 0
        %2803 = vmatpush1.bf16.msra.mxu0 0
        %2804 = vmatprep.subr.bf16.mxu0 0
        %2805 = vmatpush1.bf16.msra.mxu0 0
        %2806 = vmatprep.subr.bf16.mxu0 0
        %2807 = vmatpush1.bf16.msra.mxu0 0
        %2808 = vmatprep.mubr.bf16.mxu0 0
        %2809 = vmatmul.mubr.bf16.gmra.mrb[0].mxu0 %v2736
        %v2810 = vpop.f32.mrb[0].mxu0
        %v2811 = vadd.f32 0.0, %v2810
        %v2812 = vpop.f32.mrb[0].mxu0
        %v2813 = vpop.f32.mrb[0].mxu0
        %v2814 = vadd.f32 0.0, %v2813
        %v2815 = vpop.f32.mrb[0].mxu0
        %2816 = vmatprep.mubr.bf16.mxu0 0
        %2817 = vmatmul.mubr.bf16.gmra.mrb[0].mxu0 %v2737
        %v2818 = vpop.f32.mrb[0].mxu0
        %v2819 = vadd.f32 0.0, %v2818
        %v2820 = vpop.f32.mrb[0].mxu0
        %v2821 = vpop.f32.mrb[0].mxu0
        %v2822 = vadd.f32 0.0, %v2821
        %v2823 = vpop.f32.mrb[0].mxu0
        %2824 = vmatprep.mubr.bf16.mxu0 0
        %2825 = vmatmul.mubr.bf16.gmra.mrb[0].mxu0 %v2738
        %v2826 = vpop.f32.mrb[0].mxu0
        %v2827 = vadd.f32 0.0, %v2826
        %v2828 = vpop.f32.mrb[0].mxu0
        %v2829 = vpop.f32.mrb[0].mxu0
        %v2830 = vadd.f32 0.0, %v2829
        %v2831 = vpop.f32.mrb[0].mxu0
        %2832 = vmatprep.mubr.bf16.mxu0 0
        %2833 = vmatmul.mubr.bf16.gmra.mrb[0].mxu0 %v2739
        %v2834 = vpop.f32.mrb[0].mxu0
        %v2835 = vadd.f32 0.0, %v2834
        %v2836 = vpop.f32.mrb[0].mxu0
        %v2837 = vpop.f32.mrb[0].mxu0
        %v2838 = vadd.f32 0.0, %v2837
        %v2839 = vpop.f32.mrb[0].mxu0
        %2840 = vmatprep.mubr.bf16.mxu0 0
        %2841 = vmatmul.mubr.bf16.gmra.mrb[0].mxu0 %v2740
        %v2842 = vpop.f32.mrb[0].mxu0
        %v2843 = vadd.f32 0.0, %v2842
        %v2844 = vpop.f32.mrb[0].mxu0
        %v2845 = vpop.f32.mrb[0].mxu0
        %v2846 = vadd.f32 0.0, %v2845
        %v2847 = vpop.f32.mrb[0].mxu0
        %2848 = vmatprep.mubr.bf16.mxu0 0
        %2849 = vmatmul.mubr.bf16.gmra.mrb[0].mxu0 %v2741
        %v2850 = vpop.f32.mrb[0].mxu0
        %v2851 = vadd.f32 0.0, %v2850
        %v2852 = vpop.f32.mrb[0].mxu0
        %v2853 = vpop.f32.mrb[0].mxu0
        %v2854 = vadd.f32 0.0, %v2853
        %v2855 = vpop.f32.mrb[0].mxu0
        %2856 = vmatprep.mubr.bf16.mxu0 0
        %2857 = vmatmul.mubr.bf16.gmra.mrb[0].mxu0 %v2742
        %v2858 = vpop.f32.mrb[0].mxu0
        %v2859 = vadd.f32 0.0, %v2858
        %v2860 = vpop.f32.mrb[0].mxu0
        %v2861 = vpop.f32.mrb[0].mxu0
        %v2862 = vadd.f32 0.0, %v2861
        %v2863 = vpop.f32.mrb[0].mxu0
        %2864 = vmatprep.mubr.bf16.mxu0 0
        %2865 = vmatmul.mubr.bf16.gmra.mrb[0].mxu0 %v2743
        %v2866 = vpop.f32.mrb[0].mxu0
        %v2867 = vadd.f32 0.0, %v2866
        %v2868 = vpop.f32.mrb[0].mxu0
        %v2869 = vpop.f32.mrb[0].mxu0
        %v2870 = vadd.f32 0.0, %v2869
        %v2871 = vpop.f32.mrb[0].mxu0
        %2872 = vdwg.mxu0
        %2889 = vrot.lane.b32.xlu0 %v2811, 32
        %v2890 = vpop.permute.xlu0 %2889
        %2891 = vrot.lane.b32.xlu0 %v2814, 32
        %v2892 = vpop.permute.xlu0 %2891
        %2893 = vrot.lane.b32.xlu0 %v2819, 32
        %v2894 = vpop.permute.xlu0 %2893
        %2895 = vrot.lane.b32.xlu0 %v2822, 32
        %v2896 = vpop.permute.xlu0 %2895
        %2897 = vrot.lane.b32.xlu0 %v2827, 32
        %v2898 = vpop.permute.xlu0 %2897
        %2899 = vrot.lane.b32.xlu0 %v2830, 32
        %v2900 = vpop.permute.xlu0 %2899
        %2901 = vrot.lane.b32.xlu0 %v2835, 32
        %v2902 = vpop.permute.xlu0 %2901
        %2903 = vrot.lane.b32.xlu0 %v2838, 32
        %v2904 = vpop.permute.xlu0 %2903
        %2905 = vrot.lane.b32.xlu0 %v2843, 32
        %v2906 = vpop.permute.xlu0 %2905
        %2907 = vrot.lane.b32.xlu0 %v2846, 32
        %v2908 = vpop.permute.xlu0 %2907
        %2909 = vrot.lane.b32.xlu0 %v2851, 32
        %v2910 = vpop.permute.xlu0 %2909
        %2911 = vrot.lane.b32.xlu0 %v2854, 32
        %v2912 = vpop.permute.xlu0 %2911
        %2913 = vrot.lane.b32.xlu0 %v2859, 32
        %v2914 = vpop.permute.xlu0 %2913
        %2915 = vrot.lane.b32.xlu0 %v2862, 32
        %v2916 = vpop.permute.xlu0 %2915
        %2917 = vrot.lane.b32.xlu0 %v2867, 32
        %v2918 = vpop.permute.xlu0 %2917
        %2919 = vrot.lane.b32.xlu0 %v2870, 32
        %v2920 = vpop.permute.xlu0 %2919
        %vm2937 = vcmask 523520
        %2938 = vst.msk [vmem:[#allocation4] sm:$0xff] %vm2937, %v2890
        %2939 = vst.msk [vmem:[#allocation4 + $0x8] sm:$0xff] %vm2937, %v2892
        %2940 = vst.msk [vmem:[#allocation4 + $0x10] sm:$0xff] %vm2937, %v2894
        %2941 = vst.msk [vmem:[#allocation4 + $0x18] sm:$0xff] %vm2937, %v2896
        %2942 = vst.msk [vmem:[#allocation4 + $0x20] sm:$0xff] %vm2937, %v2898
        %2943 = vst.msk [vmem:[#allocation4 + $0x28] sm:$0xff] %vm2937, %v2900
        %2944 = vst.msk [vmem:[#allocation4 + $0x30] sm:$0xff] %vm2937, %v2902
        %2945 = vst.msk [vmem:[#allocation4 + $0x38] sm:$0xff] %vm2937, %v2904
        %2946 = vst.msk [vmem:[#allocation4 + $0x40] sm:$0xff] %vm2937, %v2906
        %2947 = vst.msk [vmem:[#allocation4 + $0x48] sm:$0xff] %vm2937, %v2908
        %2948 = vst.msk [vmem:[#allocation4 + $0x50] sm:$0xff] %vm2937, %v2910
        %2949 = vst.msk [vmem:[#allocation4 + $0x58] sm:$0xff] %vm2937, %v2912
        %2950 = vst.msk [vmem:[#allocation4 + $0x60] sm:$0xff] %vm2937, %v2914
        %2951 = vst.msk [vmem:[#allocation4 + $0x68] sm:$0xff] %vm2937, %v2916
        %2952 = vst.msk [vmem:[#allocation4 + $0x70] sm:$0xff] %vm2937, %v2918
        %2953 = vst.msk [vmem:[#allocation4 + $0x78] sm:$0xff] %vm2937, %v2920
        %v2954 = vld [vmem:[#allocation3] sm:$0xff]
        %v2955 = vld [vmem:[#allocation3 + $0x18] sm:$0xff]
        %v2956 = vld [vmem:[#allocation3 + $0x30] sm:$0xff]
        %v2957 = vld [vmem:[#allocation3 + $0x48] sm:$0xff]
        %v2958 = vld [vmem:[#allocation3 + $0x60] sm:$0xff]
        %v2959 = vld [vmem:[#allocation3 + $0x78] sm:$0xff]
        %v2960 = vld [vmem:[#allocation3 + $0x90] sm:$0xff]
        %v2961 = vld [vmem:[#allocation3 + $0xa8] sm:$0xff]
        %v2962 = vld [vmem:[#allocation3 + $0xc0] sm:$0xff]
        %v2963 = vld [vmem:[#allocation3 + $0xd8] sm:$0xff]
        %v2964 = vld [vmem:[#allocation3 + $0xf0] sm:$0xff]
        %v2965 = vld [vmem:[#allocation3 + $0x108] sm:$0xff]
        %v2966 = vld [vmem:[#allocation3 + $0x120] sm:$0xff]
        %v2967 = vld [vmem:[#allocation3 + $0x138] sm:$0xff]
        %v2968 = vld [vmem:[#allocation3 + $0x150] sm:$0xff]
        %v2969 = vld [vmem:[#allocation3 + $0x168] sm:$0xff]
        %v2970 = vpack.c.bf16 %v2955, %v2954
        %v2971 = vpack.c.bf16 %v2957, %v2956
        %v2972 = vpack.c.bf16 %v2959, %v2958
        %v2973 = vpack.c.bf16 %v2961, %v2960
        %v2974 = vpack.c.bf16 %v2963, %v2962
        %v2975 = vpack.c.bf16 %v2965, %v2964
        %v2976 = vpack.c.bf16 %v2967, %v2966
        %v2977 = vpack.c.bf16 %v2969, %v2968
        %v2978 = vld [vmem:[#allocation3 + $0x8] sm:$0xff]
        %v2979 = vld [vmem:[#allocation3 + $0x20] sm:$0xff]
        %v2980 = vld [vmem:[#allocation3 + $0x38] sm:$0xff]
        %v2981 = vld [vmem:[#allocation3 + $0x50] sm:$0xff]
        %v2982 = vld [vmem:[#allocation3 + $0x68] sm:$0xff]
        %v2983 = vld [vmem:[#allocation3 + $0x80] sm:$0xff]
        %v2984 = vld [vmem:[#allocation3 + $0x98] sm:$0xff]
        %v2985 = vld [vmem:[#allocation3 + $0xb0] sm:$0xff]
        %v2986 = vld [vmem:[#allocation3 + $0xc8] sm:$0xff]
        %v2987 = vld [vmem:[#allocation3 + $0xe0] sm:$0xff]
        %v2988 = vld [vmem:[#allocation3 + $0xf8] sm:$0xff]
        %v2989 = vld [vmem:[#allocation3 + $0x110] sm:$0xff]
        %v2990 = vld [vmem:[#allocation3 + $0x128] sm:$0xff]
        %v2991 = vld [vmem:[#allocation3 + $0x140] sm:$0xff]
        %v2992 = vld [vmem:[#allocation3 + $0x158] sm:$0xff]
        %v2993 = vld [vmem:[#allocation3 + $0x170] sm:$0xff]
        %v2994 = vpack.c.bf16 %v2979, %v2978
        %v2995 = vpack.c.bf16 %v2981, %v2980
        %v2996 = vpack.c.bf16 %v2983, %v2982
        %v2997 = vpack.c.bf16 %v2985, %v2984
        %v2998 = vpack.c.bf16 %v2987, %v2986
        %v2999 = vpack.c.bf16 %v2989, %v2988
        %v3000 = vpack.c.bf16 %v2991, %v2990
        %v3001 = vpack.c.bf16 %v2993, %v2992
        %v3002 = vld [vmem:[#allocation3 + $0x10] sm:$0xff]
        %v3003 = vld [vmem:[#allocation3 + $0x28] sm:$0xff]
        %v3004 = vld [vmem:[#allocation3 + $0x40] sm:$0xff]
        %v3005 = vld [vmem:[#allocation3 + $0x58] sm:$0xff]
        %v3006 = vld [vmem:[#allocation3 + $0x70] sm:$0xff]
        %v3007 = vld [vmem:[#allocation3 + $0x88] sm:$0xff]
        %v3008 = vld [vmem:[#allocation3 + $0xa0] sm:$0xff]
        %v3009 = vld [vmem:[#allocation3 + $0xb8] sm:$0xff]
        %v3010 = vld [vmem:[#allocation3 + $0xd0] sm:$0xff]
        %v3011 = vld [vmem:[#allocation3 + $0xe8] sm:$0xff]
        %v3012 = vld [vmem:[#allocation3 + $0x100] sm:$0xff]
        %v3013 = vld [vmem:[#allocation3 + $0x118] sm:$0xff]
        %v3014 = vld [vmem:[#allocation3 + $0x130] sm:$0xff]
        %v3015 = vld [vmem:[#allocation3 + $0x148] sm:$0xff]
        %v3016 = vld [vmem:[#allocation3 + $0x160] sm:$0xff]
        %v3017 = vld [vmem:[#allocation3 + $0x178] sm:$0xff]
        %v3018 = vpack.c.bf16 %v3003, %v3002
        %v3019 = vpack.c.bf16 %v3005, %v3004
        %v3020 = vpack.c.bf16 %v3007, %v3006
        %v3021 = vpack.c.bf16 %v3009, %v3008
        %v3022 = vpack.c.bf16 %v3011, %v3010
        %v3023 = vpack.c.bf16 %v3013, %v3012
        %v3024 = vpack.c.bf16 %v3015, %v3014
        %v3025 = vpack.c.bf16 %v3017, %v3016
        %v3026 = vld [vmem:[%s6] sm:$0xff]
        %v3027 = vld [vmem:[%s6 + $0x8] sm:$0xff]
        %v3028 = vld [vmem:[%s6 + $0x10] sm:$0xff]
        %v3029 = vld [vmem:[%s6 + $0x18] sm:$0xff]
        %v3030 = vld [vmem:[%s6 + $0x20] sm:$0xff]
        %v3031 = vld [vmem:[%s6 + $0x28] sm:$0xff]
        %v3032 = vld [vmem:[%s6 + $0x30] sm:$0xff]
        %v3033 = vld [vmem:[%s6 + $0x38] sm:$0xff]
        %v3034 = vld [vmem:[%s6 + $0x40] sm:$0xff]
        %v3035 = vld [vmem:[%s6 + $0x48] sm:$0xff]
        %v3036 = vld [vmem:[%s6 + $0x50] sm:$0xff]
        %v3037 = vld [vmem:[%s6 + $0x58] sm:$0xff]
        %v3038 = vld [vmem:[%s6 + $0x60] sm:$0xff]
        %v3039 = vld [vmem:[%s6 + $0x68] sm:$0xff]
        %v3040 = vld [vmem:[%s6 + $0x70] sm:$0xff]
        %v3041 = vld [vmem:[%s6 + $0x78] sm:$0xff]
        %3050 = vrot.lane.b32.xlu0 %v2970, 64
        %v3051 = vpop.permute.xlu0 %3050
        %3052 = vrot.lane.b32.xlu0 %v2971, 64
        %v3053 = vpop.permute.xlu0 %3052
        %3054 = vrot.lane.b32.xlu0 %v2972, 64
        %v3055 = vpop.permute.xlu0 %3054
        %3056 = vrot.lane.b32.xlu0 %v2973, 64
        %v3057 = vpop.permute.xlu0 %3056
        %3058 = vrot.lane.b32.xlu0 %v2974, 64
        %v3059 = vpop.permute.xlu0 %3058
        %3060 = vrot.lane.b32.xlu0 %v2975, 64
        %v3061 = vpop.permute.xlu0 %3060
        %3062 = vrot.lane.b32.xlu0 %v2976, 64
        %v3063 = vpop.permute.xlu0 %3062
        %3064 = vrot.lane.b32.xlu0 %v2977, 64
        %v3065 = vpop.permute.xlu0 %3064
        %3074 = vrot.lane.b32.xlu0 %v2994, 64
        %v3075 = vpop.permute.xlu0 %3074
        %3076 = vrot.lane.b32.xlu0 %v2995, 64
        %v3077 = vpop.permute.xlu0 %3076
        %3078 = vrot.lane.b32.xlu0 %v2996, 64
        %v3079 = vpop.permute.xlu0 %3078
        %3080 = vrot.lane.b32.xlu0 %v2997, 64
        %v3081 = vpop.permute.xlu0 %3080
        %3082 = vrot.lane.b32.xlu0 %v2998, 64
        %v3083 = vpop.permute.xlu0 %3082
        %3084 = vrot.lane.b32.xlu0 %v2999, 64
        %v3085 = vpop.permute.xlu0 %3084
        %3086 = vrot.lane.b32.xlu0 %v3000, 64
        %v3087 = vpop.permute.xlu0 %3086
        %3088 = vrot.lane.b32.xlu0 %v3001, 64
        %v3089 = vpop.permute.xlu0 %3088
        %v3091 = vsel %vm1900, %v3051, 0
        %v3094 = vsel %vm1900, %v3053, 0
        %v3097 = vsel %vm1900, %v3055, 0
        %v3100 = vsel %vm1900, %v3057, 0
        %v3103 = vsel %vm1900, %v3059, 0
        %v3106 = vsel %vm1900, %v3061, 0
        %v3109 = vsel %vm1900, %v3063, 0
        %v3112 = vsel %vm1900, %v3065, 0
        %v3115 = vsel %vm1900, %v3075, 0
        %v3118 = vsel %vm1900, %v3077, 0
        %v3121 = vsel %vm1900, %v3079, 0
        %v3124 = vsel %vm1900, %v3081, 0
        %v3127 = vsel %vm1900, %v3083, 0
        %v3130 = vsel %vm1900, %v3085, 0
        %v3133 = vsel %vm1900, %v3087, 0
        %v3136 = vsel %vm1900, %v3089, 0
        %3138 = vmatprep.subr.bf16.mxu0 0
        %3139 = vmatpush1.bf16.xpose.msra.mxu0 %v3115
        %3140 = vmatprep.subr.bf16.mxu0 0
        %3141 = vmatpush1.bf16.xpose.msra.mxu0 %v3118
        %3142 = vmatprep.subr.bf16.mxu0 0
        %3143 = vmatpush1.bf16.xpose.msra.mxu0 %v3121
        %3144 = vmatprep.subr.bf16.mxu0 0
        %3145 = vmatpush1.bf16.xpose.msra.mxu0 %v3124
        %3146 = vmatprep.subr.bf16.mxu0 0
        %3147 = vmatpush1.bf16.xpose.msra.mxu0 %v3127
        %3148 = vmatprep.subr.bf16.mxu0 0
        %3149 = vmatpush1.bf16.xpose.msra.mxu0 %v3130
        %3150 = vmatprep.subr.bf16.mxu0 0
        %3151 = vmatpush1.bf16.xpose.msra.mxu0 %v3133
        %3152 = vmatprep.subr.bf16.mxu0 0
        %3153 = vmatpush1.bf16.xpose.msra.mxu0 %v3136
        %3154 = vmatprep.subr.bf16.mxu0 0
        %3155 = vmatpush1.bf16.xpose.msra.mxu0 0
        %3156 = vmatprep.subr.bf16.mxu0 0
        %3157 = vmatpush1.bf16.xpose.msra.mxu0 0
        %3158 = vmatprep.subr.bf16.mxu0 0
        %3159 = vmatpush1.bf16.xpose.msra.mxu0 0
        %3160 = vmatprep.subr.bf16.mxu0 0
        %3161 = vmatpush1.bf16.xpose.msra.mxu0 0
        %3162 = vmatprep.subr.bf16.mxu0 0
        %3163 = vmatpush1.bf16.xpose.msra.mxu0 0
        %3164 = vmatprep.subr.bf16.mxu0 0
        %3165 = vmatpush1.bf16.xpose.msra.mxu0 0
        %3166 = vmatprep.subr.bf16.mxu0 0
        %3167 = vmatpush1.bf16.xpose.msra.mxu0 0
        %3168 = vmatprep.subr.bf16.mxu0 0
        %3169 = vmatpush1.bf16.xpose.msra.mxu0 0
        %3170 = vmatprep.mubr.bf16.mxu0 0
        %3171 = vmatmul.mubr.bf16.gmra.mrb[0].mxu0 %v3091
        %v3172 = vpop.f32.mrb[0].mxu0
        %v3173 = vadd.f32 %v3026, %v3172
        %v3174 = vpop.f32.mrb[0].mxu0
        %v3175 = vpop.f32.mrb[0].mxu0
        %v3176 = vadd.f32 %v3027, %v3175
        %v3177 = vpop.f32.mrb[0].mxu0
        %3178 = vmatprep.mubr.bf16.mxu0 0
        %3179 = vmatmul.mubr.bf16.gmra.mrb[0].mxu0 %v3094
        %v3180 = vpop.f32.mrb[0].mxu0
        %v3181 = vadd.f32 %v3028, %v3180
        %v3182 = vpop.f32.mrb[0].mxu0
        %v3183 = vpop.f32.mrb[0].mxu0
        %v3184 = vadd.f32 %v3029, %v3183
        %v3185 = vpop.f32.mrb[0].mxu0
        %3186 = vmatprep.mubr.bf16.mxu0 0
        %3187 = vmatmul.mubr.bf16.gmra.mrb[0].mxu0 %v3097
        %v3188 = vpop.f32.mrb[0].mxu0
        %v3189 = vadd.f32 %v3030, %v3188
        %v3190 = vpop.f32.mrb[0].mxu0
        %v3191 = vpop.f32.mrb[0].mxu0
        %v3192 = vadd.f32 %v3031, %v3191
        %v3193 = vpop.f32.mrb[0].mxu0
        %3194 = vmatprep.mubr.bf16.mxu0 0
        %3195 = vmatmul.mubr.bf16.gmra.mrb[0].mxu0 %v3100
        %v3196 = vpop.f32.mrb[0].mxu0
        %v3197 = vadd.f32 %v3032, %v3196
        %v3198 = vpop.f32.mrb[0].mxu0
        %v3199 = vpop.f32.mrb[0].mxu0
        %v3200 = vadd.f32 %v3033, %v3199
        %v3201 = vpop.f32.mrb[0].mxu0
        %3202 = vmatprep.mubr.bf16.mxu0 0
        %3203 = vmatmul.mubr.bf16.gmra.mrb[0].mxu0 %v3103
        %v3204 = vpop.f32.mrb[0].mxu0
        %v3205 = vadd.f32 %v3034, %v3204
        %v3206 = vpop.f32.mrb[0].mxu0
        %v3207 = vpop.f32.mrb[0].mxu0
        %v3208 = vadd.f32 %v3035, %v3207
        %v3209 = vpop.f32.mrb[0].mxu0
        %3210 = vmatprep.mubr.bf16.mxu0 0
        %3211 = vmatmul.mubr.bf16.gmra.mrb[0].mxu0 %v3106
        %v3212 = vpop.f32.mrb[0].mxu0
        %v3213 = vadd.f32 %v3036, %v3212
        %v3214 = vpop.f32.mrb[0].mxu0
        %v3215 = vpop.f32.mrb[0].mxu0
        %v3216 = vadd.f32 %v3037, %v3215
        %v3217 = vpop.f32.mrb[0].mxu0
        %3218 = vmatprep.mubr.bf16.mxu0 0
        %3219 = vmatmul.mubr.bf16.gmra.mrb[0].mxu0 %v3109
        %v3220 = vpop.f32.mrb[0].mxu0
        %v3221 = vadd.f32 %v3038, %v3220
        %v3222 = vpop.f32.mrb[0].mxu0
        %v3223 = vpop.f32.mrb[0].mxu0
        %v3224 = vadd.f32 %v3039, %v3223
        %v3225 = vpop.f32.mrb[0].mxu0
        %3226 = vmatprep.mubr.bf16.mxu0 0
        %3227 = vmatmul.mubr.bf16.gmra.mrb[0].mxu0 %v3112
        %v3228 = vpop.f32.mrb[0].mxu0
        %v3229 = vadd.f32 %v3040, %v3228
        %v3230 = vpop.f32.mrb[0].mxu0
        %v3231 = vpop.f32.mrb[0].mxu0
        %v3232 = vadd.f32 %v3041, %v3231
        %v3233 = vpop.f32.mrb[0].mxu0
        %3234 = vdwg.mxu0
        %3235 = vmax.xlane.f32.xlu0 %v3173
        %v3236 = vpop.xlane.xlu0 %3235
        %3237 = vmax.xlane.f32.xlu0 %v3176
        %v3238 = vpop.xlane.xlu0 %3237
        %3239 = vmax.xlane.f32.xlu0 %v3181
        %v3240 = vpop.xlane.xlu0 %3239
        %3241 = vmax.xlane.f32.xlu0 %v3184
        %v3242 = vpop.xlane.xlu0 %3241
        %3243 = vmax.xlane.f32.xlu0 %v3189
        %v3244 = vpop.xlane.xlu0 %3243
        %3245 = vmax.xlane.f32.xlu0 %v3192
        %v3246 = vpop.xlane.xlu0 %3245
        %3247 = vmax.xlane.f32.xlu0 %v3197
        %v3248 = vpop.xlane.xlu0 %3247
        %3249 = vmax.xlane.f32.xlu0 %v3200
        %v3250 = vpop.xlane.xlu0 %3249
        %3251 = vmax.xlane.f32.xlu0 %v3205
        %v3252 = vpop.xlane.xlu0 %3251
        %3253 = vmax.xlane.f32.xlu0 %v3208
        %v3254 = vpop.xlane.xlu0 %3253
        %3255 = vmax.xlane.f32.xlu0 %v3213
        %v3256 = vpop.xlane.xlu0 %3255
        %3257 = vmax.xlane.f32.xlu0 %v3216
        %v3258 = vpop.xlane.xlu0 %3257
        %3259 = vmax.xlane.f32.xlu0 %v3221
        %v3260 = vpop.xlane.xlu0 %3259
        %3261 = vmax.xlane.f32.xlu0 %v3224
        %v3262 = vpop.xlane.xlu0 %3261
        %3263 = vmax.xlane.f32.xlu0 %v3229
        %v3264 = vpop.xlane.xlu0 %3263
        %3265 = vmax.xlane.f32.xlu0 %v3232
        %v3266 = vpop.xlane.xlu0 %3265
        %v3267 = vsub.f32 %v3173, %v3236
        %v3268 = vsub.f32 %v3176, %v3238
        %v3269 = vsub.f32 %v3181, %v3240
        %v3270 = vsub.f32 %v3184, %v3242
        %v3271 = vsub.f32 %v3189, %v3244
        %v3272 = vsub.f32 %v3192, %v3246
        %v3273 = vsub.f32 %v3197, %v3248
        %v3274 = vsub.f32 %v3200, %v3250
        %v3275 = vsub.f32 %v3205, %v3252
        %v3276 = vsub.f32 %v3208, %v3254
        %v3277 = vsub.f32 %v3213, %v3256
        %v3278 = vsub.f32 %v3216, %v3258
        %v3279 = vsub.f32 %v3221, %v3260
        %v3280 = vsub.f32 %v3224, %v3262
        %v3281 = vsub.f32 %v3229, %v3264
        %v3282 = vsub.f32 %v3232, %v3266
        %v3283 = vmul.f32 %v3267, 1.442695
        %v3284 = vpow.pop %v3283
        %v3285 = vmul.f32 %v3268, 1.442695
        %v3286 = vpow.pop %v3285
        %v3287 = vmul.f32 %v3269, 1.442695
        %v3288 = vpow.pop %v3287
        %v3289 = vmul.f32 %v3270, 1.442695
        %v3290 = vpow.pop %v3289
        %v3291 = vmul.f32 %v3271, 1.442695
        %v3292 = vpow.pop %v3291
        %v3293 = vmul.f32 %v3272, 1.442695
        %v3294 = vpow.pop %v3293
        %v3295 = vmul.f32 %v3273, 1.442695
        %v3296 = vpow.pop %v3295
        %v3297 = vmul.f32 %v3274, 1.442695
        %v3298 = vpow.pop %v3297
        %v3299 = vmul.f32 %v3275, 1.442695
        %v3300 = vpow.pop %v3299
        %v3301 = vmul.f32 %v3276, 1.442695
        %v3302 = vpow.pop %v3301
        %v3303 = vmul.f32 %v3277, 1.442695
        %v3304 = vpow.pop %v3303
        %v3305 = vmul.f32 %v3278, 1.442695
        %v3306 = vpow.pop %v3305
        %v3307 = vmul.f32 %v3279, 1.442695
        %v3308 = vpow.pop %v3307
        %v3309 = vmul.f32 %v3280, 1.442695
        %v3310 = vpow.pop %v3309
        %v3311 = vmul.f32 %v3281, 1.442695
        %v3312 = vpow.pop %v3311
        %v3313 = vmul.f32 %v3282, 1.442695
        %v3314 = vpow.pop %v3313
        %3315 = vadd.xlane.f32.xlu0 %v3284
        %v3316 = vpop.xlane.xlu0 %3315
        %3317 = vadd.xlane.f32.xlu0 %v3286
        %v3318 = vpop.xlane.xlu0 %3317
        %3319 = vadd.xlane.f32.xlu0 %v3288
        %v3320 = vpop.xlane.xlu0 %3319
        %3321 = vadd.xlane.f32.xlu0 %v3290
        %v3322 = vpop.xlane.xlu0 %3321
        %3323 = vadd.xlane.f32.xlu0 %v3292
        %v3324 = vpop.xlane.xlu0 %3323
        %3325 = vadd.xlane.f32.xlu0 %v3294
        %v3326 = vpop.xlane.xlu0 %3325
        %3327 = vadd.xlane.f32.xlu0 %v3296
        %v3328 = vpop.xlane.xlu0 %3327
        %3329 = vadd.xlane.f32.xlu0 %v3298
        %v3330 = vpop.xlane.xlu0 %3329
        %3331 = vadd.xlane.f32.xlu0 %v3300
        %v3332 = vpop.xlane.xlu0 %3331
        %3333 = vadd.xlane.f32.xlu0 %v3302
        %v3334 = vpop.xlane.xlu0 %3333
        %3335 = vadd.xlane.f32.xlu0 %v3304
        %v3336 = vpop.xlane.xlu0 %3335
        %3337 = vadd.xlane.f32.xlu0 %v3306
        %v3338 = vpop.xlane.xlu0 %3337
        %3339 = vadd.xlane.f32.xlu0 %v3308
        %v3340 = vpop.xlane.xlu0 %3339
        %3341 = vadd.xlane.f32.xlu0 %v3310
        %v3342 = vpop.xlane.xlu0 %3341
        %3343 = vadd.xlane.f32.xlu0 %v3312
        %v3344 = vpop.xlane.xlu0 %3343
        %3345 = vadd.xlane.f32.xlu0 %v3314
        %v3346 = vpop.xlane.xlu0 %3345
        %v3347 = vrcp.pop %v3316
        %v3348 = vrcp.pop %v3318
        %v3349 = vrcp.pop %v3320
        %v3350 = vrcp.pop %v3322
        %v3351 = vrcp.pop %v3324
        %v3352 = vrcp.pop %v3326
        %v3353 = vrcp.pop %v3328
        %v3354 = vrcp.pop %v3330
        %v3355 = vrcp.pop %v3332
        %v3356 = vrcp.pop %v3334
        %v3357 = vrcp.pop %v3336
        %v3358 = vrcp.pop %v3338
        %v3359 = vrcp.pop %v3340
        %v3360 = vrcp.pop %v3342
        %v3361 = vrcp.pop %v3344
        %v3362 = vrcp.pop %v3346
        %v3363 = vmul.f32 %v3284, %v3347
        %v3364 = vmul.f32 %v3286, %v3348
        %v3365 = vmul.f32 %v3288, %v3349
        %v3366 = vmul.f32 %v3290, %v3350
        %v3367 = vmul.f32 %v3292, %v3351
        %v3368 = vmul.f32 %v3294, %v3352
        %v3369 = vmul.f32 %v3296, %v3353
        %v3370 = vmul.f32 %v3298, %v3354
        %v3371 = vmul.f32 %v3300, %v3355
        %v3372 = vmul.f32 %v3302, %v3356
        %v3373 = vmul.f32 %v3304, %v3357
        %v3374 = vmul.f32 %v3306, %v3358
        %v3375 = vmul.f32 %v3308, %v3359
        %v3376 = vmul.f32 %v3310, %v3360
        %v3377 = vmul.f32 %v3312, %v3361
        %v3378 = vmul.f32 %v3314, %v3362
        %v3379 = vpack.c.bf16 %v3364, %v3363
        %v3380 = vpack.c.bf16 %v3366, %v3365
        %v3381 = vpack.c.bf16 %v3368, %v3367
        %v3382 = vpack.c.bf16 %v3370, %v3369
        %v3383 = vpack.c.bf16 %v3372, %v3371
        %v3384 = vpack.c.bf16 %v3374, %v3373
        %v3385 = vpack.c.bf16 %v3376, %v3375
        %v3386 = vpack.c.bf16 %v3378, %v3377
        %3395 = vrot.lane.b32.xlu0 %v3018, 64
        %v3396 = vpop.permute.xlu0 %3395
        %3397 = vrot.lane.b32.xlu0 %v3019, 64
        %v3398 = vpop.permute.xlu0 %3397
        %3399 = vrot.lane.b32.xlu0 %v3020, 64
        %v3400 = vpop.permute.xlu0 %3399
        %3401 = vrot.lane.b32.xlu0 %v3021, 64
        %v3402 = vpop.permute.xlu0 %3401
        %3403 = vrot.lane.b32.xlu0 %v3022, 64
        %v3404 = vpop.permute.xlu0 %3403
        %3405 = vrot.lane.b32.xlu0 %v3023, 64
        %v3406 = vpop.permute.xlu0 %3405
        %3407 = vrot.lane.b32.xlu0 %v3024, 64
        %v3408 = vpop.permute.xlu0 %3407
        %3409 = vrot.lane.b32.xlu0 %v3025, 64
        %v3410 = vpop.permute.xlu0 %3409
        %3419 = vmatprep.subr.bf16.mxu0 0
        %3420 = vmatpush1.bf16.msra.mxu0 %v3396
        %3421 = vmatprep.subr.bf16.mxu0 0
        %3422 = vmatpush1.bf16.msra.mxu0 %v3398
        %3423 = vmatprep.subr.bf16.mxu0 0
        %3424 = vmatpush1.bf16.msra.mxu0 %v3400
        %3425 = vmatprep.subr.bf16.mxu0 0
        %3426 = vmatpush1.bf16.msra.mxu0 %v3402
        %3427 = vmatprep.subr.bf16.mxu0 0
        %3428 = vmatpush1.bf16.msra.mxu0 %v3404
        %3429 = vmatprep.subr.bf16.mxu0 0
        %3430 = vmatpush1.bf16.msra.mxu0 %v3406
        %3431 = vmatprep.subr.bf16.mxu0 0
        %3432 = vmatpush1.bf16.msra.mxu0 %v3408
        %3433 = vmatprep.subr.bf16.mxu0 0
        %3434 = vmatpush1.bf16.msra.mxu0 %v3410
        %3435 = vmatprep.subr.bf16.mxu0 0
        %3436 = vmatpush1.bf16.msra.mxu0 0
        %3437 = vmatprep.subr.bf16.mxu0 0
        %3438 = vmatpush1.bf16.msra.mxu0 0
        %3439 = vmatprep.subr.bf16.mxu0 0
        %3440 = vmatpush1.bf16.msra.mxu0 0
        %3441 = vmatprep.subr.bf16.mxu0 0
        %3442 = vmatpush1.bf16.msra.mxu0 0
        %3443 = vmatprep.subr.bf16.mxu0 0
        %3444 = vmatpush1.bf16.msra.mxu0 0
        %3445 = vmatprep.subr.bf16.mxu0 0
        %3446 = vmatpush1.bf16.msra.mxu0 0
        %3447 = vmatprep.subr.bf16.mxu0 0
        %3448 = vmatpush1.bf16.msra.mxu0 0
        %3449 = vmatprep.subr.bf16.mxu0 0
        %3450 = vmatpush1.bf16.msra.mxu0 0
        %3451 = vmatprep.mubr.bf16.mxu0 0
        %3452 = vmatmul.mubr.bf16.gmra.mrb[0].mxu0 %v3379
        %v3453 = vpop.f32.mrb[0].mxu0
        %v3454 = vadd.f32 0.0, %v3453
        %v3455 = vpop.f32.mrb[0].mxu0
        %v3456 = vpop.f32.mrb[0].mxu0
        %v3457 = vadd.f32 0.0, %v3456
        %v3458 = vpop.f32.mrb[0].mxu0
        %3459 = vmatprep.mubr.bf16.mxu0 0
        %3460 = vmatmul.mubr.bf16.gmra.mrb[0].mxu0 %v3380
        %v3461 = vpop.f32.mrb[0].mxu0
        %v3462 = vadd.f32 0.0, %v3461
        %v3463 = vpop.f32.mrb[0].mxu0
        %v3464 = vpop.f32.mrb[0].mxu0
        %v3465 = vadd.f32 0.0, %v3464
        %v3466 = vpop.f32.mrb[0].mxu0
        %3467 = vmatprep.mubr.bf16.mxu0 0
        %3468 = vmatmul.mubr.bf16.gmra.mrb[0].mxu0 %v3381
        %v3469 = vpop.f32.mrb[0].mxu0
        %v3470 = vadd.f32 0.0, %v3469
        %v3471 = vpop.f32.mrb[0].mxu0
        %v3472 = vpop.f32.mrb[0].mxu0
        %v3473 = vadd.f32 0.0, %v3472
        %v3474 = vpop.f32.mrb[0].mxu0
        %3475 = vmatprep.mubr.bf16.mxu0 0
        %3476 = vmatmul.mubr.bf16.gmra.mrb[0].mxu0 %v3382
        %v3477 = vpop.f32.mrb[0].mxu0
        %v3478 = vadd.f32 0.0, %v3477
        %v3479 = vpop.f32.mrb[0].mxu0
        %v3480 = vpop.f32.mrb[0].mxu0
        %v3481 = vadd.f32 0.0, %v3480
        %v3482 = vpop.f32.mrb[0].mxu0
        %3483 = vmatprep.mubr.bf16.mxu0 0
        %3484 = vmatmul.mubr.bf16.gmra.mrb[0].mxu0 %v3383
        %v3485 = vpop.f32.mrb[0].mxu0
        %v3486 = vadd.f32 0.0, %v3485
        %v3487 = vpop.f32.mrb[0].mxu0
        %v3488 = vpop.f32.mrb[0].mxu0
        %v3489 = vadd.f32 0.0, %v3488
        %v3490 = vpop.f32.mrb[0].mxu0
        %3491 = vmatprep.mubr.bf16.mxu0 0
        %3492 = vmatmul.mubr.bf16.gmra.mrb[0].mxu0 %v3384
        %v3493 = vpop.f32.mrb[0].mxu0
        %v3494 = vadd.f32 0.0, %v3493
        %v3495 = vpop.f32.mrb[0].mxu0
        %v3496 = vpop.f32.mrb[0].mxu0
        %v3497 = vadd.f32 0.0, %v3496
        %v3498 = vpop.f32.mrb[0].mxu0
        %3499 = vmatprep.mubr.bf16.mxu0 0
        %3500 = vmatmul.mubr.bf16.gmra.mrb[0].mxu0 %v3385
        %v3501 = vpop.f32.mrb[0].mxu0
        %v3502 = vadd.f32 0.0, %v3501
        %v3503 = vpop.f32.mrb[0].mxu0
        %v3504 = vpop.f32.mrb[0].mxu0
        %v3505 = vadd.f32 0.0, %v3504
        %v3506 = vpop.f32.mrb[0].mxu0
        %3507 = vmatprep.mubr.bf16.mxu0 0
        %3508 = vmatmul.mubr.bf16.gmra.mrb[0].mxu0 %v3386
        %v3509 = vpop.f32.mrb[0].mxu0
        %v3510 = vadd.f32 0.0, %v3509
        %v3511 = vpop.f32.mrb[0].mxu0
        %v3512 = vpop.f32.mrb[0].mxu0
        %v3513 = vadd.f32 0.0, %v3512
        %v3514 = vpop.f32.mrb[0].mxu0
        %3515 = vdwg.mxu0
        %3532 = vrot.lane.b32.xlu0 %v3454, 64
        %v3533 = vpop.permute.xlu0 %3532
        %3534 = vrot.lane.b32.xlu0 %v3457, 64
        %v3535 = vpop.permute.xlu0 %3534
        %3536 = vrot.lane.b32.xlu0 %v3462, 64
        %v3537 = vpop.permute.xlu0 %3536
        %3538 = vrot.lane.b32.xlu0 %v3465, 64
        %v3539 = vpop.permute.xlu0 %3538
        %3540 = vrot.lane.b32.xlu0 %v3470, 64
        %v3541 = vpop.permute.xlu0 %3540
        %3542 = vrot.lane.b32.xlu0 %v3473, 64
        %v3543 = vpop.permute.xlu0 %3542
        %3544 = vrot.lane.b32.xlu0 %v3478, 64
        %v3545 = vpop.permute.xlu0 %3544
        %3546 = vrot.lane.b32.xlu0 %v3481, 64
        %v3547 = vpop.permute.xlu0 %3546
        %3548 = vrot.lane.b32.xlu0 %v3486, 64
        %v3549 = vpop.permute.xlu0 %3548
        %3550 = vrot.lane.b32.xlu0 %v3489, 64
        %v3551 = vpop.permute.xlu0 %3550
        %3552 = vrot.lane.b32.xlu0 %v3494, 64
        %v3553 = vpop.permute.xlu0 %3552
        %3554 = vrot.lane.b32.xlu0 %v3497, 64
        %v3555 = vpop.permute.xlu0 %3554
        %3556 = vrot.lane.b32.xlu0 %v3502, 64
        %v3557 = vpop.permute.xlu0 %3556
        %3558 = vrot.lane.b32.xlu0 %v3505, 64
        %v3559 = vpop.permute.xlu0 %3558
        %3560 = vrot.lane.b32.xlu0 %v3510, 64
        %v3561 = vpop.permute.xlu0 %3560
        %3562 = vrot.lane.b32.xlu0 %v3513, 64
        %v3563 = vpop.permute.xlu0 %3562
        %vm3580 = vcmask 785920
        %3581 = vst.msk [vmem:[#allocation4] sm:$0xff] %vm3580, %v3533
        %3582 = vst.msk [vmem:[#allocation4 + $0x8] sm:$0xff] %vm3580, %v3535
        %3583 = vst.msk [vmem:[#allocation4 + $0x10] sm:$0xff] %vm3580, %v3537
        %3584 = vst.msk [vmem:[#allocation4 + $0x18] sm:$0xff] %vm3580, %v3539
        %3585 = vst.msk [vmem:[#allocation4 + $0x20] sm:$0xff] %vm3580, %v3541
        %3586 = vst.msk [vmem:[#allocation4 + $0x28] sm:$0xff] %vm3580, %v3543
        %3587 = vst.msk [vmem:[#allocation4 + $0x30] sm:$0xff] %vm3580, %v3545
        %3588 = vst.msk [vmem:[#allocation4 + $0x38] sm:$0xff] %vm3580, %v3547
        %3589 = vst.msk [vmem:[#allocation4 + $0x40] sm:$0xff] %vm3580, %v3549
        %3590 = vst.msk [vmem:[#allocation4 + $0x48] sm:$0xff] %vm3580, %v3551
        %3591 = vst.msk [vmem:[#allocation4 + $0x50] sm:$0xff] %vm3580, %v3553
        %3592 = vst.msk [vmem:[#allocation4 + $0x58] sm:$0xff] %vm3580, %v3555
        %3593 = vst.msk [vmem:[#allocation4 + $0x60] sm:$0xff] %vm3580, %v3557
        %3594 = vst.msk [vmem:[#allocation4 + $0x68] sm:$0xff] %vm3580, %v3559
        %3595 = vst.msk [vmem:[#allocation4 + $0x70] sm:$0xff] %vm3580, %v3561
        %3596 = vst.msk [vmem:[#allocation4 + $0x78] sm:$0xff] %vm3580, %v3563
        %v3597 = vld [vmem:[#allocation3] sm:$0xff]
        %v3598 = vld [vmem:[#allocation3 + $0x18] sm:$0xff]
        %v3599 = vld [vmem:[#allocation3 + $0x30] sm:$0xff]
        %v3600 = vld [vmem:[#allocation3 + $0x48] sm:$0xff]
        %v3601 = vld [vmem:[#allocation3 + $0x60] sm:$0xff]
        %v3602 = vld [vmem:[#allocation3 + $0x78] sm:$0xff]
        %v3603 = vld [vmem:[#allocation3 + $0x90] sm:$0xff]
        %v3604 = vld [vmem:[#allocation3 + $0xa8] sm:$0xff]
        %v3605 = vld [vmem:[#allocation3 + $0xc0] sm:$0xff]
        %v3606 = vld [vmem:[#allocation3 + $0xd8] sm:$0xff]
        %v3607 = vld [vmem:[#allocation3 + $0xf0] sm:$0xff]
        %v3608 = vld [vmem:[#allocation3 + $0x108] sm:$0xff]
        %v3609 = vld [vmem:[#allocation3 + $0x120] sm:$0xff]
        %v3610 = vld [vmem:[#allocation3 + $0x138] sm:$0xff]
        %v3611 = vld [vmem:[#allocation3 + $0x150] sm:$0xff]
        %v3612 = vld [vmem:[#allocation3 + $0x168] sm:$0xff]
        %v3613 = vpack.c.bf16 %v3598, %v3597
        %v3614 = vpack.c.bf16 %v3600, %v3599
        %v3615 = vpack.c.bf16 %v3602, %v3601
        %v3616 = vpack.c.bf16 %v3604, %v3603
        %v3617 = vpack.c.bf16 %v3606, %v3605
        %v3618 = vpack.c.bf16 %v3608, %v3607
        %v3619 = vpack.c.bf16 %v3610, %v3609
        %v3620 = vpack.c.bf16 %v3612, %v3611
        %v3621 = vld [vmem:[#allocation3 + $0x8] sm:$0xff]
        %v3622 = vld [vmem:[#allocation3 + $0x20] sm:$0xff]
        %v3623 = vld [vmem:[#allocation3 + $0x38] sm:$0xff]
        %v3624 = vld [vmem:[#allocation3 + $0x50] sm:$0xff]
        %v3625 = vld [vmem:[#allocation3 + $0x68] sm:$0xff]
        %v3626 = vld [vmem:[#allocation3 + $0x80] sm:$0xff]
        %v3627 = vld [vmem:[#allocation3 + $0x98] sm:$0xff]
        %v3628 = vld [vmem:[#allocation3 + $0xb0] sm:$0xff]
        %v3629 = vld [vmem:[#allocation3 + $0xc8] sm:$0xff]
        %v3630 = vld [vmem:[#allocation3 + $0xe0] sm:$0xff]
        %v3631 = vld [vmem:[#allocation3 + $0xf8] sm:$0xff]
        %v3632 = vld [vmem:[#allocation3 + $0x110] sm:$0xff]
        %v3633 = vld [vmem:[#allocation3 + $0x128] sm:$0xff]
        %v3634 = vld [vmem:[#allocation3 + $0x140] sm:$0xff]
        %v3635 = vld [vmem:[#allocation3 + $0x158] sm:$0xff]
        %v3636 = vld [vmem:[#allocation3 + $0x170] sm:$0xff]
        %v3637 = vpack.c.bf16 %v3622, %v3621
        %v3638 = vpack.c.bf16 %v3624, %v3623
        %v3639 = vpack.c.bf16 %v3626, %v3625
        %v3640 = vpack.c.bf16 %v3628, %v3627
        %v3641 = vpack.c.bf16 %v3630, %v3629
        %v3642 = vpack.c.bf16 %v3632, %v3631
        %v3643 = vpack.c.bf16 %v3634, %v3633
        %v3644 = vpack.c.bf16 %v3636, %v3635
        %v3645 = vld [vmem:[#allocation3 + $0x10] sm:$0xff]
        %v3646 = vld [vmem:[#allocation3 + $0x28] sm:$0xff]
        %v3647 = vld [vmem:[#allocation3 + $0x40] sm:$0xff]
        %v3648 = vld [vmem:[#allocation3 + $0x58] sm:$0xff]
        %v3649 = vld [vmem:[#allocation3 + $0x70] sm:$0xff]
        %v3650 = vld [vmem:[#allocation3 + $0x88] sm:$0xff]
        %v3651 = vld [vmem:[#allocation3 + $0xa0] sm:$0xff]
        %v3652 = vld [vmem:[#allocation3 + $0xb8] sm:$0xff]
        %v3653 = vld [vmem:[#allocation3 + $0xd0] sm:$0xff]
        %v3654 = vld [vmem:[#allocation3 + $0xe8] sm:$0xff]
        %v3655 = vld [vmem:[#allocation3 + $0x100] sm:$0xff]
        %v3656 = vld [vmem:[#allocation3 + $0x118] sm:$0xff]
        %v3657 = vld [vmem:[#allocation3 + $0x130] sm:$0xff]
        %v3658 = vld [vmem:[#allocation3 + $0x148] sm:$0xff]
        %v3659 = vld [vmem:[#allocation3 + $0x160] sm:$0xff]
        %v3660 = vld [vmem:[#allocation3 + $0x178] sm:$0xff]
        %v3661 = vpack.c.bf16 %v3646, %v3645
        %v3662 = vpack.c.bf16 %v3648, %v3647
        %v3663 = vpack.c.bf16 %v3650, %v3649
        %v3664 = vpack.c.bf16 %v3652, %v3651
        %v3665 = vpack.c.bf16 %v3654, %v3653
        %v3666 = vpack.c.bf16 %v3656, %v3655
        %v3667 = vpack.c.bf16 %v3658, %v3657
        %v3668 = vpack.c.bf16 %v3660, %v3659
        %v3669 = vld [vmem:[%s6] sm:$0xff]
        %v3670 = vld [vmem:[%s6 + $0x8] sm:$0xff]
        %v3671 = vld [vmem:[%s6 + $0x10] sm:$0xff]
        %v3672 = vld [vmem:[%s6 + $0x18] sm:$0xff]
        %v3673 = vld [vmem:[%s6 + $0x20] sm:$0xff]
        %v3674 = vld [vmem:[%s6 + $0x28] sm:$0xff]
        %v3675 = vld [vmem:[%s6 + $0x30] sm:$0xff]
        %v3676 = vld [vmem:[%s6 + $0x38] sm:$0xff]
        %v3677 = vld [vmem:[%s6 + $0x40] sm:$0xff]
        %v3678 = vld [vmem:[%s6 + $0x48] sm:$0xff]
        %v3679 = vld [vmem:[%s6 + $0x50] sm:$0xff]
        %v3680 = vld [vmem:[%s6 + $0x58] sm:$0xff]
        %v3681 = vld [vmem:[%s6 + $0x60] sm:$0xff]
        %v3682 = vld [vmem:[%s6 + $0x68] sm:$0xff]
        %v3683 = vld [vmem:[%s6 + $0x70] sm:$0xff]
        %v3684 = vld [vmem:[%s6 + $0x78] sm:$0xff]
        %3693 = vrot.lane.b32.xlu0 %v3613, 32
        %v3694 = vpop.permute.xlu0 %3693
        %3695 = vrot.lane.b32.xlu0 %v3614, 32
        %v3696 = vpop.permute.xlu0 %3695
        %3697 = vrot.lane.b32.xlu0 %v3615, 32
        %v3698 = vpop.permute.xlu0 %3697
        %3699 = vrot.lane.b32.xlu0 %v3616, 32
        %v3700 = vpop.permute.xlu0 %3699
        %3701 = vrot.lane.b32.xlu0 %v3617, 32
        %v3702 = vpop.permute.xlu0 %3701
        %3703 = vrot.lane.b32.xlu0 %v3618, 32
        %v3704 = vpop.permute.xlu0 %3703
        %3705 = vrot.lane.b32.xlu0 %v3619, 32
        %v3706 = vpop.permute.xlu0 %3705
        %3707 = vrot.lane.b32.xlu0 %v3620, 32
        %v3708 = vpop.permute.xlu0 %3707
        %3717 = vrot.lane.b32.xlu0 %v3637, 32
        %v3718 = vpop.permute.xlu0 %3717
        %3719 = vrot.lane.b32.xlu0 %v3638, 32
        %v3720 = vpop.permute.xlu0 %3719
        %3721 = vrot.lane.b32.xlu0 %v3639, 32
        %v3722 = vpop.permute.xlu0 %3721
        %3723 = vrot.lane.b32.xlu0 %v3640, 32
        %v3724 = vpop.permute.xlu0 %3723
        %3725 = vrot.lane.b32.xlu0 %v3641, 32
        %v3726 = vpop.permute.xlu0 %3725
        %3727 = vrot.lane.b32.xlu0 %v3642, 32
        %v3728 = vpop.permute.xlu0 %3727
        %3729 = vrot.lane.b32.xlu0 %v3643, 32
        %v3730 = vpop.permute.xlu0 %3729
        %3731 = vrot.lane.b32.xlu0 %v3644, 32
        %v3732 = vpop.permute.xlu0 %3731
        %v3734 = vsel %vm1900, %v3694, 0
        %v3737 = vsel %vm1900, %v3696, 0
        %v3740 = vsel %vm1900, %v3698, 0
        %v3743 = vsel %vm1900, %v3700, 0
        %v3746 = vsel %vm1900, %v3702, 0
        %v3749 = vsel %vm1900, %v3704, 0
        %v3752 = vsel %vm1900, %v3706, 0
        %v3755 = vsel %vm1900, %v3708, 0
        %v3758 = vsel %vm1900, %v3718, 0
        %v3761 = vsel %vm1900, %v3720, 0
        %v3764 = vsel %vm1900, %v3722, 0
        %v3767 = vsel %vm1900, %v3724, 0
        %v3770 = vsel %vm1900, %v3726, 0
        %v3773 = vsel %vm1900, %v3728, 0
        %v3776 = vsel %vm1900, %v3730, 0
        %v3779 = vsel %vm1900, %v3732, 0
        %3781 = vmatprep.subr.bf16.mxu0 0
        %3782 = vmatpush1.bf16.xpose.msra.mxu0 %v3758
        %3783 = vmatprep.subr.bf16.mxu0 0
        %3784 = vmatpush1.bf16.xpose.msra.mxu0 %v3761
        %3785 = vmatprep.subr.bf16.mxu0 0
        %3786 = vmatpush1.bf16.xpose.msra.mxu0 %v3764
        %3787 = vmatprep.subr.bf16.mxu0 0
        %3788 = vmatpush1.bf16.xpose.msra.mxu0 %v3767
        %3789 = vmatprep.subr.bf16.mxu0 0
        %3790 = vmatpush1.bf16.xpose.msra.mxu0 %v3770
        %3791 = vmatprep.subr.bf16.mxu0 0
        %3792 = vmatpush1.bf16.xpose.msra.mxu0 %v3773
        %3793 = vmatprep.subr.bf16.mxu0 0
        %3794 = vmatpush1.bf16.xpose.msra.mxu0 %v3776
        %3795 = vmatprep.subr.bf16.mxu0 0
        %3796 = vmatpush1.bf16.xpose.msra.mxu0 %v3779
        %3797 = vmatprep.subr.bf16.mxu0 0
        %3798 = vmatpush1.bf16.xpose.msra.mxu0 0
        %3799 = vmatprep.subr.bf16.mxu0 0
        %3800 = vmatpush1.bf16.xpose.msra.mxu0 0
        %3801 = vmatprep.subr.bf16.mxu0 0
        %3802 = vmatpush1.bf16.xpose.msra.mxu0 0
        %3803 = vmatprep.subr.bf16.mxu0 0
        %3804 = vmatpush1.bf16.xpose.msra.mxu0 0
        %3805 = vmatprep.subr.bf16.mxu0 0
        %3806 = vmatpush1.bf16.xpose.msra.mxu0 0
        %3807 = vmatprep.subr.bf16.mxu0 0
        %3808 = vmatpush1.bf16.xpose.msra.mxu0 0
        %3809 = vmatprep.subr.bf16.mxu0 0
        %3810 = vmatpush1.bf16.xpose.msra.mxu0 0
        %3811 = vmatprep.subr.bf16.mxu0 0
        %3812 = vmatpush1.bf16.xpose.msra.mxu0 0
        %3813 = vmatprep.mubr.bf16.mxu0 0
        %3814 = vmatmul.mubr.bf16.gmra.mrb[0].mxu0 %v3734
        %v3815 = vpop.f32.mrb[0].mxu0
        %v3816 = vadd.f32 %v3669, %v3815
        %v3817 = vpop.f32.mrb[0].mxu0
        %v3818 = vpop.f32.mrb[0].mxu0
        %v3819 = vadd.f32 %v3670, %v3818
        %v3820 = vpop.f32.mrb[0].mxu0
        %3821 = vmatprep.mubr.bf16.mxu0 0
        %3822 = vmatmul.mubr.bf16.gmra.mrb[0].mxu0 %v3737
        %v3823 = vpop.f32.mrb[0].mxu0
        %v3824 = vadd.f32 %v3671, %v3823
        %v3825 = vpop.f32.mrb[0].mxu0
        %v3826 = vpop.f32.mrb[0].mxu0
        %v3827 = vadd.f32 %v3672, %v3826
        %v3828 = vpop.f32.mrb[0].mxu0
        %3829 = vmatprep.mubr.bf16.mxu0 0
        %3830 = vmatmul.mubr.bf16.gmra.mrb[0].mxu0 %v3740
        %v3831 = vpop.f32.mrb[0].mxu0
        %v3832 = vadd.f32 %v3673, %v3831
        %v3833 = vpop.f32.mrb[0].mxu0
        %v3834 = vpop.f32.mrb[0].mxu0
        %v3835 = vadd.f32 %v3674, %v3834
        %v3836 = vpop.f32.mrb[0].mxu0
        %3837 = vmatprep.mubr.bf16.mxu0 0
        %3838 = vmatmul.mubr.bf16.gmra.mrb[0].mxu0 %v3743
        %v3839 = vpop.f32.mrb[0].mxu0
        %v3840 = vadd.f32 %v3675, %v3839
        %v3841 = vpop.f32.mrb[0].mxu0
        %v3842 = vpop.f32.mrb[0].mxu0
        %v3843 = vadd.f32 %v3676, %v3842
        %v3844 = vpop.f32.mrb[0].mxu0
        %3845 = vmatprep.mubr.bf16.mxu0 0
        %3846 = vmatmul.mubr.bf16.gmra.mrb[0].mxu0 %v3746
        %v3847 = vpop.f32.mrb[0].mxu0
        %v3848 = vadd.f32 %v3677, %v3847
        %v3849 = vpop.f32.mrb[0].mxu0
        %v3850 = vpop.f32.mrb[0].mxu0
        %v3851 = vadd.f32 %v3678, %v3850
        %v3852 = vpop.f32.mrb[0].mxu0
        %3853 = vmatprep.mubr.bf16.mxu0 0
        %3854 = vmatmul.mubr.bf16.gmra.mrb[0].mxu0 %v3749
        %v3855 = vpop.f32.mrb[0].mxu0
        %v3856 = vadd.f32 %v3679, %v3855
        %v3857 = vpop.f32.mrb[0].mxu0
        %v3858 = vpop.f32.mrb[0].mxu0
        %v3859 = vadd.f32 %v3680, %v3858
        %v3860 = vpop.f32.mrb[0].mxu0
        %3861 = vmatprep.mubr.bf16.mxu0 0
        %3862 = vmatmul.mubr.bf16.gmra.mrb[0].mxu0 %v3752
        %v3863 = vpop.f32.mrb[0].mxu0
        %v3864 = vadd.f32 %v3681, %v3863
        %v3865 = vpop.f32.mrb[0].mxu0
        %v3866 = vpop.f32.mrb[0].mxu0
        %v3867 = vadd.f32 %v3682, %v3866
        %v3868 = vpop.f32.mrb[0].mxu0
        %3869 = vmatprep.mubr.bf16.mxu0 0
        %3870 = vmatmul.mubr.bf16.gmra.mrb[0].mxu0 %v3755
        %v3871 = vpop.f32.mrb[0].mxu0
        %v3872 = vadd.f32 %v3683, %v3871
        %v3873 = vpop.f32.mrb[0].mxu0
        %v3874 = vpop.f32.mrb[0].mxu0
        %v3875 = vadd.f32 %v3684, %v3874
        %v3876 = vpop.f32.mrb[0].mxu0
        %3877 = vdwg.mxu0
        %3878 = vmax.xlane.f32.xlu0 %v3816
        %v3879 = vpop.xlane.xlu0 %3878
        %3880 = vmax.xlane.f32.xlu0 %v3819
        %v3881 = vpop.xlane.xlu0 %3880
        %3882 = vmax.xlane.f32.xlu0 %v3824
        %v3883 = vpop.xlane.xlu0 %3882
        %3884 = vmax.xlane.f32.xlu0 %v3827
        %v3885 = vpop.xlane.xlu0 %3884
        %3886 = vmax.xlane.f32.xlu0 %v3832
        %v3887 = vpop.xlane.xlu0 %3886
        %3888 = vmax.xlane.f32.xlu0 %v3835
        %v3889 = vpop.xlane.xlu0 %3888
        %3890 = vmax.xlane.f32.xlu0 %v3840
        %v3891 = vpop.xlane.xlu0 %3890
        %3892 = vmax.xlane.f32.xlu0 %v3843
        %v3893 = vpop.xlane.xlu0 %3892
        %3894 = vmax.xlane.f32.xlu0 %v3848
        %v3895 = vpop.xlane.xlu0 %3894
        %3896 = vmax.xlane.f32.xlu0 %v3851
        %v3897 = vpop.xlane.xlu0 %3896
        %3898 = vmax.xlane.f32.xlu0 %v3856
        %v3899 = vpop.xlane.xlu0 %3898
        %3900 = vmax.xlane.f32.xlu0 %v3859
        %v3901 = vpop.xlane.xlu0 %3900
        %3902 = vmax.xlane.f32.xlu0 %v3864
        %v3903 = vpop.xlane.xlu0 %3902
        %3904 = vmax.xlane.f32.xlu0 %v3867
        %v3905 = vpop.xlane.xlu0 %3904
        %3906 = vmax.xlane.f32.xlu0 %v3872
        %v3907 = vpop.xlane.xlu0 %3906
        %3908 = vmax.xlane.f32.xlu0 %v3875
        %v3909 = vpop.xlane.xlu0 %3908
        %v3910 = vsub.f32 %v3816, %v3879
        %v3911 = vsub.f32 %v3819, %v3881
        %v3912 = vsub.f32 %v3824, %v3883
        %v3913 = vsub.f32 %v3827, %v3885
        %v3914 = vsub.f32 %v3832, %v3887
        %v3915 = vsub.f32 %v3835, %v3889
        %v3916 = vsub.f32 %v3840, %v3891
        %v3917 = vsub.f32 %v3843, %v3893
        %v3918 = vsub.f32 %v3848, %v3895
        %v3919 = vsub.f32 %v3851, %v3897
        %v3920 = vsub.f32 %v3856, %v3899
        %v3921 = vsub.f32 %v3859, %v3901
        %v3922 = vsub.f32 %v3864, %v3903
        %v3923 = vsub.f32 %v3867, %v3905
        %v3924 = vsub.f32 %v3872, %v3907
        %v3925 = vsub.f32 %v3875, %v3909
        %v3926 = vmul.f32 %v3910, 1.442695
        %v3927 = vpow.pop %v3926
        %v3928 = vmul.f32 %v3911, 1.442695
        %v3929 = vpow.pop %v3928
        %v3930 = vmul.f32 %v3912, 1.442695
        %v3931 = vpow.pop %v3930
        %v3932 = vmul.f32 %v3913, 1.442695
        %v3933 = vpow.pop %v3932
        %v3934 = vmul.f32 %v3914, 1.442695
        %v3935 = vpow.pop %v3934
        %v3936 = vmul.f32 %v3915, 1.442695
        %v3937 = vpow.pop %v3936
        %v3938 = vmul.f32 %v3916, 1.442695
        %v3939 = vpow.pop %v3938
        %v3940 = vmul.f32 %v3917, 1.442695
        %v3941 = vpow.pop %v3940
        %v3942 = vmul.f32 %v3918, 1.442695
        %v3943 = vpow.pop %v3942
        %v3944 = vmul.f32 %v3919, 1.442695
        %v3945 = vpow.pop %v3944
        %v3946 = vmul.f32 %v3920, 1.442695
        %v3947 = vpow.pop %v3946
        %v3948 = vmul.f32 %v3921, 1.442695
        %v3949 = vpow.pop %v3948
        %v3950 = vmul.f32 %v3922, 1.442695
        %v3951 = vpow.pop %v3950
        %v3952 = vmul.f32 %v3923, 1.442695
        %v3953 = vpow.pop %v3952
        %v3954 = vmul.f32 %v3924, 1.442695
        %v3955 = vpow.pop %v3954
        %v3956 = vmul.f32 %v3925, 1.442695
        %v3957 = vpow.pop %v3956
        %3958 = vadd.xlane.f32.xlu0 %v3927
        %v3959 = vpop.xlane.xlu0 %3958
        %3960 = vadd.xlane.f32.xlu0 %v3929
        %v3961 = vpop.xlane.xlu0 %3960
        %3962 = vadd.xlane.f32.xlu0 %v3931
        %v3963 = vpop.xlane.xlu0 %3962
        %3964 = vadd.xlane.f32.xlu0 %v3933
        %v3965 = vpop.xlane.xlu0 %3964
        %3966 = vadd.xlane.f32.xlu0 %v3935
        %v3967 = vpop.xlane.xlu0 %3966
        %3968 = vadd.xlane.f32.xlu0 %v3937
        %v3969 = vpop.xlane.xlu0 %3968
        %3970 = vadd.xlane.f32.xlu0 %v3939
        %v3971 = vpop.xlane.xlu0 %3970
        %3972 = vadd.xlane.f32.xlu0 %v3941
        %v3973 = vpop.xlane.xlu0 %3972
        %3974 = vadd.xlane.f32.xlu0 %v3943
        %v3975 = vpop.xlane.xlu0 %3974
        %3976 = vadd.xlane.f32.xlu0 %v3945
        %v3977 = vpop.xlane.xlu0 %3976
        %3978 = vadd.xlane.f32.xlu0 %v3947
        %v3979 = vpop.xlane.xlu0 %3978
        %3980 = vadd.xlane.f32.xlu0 %v3949
        %v3981 = vpop.xlane.xlu0 %3980
        %3982 = vadd.xlane.f32.xlu0 %v3951
        %v3983 = vpop.xlane.xlu0 %3982
        %3984 = vadd.xlane.f32.xlu0 %v3953
        %v3985 = vpop.xlane.xlu0 %3984
        %3986 = vadd.xlane.f32.xlu0 %v3955
        %v3987 = vpop.xlane.xlu0 %3986
        %3988 = vadd.xlane.f32.xlu0 %v3957
        %v3989 = vpop.xlane.xlu0 %3988
        %v3990 = vrcp.pop %v3959
        %v3991 = vrcp.pop %v3961
        %v3992 = vrcp.pop %v3963
        %v3993 = vrcp.pop %v3965
        %v3994 = vrcp.pop %v3967
        %v3995 = vrcp.pop %v3969
        %v3996 = vrcp.pop %v3971
        %v3997 = vrcp.pop %v3973
        %v3998 = vrcp.pop %v3975
        %v3999 = vrcp.pop %v3977
        %v4000 = vrcp.pop %v3979
        %v4001 = vrcp.pop %v3981
        %v4002 = vrcp.pop %v3983
        %v4003 = vrcp.pop %v3985
        %v4004 = vrcp.pop %v3987
        %v4005 = vrcp.pop %v3989
        %v4006 = vmul.f32 %v3927, %v3990
        %v4007 = vmul.f32 %v3929, %v3991
        %v4008 = vmul.f32 %v3931, %v3992
        %v4009 = vmul.f32 %v3933, %v3993
        %v4010 = vmul.f32 %v3935, %v3994
        %v4011 = vmul.f32 %v3937, %v3995
        %v4012 = vmul.f32 %v3939, %v3996
        %v4013 = vmul.f32 %v3941, %v3997
        %v4014 = vmul.f32 %v3943, %v3998
        %v4015 = vmul.f32 %v3945, %v3999
        %v4016 = vmul.f32 %v3947, %v4000
        %v4017 = vmul.f32 %v3949, %v4001
        %v4018 = vmul.f32 %v3951, %v4002
        %v4019 = vmul.f32 %v3953, %v4003
        %v4020 = vmul.f32 %v3955, %v4004
        %v4021 = vmul.f32 %v3957, %v4005
        %v4022 = vpack.c.bf16 %v4007, %v4006
        %v4023 = vpack.c.bf16 %v4009, %v4008
        %v4024 = vpack.c.bf16 %v4011, %v4010
        %v4025 = vpack.c.bf16 %v4013, %v4012
        %v4026 = vpack.c.bf16 %v4015, %v4014
        %v4027 = vpack.c.bf16 %v4017, %v4016
        %v4028 = vpack.c.bf16 %v4019, %v4018
        %v4029 = vpack.c.bf16 %v4021, %v4020
        %4038 = vrot.lane.b32.xlu0 %v3661, 32
        %v4039 = vpop.permute.xlu0 %4038
        %4040 = vrot.lane.b32.xlu0 %v3662, 32
        %v4041 = vpop.permute.xlu0 %4040
        %4042 = vrot.lane.b32.xlu0 %v3663, 32
        %v4043 = vpop.permute.xlu0 %4042
        %4044 = vrot.lane.b32.xlu0 %v3664, 32
        %v4045 = vpop.permute.xlu0 %4044
        %4046 = vrot.lane.b32.xlu0 %v3665, 32
        %v4047 = vpop.permute.xlu0 %4046
        %4048 = vrot.lane.b32.xlu0 %v3666, 32
        %v4049 = vpop.permute.xlu0 %4048
        %4050 = vrot.lane.b32.xlu0 %v3667, 32
        %v4051 = vpop.permute.xlu0 %4050
        %4052 = vrot.lane.b32.xlu0 %v3668, 32
        %v4053 = vpop.permute.xlu0 %4052
        %4062 = vmatprep.subr.bf16.mxu0 0
        %4063 = vmatpush1.bf16.msra.mxu0 %v4039
        %4064 = vmatprep.subr.bf16.mxu0 0
        %4065 = vmatpush1.bf16.msra.mxu0 %v4041
        %4066 = vmatprep.subr.bf16.mxu0 0
        %4067 = vmatpush1.bf16.msra.mxu0 %v4043
        %4068 = vmatprep.subr.bf16.mxu0 0
        %4069 = vmatpush1.bf16.msra.mxu0 %v4045
        %4070 = vmatprep.subr.bf16.mxu0 0
        %4071 = vmatpush1.bf16.msra.mxu0 %v4047
        %4072 = vmatprep.subr.bf16.mxu0 0
        %4073 = vmatpush1.bf16.msra.mxu0 %v4049
        %4074 = vmatprep.subr.bf16.mxu0 0
        %4075 = vmatpush1.bf16.msra.mxu0 %v4051
        %4076 = vmatprep.subr.bf16.mxu0 0
        %4077 = vmatpush1.bf16.msra.mxu0 %v4053
        %4078 = vmatprep.subr.bf16.mxu0 0
        %4079 = vmatpush1.bf16.msra.mxu0 0
        %4080 = vmatprep.subr.bf16.mxu0 0
        %4081 = vmatpush1.bf16.msra.mxu0 0
        %4082 = vmatprep.subr.bf16.mxu0 0
        %4083 = vmatpush1.bf16.msra.mxu0 0
        %4084 = vmatprep.subr.bf16.mxu0 0
        %4085 = vmatpush1.bf16.msra.mxu0 0
        %4086 = vmatprep.subr.bf16.mxu0 0
        %4087 = vmatpush1.bf16.msra.mxu0 0
        %4088 = vmatprep.subr.bf16.mxu0 0
        %4089 = vmatpush1.bf16.msra.mxu0 0
        %4090 = vmatprep.subr.bf16.mxu0 0
        %4091 = vmatpush1.bf16.msra.mxu0 0
        %4092 = vmatprep.subr.bf16.mxu0 0
        %4093 = vmatpush1.bf16.msra.mxu0 0
        %4094 = vmatprep.mubr.bf16.mxu0 0
        %4095 = vmatmul.mubr.bf16.gmra.mrb[0].mxu0 %v4022
        %v4096 = vpop.f32.mrb[0].mxu0
        %v4097 = vadd.f32 0.0, %v4096
        %v4098 = vpop.f32.mrb[0].mxu0
        %v4099 = vpop.f32.mrb[0].mxu0
        %v4100 = vadd.f32 0.0, %v4099
        %v4101 = vpop.f32.mrb[0].mxu0
        %4102 = vmatprep.mubr.bf16.mxu0 0
        %4103 = vmatmul.mubr.bf16.gmra.mrb[0].mxu0 %v4023
        %v4104 = vpop.f32.mrb[0].mxu0
        %v4105 = vadd.f32 0.0, %v4104
        %v4106 = vpop.f32.mrb[0].mxu0
        %v4107 = vpop.f32.mrb[0].mxu0
        %v4108 = vadd.f32 0.0, %v4107
        %v4109 = vpop.f32.mrb[0].mxu0
        %4110 = vmatprep.mubr.bf16.mxu0 0
        %4111 = vmatmul.mubr.bf16.gmra.mrb[0].mxu0 %v4024
        %v4112 = vpop.f32.mrb[0].mxu0
        %v4113 = vadd.f32 0.0, %v4112
        %v4114 = vpop.f32.mrb[0].mxu0
        %v4115 = vpop.f32.mrb[0].mxu0
        %v4116 = vadd.f32 0.0, %v4115
        %v4117 = vpop.f32.mrb[0].mxu0
        %4118 = vmatprep.mubr.bf16.mxu0 0
        %4119 = vmatmul.mubr.bf16.gmra.mrb[0].mxu0 %v4025
        %v4120 = vpop.f32.mrb[0].mxu0
        %v4121 = vadd.f32 0.0, %v4120
        %v4122 = vpop.f32.mrb[0].mxu0
        %v4123 = vpop.f32.mrb[0].mxu0
        %v4124 = vadd.f32 0.0, %v4123
        %v4125 = vpop.f32.mrb[0].mxu0
        %4126 = vmatprep.mubr.bf16.mxu0 0
        %4127 = vmatmul.mubr.bf16.gmra.mrb[0].mxu0 %v4026
        %v4128 = vpop.f32.mrb[0].mxu0
        %v4129 = vadd.f32 0.0, %v4128
        %v4130 = vpop.f32.mrb[0].mxu0
        %v4131 = vpop.f32.mrb[0].mxu0
        %v4132 = vadd.f32 0.0, %v4131
        %v4133 = vpop.f32.mrb[0].mxu0
        %4134 = vmatprep.mubr.bf16.mxu0 0
        %4135 = vmatmul.mubr.bf16.gmra.mrb[0].mxu0 %v4027
        %v4136 = vpop.f32.mrb[0].mxu0
        %v4137 = vadd.f32 0.0, %v4136
        %v4138 = vpop.f32.mrb[0].mxu0
        %v4139 = vpop.f32.mrb[0].mxu0
        %v4140 = vadd.f32 0.0, %v4139
        %v4141 = vpop.f32.mrb[0].mxu0
        %4142 = vmatprep.mubr.bf16.mxu0 0
        %4143 = vmatmul.mubr.bf16.gmra.mrb[0].mxu0 %v4028
        %v4144 = vpop.f32.mrb[0].mxu0
        %v4145 = vadd.f32 0.0, %v4144
        %v4146 = vpop.f32.mrb[0].mxu0
        %v4147 = vpop.f32.mrb[0].mxu0
        %v4148 = vadd.f32 0.0, %v4147
        %v4149 = vpop.f32.mrb[0].mxu0
        %4150 = vmatprep.mubr.bf16.mxu0 0
        %4151 = vmatmul.mubr.bf16.gmra.mrb[0].mxu0 %v4029
        %v4152 = vpop.f32.mrb[0].mxu0
        %v4153 = vadd.f32 0.0, %v4152
        %v4154 = vpop.f32.mrb[0].mxu0
        %v4155 = vpop.f32.mrb[0].mxu0
        %v4156 = vadd.f32 0.0, %v4155
        %v4157 = vpop.f32.mrb[0].mxu0
        %4158 = vdwg.mxu0
        %4175 = vrot.lane.b32.xlu0 %v4097, 96
        %v4176 = vpop.permute.xlu0 %4175
        %4177 = vrot.lane.b32.xlu0 %v4100, 96
        %v4178 = vpop.permute.xlu0 %4177
        %4179 = vrot.lane.b32.xlu0 %v4105, 96
        %v4180 = vpop.permute.xlu0 %4179
        %4181 = vrot.lane.b32.xlu0 %v4108, 96
        %v4182 = vpop.permute.xlu0 %4181
        %4183 = vrot.lane.b32.xlu0 %v4113, 96
        %v4184 = vpop.permute.xlu0 %4183
        %4185 = vrot.lane.b32.xlu0 %v4116, 96
        %v4186 = vpop.permute.xlu0 %4185
        %4187 = vrot.lane.b32.xlu0 %v4121, 96
        %v4188 = vpop.permute.xlu0 %4187
        %4189 = vrot.lane.b32.xlu0 %v4124, 96
        %v4190 = vpop.permute.xlu0 %4189
        %4191 = vrot.lane.b32.xlu0 %v4129, 96
        %v4192 = vpop.permute.xlu0 %4191
        %4193 = vrot.lane.b32.xlu0 %v4132, 96
        %v4194 = vpop.permute.xlu0 %4193
        %4195 = vrot.lane.b32.xlu0 %v4137, 96
        %v4196 = vpop.permute.xlu0 %4195
        %4197 = vrot.lane.b32.xlu0 %v4140, 96
        %v4198 = vpop.permute.xlu0 %4197
        %4199 = vrot.lane.b32.xlu0 %v4145, 96
        %v4200 = vpop.permute.xlu0 %4199
        %4201 = vrot.lane.b32.xlu0 %v4148, 96
        %v4202 = vpop.permute.xlu0 %4201
        %4203 = vrot.lane.b32.xlu0 %v4153, 96
        %v4204 = vpop.permute.xlu0 %4203
        %4205 = vrot.lane.b32.xlu0 %v4156, 96
        %v4206 = vpop.permute.xlu0 %4205
        %vm4223 = vcmask 1048320
        %4224 = vst.msk [vmem:[#allocation4] sm:$0xff] %vm4223, %v4176
        %4225 = vst.msk [vmem:[#allocation4 + $0x8] sm:$0xff] %vm4223, %v4178
        %4226 = vst.msk [vmem:[#allocation4 + $0x10] sm:$0xff] %vm4223, %v4180
        %4227 = vst.msk [vmem:[#allocation4 + $0x18] sm:$0xff] %vm4223, %v4182
        %4228 = vst.msk [vmem:[#allocation4 + $0x20] sm:$0xff] %vm4223, %v4184
        %4229 = vst.msk [vmem:[#allocation4 + $0x28] sm:$0xff] %vm4223, %v4186
        %4230 = vst.msk [vmem:[#allocation4 + $0x30] sm:$0xff] %vm4223, %v4188
        %4231 = vst.msk [vmem:[#allocation4 + $0x38] sm:$0xff] %vm4223, %v4190
        %4232 = vst.msk [vmem:[#allocation4 + $0x40] sm:$0xff] %vm4223, %v4192
        %4233 = vst.msk [vmem:[#allocation4 + $0x48] sm:$0xff] %vm4223, %v4194
        %4234 = vst.msk [vmem:[#allocation4 + $0x50] sm:$0xff] %vm4223, %v4196
        %4235 = vst.msk [vmem:[#allocation4 + $0x58] sm:$0xff] %vm4223, %v4198
        %4236 = vst.msk [vmem:[#allocation4 + $0x60] sm:$0xff] %vm4223, %v4200
        %4237 = vst.msk [vmem:[#allocation4 + $0x68] sm:$0xff] %vm4223, %v4202
        %4238 = vst.msk [vmem:[#allocation4 + $0x70] sm:$0xff] %vm4223, %v4204
        %4239 = vst.msk [vmem:[#allocation4 + $0x78] sm:$0xff] %vm4223, %v4206
        %v4240 = vld [vmem:[#allocation3 + $0x180] sm:$0xff]
        %v4241 = vld [vmem:[#allocation3 + $0x198] sm:$0xff]
        %v4242 = vld [vmem:[#allocation3 + $0x1b0] sm:$0xff]
        %v4243 = vld [vmem:[#allocation3 + $0x1c8] sm:$0xff]
        %v4244 = vld [vmem:[#allocation3 + $0x1e0] sm:$0xff]
        %v4245 = vld [vmem:[#allocation3 + $0x1f8] sm:$0xff]
        %v4246 = vld [vmem:[#allocation3 + $0x210] sm:$0xff]
        %v4247 = vld [vmem:[#allocation3 + $0x228] sm:$0xff]
        %v4248 = vld [vmem:[#allocation3 + $0x240] sm:$0xff]
        %v4249 = vld [vmem:[#allocation3 + $0x258] sm:$0xff]
        %v4250 = vld [vmem:[#allocation3 + $0x270] sm:$0xff]
        %v4251 = vld [vmem:[#allocation3 + $0x288] sm:$0xff]
        %v4252 = vld [vmem:[#allocation3 + $0x2a0] sm:$0xff]
        %v4253 = vld [vmem:[#allocation3 + $0x2b8] sm:$0xff]
        %v4254 = vld [vmem:[#allocation3 + $0x2d0] sm:$0xff]
        %v4255 = vld [vmem:[#allocation3 + $0x2e8] sm:$0xff]
        %v4256 = vpack.c.bf16 %v4241, %v4240
        %v4257 = vpack.c.bf16 %v4243, %v4242
        %v4258 = vpack.c.bf16 %v4245, %v4244
        %v4259 = vpack.c.bf16 %v4247, %v4246
        %v4260 = vpack.c.bf16 %v4249, %v4248
        %v4261 = vpack.c.bf16 %v4251, %v4250
        %v4262 = vpack.c.bf16 %v4253, %v4252
        %v4263 = vpack.c.bf16 %v4255, %v4254
        %v4264 = vld [vmem:[#allocation3 + $0x188] sm:$0xff]
        %v4265 = vld [vmem:[#allocation3 + $0x1a0] sm:$0xff]
        %v4266 = vld [vmem:[#allocation3 + $0x1b8] sm:$0xff]
        %v4267 = vld [vmem:[#allocation3 + $0x1d0] sm:$0xff]
        %v4268 = vld [vmem:[#allocation3 + $0x1e8] sm:$0xff]
        %v4269 = vld [vmem:[#allocation3 + $0x200] sm:$0xff]
        %v4270 = vld [vmem:[#allocation3 + $0x218] sm:$0xff]
        %v4271 = vld [vmem:[#allocation3 + $0x230] sm:$0xff]
        %v4272 = vld [vmem:[#allocation3 + $0x248] sm:$0xff]
        %v4273 = vld [vmem:[#allocation3 + $0x260] sm:$0xff]
        %v4274 = vld [vmem:[#allocation3 + $0x278] sm:$0xff]
        %v4275 = vld [vmem:[#allocation3 + $0x290] sm:$0xff]
        %v4276 = vld [vmem:[#allocation3 + $0x2a8] sm:$0xff]
        %v4277 = vld [vmem:[#allocation3 + $0x2c0] sm:$0xff]
        %v4278 = vld [vmem:[#allocation3 + $0x2d8] sm:$0xff]
        %v4279 = vld [vmem:[#allocation3 + $0x2f0] sm:$0xff]
        %v4280 = vpack.c.bf16 %v4265, %v4264
        %v4281 = vpack.c.bf16 %v4267, %v4266
        %v4282 = vpack.c.bf16 %v4269, %v4268
        %v4283 = vpack.c.bf16 %v4271, %v4270
        %v4284 = vpack.c.bf16 %v4273, %v4272
        %v4285 = vpack.c.bf16 %v4275, %v4274
        %v4286 = vpack.c.bf16 %v4277, %v4276
        %v4287 = vpack.c.bf16 %v4279, %v4278
        %v4288 = vld [vmem:[#allocation3 + $0x190] sm:$0xff]
        %v4289 = vld [vmem:[#allocation3 + $0x1a8] sm:$0xff]
        %v4290 = vld [vmem:[#allocation3 + $0x1c0] sm:$0xff]
        %v4291 = vld [vmem:[#allocation3 + $0x1d8] sm:$0xff]
        %v4292 = vld [vmem:[#allocation3 + $0x1f0] sm:$0xff]
        %v4293 = vld [vmem:[#allocation3 + $0x208] sm:$0xff]
        %v4294 = vld [vmem:[#allocation3 + $0x220] sm:$0xff]
        %v4295 = vld [vmem:[#allocation3 + $0x238] sm:$0xff]
        %v4296 = vld [vmem:[#allocation3 + $0x250] sm:$0xff]
        %v4297 = vld [vmem:[#allocation3 + $0x268] sm:$0xff]
        %v4298 = vld [vmem:[#allocation3 + $0x280] sm:$0xff]
        %v4299 = vld [vmem:[#allocation3 + $0x298] sm:$0xff]
        %v4300 = vld [vmem:[#allocation3 + $0x2b0] sm:$0xff]
        %v4301 = vld [vmem:[#allocation3 + $0x2c8] sm:$0xff]
        %v4302 = vld [vmem:[#allocation3 + $0x2e0] sm:$0xff]
        %v4303 = vld [vmem:[#allocation3 + $0x2f8] sm:$0xff]
        %v4304 = vpack.c.bf16 %v4289, %v4288
        %v4305 = vpack.c.bf16 %v4291, %v4290
        %v4306 = vpack.c.bf16 %v4293, %v4292
        %v4307 = vpack.c.bf16 %v4295, %v4294
        %v4308 = vpack.c.bf16 %v4297, %v4296
        %v4309 = vpack.c.bf16 %v4299, %v4298
        %v4310 = vpack.c.bf16 %v4301, %v4300
        %v4311 = vpack.c.bf16 %v4303, %v4302
        %v4312 = vld [vmem:[%s6] sm:$0xff]
        %v4313 = vld [vmem:[%s6 + $0x8] sm:$0xff]
        %v4314 = vld [vmem:[%s6 + $0x10] sm:$0xff]
        %v4315 = vld [vmem:[%s6 + $0x18] sm:$0xff]
        %v4316 = vld [vmem:[%s6 + $0x20] sm:$0xff]
        %v4317 = vld [vmem:[%s6 + $0x28] sm:$0xff]
        %v4318 = vld [vmem:[%s6 + $0x30] sm:$0xff]
        %v4319 = vld [vmem:[%s6 + $0x38] sm:$0xff]
        %v4320 = vld [vmem:[%s6 + $0x40] sm:$0xff]
        %v4321 = vld [vmem:[%s6 + $0x48] sm:$0xff]
        %v4322 = vld [vmem:[%s6 + $0x50] sm:$0xff]
        %v4323 = vld [vmem:[%s6 + $0x58] sm:$0xff]
        %v4324 = vld [vmem:[%s6 + $0x60] sm:$0xff]
        %v4325 = vld [vmem:[%s6 + $0x68] sm:$0xff]
        %v4326 = vld [vmem:[%s6 + $0x70] sm:$0xff]
        %v4327 = vld [vmem:[%s6 + $0x78] sm:$0xff]
        %v4329 = vsel %vm1900, %v4256, 0
        %v4332 = vsel %vm1900, %v4257, 0
        %v4335 = vsel %vm1900, %v4258, 0
        %v4338 = vsel %vm1900, %v4259, 0
        %v4341 = vsel %vm1900, %v4260, 0
        %v4344 = vsel %vm1900, %v4261, 0
        %v4347 = vsel %vm1900, %v4262, 0
        %v4350 = vsel %vm1900, %v4263, 0
        %v4353 = vsel %vm1900, %v4280, 0
        %v4356 = vsel %vm1900, %v4281, 0
        %v4359 = vsel %vm1900, %v4282, 0
        %v4362 = vsel %vm1900, %v4283, 0
        %v4365 = vsel %vm1900, %v4284, 0
        %v4368 = vsel %vm1900, %v4285, 0
        %v4371 = vsel %vm1900, %v4286, 0
        %v4374 = vsel %vm1900, %v4287, 0
        %4376 = vmatprep.subr.bf16.mxu0 0
        %4377 = vmatpush1.bf16.xpose.msra.mxu0 %v4353
        %4378 = vmatprep.subr.bf16.mxu0 0
        %4379 = vmatpush1.bf16.xpose.msra.mxu0 %v4356
        %4380 = vmatprep.subr.bf16.mxu0 0
        %4381 = vmatpush1.bf16.xpose.msra.mxu0 %v4359
        %4382 = vmatprep.subr.bf16.mxu0 0
        %4383 = vmatpush1.bf16.xpose.msra.mxu0 %v4362
        %4384 = vmatprep.subr.bf16.mxu0 0
        %4385 = vmatpush1.bf16.xpose.msra.mxu0 %v4365
        %4386 = vmatprep.subr.bf16.mxu0 0
        %4387 = vmatpush1.bf16.xpose.msra.mxu0 %v4368
        %4388 = vmatprep.subr.bf16.mxu0 0
        %4389 = vmatpush1.bf16.xpose.msra.mxu0 %v4371
        %4390 = vmatprep.subr.bf16.mxu0 0
        %4391 = vmatpush1.bf16.xpose.msra.mxu0 %v4374
        %4392 = vmatprep.subr.bf16.mxu0 0
        %4393 = vmatpush1.bf16.xpose.msra.mxu0 0
        %4394 = vmatprep.subr.bf16.mxu0 0
        %4395 = vmatpush1.bf16.xpose.msra.mxu0 0
        %4396 = vmatprep.subr.bf16.mxu0 0
        %4397 = vmatpush1.bf16.xpose.msra.mxu0 0
        %4398 = vmatprep.subr.bf16.mxu0 0
        %4399 = vmatpush1.bf16.xpose.msra.mxu0 0
        %4400 = vmatprep.subr.bf16.mxu0 0
        %4401 = vmatpush1.bf16.xpose.msra.mxu0 0
        %4402 = vmatprep.subr.bf16.mxu0 0
        %4403 = vmatpush1.bf16.xpose.msra.mxu0 0
        %4404 = vmatprep.subr.bf16.mxu0 0
        %4405 = vmatpush1.bf16.xpose.msra.mxu0 0
        %4406 = vmatprep.subr.bf16.mxu0 0
        %4407 = vmatpush1.bf16.xpose.msra.mxu0 0
        %4408 = vmatprep.mubr.bf16.mxu0 0
        %4409 = vmatmul.mubr.bf16.gmra.mrb[0].mxu0 %v4329
        %v4410 = vpop.f32.mrb[0].mxu0
        %v4411 = vadd.f32 %v4312, %v4410
        %v4412 = vpop.f32.mrb[0].mxu0
        %v4413 = vpop.f32.mrb[0].mxu0
        %v4414 = vadd.f32 %v4313, %v4413
        %v4415 = vpop.f32.mrb[0].mxu0
        %4416 = vmatprep.mubr.bf16.mxu0 0
        %4417 = vmatmul.mubr.bf16.gmra.mrb[0].mxu0 %v4332
        %v4418 = vpop.f32.mrb[0].mxu0
        %v4419 = vadd.f32 %v4314, %v4418
        %v4420 = vpop.f32.mrb[0].mxu0
        %v4421 = vpop.f32.mrb[0].mxu0
        %v4422 = vadd.f32 %v4315, %v4421
        %v4423 = vpop.f32.mrb[0].mxu0
        %4424 = vmatprep.mubr.bf16.mxu0 0
        %4425 = vmatmul.mubr.bf16.gmra.mrb[0].mxu0 %v4335
        %v4426 = vpop.f32.mrb[0].mxu0
        %v4427 = vadd.f32 %v4316, %v4426
        %v4428 = vpop.f32.mrb[0].mxu0
        %v4429 = vpop.f32.mrb[0].mxu0
        %v4430 = vadd.f32 %v4317, %v4429
        %v4431 = vpop.f32.mrb[0].mxu0
        %4432 = vmatprep.mubr.bf16.mxu0 0
        %4433 = vmatmul.mubr.bf16.gmra.mrb[0].mxu0 %v4338
        %v4434 = vpop.f32.mrb[0].mxu0
        %v4435 = vadd.f32 %v4318, %v4434
        %v4436 = vpop.f32.mrb[0].mxu0
        %v4437 = vpop.f32.mrb[0].mxu0
        %v4438 = vadd.f32 %v4319, %v4437
        %v4439 = vpop.f32.mrb[0].mxu0
        %4440 = vmatprep.mubr.bf16.mxu0 0
        %4441 = vmatmul.mubr.bf16.gmra.mrb[0].mxu0 %v4341
        %v4442 = vpop.f32.mrb[0].mxu0
        %v4443 = vadd.f32 %v4320, %v4442
        %v4444 = vpop.f32.mrb[0].mxu0
        %v4445 = vpop.f32.mrb[0].mxu0
        %v4446 = vadd.f32 %v4321, %v4445
        %v4447 = vpop.f32.mrb[0].mxu0
        %4448 = vmatprep.mubr.bf16.mxu0 0
        %4449 = vmatmul.mubr.bf16.gmra.mrb[0].mxu0 %v4344
        %v4450 = vpop.f32.mrb[0].mxu0
        %v4451 = vadd.f32 %v4322, %v4450
        %v4452 = vpop.f32.mrb[0].mxu0
        %v4453 = vpop.f32.mrb[0].mxu0
        %v4454 = vadd.f32 %v4323, %v4453
        %v4455 = vpop.f32.mrb[0].mxu0
        %4456 = vmatprep.mubr.bf16.mxu0 0
        %4457 = vmatmul.mubr.bf16.gmra.mrb[0].mxu0 %v4347
        %v4458 = vpop.f32.mrb[0].mxu0
        %v4459 = vadd.f32 %v4324, %v4458
        %v4460 = vpop.f32.mrb[0].mxu0
        %v4461 = vpop.f32.mrb[0].mxu0
        %v4462 = vadd.f32 %v4325, %v4461
        %v4463 = vpop.f32.mrb[0].mxu0
        %4464 = vmatprep.mubr.bf16.mxu0 0
        %4465 = vmatmul.mubr.bf16.gmra.mrb[0].mxu0 %v4350
        %v4466 = vpop.f32.mrb[0].mxu0
        %v4467 = vadd.f32 %v4326, %v4466
        %v4468 = vpop.f32.mrb[0].mxu0
        %v4469 = vpop.f32.mrb[0].mxu0
        %v4470 = vadd.f32 %v4327, %v4469
        %v4471 = vpop.f32.mrb[0].mxu0
        %4472 = vdwg.mxu0
        %4473 = vmax.xlane.f32.xlu0 %v4411
        %v4474 = vpop.xlane.xlu0 %4473
        %4475 = vmax.xlane.f32.xlu0 %v4414
        %v4476 = vpop.xlane.xlu0 %4475
        %4477 = vmax.xlane.f32.xlu0 %v4419
        %v4478 = vpop.xlane.xlu0 %4477
        %4479 = vmax.xlane.f32.xlu0 %v4422
        %v4480 = vpop.xlane.xlu0 %4479
        %4481 = vmax.xlane.f32.xlu0 %v4427
        %v4482 = vpop.xlane.xlu0 %4481
        %4483 = vmax.xlane.f32.xlu0 %v4430
        %v4484 = vpop.xlane.xlu0 %4483
        %4485 = vmax.xlane.f32.xlu0 %v4435
        %v4486 = vpop.xlane.xlu0 %4485
        %4487 = vmax.xlane.f32.xlu0 %v4438
        %v4488 = vpop.xlane.xlu0 %4487
        %4489 = vmax.xlane.f32.xlu0 %v4443
        %v4490 = vpop.xlane.xlu0 %4489
        %4491 = vmax.xlane.f32.xlu0 %v4446
        %v4492 = vpop.xlane.xlu0 %4491
        %4493 = vmax.xlane.f32.xlu0 %v4451
        %v4494 = vpop.xlane.xlu0 %4493
        %4495 = vmax.xlane.f32.xlu0 %v4454
        %v4496 = vpop.xlane.xlu0 %4495
        %4497 = vmax.xlane.f32.xlu0 %v4459
        %v4498 = vpop.xlane.xlu0 %4497
        %4499 = vmax.xlane.f32.xlu0 %v4462
        %v4500 = vpop.xlane.xlu0 %4499
        %4501 = vmax.xlane.f32.xlu0 %v4467
        %v4502 = vpop.xlane.xlu0 %4501
        %4503 = vmax.xlane.f32.xlu0 %v4470
        %v4504 = vpop.xlane.xlu0 %4503
        %v4505 = vsub.f32 %v4411, %v4474
        %v4506 = vsub.f32 %v4414, %v4476
        %v4507 = vsub.f32 %v4419, %v4478
        %v4508 = vsub.f32 %v4422, %v4480
        %v4509 = vsub.f32 %v4427, %v4482
        %v4510 = vsub.f32 %v4430, %v4484
        %v4511 = vsub.f32 %v4435, %v4486
        %v4512 = vsub.f32 %v4438, %v4488
        %v4513 = vsub.f32 %v4443, %v4490
        %v4514 = vsub.f32 %v4446, %v4492
        %v4515 = vsub.f32 %v4451, %v4494
        %v4516 = vsub.f32 %v4454, %v4496
        %v4517 = vsub.f32 %v4459, %v4498
        %v4518 = vsub.f32 %v4462, %v4500
        %v4519 = vsub.f32 %v4467, %v4502
        %v4520 = vsub.f32 %v4470, %v4504
        %v4521 = vmul.f32 %v4505, 1.442695
        %v4522 = vpow.pop %v4521
        %v4523 = vmul.f32 %v4506, 1.442695
        %v4524 = vpow.pop %v4523
        %v4525 = vmul.f32 %v4507, 1.442695
        %v4526 = vpow.pop %v4525
        %v4527 = vmul.f32 %v4508, 1.442695
        %v4528 = vpow.pop %v4527
        %v4529 = vmul.f32 %v4509, 1.442695
        %v4530 = vpow.pop %v4529
        %v4531 = vmul.f32 %v4510, 1.442695
        %v4532 = vpow.pop %v4531
        %v4533 = vmul.f32 %v4511, 1.442695
        %v4534 = vpow.pop %v4533
        %v4535 = vmul.f32 %v4512, 1.442695
        %v4536 = vpow.pop %v4535
        %v4537 = vmul.f32 %v4513, 1.442695
        %v4538 = vpow.pop %v4537
        %v4539 = vmul.f32 %v4514, 1.442695
        %v4540 = vpow.pop %v4539
        %v4541 = vmul.f32 %v4515, 1.442695
        %v4542 = vpow.pop %v4541
        %v4543 = vmul.f32 %v4516, 1.442695
        %v4544 = vpow.pop %v4543
        %v4545 = vmul.f32 %v4517, 1.442695
        %v4546 = vpow.pop %v4545
        %v4547 = vmul.f32 %v4518, 1.442695
        %v4548 = vpow.pop %v4547
        %v4549 = vmul.f32 %v4519, 1.442695
        %v4550 = vpow.pop %v4549
        %v4551 = vmul.f32 %v4520, 1.442695
        %v4552 = vpow.pop %v4551
        %4553 = vadd.xlane.f32.xlu0 %v4522
        %v4554 = vpop.xlane.xlu0 %4553
        %4555 = vadd.xlane.f32.xlu0 %v4524
        %v4556 = vpop.xlane.xlu0 %4555
        %4557 = vadd.xlane.f32.xlu0 %v4526
        %v4558 = vpop.xlane.xlu0 %4557
        %4559 = vadd.xlane.f32.xlu0 %v4528
        %v4560 = vpop.xlane.xlu0 %4559
        %4561 = vadd.xlane.f32.xlu0 %v4530
        %v4562 = vpop.xlane.xlu0 %4561
        %4563 = vadd.xlane.f32.xlu0 %v4532
        %v4564 = vpop.xlane.xlu0 %4563
        %4565 = vadd.xlane.f32.xlu0 %v4534
        %v4566 = vpop.xlane.xlu0 %4565
        %4567 = vadd.xlane.f32.xlu0 %v4536
        %v4568 = vpop.xlane.xlu0 %4567
        %4569 = vadd.xlane.f32.xlu0 %v4538
        %v4570 = vpop.xlane.xlu0 %4569
        %4571 = vadd.xlane.f32.xlu0 %v4540
        %v4572 = vpop.xlane.xlu0 %4571
        %4573 = vadd.xlane.f32.xlu0 %v4542
        %v4574 = vpop.xlane.xlu0 %4573
        %4575 = vadd.xlane.f32.xlu0 %v4544
        %v4576 = vpop.xlane.xlu0 %4575
        %4577 = vadd.xlane.f32.xlu0 %v4546
        %v4578 = vpop.xlane.xlu0 %4577
        %4579 = vadd.xlane.f32.xlu0 %v4548
        %v4580 = vpop.xlane.xlu0 %4579
        %4581 = vadd.xlane.f32.xlu0 %v4550
        %v4582 = vpop.xlane.xlu0 %4581
        %4583 = vadd.xlane.f32.xlu0 %v4552
        %v4584 = vpop.xlane.xlu0 %4583
        %v4585 = vrcp.pop %v4554
        %v4586 = vrcp.pop %v4556
        %v4587 = vrcp.pop %v4558
        %v4588 = vrcp.pop %v4560
        %v4589 = vrcp.pop %v4562
        %v4590 = vrcp.pop %v4564
        %v4591 = vrcp.pop %v4566
        %v4592 = vrcp.pop %v4568
        %v4593 = vrcp.pop %v4570
        %v4594 = vrcp.pop %v4572
        %v4595 = vrcp.pop %v4574
        %v4596 = vrcp.pop %v4576
        %v4597 = vrcp.pop %v4578
        %v4598 = vrcp.pop %v4580
        %v4599 = vrcp.pop %v4582
        %v4600 = vrcp.pop %v4584
        %v4601 = vmul.f32 %v4522, %v4585
        %v4602 = vmul.f32 %v4524, %v4586
        %v4603 = vmul.f32 %v4526, %v4587
        %v4604 = vmul.f32 %v4528, %v4588
        %v4605 = vmul.f32 %v4530, %v4589
        %v4606 = vmul.f32 %v4532, %v4590
        %v4607 = vmul.f32 %v4534, %v4591
        %v4608 = vmul.f32 %v4536, %v4592
        %v4609 = vmul.f32 %v4538, %v4593
        %v4610 = vmul.f32 %v4540, %v4594
        %v4611 = vmul.f32 %v4542, %v4595
        %v4612 = vmul.f32 %v4544, %v4596
        %v4613 = vmul.f32 %v4546, %v4597
        %v4614 = vmul.f32 %v4548, %v4598
        %v4615 = vmul.f32 %v4550, %v4599
        %v4616 = vmul.f32 %v4552, %v4600
        %v4617 = vpack.c.bf16 %v4602, %v4601
        %v4618 = vpack.c.bf16 %v4604, %v4603
        %v4619 = vpack.c.bf16 %v4606, %v4605
        %v4620 = vpack.c.bf16 %v4608, %v4607
        %v4621 = vpack.c.bf16 %v4610, %v4609
        %v4622 = vpack.c.bf16 %v4612, %v4611
        %v4623 = vpack.c.bf16 %v4614, %v4613
        %v4624 = vpack.c.bf16 %v4616, %v4615
        %4625 = vmatprep.subr.bf16.mxu0 0
        %4626 = vmatpush1.bf16.msra.mxu0 %v4304
        %4627 = vmatprep.subr.bf16.mxu0 0
        %4628 = vmatpush1.bf16.msra.mxu0 %v4305
        %4629 = vmatprep.subr.bf16.mxu0 0
        %4630 = vmatpush1.bf16.msra.mxu0 %v4306
        %4631 = vmatprep.subr.bf16.mxu0 0
        %4632 = vmatpush1.bf16.msra.mxu0 %v4307
        %4633 = vmatprep.subr.bf16.mxu0 0
        %4634 = vmatpush1.bf16.msra.mxu0 %v4308
        %4635 = vmatprep.subr.bf16.mxu0 0
        %4636 = vmatpush1.bf16.msra.mxu0 %v4309
        %4637 = vmatprep.subr.bf16.mxu0 0
        %4638 = vmatpush1.bf16.msra.mxu0 %v4310
        %4639 = vmatprep.subr.bf16.mxu0 0
        %4640 = vmatpush1.bf16.msra.mxu0 %v4311
        %4641 = vmatprep.subr.bf16.mxu0 0
        %4642 = vmatpush1.bf16.msra.mxu0 0
        %4643 = vmatprep.subr.bf16.mxu0 0
        %4644 = vmatpush1.bf16.msra.mxu0 0
        %4645 = vmatprep.subr.bf16.mxu0 0
        %4646 = vmatpush1.bf16.msra.mxu0 0
        %4647 = vmatprep.subr.bf16.mxu0 0
        %4648 = vmatpush1.bf16.msra.mxu0 0
        %4649 = vmatprep.subr.bf16.mxu0 0
        %4650 = vmatpush1.bf16.msra.mxu0 0
        %4651 = vmatprep.subr.bf16.mxu0 0
        %4652 = vmatpush1.bf16.msra.mxu0 0
        %4653 = vmatprep.subr.bf16.mxu0 0
        %4654 = vmatpush1.bf16.msra.mxu0 0
        %4655 = vmatprep.subr.bf16.mxu0 0
        %4656 = vmatpush1.bf16.msra.mxu0 0
        %4657 = vmatprep.mubr.bf16.mxu0 0
        %4658 = vmatmul.mubr.bf16.gmra.mrb[0].mxu0 %v4617
        %v4659 = vpop.f32.mrb[0].mxu0
        %v4660 = vadd.f32 0.0, %v4659
        %v4661 = vpop.f32.mrb[0].mxu0
        %v4662 = vpop.f32.mrb[0].mxu0
        %v4663 = vadd.f32 0.0, %v4662
        %v4664 = vpop.f32.mrb[0].mxu0
        %4665 = vmatprep.mubr.bf16.mxu0 0
        %4666 = vmatmul.mubr.bf16.gmra.mrb[0].mxu0 %v4618
        %v4667 = vpop.f32.mrb[0].mxu0
        %v4668 = vadd.f32 0.0, %v4667
        %v4669 = vpop.f32.mrb[0].mxu0
        %v4670 = vpop.f32.mrb[0].mxu0
        %v4671 = vadd.f32 0.0, %v4670
        %v4672 = vpop.f32.mrb[0].mxu0
        %4673 = vmatprep.mubr.bf16.mxu0 0
        %4674 = vmatmul.mubr.bf16.gmra.mrb[0].mxu0 %v4619
        %v4675 = vpop.f32.mrb[0].mxu0
        %v4676 = vadd.f32 0.0, %v4675
        %v4677 = vpop.f32.mrb[0].mxu0
        %v4678 = vpop.f32.mrb[0].mxu0
        %v4679 = vadd.f32 0.0, %v4678
        %v4680 = vpop.f32.mrb[0].mxu0
        %4681 = vmatprep.mubr.bf16.mxu0 0
        %4682 = vmatmul.mubr.bf16.gmra.mrb[0].mxu0 %v4620
        %v4683 = vpop.f32.mrb[0].mxu0
        %v4684 = vadd.f32 0.0, %v4683
        %v4685 = vpop.f32.mrb[0].mxu0
        %v4686 = vpop.f32.mrb[0].mxu0
        %v4687 = vadd.f32 0.0, %v4686
        %v4688 = vpop.f32.mrb[0].mxu0
        %4689 = vmatprep.mubr.bf16.mxu0 0
        %4690 = vmatmul.mubr.bf16.gmra.mrb[0].mxu0 %v4621
        %v4691 = vpop.f32.mrb[0].mxu0
        %v4692 = vadd.f32 0.0, %v4691
        %v4693 = vpop.f32.mrb[0].mxu0
        %v4694 = vpop.f32.mrb[0].mxu0
        %v4695 = vadd.f32 0.0, %v4694
        %v4696 = vpop.f32.mrb[0].mxu0
        %4697 = vmatprep.mubr.bf16.mxu0 0
        %4698 = vmatmul.mubr.bf16.gmra.mrb[0].mxu0 %v4622
        %v4699 = vpop.f32.mrb[0].mxu0
        %v4700 = vadd.f32 0.0, %v4699
        %v4701 = vpop.f32.mrb[0].mxu0
        %v4702 = vpop.f32.mrb[0].mxu0
        %v4703 = vadd.f32 0.0, %v4702
        %v4704 = vpop.f32.mrb[0].mxu0
        %4705 = vmatprep.mubr.bf16.mxu0 0
        %4706 = vmatmul.mubr.bf16.gmra.mrb[0].mxu0 %v4623
        %v4707 = vpop.f32.mrb[0].mxu0
        %v4708 = vadd.f32 0.0, %v4707
        %v4709 = vpop.f32.mrb[0].mxu0
        %v4710 = vpop.f32.mrb[0].mxu0
        %v4711 = vadd.f32 0.0, %v4710
        %v4712 = vpop.f32.mrb[0].mxu0
        %4713 = vmatprep.mubr.bf16.mxu0 0
        %4714 = vmatmul.mubr.bf16.gmra.mrb[0].mxu0 %v4624
        %v4715 = vpop.f32.mrb[0].mxu0
        %v4716 = vadd.f32 0.0, %v4715
        %v4717 = vpop.f32.mrb[0].mxu0
        %v4718 = vpop.f32.mrb[0].mxu0
        %v4719 = vadd.f32 0.0, %v4718
        %v4720 = vpop.f32.mrb[0].mxu0
        %4721 = vdwg.mxu0
        %4722 = vst.msk [vmem:[#allocation4 + $0x80] sm:$0xff] %vm1900, %v4660
        %4723 = vst.msk [vmem:[#allocation4 + $0x88] sm:$0xff] %vm1900, %v4663
        %4724 = vst.msk [vmem:[#allocation4 + $0x90] sm:$0xff] %vm1900, %v4668
        %4725 = vst.msk [vmem:[#allocation4 + $0x98] sm:$0xff] %vm1900, %v4671
        %4726 = vst.msk [vmem:[#allocation4 + $0xa0] sm:$0xff] %vm1900, %v4676
        %4727 = vst.msk [vmem:[#allocation4 + $0xa8] sm:$0xff] %vm1900, %v4679
        %4728 = vst.msk [vmem:[#allocation4 + $0xb0] sm:$0xff] %vm1900, %v4684
        %4729 = vst.msk [vmem:[#allocation4 + $0xb8] sm:$0xff] %vm1900, %v4687
        %4730 = vst.msk [vmem:[#allocation4 + $0xc0] sm:$0xff] %vm1900, %v4692
        %4731 = vst.msk [vmem:[#allocation4 + $0xc8] sm:$0xff] %vm1900, %v4695
        %4732 = vst.msk [vmem:[#allocation4 + $0xd0] sm:$0xff] %vm1900, %v4700
        %4733 = vst.msk [vmem:[#allocation4 + $0xd8] sm:$0xff] %vm1900, %v4703
        %4734 = vst.msk [vmem:[#allocation4 + $0xe0] sm:$0xff] %vm1900, %v4708
        %4735 = vst.msk [vmem:[#allocation4 + $0xe8] sm:$0xff] %vm1900, %v4711
        %4736 = vst.msk [vmem:[#allocation4 + $0xf0] sm:$0xff] %vm1900, %v4716
        %4737 = vst.msk [vmem:[#allocation4 + $0xf8] sm:$0xff] %vm1900, %v4719
        %v4738 = vld [vmem:[#allocation3 + $0x180] sm:$0xff]
        %v4739 = vld [vmem:[#allocation3 + $0x198] sm:$0xff]
        %v4740 = vld [vmem:[#allocation3 + $0x1b0] sm:$0xff]
        %v4741 = vld [vmem:[#allocation3 + $0x1c8] sm:$0xff]
        %v4742 = vld [vmem:[#allocation3 + $0x1e0] sm:$0xff]
        %v4743 = vld [vmem:[#allocation3 + $0x1f8] sm:$0xff]
        %v4744 = vld [vmem:[#allocation3 + $0x210] sm:$0xff]
        %v4745 = vld [vmem:[#allocation3 + $0x228] sm:$0xff]
        %v4746 = vld [vmem:[#allocation3 + $0x240] sm:$0xff]
        %v4747 = vld [vmem:[#allocation3 + $0x258] sm:$0xff]
        %v4748 = vld [vmem:[#allocation3 + $0x270] sm:$0xff]
        %v4749 = vld [vmem:[#allocation3 + $0x288] sm:$0xff]
        %v4750 = vld [vmem:[#allocation3 + $0x2a0] sm:$0xff]
        %v4751 = vld [vmem:[#allocation3 + $0x2b8] sm:$0xff]
        %v4752 = vld [vmem:[#allocation3 + $0x2d0] sm:$0xff]
        %v4753 = vld [vmem:[#allocation3 + $0x2e8] sm:$0xff]
        %v4754 = vpack.c.bf16 %v4739, %v4738
        %v4755 = vpack.c.bf16 %v4741, %v4740
        %v4756 = vpack.c.bf16 %v4743, %v4742
        %v4757 = vpack.c.bf16 %v4745, %v4744
        %v4758 = vpack.c.bf16 %v4747, %v4746
        %v4759 = vpack.c.bf16 %v4749, %v4748
        %v4760 = vpack.c.bf16 %v4751, %v4750
        %v4761 = vpack.c.bf16 %v4753, %v4752
        %v4762 = vld [vmem:[#allocation3 + $0x188] sm:$0xff]
        %v4763 = vld [vmem:[#allocation3 + $0x1a0] sm:$0xff]
        %v4764 = vld [vmem:[#allocation3 + $0x1b8] sm:$0xff]
        %v4765 = vld [vmem:[#allocation3 + $0x1d0] sm:$0xff]
        %v4766 = vld [vmem:[#allocation3 + $0x1e8] sm:$0xff]
        %v4767 = vld [vmem:[#allocation3 + $0x200] sm:$0xff]
        %v4768 = vld [vmem:[#allocation3 + $0x218] sm:$0xff]
        %v4769 = vld [vmem:[#allocation3 + $0x230] sm:$0xff]
        %v4770 = vld [vmem:[#allocation3 + $0x248] sm:$0xff]
        %v4771 = vld [vmem:[#allocation3 + $0x260] sm:$0xff]
        %v4772 = vld [vmem:[#allocation3 + $0x278] sm:$0xff]
        %v4773 = vld [vmem:[#allocation3 + $0x290] sm:$0xff]
        %v4774 = vld [vmem:[#allocation3 + $0x2a8] sm:$0xff]
        %v4775 = vld [vmem:[#allocation3 + $0x2c0] sm:$0xff]
        %v4776 = vld [vmem:[#allocation3 + $0x2d8] sm:$0xff]
        %v4777 = vld [vmem:[#allocation3 + $0x2f0] sm:$0xff]
        %v4778 = vpack.c.bf16 %v4763, %v4762
        %v4779 = vpack.c.bf16 %v4765, %v4764
        %v4780 = vpack.c.bf16 %v4767, %v4766
        %v4781 = vpack.c.bf16 %v4769, %v4768
        %v4782 = vpack.c.bf16 %v4771, %v4770
        %v4783 = vpack.c.bf16 %v4773, %v4772
        %v4784 = vpack.c.bf16 %v4775, %v4774
        %v4785 = vpack.c.bf16 %v4777, %v4776
        %v4786 = vld [vmem:[#allocation3 + $0x190] sm:$0xff]
        %v4787 = vld [vmem:[#allocation3 + $0x1a8] sm:$0xff]
        %v4788 = vld [vmem:[#allocation3 + $0x1c0] sm:$0xff]
        %v4789 = vld [vmem:[#allocation3 + $0x1d8] sm:$0xff]
        %v4790 = vld [vmem:[#allocation3 + $0x1f0] sm:$0xff]
        %v4791 = vld [vmem:[#allocation3 + $0x208] sm:$0xff]
        %v4792 = vld [vmem:[#allocation3 + $0x220] sm:$0xff]
        %v4793 = vld [vmem:[#allocation3 + $0x238] sm:$0xff]
        %v4794 = vld [vmem:[#allocation3 + $0x250] sm:$0xff]
        %v4795 = vld [vmem:[#allocation3 + $0x268] sm:$0xff]
        %v4796 = vld [vmem:[#allocation3 + $0x280] sm:$0xff]
        %v4797 = vld [vmem:[#allocation3 + $0x298] sm:$0xff]
        %v4798 = vld [vmem:[#allocation3 + $0x2b0] sm:$0xff]
        %v4799 = vld [vmem:[#allocation3 + $0x2c8] sm:$0xff]
        %v4800 = vld [vmem:[#allocation3 + $0x2e0] sm:$0xff]
        %v4801 = vld [vmem:[#allocation3 + $0x2f8] sm:$0xff]
        %v4802 = vpack.c.bf16 %v4787, %v4786
        %v4803 = vpack.c.bf16 %v4789, %v4788
        %v4804 = vpack.c.bf16 %v4791, %v4790
        %v4805 = vpack.c.bf16 %v4793, %v4792
        %v4806 = vpack.c.bf16 %v4795, %v4794
        %v4807 = vpack.c.bf16 %v4797, %v4796
        %v4808 = vpack.c.bf16 %v4799, %v4798
        %v4809 = vpack.c.bf16 %v4801, %v4800
        %v4810 = vld [vmem:[%s6] sm:$0xff]
        %v4811 = vld [vmem:[%s6 + $0x8] sm:$0xff]
        %v4812 = vld [vmem:[%s6 + $0x10] sm:$0xff]
        %v4813 = vld [vmem:[%s6 + $0x18] sm:$0xff]
        %v4814 = vld [vmem:[%s6 + $0x20] sm:$0xff]
        %v4815 = vld [vmem:[%s6 + $0x28] sm:$0xff]
        %v4816 = vld [vmem:[%s6 + $0x30] sm:$0xff]
        %v4817 = vld [vmem:[%s6 + $0x38] sm:$0xff]
        %v4818 = vld [vmem:[%s6 + $0x40] sm:$0xff]
        %v4819 = vld [vmem:[%s6 + $0x48] sm:$0xff]
        %v4820 = vld [vmem:[%s6 + $0x50] sm:$0xff]
        %v4821 = vld [vmem:[%s6 + $0x58] sm:$0xff]
        %v4822 = vld [vmem:[%s6 + $0x60] sm:$0xff]
        %v4823 = vld [vmem:[%s6 + $0x68] sm:$0xff]
        %v4824 = vld [vmem:[%s6 + $0x70] sm:$0xff]
        %v4825 = vld [vmem:[%s6 + $0x78] sm:$0xff]
        %4834 = vrot.lane.b32.xlu0 %v4754, 96
        %v4835 = vpop.permute.xlu0 %4834
        %4836 = vrot.lane.b32.xlu0 %v4755, 96
        %v4837 = vpop.permute.xlu0 %4836
        %4838 = vrot.lane.b32.xlu0 %v4756, 96
        %v4839 = vpop.permute.xlu0 %4838
        %4840 = vrot.lane.b32.xlu0 %v4757, 96
        %v4841 = vpop.permute.xlu0 %4840
        %4842 = vrot.lane.b32.xlu0 %v4758, 96
        %v4843 = vpop.permute.xlu0 %4842
        %4844 = vrot.lane.b32.xlu0 %v4759, 96
        %v4845 = vpop.permute.xlu0 %4844
        %4846 = vrot.lane.b32.xlu0 %v4760, 96
        %v4847 = vpop.permute.xlu0 %4846
        %4848 = vrot.lane.b32.xlu0 %v4761, 96
        %v4849 = vpop.permute.xlu0 %4848
        %4858 = vrot.lane.b32.xlu0 %v4778, 96
        %v4859 = vpop.permute.xlu0 %4858
        %4860 = vrot.lane.b32.xlu0 %v4779, 96
        %v4861 = vpop.permute.xlu0 %4860
        %4862 = vrot.lane.b32.xlu0 %v4780, 96
        %v4863 = vpop.permute.xlu0 %4862
        %4864 = vrot.lane.b32.xlu0 %v4781, 96
        %v4865 = vpop.permute.xlu0 %4864
        %4866 = vrot.lane.b32.xlu0 %v4782, 96
        %v4867 = vpop.permute.xlu0 %4866
        %4868 = vrot.lane.b32.xlu0 %v4783, 96
        %v4869 = vpop.permute.xlu0 %4868
        %4870 = vrot.lane.b32.xlu0 %v4784, 96
        %v4871 = vpop.permute.xlu0 %4870
        %4872 = vrot.lane.b32.xlu0 %v4785, 96
        %v4873 = vpop.permute.xlu0 %4872
        %v4875 = vsel %vm1900, %v4835, 0
        %v4878 = vsel %vm1900, %v4837, 0
        %v4881 = vsel %vm1900, %v4839, 0
        %v4884 = vsel %vm1900, %v4841, 0
        %v4887 = vsel %vm1900, %v4843, 0
        %v4890 = vsel %vm1900, %v4845, 0
        %v4893 = vsel %vm1900, %v4847, 0
        %v4896 = vsel %vm1900, %v4849, 0
        %v4899 = vsel %vm1900, %v4859, 0
        %v4902 = vsel %vm1900, %v4861, 0
        %v4905 = vsel %vm1900, %v4863, 0
        %v4908 = vsel %vm1900, %v4865, 0
        %v4911 = vsel %vm1900, %v4867, 0
        %v4914 = vsel %vm1900, %v4869, 0
        %v4917 = vsel %vm1900, %v4871, 0
        %v4920 = vsel %vm1900, %v4873, 0
        %4922 = vmatprep.subr.bf16.mxu0 0
        %4923 = vmatpush1.bf16.xpose.msra.mxu0 %v4899
        %4924 = vmatprep.subr.bf16.mxu0 0
        %4925 = vmatpush1.bf16.xpose.msra.mxu0 %v4902
        %4926 = vmatprep.subr.bf16.mxu0 0
        %4927 = vmatpush1.bf16.xpose.msra.mxu0 %v4905
        %4928 = vmatprep.subr.bf16.mxu0 0
        %4929 = vmatpush1.bf16.xpose.msra.mxu0 %v4908
        %4930 = vmatprep.subr.bf16.mxu0 0
        %4931 = vmatpush1.bf16.xpose.msra.mxu0 %v4911
        %4932 = vmatprep.subr.bf16.mxu0 0
        %4933 = vmatpush1.bf16.xpose.msra.mxu0 %v4914
        %4934 = vmatprep.subr.bf16.mxu0 0
        %4935 = vmatpush1.bf16.xpose.msra.mxu0 %v4917
        %4936 = vmatprep.subr.bf16.mxu0 0
        %4937 = vmatpush1.bf16.xpose.msra.mxu0 %v4920
        %4938 = vmatprep.subr.bf16.mxu0 0
        %4939 = vmatpush1.bf16.xpose.msra.mxu0 0
        %4940 = vmatprep.subr.bf16.mxu0 0
        %4941 = vmatpush1.bf16.xpose.msra.mxu0 0
        %4942 = vmatprep.subr.bf16.mxu0 0
        %4943 = vmatpush1.bf16.xpose.msra.mxu0 0
        %4944 = vmatprep.subr.bf16.mxu0 0
        %4945 = vmatpush1.bf16.xpose.msra.mxu0 0
        %4946 = vmatprep.subr.bf16.mxu0 0
        %4947 = vmatpush1.bf16.xpose.msra.mxu0 0
        %4948 = vmatprep.subr.bf16.mxu0 0
        %4949 = vmatpush1.bf16.xpose.msra.mxu0 0
        %4950 = vmatprep.subr.bf16.mxu0 0
        %4951 = vmatpush1.bf16.xpose.msra.mxu0 0
        %4952 = vmatprep.subr.bf16.mxu0 0
        %4953 = vmatpush1.bf16.xpose.msra.mxu0 0
        %4954 = vmatprep.mubr.bf16.mxu0 0
        %4955 = vmatmul.mubr.bf16.gmra.mrb[0].mxu0 %v4875
        %v4956 = vpop.f32.mrb[0].mxu0
        %v4957 = vadd.f32 %v4810, %v4956
        %v4958 = vpop.f32.mrb[0].mxu0
        %v4959 = vpop.f32.mrb[0].mxu0
        %v4960 = vadd.f32 %v4811, %v4959
        %v4961 = vpop.f32.mrb[0].mxu0
        %4962 = vmatprep.mubr.bf16.mxu0 0
        %4963 = vmatmul.mubr.bf16.gmra.mrb[0].mxu0 %v4878
        %v4964 = vpop.f32.mrb[0].mxu0
        %v4965 = vadd.f32 %v4812, %v4964
        %v4966 = vpop.f32.mrb[0].mxu0
        %v4967 = vpop.f32.mrb[0].mxu0
        %v4968 = vadd.f32 %v4813, %v4967
        %v4969 = vpop.f32.mrb[0].mxu0
        %4970 = vmatprep.mubr.bf16.mxu0 0
        %4971 = vmatmul.mubr.bf16.gmra.mrb[0].mxu0 %v4881
        %v4972 = vpop.f32.mrb[0].mxu0
        %v4973 = vadd.f32 %v4814, %v4972
        %v4974 = vpop.f32.mrb[0].mxu0
        %v4975 = vpop.f32.mrb[0].mxu0
        %v4976 = vadd.f32 %v4815, %v4975
        %v4977 = vpop.f32.mrb[0].mxu0
        %4978 = vmatprep.mubr.bf16.mxu0 0
        %4979 = vmatmul.mubr.bf16.gmra.mrb[0].mxu0 %v4884
        %v4980 = vpop.f32.mrb[0].mxu0
        %v4981 = vadd.f32 %v4816, %v4980
        %v4982 = vpop.f32.mrb[0].mxu0
        %v4983 = vpop.f32.mrb[0].mxu0
        %v4984 = vadd.f32 %v4817, %v4983
        %v4985 = vpop.f32.mrb[0].mxu0
        %4986 = vmatprep.mubr.bf16.mxu0 0
        %4987 = vmatmul.mubr.bf16.gmra.mrb[0].mxu0 %v4887
        %v4988 = vpop.f32.mrb[0].mxu0
        %v4989 = vadd.f32 %v4818, %v4988
        %v4990 = vpop.f32.mrb[0].mxu0
        %v4991 = vpop.f32.mrb[0].mxu0
        %v4992 = vadd.f32 %v4819, %v4991
        %v4993 = vpop.f32.mrb[0].mxu0
        %4994 = vmatprep.mubr.bf16.mxu0 0
        %4995 = vmatmul.mubr.bf16.gmra.mrb[0].mxu0 %v4890
        %v4996 = vpop.f32.mrb[0].mxu0
        %v4997 = vadd.f32 %v4820, %v4996
        %v4998 = vpop.f32.mrb[0].mxu0
        %v4999 = vpop.f32.mrb[0].mxu0
        %v5000 = vadd.f32 %v4821, %v4999
        %v5001 = vpop.f32.mrb[0].mxu0
        %5002 = vmatprep.mubr.bf16.mxu0 0
        %5003 = vmatmul.mubr.bf16.gmra.mrb[0].mxu0 %v4893
        %v5004 = vpop.f32.mrb[0].mxu0
        %v5005 = vadd.f32 %v4822, %v5004
        %v5006 = vpop.f32.mrb[0].mxu0
        %v5007 = vpop.f32.mrb[0].mxu0
        %v5008 = vadd.f32 %v4823, %v5007
        %v5009 = vpop.f32.mrb[0].mxu0
        %5010 = vmatprep.mubr.bf16.mxu0 0
        %5011 = vmatmul.mubr.bf16.gmra.mrb[0].mxu0 %v4896
        %v5012 = vpop.f32.mrb[0].mxu0
        %v5013 = vadd.f32 %v4824, %v5012
        %v5014 = vpop.f32.mrb[0].mxu0
        %v5015 = vpop.f32.mrb[0].mxu0
        %v5016 = vadd.f32 %v4825, %v5015
        %v5017 = vpop.f32.mrb[0].mxu0
        %5018 = vdwg.mxu0
        %5019 = vmax.xlane.f32.xlu0 %v4957
        %v5020 = vpop.xlane.xlu0 %5019
        %5021 = vmax.xlane.f32.xlu0 %v4960
        %v5022 = vpop.xlane.xlu0 %5021
        %5023 = vmax.xlane.f32.xlu0 %v4965
        %v5024 = vpop.xlane.xlu0 %5023
        %5025 = vmax.xlane.f32.xlu0 %v4968
        %v5026 = vpop.xlane.xlu0 %5025
        %5027 = vmax.xlane.f32.xlu0 %v4973
        %v5028 = vpop.xlane.xlu0 %5027
        %5029 = vmax.xlane.f32.xlu0 %v4976
        %v5030 = vpop.xlane.xlu0 %5029
        %5031 = vmax.xlane.f32.xlu0 %v4981
        %v5032 = vpop.xlane.xlu0 %5031
        %5033 = vmax.xlane.f32.xlu0 %v4984
        %v5034 = vpop.xlane.xlu0 %5033
        %5035 = vmax.xlane.f32.xlu0 %v4989
        %v5036 = vpop.xlane.xlu0 %5035
        %5037 = vmax.xlane.f32.xlu0 %v4992
        %v5038 = vpop.xlane.xlu0 %5037
        %5039 = vmax.xlane.f32.xlu0 %v4997
        %v5040 = vpop.xlane.xlu0 %5039
        %5041 = vmax.xlane.f32.xlu0 %v5000
        %v5042 = vpop.xlane.xlu0 %5041
        %5043 = vmax.xlane.f32.xlu0 %v5005
        %v5044 = vpop.xlane.xlu0 %5043
        %5045 = vmax.xlane.f32.xlu0 %v5008
        %v5046 = vpop.xlane.xlu0 %5045
        %5047 = vmax.xlane.f32.xlu0 %v5013
        %v5048 = vpop.xlane.xlu0 %5047
        %5049 = vmax.xlane.f32.xlu0 %v5016
        %v5050 = vpop.xlane.xlu0 %5049
        %v5051 = vsub.f32 %v4957, %v5020
        %v5052 = vsub.f32 %v4960, %v5022
        %v5053 = vsub.f32 %v4965, %v5024
        %v5054 = vsub.f32 %v4968, %v5026
        %v5055 = vsub.f32 %v4973, %v5028
        %v5056 = vsub.f32 %v4976, %v5030
        %v5057 = vsub.f32 %v4981, %v5032
        %v5058 = vsub.f32 %v4984, %v5034
        %v5059 = vsub.f32 %v4989, %v5036
        %v5060 = vsub.f32 %v4992, %v5038
        %v5061 = vsub.f32 %v4997, %v5040
        %v5062 = vsub.f32 %v5000, %v5042
        %v5063 = vsub.f32 %v5005, %v5044
        %v5064 = vsub.f32 %v5008, %v5046
        %v5065 = vsub.f32 %v5013, %v5048
        %v5066 = vsub.f32 %v5016, %v5050
        %v5067 = vmul.f32 %v5051, 1.442695
        %v5068 = vpow.pop %v5067
        %v5069 = vmul.f32 %v5052, 1.442695
        %v5070 = vpow.pop %v5069
        %v5071 = vmul.f32 %v5053, 1.442695
        %v5072 = vpow.pop %v5071
        %v5073 = vmul.f32 %v5054, 1.442695
        %v5074 = vpow.pop %v5073
        %v5075 = vmul.f32 %v5055, 1.442695
        %v5076 = vpow.pop %v5075
        %v5077 = vmul.f32 %v5056, 1.442695
        %v5078 = vpow.pop %v5077
        %v5079 = vmul.f32 %v5057, 1.442695
        %v5080 = vpow.pop %v5079
        %v5081 = vmul.f32 %v5058, 1.442695
        %v5082 = vpow.pop %v5081
        %v5083 = vmul.f32 %v5059, 1.442695
        %v5084 = vpow.pop %v5083
        %v5085 = vmul.f32 %v5060, 1.442695
        %v5086 = vpow.pop %v5085
        %v5087 = vmul.f32 %v5061, 1.442695
        %v5088 = vpow.pop %v5087
        %v5089 = vmul.f32 %v5062, 1.442695
        %v5090 = vpow.pop %v5089
        %v5091 = vmul.f32 %v5063, 1.442695
        %v5092 = vpow.pop %v5091
        %v5093 = vmul.f32 %v5064, 1.442695
        %v5094 = vpow.pop %v5093
        %v5095 = vmul.f32 %v5065, 1.442695
        %v5096 = vpow.pop %v5095
        %v5097 = vmul.f32 %v5066, 1.442695
        %v5098 = vpow.pop %v5097
        %5099 = vadd.xlane.f32.xlu0 %v5068
        %v5100 = vpop.xlane.xlu0 %5099
        %5101 = vadd.xlane.f32.xlu0 %v5070
        %v5102 = vpop.xlane.xlu0 %5101
        %5103 = vadd.xlane.f32.xlu0 %v5072
        %v5104 = vpop.xlane.xlu0 %5103
        %5105 = vadd.xlane.f32.xlu0 %v5074
        %v5106 = vpop.xlane.xlu0 %5105
        %5107 = vadd.xlane.f32.xlu0 %v5076
        %v5108 = vpop.xlane.xlu0 %5107
        %5109 = vadd.xlane.f32.xlu0 %v5078
        %v5110 = vpop.xlane.xlu0 %5109
        %5111 = vadd.xlane.f32.xlu0 %v5080
        %v5112 = vpop.xlane.xlu0 %5111
        %5113 = vadd.xlane.f32.xlu0 %v5082
        %v5114 = vpop.xlane.xlu0 %5113
        %5115 = vadd.xlane.f32.xlu0 %v5084
        %v5116 = vpop.xlane.xlu0 %5115
        %5117 = vadd.xlane.f32.xlu0 %v5086
        %v5118 = vpop.xlane.xlu0 %5117
        %5119 = vadd.xlane.f32.xlu0 %v5088
        %v5120 = vpop.xlane.xlu0 %5119
        %5121 = vadd.xlane.f32.xlu0 %v5090
        %v5122 = vpop.xlane.xlu0 %5121
        %5123 = vadd.xlane.f32.xlu0 %v5092
        %v5124 = vpop.xlane.xlu0 %5123
        %5125 = vadd.xlane.f32.xlu0 %v5094
        %v5126 = vpop.xlane.xlu0 %5125
        %5127 = vadd.xlane.f32.xlu0 %v5096
        %v5128 = vpop.xlane.xlu0 %5127
        %5129 = vadd.xlane.f32.xlu0 %v5098
        %v5130 = vpop.xlane.xlu0 %5129
        %v5131 = vrcp.pop %v5100
        %v5132 = vrcp.pop %v5102
        %v5133 = vrcp.pop %v5104
        %v5134 = vrcp.pop %v5106
        %v5135 = vrcp.pop %v5108
        %v5136 = vrcp.pop %v5110
        %v5137 = vrcp.pop %v5112
        %v5138 = vrcp.pop %v5114
        %v5139 = vrcp.pop %v5116
        %v5140 = vrcp.pop %v5118
        %v5141 = vrcp.pop %v5120
        %v5142 = vrcp.pop %v5122
        %v5143 = vrcp.pop %v5124
        %v5144 = vrcp.pop %v5126
        %v5145 = vrcp.pop %v5128
        %v5146 = vrcp.pop %v5130
        %v5147 = vmul.f32 %v5068, %v5131
        %v5148 = vmul.f32 %v5070, %v5132
        %v5149 = vmul.f32 %v5072, %v5133
        %v5150 = vmul.f32 %v5074, %v5134
        %v5151 = vmul.f32 %v5076, %v5135
        %v5152 = vmul.f32 %v5078, %v5136
        %v5153 = vmul.f32 %v5080, %v5137
        %v5154 = vmul.f32 %v5082, %v5138
        %v5155 = vmul.f32 %v5084, %v5139
        %v5156 = vmul.f32 %v5086, %v5140
        %v5157 = vmul.f32 %v5088, %v5141
        %v5158 = vmul.f32 %v5090, %v5142
        %v5159 = vmul.f32 %v5092, %v5143
        %v5160 = vmul.f32 %v5094, %v5144
        %v5161 = vmul.f32 %v5096, %v5145
        %v5162 = vmul.f32 %v5098, %v5146
        %v5163 = vpack.c.bf16 %v5148, %v5147
        %v5164 = vpack.c.bf16 %v5150, %v5149
        %v5165 = vpack.c.bf16 %v5152, %v5151
        %v5166 = vpack.c.bf16 %v5154, %v5153
        %v5167 = vpack.c.bf16 %v5156, %v5155
        %v5168 = vpack.c.bf16 %v5158, %v5157
        %v5169 = vpack.c.bf16 %v5160, %v5159
        %v5170 = vpack.c.bf16 %v5162, %v5161
        %5179 = vrot.lane.b32.xlu0 %v4802, 96
        %v5180 = vpop.permute.xlu0 %5179
        %5181 = vrot.lane.b32.xlu0 %v4803, 96
        %v5182 = vpop.permute.xlu0 %5181
        %5183 = vrot.lane.b32.xlu0 %v4804, 96
        %v5184 = vpop.permute.xlu0 %5183
        %5185 = vrot.lane.b32.xlu0 %v4805, 96
        %v5186 = vpop.permute.xlu0 %5185
        %5187 = vrot.lane.b32.xlu0 %v4806, 96
        %v5188 = vpop.permute.xlu0 %5187
        %5189 = vrot.lane.b32.xlu0 %v4807, 96
        %v5190 = vpop.permute.xlu0 %5189
        %5191 = vrot.lane.b32.xlu0 %v4808, 96
        %v5192 = vpop.permute.xlu0 %5191
        %5193 = vrot.lane.b32.xlu0 %v4809, 96
        %v5194 = vpop.permute.xlu0 %5193
        %5203 = vmatprep.subr.bf16.mxu0 0
        %5204 = vmatpush1.bf16.msra.mxu0 %v5180
        %5205 = vmatprep.subr.bf16.mxu0 0
        %5206 = vmatpush1.bf16.msra.mxu0 %v5182
        %5207 = vmatprep.subr.bf16.mxu0 0
        %5208 = vmatpush1.bf16.msra.mxu0 %v5184
        %5209 = vmatprep.subr.bf16.mxu0 0
        %5210 = vmatpush1.bf16.msra.mxu0 %v5186
        %5211 = vmatprep.subr.bf16.mxu0 0
        %5212 = vmatpush1.bf16.msra.mxu0 %v5188
        %5213 = vmatprep.subr.bf16.mxu0 0
        %5214 = vmatpush1.bf16.msra.mxu0 %v5190
        %5215 = vmatprep.subr.bf16.mxu0 0
        %5216 = vmatpush1.bf16.msra.mxu0 %v5192
        %5217 = vmatprep.subr.bf16.mxu0 0
        %5218 = vmatpush1.bf16.msra.mxu0 %v5194
        %5219 = vmatprep.subr.bf16.mxu0 0
        %5220 = vmatpush1.bf16.msra.mxu0 0
        %5221 = vmatprep.subr.bf16.mxu0 0
        %5222 = vmatpush1.bf16.msra.mxu0 0
        %5223 = vmatprep.subr.bf16.mxu0 0
        %5224 = vmatpush1.bf16.msra.mxu0 0
        %5225 = vmatprep.subr.bf16.mxu0 0
        %5226 = vmatpush1.bf16.msra.mxu0 0
        %5227 = vmatprep.subr.bf16.mxu0 0
        %5228 = vmatpush1.bf16.msra.mxu0 0
        %5229 = vmatprep.subr.bf16.mxu0 0
        %5230 = vmatpush1.bf16.msra.mxu0 0
        %5231 = vmatprep.subr.bf16.mxu0 0
        %5232 = vmatpush1.bf16.msra.mxu0 0
        %5233 = vmatprep.subr.bf16.mxu0 0
        %5234 = vmatpush1.bf16.msra.mxu0 0
        %5235 = vmatprep.mubr.bf16.mxu0 0
        %5236 = vmatmul.mubr.bf16.gmra.mrb[0].mxu0 %v5163
        %v5237 = vpop.f32.mrb[0].mxu0
        %v5238 = vadd.f32 0.0, %v5237
        %v5239 = vpop.f32.mrb[0].mxu0
        %v5240 = vpop.f32.mrb[0].mxu0
        %v5241 = vadd.f32 0.0, %v5240
        %v5242 = vpop.f32.mrb[0].mxu0
        %5243 = vmatprep.mubr.bf16.mxu0 0
        %5244 = vmatmul.mubr.bf16.gmra.mrb[0].mxu0 %v5164
        %v5245 = vpop.f32.mrb[0].mxu0
        %v5246 = vadd.f32 0.0, %v5245
        %v5247 = vpop.f32.mrb[0].mxu0
        %v5248 = vpop.f32.mrb[0].mxu0
        %v5249 = vadd.f32 0.0, %v5248
        %v5250 = vpop.f32.mrb[0].mxu0
        %5251 = vmatprep.mubr.bf16.mxu0 0
        %5252 = vmatmul.mubr.bf16.gmra.mrb[0].mxu0 %v5165
        %v5253 = vpop.f32.mrb[0].mxu0
        %v5254 = vadd.f32 0.0, %v5253
        %v5255 = vpop.f32.mrb[0].mxu0
        %v5256 = vpop.f32.mrb[0].mxu0
        %v5257 = vadd.f32 0.0, %v5256
        %v5258 = vpop.f32.mrb[0].mxu0
        %5259 = vmatprep.mubr.bf16.mxu0 0
        %5260 = vmatmul.mubr.bf16.gmra.mrb[0].mxu0 %v5166
        %v5261 = vpop.f32.mrb[0].mxu0
        %v5262 = vadd.f32 0.0, %v5261
        %v5263 = vpop.f32.mrb[0].mxu0
        %v5264 = vpop.f32.mrb[0].mxu0
        %v5265 = vadd.f32 0.0, %v5264
        %v5266 = vpop.f32.mrb[0].mxu0
        %5267 = vmatprep.mubr.bf16.mxu0 0
        %5268 = vmatmul.mubr.bf16.gmra.mrb[0].mxu0 %v5167
        %v5269 = vpop.f32.mrb[0].mxu0
        %v5270 = vadd.f32 0.0, %v5269
        %v5271 = vpop.f32.mrb[0].mxu0
        %v5272 = vpop.f32.mrb[0].mxu0
        %v5273 = vadd.f32 0.0, %v5272
        %v5274 = vpop.f32.mrb[0].mxu0
        %5275 = vmatprep.mubr.bf16.mxu0 0
        %5276 = vmatmul.mubr.bf16.gmra.mrb[0].mxu0 %v5168
        %v5277 = vpop.f32.mrb[0].mxu0
        %v5278 = vadd.f32 0.0, %v5277
        %v5279 = vpop.f32.mrb[0].mxu0
        %v5280 = vpop.f32.mrb[0].mxu0
        %v5281 = vadd.f32 0.0, %v5280
        %v5282 = vpop.f32.mrb[0].mxu0
        %5283 = vmatprep.mubr.bf16.mxu0 0
        %5284 = vmatmul.mubr.bf16.gmra.mrb[0].mxu0 %v5169
        %v5285 = vpop.f32.mrb[0].mxu0
        %v5286 = vadd.f32 0.0, %v5285
        %v5287 = vpop.f32.mrb[0].mxu0
        %v5288 = vpop.f32.mrb[0].mxu0
        %v5289 = vadd.f32 0.0, %v5288
        %v5290 = vpop.f32.mrb[0].mxu0
        %5291 = vmatprep.mubr.bf16.mxu0 0
        %5292 = vmatmul.mubr.bf16.gmra.mrb[0].mxu0 %v5170
        %v5293 = vpop.f32.mrb[0].mxu0
        %v5294 = vadd.f32 0.0, %v5293
        %v5295 = vpop.f32.mrb[0].mxu0
        %v5296 = vpop.f32.mrb[0].mxu0
        %v5297 = vadd.f32 0.0, %v5296
        %v5298 = vpop.f32.mrb[0].mxu0
        %5299 = vdwg.mxu0
        %5316 = vrot.lane.b32.xlu0 %v5238, 32
        %v5317 = vpop.permute.xlu0 %5316
        %5318 = vrot.lane.b32.xlu0 %v5241, 32
        %v5319 = vpop.permute.xlu0 %5318
        %5320 = vrot.lane.b32.xlu0 %v5246, 32
        %v5321 = vpop.permute.xlu0 %5320
        %5322 = vrot.lane.b32.xlu0 %v5249, 32
        %v5323 = vpop.permute.xlu0 %5322
        %5324 = vrot.lane.b32.xlu0 %v5254, 32
        %v5325 = vpop.permute.xlu0 %5324
        %5326 = vrot.lane.b32.xlu0 %v5257, 32
        %v5327 = vpop.permute.xlu0 %5326
        %5328 = vrot.lane.b32.xlu0 %v5262, 32
        %v5329 = vpop.permute.xlu0 %5328
        %5330 = vrot.lane.b32.xlu0 %v5265, 32
        %v5331 = vpop.permute.xlu0 %5330
        %5332 = vrot.lane.b32.xlu0 %v5270, 32
        %v5333 = vpop.permute.xlu0 %5332
        %5334 = vrot.lane.b32.xlu0 %v5273, 32
        %v5335 = vpop.permute.xlu0 %5334
        %5336 = vrot.lane.b32.xlu0 %v5278, 32
        %v5337 = vpop.permute.xlu0 %5336
        %5338 = vrot.lane.b32.xlu0 %v5281, 32
        %v5339 = vpop.permute.xlu0 %5338
        %5340 = vrot.lane.b32.xlu0 %v5286, 32
        %v5341 = vpop.permute.xlu0 %5340
        %5342 = vrot.lane.b32.xlu0 %v5289, 32
        %v5343 = vpop.permute.xlu0 %5342
        %5344 = vrot.lane.b32.xlu0 %v5294, 32
        %v5345 = vpop.permute.xlu0 %5344
        %5346 = vrot.lane.b32.xlu0 %v5297, 32
        %v5347 = vpop.permute.xlu0 %5346
        %5364 = vst.msk [vmem:[#allocation4 + $0x80] sm:$0xff] %vm2937, %v5317
        %5365 = vst.msk [vmem:[#allocation4 + $0x88] sm:$0xff] %vm2937, %v5319
        %5366 = vst.msk [vmem:[#allocation4 + $0x90] sm:$0xff] %vm2937, %v5321
        %5367 = vst.msk [vmem:[#allocation4 + $0x98] sm:$0xff] %vm2937, %v5323
        %5368 = vst.msk [vmem:[#allocation4 + $0xa0] sm:$0xff] %vm2937, %v5325
        %5369 = vst.msk [vmem:[#allocation4 + $0xa8] sm:$0xff] %vm2937, %v5327
        %5370 = vst.msk [vmem:[#allocation4 + $0xb0] sm:$0xff] %vm2937, %v5329
        %5371 = vst.msk [vmem:[#allocation4 + $0xb8] sm:$0xff] %vm2937, %v5331
        %5372 = vst.msk [vmem:[#allocation4 + $0xc0] sm:$0xff] %vm2937, %v5333
        %5373 = vst.msk [vmem:[#allocation4 + $0xc8] sm:$0xff] %vm2937, %v5335
        %5374 = vst.msk [vmem:[#allocation4 + $0xd0] sm:$0xff] %vm2937, %v5337
        %5375 = vst.msk [vmem:[#allocation4 + $0xd8] sm:$0xff] %vm2937, %v5339
        %5376 = vst.msk [vmem:[#allocation4 + $0xe0] sm:$0xff] %vm2937, %v5341
        %5377 = vst.msk [vmem:[#allocation4 + $0xe8] sm:$0xff] %vm2937, %v5343
        %5378 = vst.msk [vmem:[#allocation4 + $0xf0] sm:$0xff] %vm2937, %v5345
        %5379 = vst.msk [vmem:[#allocation4 + $0xf8] sm:$0xff] %vm2937, %v5347
        %v5380 = vld [vmem:[#allocation3 + $0x180] sm:$0xff]
        %v5381 = vld [vmem:[#allocation3 + $0x198] sm:$0xff]
        %v5382 = vld [vmem:[#allocation3 + $0x1b0] sm:$0xff]
        %v5383 = vld [vmem:[#allocation3 + $0x1c8] sm:$0xff]
        %v5384 = vld [vmem:[#allocation3 + $0x1e0] sm:$0xff]
        %v5385 = vld [vmem:[#allocation3 + $0x1f8] sm:$0xff]
        %v5386 = vld [vmem:[#allocation3 + $0x210] sm:$0xff]
        %v5387 = vld [vmem:[#allocation3 + $0x228] sm:$0xff]
        %v5388 = vld [vmem:[#allocation3 + $0x240] sm:$0xff]
        %v5389 = vld [vmem:[#allocation3 + $0x258] sm:$0xff]
        %v5390 = vld [vmem:[#allocation3 + $0x270] sm:$0xff]
        %v5391 = vld [vmem:[#allocation3 + $0x288] sm:$0xff]
        %v5392 = vld [vmem:[#allocation3 + $0x2a0] sm:$0xff]
        %v5393 = vld [vmem:[#allocation3 + $0x2b8] sm:$0xff]
        %v5394 = vld [vmem:[#allocation3 + $0x2d0] sm:$0xff]
        %v5395 = vld [vmem:[#allocation3 + $0x2e8] sm:$0xff]
        %v5396 = vpack.c.bf16 %v5381, %v5380
        %v5397 = vpack.c.bf16 %v5383, %v5382
        %v5398 = vpack.c.bf16 %v5385, %v5384
        %v5399 = vpack.c.bf16 %v5387, %v5386
        %v5400 = vpack.c.bf16 %v5389, %v5388
        %v5401 = vpack.c.bf16 %v5391, %v5390
        %v5402 = vpack.c.bf16 %v5393, %v5392
        %v5403 = vpack.c.bf16 %v5395, %v5394
        %v5404 = vld [vmem:[#allocation3 + $0x188] sm:$0xff]
        %v5405 = vld [vmem:[#allocation3 + $0x1a0] sm:$0xff]
        %v5406 = vld [vmem:[#allocation3 + $0x1b8] sm:$0xff]
        %v5407 = vld [vmem:[#allocation3 + $0x1d0] sm:$0xff]
        %v5408 = vld [vmem:[#allocation3 + $0x1e8] sm:$0xff]
        %v5409 = vld [vmem:[#allocation3 + $0x200] sm:$0xff]
        %v5410 = vld [vmem:[#allocation3 + $0x218] sm:$0xff]
        %v5411 = vld [vmem:[#allocation3 + $0x230] sm:$0xff]
        %v5412 = vld [vmem:[#allocation3 + $0x248] sm:$0xff]
        %v5413 = vld [vmem:[#allocation3 + $0x260] sm:$0xff]
        %v5414 = vld [vmem:[#allocation3 + $0x278] sm:$0xff]
        %v5415 = vld [vmem:[#allocation3 + $0x290] sm:$0xff]
        %v5416 = vld [vmem:[#allocation3 + $0x2a8] sm:$0xff]
        %v5417 = vld [vmem:[#allocation3 + $0x2c0] sm:$0xff]
        %v5418 = vld [vmem:[#allocation3 + $0x2d8] sm:$0xff]
        %v5419 = vld [vmem:[#allocation3 + $0x2f0] sm:$0xff]
        %v5420 = vpack.c.bf16 %v5405, %v5404
        %v5421 = vpack.c.bf16 %v5407, %v5406
        %v5422 = vpack.c.bf16 %v5409, %v5408
        %v5423 = vpack.c.bf16 %v5411, %v5410
        %v5424 = vpack.c.bf16 %v5413, %v5412
        %v5425 = vpack.c.bf16 %v5415, %v5414
        %v5426 = vpack.c.bf16 %v5417, %v5416
        %v5427 = vpack.c.bf16 %v5419, %v5418
        %v5428 = vld [vmem:[#allocation3 + $0x190] sm:$0xff]
        %v5429 = vld [vmem:[#allocation3 + $0x1a8] sm:$0xff]
        %v5430 = vld [vmem:[#allocation3 + $0x1c0] sm:$0xff]
        %v5431 = vld [vmem:[#allocation3 + $0x1d8] sm:$0xff]
        %v5432 = vld [vmem:[#allocation3 + $0x1f0] sm:$0xff]
        %v5433 = vld [vmem:[#allocation3 + $0x208] sm:$0xff]
        %v5434 = vld [vmem:[#allocation3 + $0x220] sm:$0xff]
        %v5435 = vld [vmem:[#allocation3 + $0x238] sm:$0xff]
        %v5436 = vld [vmem:[#allocation3 + $0x250] sm:$0xff]
        %v5437 = vld [vmem:[#allocation3 + $0x268] sm:$0xff]
        %v5438 = vld [vmem:[#allocation3 + $0x280] sm:$0xff]
        %v5439 = vld [vmem:[#allocation3 + $0x298] sm:$0xff]
        %v5440 = vld [vmem:[#allocation3 + $0x2b0] sm:$0xff]
        %v5441 = vld [vmem:[#allocation3 + $0x2c8] sm:$0xff]
        %v5442 = vld [vmem:[#allocation3 + $0x2e0] sm:$0xff]
        %v5443 = vld [vmem:[#allocation3 + $0x2f8] sm:$0xff]
        %v5444 = vpack.c.bf16 %v5429, %v5428
        %v5445 = vpack.c.bf16 %v5431, %v5430
        %v5446 = vpack.c.bf16 %v5433, %v5432
        %v5447 = vpack.c.bf16 %v5435, %v5434
        %v5448 = vpack.c.bf16 %v5437, %v5436
        %v5449 = vpack.c.bf16 %v5439, %v5438
        %v5450 = vpack.c.bf16 %v5441, %v5440
        %v5451 = vpack.c.bf16 %v5443, %v5442
        %v5452 = vld [vmem:[%s6] sm:$0xff]
        %v5453 = vld [vmem:[%s6 + $0x8] sm:$0xff]
        %v5454 = vld [vmem:[%s6 + $0x10] sm:$0xff]
        %v5455 = vld [vmem:[%s6 + $0x18] sm:$0xff]
        %v5456 = vld [vmem:[%s6 + $0x20] sm:$0xff]
        %v5457 = vld [vmem:[%s6 + $0x28] sm:$0xff]
        %v5458 = vld [vmem:[%s6 + $0x30] sm:$0xff]
        %v5459 = vld [vmem:[%s6 + $0x38] sm:$0xff]
        %v5460 = vld [vmem:[%s6 + $0x40] sm:$0xff]
        %v5461 = vld [vmem:[%s6 + $0x48] sm:$0xff]
        %v5462 = vld [vmem:[%s6 + $0x50] sm:$0xff]
        %v5463 = vld [vmem:[%s6 + $0x58] sm:$0xff]
        %v5464 = vld [vmem:[%s6 + $0x60] sm:$0xff]
        %v5465 = vld [vmem:[%s6 + $0x68] sm:$0xff]
        %v5466 = vld [vmem:[%s6 + $0x70] sm:$0xff]
        %v5467 = vld [vmem:[%s6 + $0x78] sm:$0xff]
        %5476 = vrot.lane.b32.xlu0 %v5396, 64
        %v5477 = vpop.permute.xlu0 %5476
        %5478 = vrot.lane.b32.xlu0 %v5397, 64
        %v5479 = vpop.permute.xlu0 %5478
        %5480 = vrot.lane.b32.xlu0 %v5398, 64
        %v5481 = vpop.permute.xlu0 %5480
        %5482 = vrot.lane.b32.xlu0 %v5399, 64
        %v5483 = vpop.permute.xlu0 %5482
        %5484 = vrot.lane.b32.xlu0 %v5400, 64
        %v5485 = vpop.permute.xlu0 %5484
        %5486 = vrot.lane.b32.xlu0 %v5401, 64
        %v5487 = vpop.permute.xlu0 %5486
        %5488 = vrot.lane.b32.xlu0 %v5402, 64
        %v5489 = vpop.permute.xlu0 %5488
        %5490 = vrot.lane.b32.xlu0 %v5403, 64
        %v5491 = vpop.permute.xlu0 %5490
        %5500 = vrot.lane.b32.xlu0 %v5420, 64
        %v5501 = vpop.permute.xlu0 %5500
        %5502 = vrot.lane.b32.xlu0 %v5421, 64
        %v5503 = vpop.permute.xlu0 %5502
        %5504 = vrot.lane.b32.xlu0 %v5422, 64
        %v5505 = vpop.permute.xlu0 %5504
        %5506 = vrot.lane.b32.xlu0 %v5423, 64
        %v5507 = vpop.permute.xlu0 %5506
        %5508 = vrot.lane.b32.xlu0 %v5424, 64
        %v5509 = vpop.permute.xlu0 %5508
        %5510 = vrot.lane.b32.xlu0 %v5425, 64
        %v5511 = vpop.permute.xlu0 %5510
        %5512 = vrot.lane.b32.xlu0 %v5426, 64
        %v5513 = vpop.permute.xlu0 %5512
        %5514 = vrot.lane.b32.xlu0 %v5427, 64
        %v5515 = vpop.permute.xlu0 %5514
        %v5517 = vsel %vm1900, %v5477, 0
        %v5520 = vsel %vm1900, %v5479, 0
        %v5523 = vsel %vm1900, %v5481, 0
        %v5526 = vsel %vm1900, %v5483, 0
        %v5529 = vsel %vm1900, %v5485, 0
        %v5532 = vsel %vm1900, %v5487, 0
        %v5535 = vsel %vm1900, %v5489, 0
        %v5538 = vsel %vm1900, %v5491, 0
        %v5541 = vsel %vm1900, %v5501, 0
        %v5544 = vsel %vm1900, %v5503, 0
        %v5547 = vsel %vm1900, %v5505, 0
        %v5550 = vsel %vm1900, %v5507, 0
        %v5553 = vsel %vm1900, %v5509, 0
        %v5556 = vsel %vm1900, %v5511, 0
        %v5559 = vsel %vm1900, %v5513, 0
        %v5562 = vsel %vm1900, %v5515, 0
        %5564 = vmatprep.subr.bf16.mxu0 0
        %5565 = vmatpush1.bf16.xpose.msra.mxu0 %v5541
        %5566 = vmatprep.subr.bf16.mxu0 0
        %5567 = vmatpush1.bf16.xpose.msra.mxu0 %v5544
        %5568 = vmatprep.subr.bf16.mxu0 0
        %5569 = vmatpush1.bf16.xpose.msra.mxu0 %v5547
        %5570 = vmatprep.subr.bf16.mxu0 0
        %5571 = vmatpush1.bf16.xpose.msra.mxu0 %v5550
        %5572 = vmatprep.subr.bf16.mxu0 0
        %5573 = vmatpush1.bf16.xpose.msra.mxu0 %v5553
        %5574 = vmatprep.subr.bf16.mxu0 0
        %5575 = vmatpush1.bf16.xpose.msra.mxu0 %v5556
        %5576 = vmatprep.subr.bf16.mxu0 0
        %5577 = vmatpush1.bf16.xpose.msra.mxu0 %v5559
        %5578 = vmatprep.subr.bf16.mxu0 0
        %5579 = vmatpush1.bf16.xpose.msra.mxu0 %v5562
        %5580 = vmatprep.subr.bf16.mxu0 0
        %5581 = vmatpush1.bf16.xpose.msra.mxu0 0
        %5582 = vmatprep.subr.bf16.mxu0 0
        %5583 = vmatpush1.bf16.xpose.msra.mxu0 0
        %5584 = vmatprep.subr.bf16.mxu0 0
        %5585 = vmatpush1.bf16.xpose.msra.mxu0 0
        %5586 = vmatprep.subr.bf16.mxu0 0
        %5587 = vmatpush1.bf16.xpose.msra.mxu0 0
        %5588 = vmatprep.subr.bf16.mxu0 0
        %5589 = vmatpush1.bf16.xpose.msra.mxu0 0
        %5590 = vmatprep.subr.bf16.mxu0 0
        %5591 = vmatpush1.bf16.xpose.msra.mxu0 0
        %5592 = vmatprep.subr.bf16.mxu0 0
        %5593 = vmatpush1.bf16.xpose.msra.mxu0 0
        %5594 = vmatprep.subr.bf16.mxu0 0
        %5595 = vmatpush1.bf16.xpose.msra.mxu0 0
        %5596 = vmatprep.mubr.bf16.mxu0 0
        %5597 = vmatmul.mubr.bf16.gmra.mrb[0].mxu0 %v5517
        %v5598 = vpop.f32.mrb[0].mxu0
        %v5599 = vadd.f32 %v5452, %v5598
        %v5600 = vpop.f32.mrb[0].mxu0
        %v5601 = vpop.f32.mrb[0].mxu0
        %v5602 = vadd.f32 %v5453, %v5601
        %v5603 = vpop.f32.mrb[0].mxu0
        %5604 = vmatprep.mubr.bf16.mxu0 0
        %5605 = vmatmul.mubr.bf16.gmra.mrb[0].mxu0 %v5520
        %v5606 = vpop.f32.mrb[0].mxu0
        %v5607 = vadd.f32 %v5454, %v5606
        %v5608 = vpop.f32.mrb[0].mxu0
        %v5609 = vpop.f32.mrb[0].mxu0
        %v5610 = vadd.f32 %v5455, %v5609
        %v5611 = vpop.f32.mrb[0].mxu0
        %5612 = vmatprep.mubr.bf16.mxu0 0
        %5613 = vmatmul.mubr.bf16.gmra.mrb[0].mxu0 %v5523
        %v5614 = vpop.f32.mrb[0].mxu0
        %v5615 = vadd.f32 %v5456, %v5614
        %v5616 = vpop.f32.mrb[0].mxu0
        %v5617 = vpop.f32.mrb[0].mxu0
        %v5618 = vadd.f32 %v5457, %v5617
        %v5619 = vpop.f32.mrb[0].mxu0
        %5620 = vmatprep.mubr.bf16.mxu0 0
        %5621 = vmatmul.mubr.bf16.gmra.mrb[0].mxu0 %v5526
        %v5622 = vpop.f32.mrb[0].mxu0
        %v5623 = vadd.f32 %v5458, %v5622
        %v5624 = vpop.f32.mrb[0].mxu0
        %v5625 = vpop.f32.mrb[0].mxu0
        %v5626 = vadd.f32 %v5459, %v5625
        %v5627 = vpop.f32.mrb[0].mxu0
        %5628 = vmatprep.mubr.bf16.mxu0 0
        %5629 = vmatmul.mubr.bf16.gmra.mrb[0].mxu0 %v5529
        %v5630 = vpop.f32.mrb[0].mxu0
        %v5631 = vadd.f32 %v5460, %v5630
        %v5632 = vpop.f32.mrb[0].mxu0
        %v5633 = vpop.f32.mrb[0].mxu0
        %v5634 = vadd.f32 %v5461, %v5633
        %v5635 = vpop.f32.mrb[0].mxu0
        %5636 = vmatprep.mubr.bf16.mxu0 0
        %5637 = vmatmul.mubr.bf16.gmra.mrb[0].mxu0 %v5532
        %v5638 = vpop.f32.mrb[0].mxu0
        %v5639 = vadd.f32 %v5462, %v5638
        %v5640 = vpop.f32.mrb[0].mxu0
        %v5641 = vpop.f32.mrb[0].mxu0
        %v5642 = vadd.f32 %v5463, %v5641
        %v5643 = vpop.f32.mrb[0].mxu0
        %5644 = vmatprep.mubr.bf16.mxu0 0
        %5645 = vmatmul.mubr.bf16.gmra.mrb[0].mxu0 %v5535
        %v5646 = vpop.f32.mrb[0].mxu0
        %v5647 = vadd.f32 %v5464, %v5646
        %v5648 = vpop.f32.mrb[0].mxu0
        %v5649 = vpop.f32.mrb[0].mxu0
        %v5650 = vadd.f32 %v5465, %v5649
        %v5651 = vpop.f32.mrb[0].mxu0
        %5652 = vmatprep.mubr.bf16.mxu0 0
        %5653 = vmatmul.mubr.bf16.gmra.mrb[0].mxu0 %v5538
        %v5654 = vpop.f32.mrb[0].mxu0
        %v5655 = vadd.f32 %v5466, %v5654
        %v5656 = vpop.f32.mrb[0].mxu0
        %v5657 = vpop.f32.mrb[0].mxu0
        %v5658 = vadd.f32 %v5467, %v5657
        %v5659 = vpop.f32.mrb[0].mxu0
        %5660 = vdwg.mxu0
        %5661 = vmax.xlane.f32.xlu0 %v5599
        %v5662 = vpop.xlane.xlu0 %5661
        %5663 = vmax.xlane.f32.xlu0 %v5602
        %v5664 = vpop.xlane.xlu0 %5663
        %5665 = vmax.xlane.f32.xlu0 %v5607
        %v5666 = vpop.xlane.xlu0 %5665
        %5667 = vmax.xlane.f32.xlu0 %v5610
        %v5668 = vpop.xlane.xlu0 %5667
        %5669 = vmax.xlane.f32.xlu0 %v5615
        %v5670 = vpop.xlane.xlu0 %5669
        %5671 = vmax.xlane.f32.xlu0 %v5618
        %v5672 = vpop.xlane.xlu0 %5671
        %5673 = vmax.xlane.f32.xlu0 %v5623
        %v5674 = vpop.xlane.xlu0 %5673
        %5675 = vmax.xlane.f32.xlu0 %v5626
        %v5676 = vpop.xlane.xlu0 %5675
        %5677 = vmax.xlane.f32.xlu0 %v5631
        %v5678 = vpop.xlane.xlu0 %5677
        %5679 = vmax.xlane.f32.xlu0 %v5634
        %v5680 = vpop.xlane.xlu0 %5679
        %5681 = vmax.xlane.f32.xlu0 %v5639
        %v5682 = vpop.xlane.xlu0 %5681
        %5683 = vmax.xlane.f32.xlu0 %v5642
        %v5684 = vpop.xlane.xlu0 %5683
        %5685 = vmax.xlane.f32.xlu0 %v5647
        %v5686 = vpop.xlane.xlu0 %5685
        %5687 = vmax.xlane.f32.xlu0 %v5650
        %v5688 = vpop.xlane.xlu0 %5687
        %5689 = vmax.xlane.f32.xlu0 %v5655
        %v5690 = vpop.xlane.xlu0 %5689
        %5691 = vmax.xlane.f32.xlu0 %v5658
        %v5692 = vpop.xlane.xlu0 %5691
        %v5693 = vsub.f32 %v5599, %v5662
        %v5694 = vsub.f32 %v5602, %v5664
        %v5695 = vsub.f32 %v5607, %v5666
        %v5696 = vsub.f32 %v5610, %v5668
        %v5697 = vsub.f32 %v5615, %v5670
        %v5698 = vsub.f32 %v5618, %v5672
        %v5699 = vsub.f32 %v5623, %v5674
        %v5700 = vsub.f32 %v5626, %v5676
        %v5701 = vsub.f32 %v5631, %v5678
        %v5702 = vsub.f32 %v5634, %v5680
        %v5703 = vsub.f32 %v5639, %v5682
        %v5704 = vsub.f32 %v5642, %v5684
        %v5705 = vsub.f32 %v5647, %v5686
        %v5706 = vsub.f32 %v5650, %v5688
        %v5707 = vsub.f32 %v5655, %v5690
        %v5708 = vsub.f32 %v5658, %v5692
        %v5709 = vmul.f32 %v5693, 1.442695
        %v5710 = vpow.pop %v5709
        %v5711 = vmul.f32 %v5694, 1.442695
        %v5712 = vpow.pop %v5711
        %v5713 = vmul.f32 %v5695, 1.442695
        %v5714 = vpow.pop %v5713
        %v5715 = vmul.f32 %v5696, 1.442695
        %v5716 = vpow.pop %v5715
        %v5717 = vmul.f32 %v5697, 1.442695
        %v5718 = vpow.pop %v5717
        %v5719 = vmul.f32 %v5698, 1.442695
        %v5720 = vpow.pop %v5719
        %v5721 = vmul.f32 %v5699, 1.442695
        %v5722 = vpow.pop %v5721
        %v5723 = vmul.f32 %v5700, 1.442695
        %v5724 = vpow.pop %v5723
        %v5725 = vmul.f32 %v5701, 1.442695
        %v5726 = vpow.pop %v5725
        %v5727 = vmul.f32 %v5702, 1.442695
        %v5728 = vpow.pop %v5727
        %v5729 = vmul.f32 %v5703, 1.442695
        %v5730 = vpow.pop %v5729
        %v5731 = vmul.f32 %v5704, 1.442695
        %v5732 = vpow.pop %v5731
        %v5733 = vmul.f32 %v5705, 1.442695
        %v5734 = vpow.pop %v5733
        %v5735 = vmul.f32 %v5706, 1.442695
        %v5736 = vpow.pop %v5735
        %v5737 = vmul.f32 %v5707, 1.442695
        %v5738 = vpow.pop %v5737
        %v5739 = vmul.f32 %v5708, 1.442695
        %v5740 = vpow.pop %v5739
        %5741 = vadd.xlane.f32.xlu0 %v5710
        %v5742 = vpop.xlane.xlu0 %5741
        %5743 = vadd.xlane.f32.xlu0 %v5712
        %v5744 = vpop.xlane.xlu0 %5743
        %5745 = vadd.xlane.f32.xlu0 %v5714
        %v5746 = vpop.xlane.xlu0 %5745
        %5747 = vadd.xlane.f32.xlu0 %v5716
        %v5748 = vpop.xlane.xlu0 %5747
        %5749 = vadd.xlane.f32.xlu0 %v5718
        %v5750 = vpop.xlane.xlu0 %5749
        %5751 = vadd.xlane.f32.xlu0 %v5720
        %v5752 = vpop.xlane.xlu0 %5751
        %5753 = vadd.xlane.f32.xlu0 %v5722
        %v5754 = vpop.xlane.xlu0 %5753
        %5755 = vadd.xlane.f32.xlu0 %v5724
        %v5756 = vpop.xlane.xlu0 %5755
        %5757 = vadd.xlane.f32.xlu0 %v5726
        %v5758 = vpop.xlane.xlu0 %5757
        %5759 = vadd.xlane.f32.xlu0 %v5728
        %v5760 = vpop.xlane.xlu0 %5759
        %5761 = vadd.xlane.f32.xlu0 %v5730
        %v5762 = vpop.xlane.xlu0 %5761
        %5763 = vadd.xlane.f32.xlu0 %v5732
        %v5764 = vpop.xlane.xlu0 %5763
        %5765 = vadd.xlane.f32.xlu0 %v5734
        %v5766 = vpop.xlane.xlu0 %5765
        %5767 = vadd.xlane.f32.xlu0 %v5736
        %v5768 = vpop.xlane.xlu0 %5767
        %5769 = vadd.xlane.f32.xlu0 %v5738
        %v5770 = vpop.xlane.xlu0 %5769
        %5771 = vadd.xlane.f32.xlu0 %v5740
        %v5772 = vpop.xlane.xlu0 %5771
        %v5773 = vrcp.pop %v5742
        %v5774 = vrcp.pop %v5744
        %v5775 = vrcp.pop %v5746
        %v5776 = vrcp.pop %v5748
        %v5777 = vrcp.pop %v5750
        %v5778 = vrcp.pop %v5752
        %v5779 = vrcp.pop %v5754
        %v5780 = vrcp.pop %v5756
        %v5781 = vrcp.pop %v5758
        %v5782 = vrcp.pop %v5760
        %v5783 = vrcp.pop %v5762
        %v5784 = vrcp.pop %v5764
        %v5785 = vrcp.pop %v5766
        %v5786 = vrcp.pop %v5768
        %v5787 = vrcp.pop %v5770
        %v5788 = vrcp.pop %v5772
        %v5789 = vmul.f32 %v5710, %v5773
        %v5790 = vmul.f32 %v5712, %v5774
        %v5791 = vmul.f32 %v5714, %v5775
        %v5792 = vmul.f32 %v5716, %v5776
        %v5793 = vmul.f32 %v5718, %v5777
        %v5794 = vmul.f32 %v5720, %v5778
        %v5795 = vmul.f32 %v5722, %v5779
        %v5796 = vmul.f32 %v5724, %v5780
        %v5797 = vmul.f32 %v5726, %v5781
        %v5798 = vmul.f32 %v5728, %v5782
        %v5799 = vmul.f32 %v5730, %v5783
        %v5800 = vmul.f32 %v5732, %v5784
        %v5801 = vmul.f32 %v5734, %v5785
        %v5802 = vmul.f32 %v5736, %v5786
        %v5803 = vmul.f32 %v5738, %v5787
        %v5804 = vmul.f32 %v5740, %v5788
        %v5805 = vpack.c.bf16 %v5790, %v5789
        %v5806 = vpack.c.bf16 %v5792, %v5791
        %v5807 = vpack.c.bf16 %v5794, %v5793
        %v5808 = vpack.c.bf16 %v5796, %v5795
        %v5809 = vpack.c.bf16 %v5798, %v5797
        %v5810 = vpack.c.bf16 %v5800, %v5799
        %v5811 = vpack.c.bf16 %v5802, %v5801
        %v5812 = vpack.c.bf16 %v5804, %v5803
        %5821 = vrot.lane.b32.xlu0 %v5444, 64
        %v5822 = vpop.permute.xlu0 %5821
        %5823 = vrot.lane.b32.xlu0 %v5445, 64
        %v5824 = vpop.permute.xlu0 %5823
        %5825 = vrot.lane.b32.xlu0 %v5446, 64
        %v5826 = vpop.permute.xlu0 %5825
        %5827 = vrot.lane.b32.xlu0 %v5447, 64
        %v5828 = vpop.permute.xlu0 %5827
        %5829 = vrot.lane.b32.xlu0 %v5448, 64
        %v5830 = vpop.permute.xlu0 %5829
        %5831 = vrot.lane.b32.xlu0 %v5449, 64
        %v5832 = vpop.permute.xlu0 %5831
        %5833 = vrot.lane.b32.xlu0 %v5450, 64
        %v5834 = vpop.permute.xlu0 %5833
        %5835 = vrot.lane.b32.xlu0 %v5451, 64
        %v5836 = vpop.permute.xlu0 %5835
        %5845 = vmatprep.subr.bf16.mxu0 0
        %5846 = vmatpush1.bf16.msra.mxu0 %v5822
        %5847 = vmatprep.subr.bf16.mxu0 0
        %5848 = vmatpush1.bf16.msra.mxu0 %v5824
        %5849 = vmatprep.subr.bf16.mxu0 0
        %5850 = vmatpush1.bf16.msra.mxu0 %v5826
        %5851 = vmatprep.subr.bf16.mxu0 0
        %5852 = vmatpush1.bf16.msra.mxu0 %v5828
        %5853 = vmatprep.subr.bf16.mxu0 0
        %5854 = vmatpush1.bf16.msra.mxu0 %v5830
        %5855 = vmatprep.subr.bf16.mxu0 0
        %5856 = vmatpush1.bf16.msra.mxu0 %v5832
        %5857 = vmatprep.subr.bf16.mxu0 0
        %5858 = vmatpush1.bf16.msra.mxu0 %v5834
        %5859 = vmatprep.subr.bf16.mxu0 0
        %5860 = vmatpush1.bf16.msra.mxu0 %v5836
        %5861 = vmatprep.subr.bf16.mxu0 0
        %5862 = vmatpush1.bf16.msra.mxu0 0
        %5863 = vmatprep.subr.bf16.mxu0 0
        %5864 = vmatpush1.bf16.msra.mxu0 0
        %5865 = vmatprep.subr.bf16.mxu0 0
        %5866 = vmatpush1.bf16.msra.mxu0 0
        %5867 = vmatprep.subr.bf16.mxu0 0
        %5868 = vmatpush1.bf16.msra.mxu0 0
        %5869 = vmatprep.subr.bf16.mxu0 0
        %5870 = vmatpush1.bf16.msra.mxu0 0
        %5871 = vmatprep.subr.bf16.mxu0 0
        %5872 = vmatpush1.bf16.msra.mxu0 0
        %5873 = vmatprep.subr.bf16.mxu0 0
        %5874 = vmatpush1.bf16.msra.mxu0 0
        %5875 = vmatprep.subr.bf16.mxu0 0
        %5876 = vmatpush1.bf16.msra.mxu0 0
        %5877 = vmatprep.mubr.bf16.mxu0 0
        %5878 = vmatmul.mubr.bf16.gmra.mrb[0].mxu0 %v5805
        %v5879 = vpop.f32.mrb[0].mxu0
        %v5880 = vadd.f32 0.0, %v5879
        %v5881 = vpop.f32.mrb[0].mxu0
        %v5882 = vpop.f32.mrb[0].mxu0
        %v5883 = vadd.f32 0.0, %v5882
        %v5884 = vpop.f32.mrb[0].mxu0
        %5885 = vmatprep.mubr.bf16.mxu0 0
        %5886 = vmatmul.mubr.bf16.gmra.mrb[0].mxu0 %v5806
        %v5887 = vpop.f32.mrb[0].mxu0
        %v5888 = vadd.f32 0.0, %v5887
        %v5889 = vpop.f32.mrb[0].mxu0
        %v5890 = vpop.f32.mrb[0].mxu0
        %v5891 = vadd.f32 0.0, %v5890
        %v5892 = vpop.f32.mrb[0].mxu0
        %5893 = vmatprep.mubr.bf16.mxu0 0
        %5894 = vmatmul.mubr.bf16.gmra.mrb[0].mxu0 %v5807
        %v5895 = vpop.f32.mrb[0].mxu0
        %v5896 = vadd.f32 0.0, %v5895
        %v5897 = vpop.f32.mrb[0].mxu0
        %v5898 = vpop.f32.mrb[0].mxu0
        %v5899 = vadd.f32 0.0, %v5898
        %v5900 = vpop.f32.mrb[0].mxu0
        %5901 = vmatprep.mubr.bf16.mxu0 0
        %5902 = vmatmul.mubr.bf16.gmra.mrb[0].mxu0 %v5808
        %v5903 = vpop.f32.mrb[0].mxu0
        %v5904 = vadd.f32 0.0, %v5903
        %v5905 = vpop.f32.mrb[0].mxu0
        %v5906 = vpop.f32.mrb[0].mxu0
        %v5907 = vadd.f32 0.0, %v5906
        %v5908 = vpop.f32.mrb[0].mxu0
        %5909 = vmatprep.mubr.bf16.mxu0 0
        %5910 = vmatmul.mubr.bf16.gmra.mrb[0].mxu0 %v5809
        %v5911 = vpop.f32.mrb[0].mxu0
        %v5912 = vadd.f32 0.0, %v5911
        %v5913 = vpop.f32.mrb[0].mxu0
        %v5914 = vpop.f32.mrb[0].mxu0
        %v5915 = vadd.f32 0.0, %v5914
        %v5916 = vpop.f32.mrb[0].mxu0
        %5917 = vmatprep.mubr.bf16.mxu0 0
        %5918 = vmatmul.mubr.bf16.gmra.mrb[0].mxu0 %v5810
        %v5919 = vpop.f32.mrb[0].mxu0
        %v5920 = vadd.f32 0.0, %v5919
        %v5921 = vpop.f32.mrb[0].mxu0
        %v5922 = vpop.f32.mrb[0].mxu0
        %v5923 = vadd.f32 0.0, %v5922
        %v5924 = vpop.f32.mrb[0].mxu0
        %5925 = vmatprep.mubr.bf16.mxu0 0
        %5926 = vmatmul.mubr.bf16.gmra.mrb[0].mxu0 %v5811
        %v5927 = vpop.f32.mrb[0].mxu0
        %v5928 = vadd.f32 0.0, %v5927
        %v5929 = vpop.f32.mrb[0].mxu0
        %v5930 = vpop.f32.mrb[0].mxu0
        %v5931 = vadd.f32 0.0, %v5930
        %v5932 = vpop.f32.mrb[0].mxu0
        %5933 = vmatprep.mubr.bf16.mxu0 0
        %5934 = vmatmul.mubr.bf16.gmra.mrb[0].mxu0 %v5812
        %v5935 = vpop.f32.mrb[0].mxu0
        %v5936 = vadd.f32 0.0, %v5935
        %v5937 = vpop.f32.mrb[0].mxu0
        %v5938 = vpop.f32.mrb[0].mxu0
        %v5939 = vadd.f32 0.0, %v5938
        %v5940 = vpop.f32.mrb[0].mxu0
        %5941 = vdwg.mxu0
        %5958 = vrot.lane.b32.xlu0 %v5880, 64
        %v5959 = vpop.permute.xlu0 %5958
        %5960 = vrot.lane.b32.xlu0 %v5883, 64
        %v5961 = vpop.permute.xlu0 %5960
        %5962 = vrot.lane.b32.xlu0 %v5888, 64
        %v5963 = vpop.permute.xlu0 %5962
        %5964 = vrot.lane.b32.xlu0 %v5891, 64
        %v5965 = vpop.permute.xlu0 %5964
        %5966 = vrot.lane.b32.xlu0 %v5896, 64
        %v5967 = vpop.permute.xlu0 %5966
        %5968 = vrot.lane.b32.xlu0 %v5899, 64
        %v5969 = vpop.permute.xlu0 %5968
        %5970 = vrot.lane.b32.xlu0 %v5904, 64
        %v5971 = vpop.permute.xlu0 %5970
        %5972 = vrot.lane.b32.xlu0 %v5907, 64
        %v5973 = vpop.permute.xlu0 %5972
        %5974 = vrot.lane.b32.xlu0 %v5912, 64
        %v5975 = vpop.permute.xlu0 %5974
        %5976 = vrot.lane.b32.xlu0 %v5915, 64
        %v5977 = vpop.permute.xlu0 %5976
        %5978 = vrot.lane.b32.xlu0 %v5920, 64
        %v5979 = vpop.permute.xlu0 %5978
        %5980 = vrot.lane.b32.xlu0 %v5923, 64
        %v5981 = vpop.permute.xlu0 %5980
        %5982 = vrot.lane.b32.xlu0 %v5928, 64
        %v5983 = vpop.permute.xlu0 %5982
        %5984 = vrot.lane.b32.xlu0 %v5931, 64
        %v5985 = vpop.permute.xlu0 %5984
        %5986 = vrot.lane.b32.xlu0 %v5936, 64
        %v5987 = vpop.permute.xlu0 %5986
        %5988 = vrot.lane.b32.xlu0 %v5939, 64
        %v5989 = vpop.permute.xlu0 %5988
        %6006 = vst.msk [vmem:[#allocation4 + $0x80] sm:$0xff] %vm3580, %v5959
        %6007 = vst.msk [vmem:[#allocation4 + $0x88] sm:$0xff] %vm3580, %v5961
        %6008 = vst.msk [vmem:[#allocation4 + $0x90] sm:$0xff] %vm3580, %v5963
        %6009 = vst.msk [vmem:[#allocation4 + $0x98] sm:$0xff] %vm3580, %v5965
        %6010 = vst.msk [vmem:[#allocation4 + $0xa0] sm:$0xff] %vm3580, %v5967
        %6011 = vst.msk [vmem:[#allocation4 + $0xa8] sm:$0xff] %vm3580, %v5969
        %6012 = vst.msk [vmem:[#allocation4 + $0xb0] sm:$0xff] %vm3580, %v5971
        %6013 = vst.msk [vmem:[#allocation4 + $0xb8] sm:$0xff] %vm3580, %v5973
        %6014 = vst.msk [vmem:[#allocation4 + $0xc0] sm:$0xff] %vm3580, %v5975
        %6015 = vst.msk [vmem:[#allocation4 + $0xc8] sm:$0xff] %vm3580, %v5977
        %6016 = vst.msk [vmem:[#allocation4 + $0xd0] sm:$0xff] %vm3580, %v5979
        %6017 = vst.msk [vmem:[#allocation4 + $0xd8] sm:$0xff] %vm3580, %v5981
        %6018 = vst.msk [vmem:[#allocation4 + $0xe0] sm:$0xff] %vm3580, %v5983
        %6019 = vst.msk [vmem:[#allocation4 + $0xe8] sm:$0xff] %vm3580, %v5985
        %6020 = vst.msk [vmem:[#allocation4 + $0xf0] sm:$0xff] %vm3580, %v5987
        %6021 = vst.msk [vmem:[#allocation4 + $0xf8] sm:$0xff] %vm3580, %v5989
        %v6022 = vld [vmem:[#allocation3 + $0x180] sm:$0xff]
        %v6023 = vld [vmem:[#allocation3 + $0x198] sm:$0xff]
        %v6024 = vld [vmem:[#allocation3 + $0x1b0] sm:$0xff]
        %v6025 = vld [vmem:[#allocation3 + $0x1c8] sm:$0xff]
        %v6026 = vld [vmem:[#allocation3 + $0x1e0] sm:$0xff]
        %v6027 = vld [vmem:[#allocation3 + $0x1f8] sm:$0xff]
        %v6028 = vld [vmem:[#allocation3 + $0x210] sm:$0xff]
        %v6029 = vld [vmem:[#allocation3 + $0x228] sm:$0xff]
        %v6030 = vld [vmem:[#allocation3 + $0x240] sm:$0xff]
        %v6031 = vld [vmem:[#allocation3 + $0x258] sm:$0xff]
        %v6032 = vld [vmem:[#allocation3 + $0x270] sm:$0xff]
        %v6033 = vld [vmem:[#allocation3 + $0x288] sm:$0xff]
        %v6034 = vld [vmem:[#allocation3 + $0x2a0] sm:$0xff]
        %v6035 = vld [vmem:[#allocation3 + $0x2b8] sm:$0xff]
        %v6036 = vld [vmem:[#allocation3 + $0x2d0] sm:$0xff]
        %v6037 = vld [vmem:[#allocation3 + $0x2e8] sm:$0xff]
        %v6038 = vpack.c.bf16 %v6023, %v6022
        %v6039 = vpack.c.bf16 %v6025, %v6024
        %v6040 = vpack.c.bf16 %v6027, %v6026
        %v6041 = vpack.c.bf16 %v6029, %v6028
        %v6042 = vpack.c.bf16 %v6031, %v6030
        %v6043 = vpack.c.bf16 %v6033, %v6032
        %v6044 = vpack.c.bf16 %v6035, %v6034
        %v6045 = vpack.c.bf16 %v6037, %v6036
        %v6046 = vld [vmem:[#allocation3 + $0x188] sm:$0xff]
        %v6047 = vld [vmem:[#allocation3 + $0x1a0] sm:$0xff]
        %v6048 = vld [vmem:[#allocation3 + $0x1b8] sm:$0xff]
        %v6049 = vld [vmem:[#allocation3 + $0x1d0] sm:$0xff]
        %v6050 = vld [vmem:[#allocation3 + $0x1e8] sm:$0xff]
        %v6051 = vld [vmem:[#allocation3 + $0x200] sm:$0xff]
        %v6052 = vld [vmem:[#allocation3 + $0x218] sm:$0xff]
        %v6053 = vld [vmem:[#allocation3 + $0x230] sm:$0xff]
        %v6054 = vld [vmem:[#allocation3 + $0x248] sm:$0xff]
        %v6055 = vld [vmem:[#allocation3 + $0x260] sm:$0xff]
        %v6056 = vld [vmem:[#allocation3 + $0x278] sm:$0xff]
        %v6057 = vld [vmem:[#allocation3 + $0x290] sm:$0xff]
        %v6058 = vld [vmem:[#allocation3 + $0x2a8] sm:$0xff]
        %v6059 = vld [vmem:[#allocation3 + $0x2c0] sm:$0xff]
        %v6060 = vld [vmem:[#allocation3 + $0x2d8] sm:$0xff]
        %v6061 = vld [vmem:[#allocation3 + $0x2f0] sm:$0xff]
        %v6062 = vpack.c.bf16 %v6047, %v6046
        %v6063 = vpack.c.bf16 %v6049, %v6048
        %v6064 = vpack.c.bf16 %v6051, %v6050
        %v6065 = vpack.c.bf16 %v6053, %v6052
        %v6066 = vpack.c.bf16 %v6055, %v6054
        %v6067 = vpack.c.bf16 %v6057, %v6056
        %v6068 = vpack.c.bf16 %v6059, %v6058
        %v6069 = vpack.c.bf16 %v6061, %v6060
        %v6070 = vld [vmem:[#allocation3 + $0x190] sm:$0xff]
        %v6071 = vld [vmem:[#allocation3 + $0x1a8] sm:$0xff]
        %v6072 = vld [vmem:[#allocation3 + $0x1c0] sm:$0xff]
        %v6073 = vld [vmem:[#allocation3 + $0x1d8] sm:$0xff]
        %v6074 = vld [vmem:[#allocation3 + $0x1f0] sm:$0xff]
        %v6075 = vld [vmem:[#allocation3 + $0x208] sm:$0xff]
        %v6076 = vld [vmem:[#allocation3 + $0x220] sm:$0xff]
        %v6077 = vld [vmem:[#allocation3 + $0x238] sm:$0xff]
        %v6078 = vld [vmem:[#allocation3 + $0x250] sm:$0xff]
        %v6079 = vld [vmem:[#allocation3 + $0x268] sm:$0xff]
        %v6080 = vld [vmem:[#allocation3 + $0x280] sm:$0xff]
        %v6081 = vld [vmem:[#allocation3 + $0x298] sm:$0xff]
        %v6082 = vld [vmem:[#allocation3 + $0x2b0] sm:$0xff]
        %v6083 = vld [vmem:[#allocation3 + $0x2c8] sm:$0xff]
        %v6084 = vld [vmem:[#allocation3 + $0x2e0] sm:$0xff]
        %v6085 = vld [vmem:[#allocation3 + $0x2f8] sm:$0xff]
        %v6086 = vpack.c.bf16 %v6071, %v6070
        %v6087 = vpack.c.bf16 %v6073, %v6072
        %v6088 = vpack.c.bf16 %v6075, %v6074
        %v6089 = vpack.c.bf16 %v6077, %v6076
        %v6090 = vpack.c.bf16 %v6079, %v6078
        %v6091 = vpack.c.bf16 %v6081, %v6080
        %v6092 = vpack.c.bf16 %v6083, %v6082
        %v6093 = vpack.c.bf16 %v6085, %v6084
        %v6094 = vld [vmem:[%s6] sm:$0xff]
        %v6095 = vld [vmem:[%s6 + $0x8] sm:$0xff]
        %v6096 = vld [vmem:[%s6 + $0x10] sm:$0xff]
        %v6097 = vld [vmem:[%s6 + $0x18] sm:$0xff]
        %v6098 = vld [vmem:[%s6 + $0x20] sm:$0xff]
        %v6099 = vld [vmem:[%s6 + $0x28] sm:$0xff]
        %v6100 = vld [vmem:[%s6 + $0x30] sm:$0xff]
        %v6101 = vld [vmem:[%s6 + $0x38] sm:$0xff]
        %v6102 = vld [vmem:[%s6 + $0x40] sm:$0xff]
        %v6103 = vld [vmem:[%s6 + $0x48] sm:$0xff]
        %v6104 = vld [vmem:[%s6 + $0x50] sm:$0xff]
        %v6105 = vld [vmem:[%s6 + $0x58] sm:$0xff]
        %v6106 = vld [vmem:[%s6 + $0x60] sm:$0xff]
        %v6107 = vld [vmem:[%s6 + $0x68] sm:$0xff]
        %v6108 = vld [vmem:[%s6 + $0x70] sm:$0xff]
        %v6109 = vld [vmem:[%s6 + $0x78] sm:$0xff]
        %6118 = vrot.lane.b32.xlu0 %v6038, 32
        %v6119 = vpop.permute.xlu0 %6118
        %6120 = vrot.lane.b32.xlu0 %v6039, 32
        %v6121 = vpop.permute.xlu0 %6120
        %6122 = vrot.lane.b32.xlu0 %v6040, 32
        %v6123 = vpop.permute.xlu0 %6122
        %6124 = vrot.lane.b32.xlu0 %v6041, 32
        %v6125 = vpop.permute.xlu0 %6124
        %6126 = vrot.lane.b32.xlu0 %v6042, 32
        %v6127 = vpop.permute.xlu0 %6126
        %6128 = vrot.lane.b32.xlu0 %v6043, 32
        %v6129 = vpop.permute.xlu0 %6128
        %6130 = vrot.lane.b32.xlu0 %v6044, 32
        %v6131 = vpop.permute.xlu0 %6130
        %6132 = vrot.lane.b32.xlu0 %v6045, 32
        %v6133 = vpop.permute.xlu0 %6132
        %6142 = vrot.lane.b32.xlu0 %v6062, 32
        %v6143 = vpop.permute.xlu0 %6142
        %6144 = vrot.lane.b32.xlu0 %v6063, 32
        %v6145 = vpop.permute.xlu0 %6144
        %6146 = vrot.lane.b32.xlu0 %v6064, 32
        %v6147 = vpop.permute.xlu0 %6146
        %6148 = vrot.lane.b32.xlu0 %v6065, 32
        %v6149 = vpop.permute.xlu0 %6148
        %6150 = vrot.lane.b32.xlu0 %v6066, 32
        %v6151 = vpop.permute.xlu0 %6150
        %6152 = vrot.lane.b32.xlu0 %v6067, 32
        %v6153 = vpop.permute.xlu0 %6152
        %6154 = vrot.lane.b32.xlu0 %v6068, 32
        %v6155 = vpop.permute.xlu0 %6154
        %6156 = vrot.lane.b32.xlu0 %v6069, 32
        %v6157 = vpop.permute.xlu0 %6156
        %v6159 = vsel %vm1900, %v6119, 0
        %v6162 = vsel %vm1900, %v6121, 0
        %v6165 = vsel %vm1900, %v6123, 0
        %v6168 = vsel %vm1900, %v6125, 0
        %v6171 = vsel %vm1900, %v6127, 0
        %v6174 = vsel %vm1900, %v6129, 0
        %v6177 = vsel %vm1900, %v6131, 0
        %v6180 = vsel %vm1900, %v6133, 0
        %v6183 = vsel %vm1900, %v6143, 0
        %v6186 = vsel %vm1900, %v6145, 0
        %v6189 = vsel %vm1900, %v6147, 0
        %v6192 = vsel %vm1900, %v6149, 0
        %v6195 = vsel %vm1900, %v6151, 0
        %v6198 = vsel %vm1900, %v6153, 0
        %v6201 = vsel %vm1900, %v6155, 0
        %v6204 = vsel %vm1900, %v6157, 0
        %6206 = vmatprep.subr.bf16.mxu0 0
        %6207 = vmatpush1.bf16.xpose.msra.mxu0 %v6183
        %6208 = vmatprep.subr.bf16.mxu0 0
        %6209 = vmatpush1.bf16.xpose.msra.mxu0 %v6186
        %6210 = vmatprep.subr.bf16.mxu0 0
        %6211 = vmatpush1.bf16.xpose.msra.mxu0 %v6189
        %6212 = vmatprep.subr.bf16.mxu0 0
        %6213 = vmatpush1.bf16.xpose.msra.mxu0 %v6192
        %6214 = vmatprep.subr.bf16.mxu0 0
        %6215 = vmatpush1.bf16.xpose.msra.mxu0 %v6195
        %6216 = vmatprep.subr.bf16.mxu0 0
        %6217 = vmatpush1.bf16.xpose.msra.mxu0 %v6198
        %6218 = vmatprep.subr.bf16.mxu0 0
        %6219 = vmatpush1.bf16.xpose.msra.mxu0 %v6201
        %6220 = vmatprep.subr.bf16.mxu0 0
        %6221 = vmatpush1.bf16.xpose.msra.mxu0 %v6204
        %6222 = vmatprep.subr.bf16.mxu0 0
        %6223 = vmatpush1.bf16.xpose.msra.mxu0 0
        %6224 = vmatprep.subr.bf16.mxu0 0
        %6225 = vmatpush1.bf16.xpose.msra.mxu0 0
        %6226 = vmatprep.subr.bf16.mxu0 0
        %6227 = vmatpush1.bf16.xpose.msra.mxu0 0
        %6228 = vmatprep.subr.bf16.mxu0 0
        %6229 = vmatpush1.bf16.xpose.msra.mxu0 0
        %6230 = vmatprep.subr.bf16.mxu0 0
        %6231 = vmatpush1.bf16.xpose.msra.mxu0 0
        %6232 = vmatprep.subr.bf16.mxu0 0
        %6233 = vmatpush1.bf16.xpose.msra.mxu0 0
        %6234 = vmatprep.subr.bf16.mxu0 0
        %6235 = vmatpush1.bf16.xpose.msra.mxu0 0
        %6236 = vmatprep.subr.bf16.mxu0 0
        %6237 = vmatpush1.bf16.xpose.msra.mxu0 0
        %6238 = vmatprep.mubr.bf16.mxu0 0
        %6239 = vmatmul.mubr.bf16.gmra.mrb[0].mxu0 %v6159
        %v6240 = vpop.f32.mrb[0].mxu0
        %v6241 = vadd.f32 %v6094, %v6240
        %v6242 = vpop.f32.mrb[0].mxu0
        %v6243 = vpop.f32.mrb[0].mxu0
        %v6244 = vadd.f32 %v6095, %v6243
        %v6245 = vpop.f32.mrb[0].mxu0
        %6246 = vmatprep.mubr.bf16.mxu0 0
        %6247 = vmatmul.mubr.bf16.gmra.mrb[0].mxu0 %v6162
        %v6248 = vpop.f32.mrb[0].mxu0
        %v6249 = vadd.f32 %v6096, %v6248
        %v6250 = vpop.f32.mrb[0].mxu0
        %v6251 = vpop.f32.mrb[0].mxu0
        %v6252 = vadd.f32 %v6097, %v6251
        %v6253 = vpop.f32.mrb[0].mxu0
        %6254 = vmatprep.mubr.bf16.mxu0 0
        %6255 = vmatmul.mubr.bf16.gmra.mrb[0].mxu0 %v6165
        %v6256 = vpop.f32.mrb[0].mxu0
        %v6257 = vadd.f32 %v6098, %v6256
        %v6258 = vpop.f32.mrb[0].mxu0
        %v6259 = vpop.f32.mrb[0].mxu0
        %v6260 = vadd.f32 %v6099, %v6259
        %v6261 = vpop.f32.mrb[0].mxu0
        %6262 = vmatprep.mubr.bf16.mxu0 0
        %6263 = vmatmul.mubr.bf16.gmra.mrb[0].mxu0 %v6168
        %v6264 = vpop.f32.mrb[0].mxu0
        %v6265 = vadd.f32 %v6100, %v6264
        %v6266 = vpop.f32.mrb[0].mxu0
        %v6267 = vpop.f32.mrb[0].mxu0
        %v6268 = vadd.f32 %v6101, %v6267
        %v6269 = vpop.f32.mrb[0].mxu0
        %6270 = vmatprep.mubr.bf16.mxu0 0
        %6271 = vmatmul.mubr.bf16.gmra.mrb[0].mxu0 %v6171
        %v6272 = vpop.f32.mrb[0].mxu0
        %v6273 = vadd.f32 %v6102, %v6272
        %v6274 = vpop.f32.mrb[0].mxu0
        %v6275 = vpop.f32.mrb[0].mxu0
        %v6276 = vadd.f32 %v6103, %v6275
        %v6277 = vpop.f32.mrb[0].mxu0
        %6278 = vmatprep.mubr.bf16.mxu0 0
        %6279 = vmatmul.mubr.bf16.gmra.mrb[0].mxu0 %v6174
        %v6280 = vpop.f32.mrb[0].mxu0
        %v6281 = vadd.f32 %v6104, %v6280
        %v6282 = vpop.f32.mrb[0].mxu0
        %v6283 = vpop.f32.mrb[0].mxu0
        %v6284 = vadd.f32 %v6105, %v6283
        %v6285 = vpop.f32.mrb[0].mxu0
        %6286 = vmatprep.mubr.bf16.mxu0 0
        %6287 = vmatmul.mubr.bf16.gmra.mrb[0].mxu0 %v6177
        %v6288 = vpop.f32.mrb[0].mxu0
        %v6289 = vadd.f32 %v6106, %v6288
        %v6290 = vpop.f32.mrb[0].mxu0
        %v6291 = vpop.f32.mrb[0].mxu0
        %v6292 = vadd.f32 %v6107, %v6291
        %v6293 = vpop.f32.mrb[0].mxu0
        %6294 = vmatprep.mubr.bf16.mxu0 0
        %6295 = vmatmul.mubr.bf16.gmra.mrb[0].mxu0 %v6180
        %v6296 = vpop.f32.mrb[0].mxu0
        %v6297 = vadd.f32 %v6108, %v6296
        %v6298 = vpop.f32.mrb[0].mxu0
        %v6299 = vpop.f32.mrb[0].mxu0
        %v6300 = vadd.f32 %v6109, %v6299
        %v6301 = vpop.f32.mrb[0].mxu0
        %6302 = vdwg.mxu0
        %6303 = vmax.xlane.f32.xlu0 %v6241
        %v6304 = vpop.xlane.xlu0 %6303
        %6305 = vmax.xlane.f32.xlu0 %v6244
        %v6306 = vpop.xlane.xlu0 %6305
        %6307 = vmax.xlane.f32.xlu0 %v6249
        %v6308 = vpop.xlane.xlu0 %6307
        %6309 = vmax.xlane.f32.xlu0 %v6252
        %v6310 = vpop.xlane.xlu0 %6309
        %6311 = vmax.xlane.f32.xlu0 %v6257
        %v6312 = vpop.xlane.xlu0 %6311
        %6313 = vmax.xlane.f32.xlu0 %v6260
        %v6314 = vpop.xlane.xlu0 %6313
        %6315 = vmax.xlane.f32.xlu0 %v6265
        %v6316 = vpop.xlane.xlu0 %6315
        %6317 = vmax.xlane.f32.xlu0 %v6268
        %v6318 = vpop.xlane.xlu0 %6317
        %6319 = vmax.xlane.f32.xlu0 %v6273
        %v6320 = vpop.xlane.xlu0 %6319
        %6321 = vmax.xlane.f32.xlu0 %v6276
        %v6322 = vpop.xlane.xlu0 %6321
        %6323 = vmax.xlane.f32.xlu0 %v6281
        %v6324 = vpop.xlane.xlu0 %6323
        %6325 = vmax.xlane.f32.xlu0 %v6284
        %v6326 = vpop.xlane.xlu0 %6325
        %6327 = vmax.xlane.f32.xlu0 %v6289
        %v6328 = vpop.xlane.xlu0 %6327
        %6329 = vmax.xlane.f32.xlu0 %v6292
        %v6330 = vpop.xlane.xlu0 %6329
        %6331 = vmax.xlane.f32.xlu0 %v6297
        %v6332 = vpop.xlane.xlu0 %6331
        %6333 = vmax.xlane.f32.xlu0 %v6300
        %v6334 = vpop.xlane.xlu0 %6333
        %v6335 = vsub.f32 %v6241, %v6304
        %v6336 = vsub.f32 %v6244, %v6306
        %v6337 = vsub.f32 %v6249, %v6308
        %v6338 = vsub.f32 %v6252, %v6310
        %v6339 = vsub.f32 %v6257, %v6312
        %v6340 = vsub.f32 %v6260, %v6314
        %v6341 = vsub.f32 %v6265, %v6316
        %v6342 = vsub.f32 %v6268, %v6318
        %v6343 = vsub.f32 %v6273, %v6320
        %v6344 = vsub.f32 %v6276, %v6322
        %v6345 = vsub.f32 %v6281, %v6324
        %v6346 = vsub.f32 %v6284, %v6326
        %v6347 = vsub.f32 %v6289, %v6328
        %v6348 = vsub.f32 %v6292, %v6330
        %v6349 = vsub.f32 %v6297, %v6332
        %v6350 = vsub.f32 %v6300, %v6334
        %v6351 = vmul.f32 %v6335, 1.442695
        %v6352 = vpow.pop %v6351
        %v6353 = vmul.f32 %v6336, 1.442695
        %v6354 = vpow.pop %v6353
        %v6355 = vmul.f32 %v6337, 1.442695
        %v6356 = vpow.pop %v6355
        %v6357 = vmul.f32 %v6338, 1.442695
        %v6358 = vpow.pop %v6357
        %v6359 = vmul.f32 %v6339, 1.442695
        %v6360 = vpow.pop %v6359
        %v6361 = vmul.f32 %v6340, 1.442695
        %v6362 = vpow.pop %v6361
        %v6363 = vmul.f32 %v6341, 1.442695
        %v6364 = vpow.pop %v6363
        %v6365 = vmul.f32 %v6342, 1.442695
        %v6366 = vpow.pop %v6365
        %v6367 = vmul.f32 %v6343, 1.442695
        %v6368 = vpow.pop %v6367
        %v6369 = vmul.f32 %v6344, 1.442695
        %v6370 = vpow.pop %v6369
        %v6371 = vmul.f32 %v6345, 1.442695
        %v6372 = vpow.pop %v6371
        %v6373 = vmul.f32 %v6346, 1.442695
        %v6374 = vpow.pop %v6373
        %v6375 = vmul.f32 %v6347, 1.442695
        %v6376 = vpow.pop %v6375
        %v6377 = vmul.f32 %v6348, 1.442695
        %v6378 = vpow.pop %v6377
        %v6379 = vmul.f32 %v6349, 1.442695
        %v6380 = vpow.pop %v6379
        %v6381 = vmul.f32 %v6350, 1.442695
        %v6382 = vpow.pop %v6381
        %6383 = vadd.xlane.f32.xlu0 %v6352
        %v6384 = vpop.xlane.xlu0 %6383
        %6385 = vadd.xlane.f32.xlu0 %v6354
        %v6386 = vpop.xlane.xlu0 %6385
        %6387 = vadd.xlane.f32.xlu0 %v6356
        %v6388 = vpop.xlane.xlu0 %6387
        %6389 = vadd.xlane.f32.xlu0 %v6358
        %v6390 = vpop.xlane.xlu0 %6389
        %6391 = vadd.xlane.f32.xlu0 %v6360
        %v6392 = vpop.xlane.xlu0 %6391
        %6393 = vadd.xlane.f32.xlu0 %v6362
        %v6394 = vpop.xlane.xlu0 %6393
        %6395 = vadd.xlane.f32.xlu0 %v6364
        %v6396 = vpop.xlane.xlu0 %6395
        %6397 = vadd.xlane.f32.xlu0 %v6366
        %v6398 = vpop.xlane.xlu0 %6397
        %6399 = vadd.xlane.f32.xlu0 %v6368
        %v6400 = vpop.xlane.xlu0 %6399
        %6401 = vadd.xlane.f32.xlu0 %v6370
        %v6402 = vpop.xlane.xlu0 %6401
        %6403 = vadd.xlane.f32.xlu0 %v6372
        %v6404 = vpop.xlane.xlu0 %6403
        %6405 = vadd.xlane.f32.xlu0 %v6374
        %v6406 = vpop.xlane.xlu0 %6405
        %6407 = vadd.xlane.f32.xlu0 %v6376
        %v6408 = vpop.xlane.xlu0 %6407
        %6409 = vadd.xlane.f32.xlu0 %v6378
        %v6410 = vpop.xlane.xlu0 %6409
        %6411 = vadd.xlane.f32.xlu0 %v6380
        %v6412 = vpop.xlane.xlu0 %6411
        %6413 = vadd.xlane.f32.xlu0 %v6382
        %v6414 = vpop.xlane.xlu0 %6413
        %v6415 = vrcp.pop %v6384
        %v6416 = vrcp.pop %v6386
        %v6417 = vrcp.pop %v6388
        %v6418 = vrcp.pop %v6390
        %v6419 = vrcp.pop %v6392
        %v6420 = vrcp.pop %v6394
        %v6421 = vrcp.pop %v6396
        %v6422 = vrcp.pop %v6398
        %v6423 = vrcp.pop %v6400
        %v6424 = vrcp.pop %v6402
        %v6425 = vrcp.pop %v6404
        %v6426 = vrcp.pop %v6406
        %v6427 = vrcp.pop %v6408
        %v6428 = vrcp.pop %v6410
        %v6429 = vrcp.pop %v6412
        %v6430 = vrcp.pop %v6414
        %v6431 = vmul.f32 %v6352, %v6415
        %v6432 = vmul.f32 %v6354, %v6416
        %v6433 = vmul.f32 %v6356, %v6417
        %v6434 = vmul.f32 %v6358, %v6418
        %v6435 = vmul.f32 %v6360, %v6419
        %v6436 = vmul.f32 %v6362, %v6420
        %v6437 = vmul.f32 %v6364, %v6421
        %v6438 = vmul.f32 %v6366, %v6422
        %v6439 = vmul.f32 %v6368, %v6423
        %v6440 = vmul.f32 %v6370, %v6424
        %v6441 = vmul.f32 %v6372, %v6425
        %v6442 = vmul.f32 %v6374, %v6426
        %v6443 = vmul.f32 %v6376, %v6427
        %v6444 = vmul.f32 %v6378, %v6428
        %v6445 = vmul.f32 %v6380, %v6429
        %v6446 = vmul.f32 %v6382, %v6430
        %v6447 = vpack.c.bf16 %v6432, %v6431
        %v6448 = vpack.c.bf16 %v6434, %v6433
        %v6449 = vpack.c.bf16 %v6436, %v6435
        %v6450 = vpack.c.bf16 %v6438, %v6437
        %v6451 = vpack.c.bf16 %v6440, %v6439
        %v6452 = vpack.c.bf16 %v6442, %v6441
        %v6453 = vpack.c.bf16 %v6444, %v6443
        %v6454 = vpack.c.bf16 %v6446, %v6445
        %6463 = vrot.lane.b32.xlu0 %v6086, 32
        %v6464 = vpop.permute.xlu0 %6463
        %6465 = vrot.lane.b32.xlu0 %v6087, 32
        %v6466 = vpop.permute.xlu0 %6465
        %6467 = vrot.lane.b32.xlu0 %v6088, 32
        %v6468 = vpop.permute.xlu0 %6467
        %6469 = vrot.lane.b32.xlu0 %v6089, 32
        %v6470 = vpop.permute.xlu0 %6469
        %6471 = vrot.lane.b32.xlu0 %v6090, 32
        %v6472 = vpop.permute.xlu0 %6471
        %6473 = vrot.lane.b32.xlu0 %v6091, 32
        %v6474 = vpop.permute.xlu0 %6473
        %6475 = vrot.lane.b32.xlu0 %v6092, 32
        %v6476 = vpop.permute.xlu0 %6475
        %6477 = vrot.lane.b32.xlu0 %v6093, 32
        %v6478 = vpop.permute.xlu0 %6477
        %6487 = vmatprep.subr.bf16.mxu0 0
        %6488 = vmatpush1.bf16.msra.mxu0 %v6464
        %6489 = vmatprep.subr.bf16.mxu0 0
        %6490 = vmatpush1.bf16.msra.mxu0 %v6466
        %6491 = vmatprep.subr.bf16.mxu0 0
        %6492 = vmatpush1.bf16.msra.mxu0 %v6468
        %6493 = vmatprep.subr.bf16.mxu0 0
        %6494 = vmatpush1.bf16.msra.mxu0 %v6470
        %6495 = vmatprep.subr.bf16.mxu0 0
        %6496 = vmatpush1.bf16.msra.mxu0 %v6472
        %6497 = vmatprep.subr.bf16.mxu0 0
        %6498 = vmatpush1.bf16.msra.mxu0 %v6474
        %6499 = vmatprep.subr.bf16.mxu0 0
        %6500 = vmatpush1.bf16.msra.mxu0 %v6476
        %6501 = vmatprep.subr.bf16.mxu0 0
        %6502 = vmatpush1.bf16.msra.mxu0 %v6478
        %6503 = vmatprep.subr.bf16.mxu0 0
        %6504 = vmatpush1.bf16.msra.mxu0 0
        %6505 = vmatprep.subr.bf16.mxu0 0
        %6506 = vmatpush1.bf16.msra.mxu0 0
        %6507 = vmatprep.subr.bf16.mxu0 0
        %6508 = vmatpush1.bf16.msra.mxu0 0
        %6509 = vmatprep.subr.bf16.mxu0 0
        %6510 = vmatpush1.bf16.msra.mxu0 0
        %6511 = vmatprep.subr.bf16.mxu0 0
        %6512 = vmatpush1.bf16.msra.mxu0 0
        %6513 = vmatprep.subr.bf16.mxu0 0
        %6514 = vmatpush1.bf16.msra.mxu0 0
        %6515 = vmatprep.subr.bf16.mxu0 0
        %6516 = vmatpush1.bf16.msra.mxu0 0
        %6517 = vmatprep.subr.bf16.mxu0 0
        %6518 = vmatpush1.bf16.msra.mxu0 0
        %6519 = vmatprep.mubr.bf16.mxu0 0
        %6520 = vmatmul.mubr.bf16.gmra.mrb[0].mxu0 %v6447
        %v6521 = vpop.f32.mrb[0].mxu0
        %v6522 = vadd.f32 0.0, %v6521
        %v6523 = vpop.f32.mrb[0].mxu0
        %v6524 = vpop.f32.mrb[0].mxu0
        %v6525 = vadd.f32 0.0, %v6524
        %v6526 = vpop.f32.mrb[0].mxu0
        %6527 = vmatprep.mubr.bf16.mxu0 0
        %6528 = vmatmul.mubr.bf16.gmra.mrb[0].mxu0 %v6448
        %v6529 = vpop.f32.mrb[0].mxu0
        %v6530 = vadd.f32 0.0, %v6529
        %v6531 = vpop.f32.mrb[0].mxu0
        %v6532 = vpop.f32.mrb[0].mxu0
        %v6533 = vadd.f32 0.0, %v6532
        %v6534 = vpop.f32.mrb[0].mxu0
        %6535 = vmatprep.mubr.bf16.mxu0 0
        %6536 = vmatmul.mubr.bf16.gmra.mrb[0].mxu0 %v6449
        %v6537 = vpop.f32.mrb[0].mxu0
        %v6538 = vadd.f32 0.0, %v6537
        %v6539 = vpop.f32.mrb[0].mxu0
        %v6540 = vpop.f32.mrb[0].mxu0
        %v6541 = vadd.f32 0.0, %v6540
        %v6542 = vpop.f32.mrb[0].mxu0
        %6543 = vmatprep.mubr.bf16.mxu0 0
        %6544 = vmatmul.mubr.bf16.gmra.mrb[0].mxu0 %v6450
        %v6545 = vpop.f32.mrb[0].mxu0
        %v6546 = vadd.f32 0.0, %v6545
        %v6547 = vpop.f32.mrb[0].mxu0
        %v6548 = vpop.f32.mrb[0].mxu0
        %v6549 = vadd.f32 0.0, %v6548
        %v6550 = vpop.f32.mrb[0].mxu0
        %6551 = vmatprep.mubr.bf16.mxu0 0
        %6552 = vmatmul.mubr.bf16.gmra.mrb[0].mxu0 %v6451
        %v6553 = vpop.f32.mrb[0].mxu0
        %v6554 = vadd.f32 0.0, %v6553
        %v6555 = vpop.f32.mrb[0].mxu0
        %v6556 = vpop.f32.mrb[0].mxu0
        %v6557 = vadd.f32 0.0, %v6556
        %v6558 = vpop.f32.mrb[0].mxu0
        %6559 = vmatprep.mubr.bf16.mxu0 0
        %6560 = vmatmul.mubr.bf16.gmra.mrb[0].mxu0 %v6452
        %v6561 = vpop.f32.mrb[0].mxu0
        %v6562 = vadd.f32 0.0, %v6561
        %v6563 = vpop.f32.mrb[0].mxu0
        %v6564 = vpop.f32.mrb[0].mxu0
        %v6565 = vadd.f32 0.0, %v6564
        %v6566 = vpop.f32.mrb[0].mxu0
        %6567 = vmatprep.mubr.bf16.mxu0 0
        %6568 = vmatmul.mubr.bf16.gmra.mrb[0].mxu0 %v6453
        %v6569 = vpop.f32.mrb[0].mxu0
        %v6570 = vadd.f32 0.0, %v6569
        %v6571 = vpop.f32.mrb[0].mxu0
        %v6572 = vpop.f32.mrb[0].mxu0
        %v6573 = vadd.f32 0.0, %v6572
        %v6574 = vpop.f32.mrb[0].mxu0
        %6575 = vmatprep.mubr.bf16.mxu0 0
        %6576 = vmatmul.mubr.bf16.gmra.mrb[0].mxu0 %v6454
        %v6577 = vpop.f32.mrb[0].mxu0
        %v6578 = vadd.f32 0.0, %v6577
        %v6579 = vpop.f32.mrb[0].mxu0
        %v6580 = vpop.f32.mrb[0].mxu0
        %v6581 = vadd.f32 0.0, %v6580
        %v6582 = vpop.f32.mrb[0].mxu0
        %6583 = vdwg.mxu0
        %6600 = vrot.lane.b32.xlu0 %v6522, 96
        %v6601 = vpop.permute.xlu0 %6600
        %6602 = vrot.lane.b32.xlu0 %v6525, 96
        %v6603 = vpop.permute.xlu0 %6602
        %6604 = vrot.lane.b32.xlu0 %v6530, 96
        %v6605 = vpop.permute.xlu0 %6604
        %6606 = vrot.lane.b32.xlu0 %v6533, 96
        %v6607 = vpop.permute.xlu0 %6606
        %6608 = vrot.lane.b32.xlu0 %v6538, 96
        %v6609 = vpop.permute.xlu0 %6608
        %6610 = vrot.lane.b32.xlu0 %v6541, 96
        %v6611 = vpop.permute.xlu0 %6610
        %6612 = vrot.lane.b32.xlu0 %v6546, 96
        %v6613 = vpop.permute.xlu0 %6612
        %6614 = vrot.lane.b32.xlu0 %v6549, 96
        %v6615 = vpop.permute.xlu0 %6614
        %6616 = vrot.lane.b32.xlu0 %v6554, 96
        %v6617 = vpop.permute.xlu0 %6616
        %6618 = vrot.lane.b32.xlu0 %v6557, 96
        %v6619 = vpop.permute.xlu0 %6618
        %6620 = vrot.lane.b32.xlu0 %v6562, 96
        %v6621 = vpop.permute.xlu0 %6620
        %6622 = vrot.lane.b32.xlu0 %v6565, 96
        %v6623 = vpop.permute.xlu0 %6622
        %6624 = vrot.lane.b32.xlu0 %v6570, 96
        %v6625 = vpop.permute.xlu0 %6624
        %6626 = vrot.lane.b32.xlu0 %v6573, 96
        %v6627 = vpop.permute.xlu0 %6626
        %6628 = vrot.lane.b32.xlu0 %v6578, 96
        %v6629 = vpop.permute.xlu0 %6628
        %6630 = vrot.lane.b32.xlu0 %v6581, 96
        %v6631 = vpop.permute.xlu0 %6630
        %6648 = vst.msk [vmem:[#allocation4 + $0x80] sm:$0xff] %vm4223, %v6601
        %6649 = vst.msk [vmem:[#allocation4 + $0x88] sm:$0xff] %vm4223, %v6603
        %6650 = vst.msk [vmem:[#allocation4 + $0x90] sm:$0xff] %vm4223, %v6605
        %6651 = vst.msk [vmem:[#allocation4 + $0x98] sm:$0xff] %vm4223, %v6607
        %6652 = vst.msk [vmem:[#allocation4 + $0xa0] sm:$0xff] %vm4223, %v6609
        %6653 = vst.msk [vmem:[#allocation4 + $0xa8] sm:$0xff] %vm4223, %v6611
        %6654 = vst.msk [vmem:[#allocation4 + $0xb0] sm:$0xff] %vm4223, %v6613
        %6655 = vst.msk [vmem:[#allocation4 + $0xb8] sm:$0xff] %vm4223, %v6615
        %6656 = vst.msk [vmem:[#allocation4 + $0xc0] sm:$0xff] %vm4223, %v6617
        %6657 = vst.msk [vmem:[#allocation4 + $0xc8] sm:$0xff] %vm4223, %v6619
        %6658 = vst.msk [vmem:[#allocation4 + $0xd0] sm:$0xff] %vm4223, %v6621
        %6659 = vst.msk [vmem:[#allocation4 + $0xd8] sm:$0xff] %vm4223, %v6623
        %6660 = vst.msk [vmem:[#allocation4 + $0xe0] sm:$0xff] %vm4223, %v6625
        %6661 = vst.msk [vmem:[#allocation4 + $0xe8] sm:$0xff] %vm4223, %v6627
        %6662 = vst.msk [vmem:[#allocation4 + $0xf0] sm:$0xff] %vm4223, %v6629
        %6663 = vst.msk [vmem:[#allocation4 + $0xf8] sm:$0xff] %vm4223, %v6631
        %v6664 = vld [vmem:[#allocation4] sm:$0xff]
        %v6665 = vld [vmem:[#allocation4 + $0x8] sm:$0xff]
        %v6666 = vld [vmem:[#allocation4 + $0x10] sm:$0xff]
        %v6667 = vld [vmem:[#allocation4 + $0x18] sm:$0xff]
        %v6668 = vld [vmem:[#allocation4 + $0x20] sm:$0xff]
        %v6669 = vld [vmem:[#allocation4 + $0x28] sm:$0xff]
        %v6670 = vld [vmem:[#allocation4 + $0x30] sm:$0xff]
        %v6671 = vld [vmem:[#allocation4 + $0x38] sm:$0xff]
        %v6672 = vld [vmem:[#allocation4 + $0x40] sm:$0xff]
        %v6673 = vld [vmem:[#allocation4 + $0x48] sm:$0xff]
        %v6674 = vld [vmem:[#allocation4 + $0x50] sm:$0xff]
        %v6675 = vld [vmem:[#allocation4 + $0x58] sm:$0xff]
        %v6676 = vld [vmem:[#allocation4 + $0x60] sm:$0xff]
        %v6677 = vld [vmem:[#allocation4 + $0x68] sm:$0xff]
        %v6678 = vld [vmem:[#allocation4 + $0x70] sm:$0xff]
        %v6679 = vld [vmem:[#allocation4 + $0x78] sm:$0xff]
        %v6680 = vld [vmem:[#allocation4 + $0x80] sm:$0xff]
        %v6681 = vld [vmem:[#allocation4 + $0x88] sm:$0xff]
        %v6682 = vld [vmem:[#allocation4 + $0x90] sm:$0xff]
        %v6683 = vld [vmem:[#allocation4 + $0x98] sm:$0xff]
        %v6684 = vld [vmem:[#allocation4 + $0xa0] sm:$0xff]
        %v6685 = vld [vmem:[#allocation4 + $0xa8] sm:$0xff]
        %v6686 = vld [vmem:[#allocation4 + $0xb0] sm:$0xff]
        %v6687 = vld [vmem:[#allocation4 + $0xb8] sm:$0xff]
        %v6688 = vld [vmem:[#allocation4 + $0xc0] sm:$0xff]
        %v6689 = vld [vmem:[#allocation4 + $0xc8] sm:$0xff]
        %v6690 = vld [vmem:[#allocation4 + $0xd0] sm:$0xff]
        %v6691 = vld [vmem:[#allocation4 + $0xd8] sm:$0xff]
        %v6692 = vld [vmem:[#allocation4 + $0xe0] sm:$0xff]
        %v6693 = vld [vmem:[#allocation4 + $0xe8] sm:$0xff]
        %v6694 = vld [vmem:[#allocation4 + $0xf0] sm:$0xff]
        %v6695 = vld [vmem:[#allocation4 + $0xf8] sm:$0xff]
        %v6696 = vpack.c.bf16 %v6665, %v6664
        %v6697 = vpack.c.bf16 %v6667, %v6666
        %v6698 = vpack.c.bf16 %v6669, %v6668
        %v6699 = vpack.c.bf16 %v6671, %v6670
        %v6700 = vpack.c.bf16 %v6673, %v6672
        %v6701 = vpack.c.bf16 %v6675, %v6674
        %v6702 = vpack.c.bf16 %v6677, %v6676
        %v6703 = vpack.c.bf16 %v6679, %v6678
        %v6704 = vpack.c.bf16 %v6681, %v6680
        %v6705 = vpack.c.bf16 %v6683, %v6682
        %v6706 = vpack.c.bf16 %v6685, %v6684
        %v6707 = vpack.c.bf16 %v6687, %v6686
        %v6708 = vpack.c.bf16 %v6689, %v6688
        %v6709 = vpack.c.bf16 %v6691, %v6690
        %v6710 = vpack.c.bf16 %v6693, %v6692
        %v6711 = vpack.c.bf16 %v6695, %v6694
        %v6712 = vld [vmem:[%s4] sm:$0xf]
        %v6713 = vld [vmem:[%s4 + $0x4] sm:$0xf]
        %v6714 = vld [vmem:[%s4 + $0x8] sm:$0xf]
        %v6715 = vld [vmem:[%s4 + $0xc] sm:$0xf]
        %v6716 = vld [vmem:[%s4 + $0x10] sm:$0xf]
        %v6717 = vld [vmem:[%s4 + $0x14] sm:$0xf]
        %v6718 = vld [vmem:[%s4 + $0x18] sm:$0xf]
        %v6719 = vld [vmem:[%s4 + $0x1c] sm:$0xf]
        %v6720 = vld [vmem:[%s4 + $0x20] sm:$0xf]
        %v6721 = vld [vmem:[%s4 + $0x24] sm:$0xf]
        %v6722 = vld [vmem:[%s4 + $0x28] sm:$0xf]
        %v6723 = vld [vmem:[%s4 + $0x2c] sm:$0xf]
        %v6724 = vld [vmem:[%s4 + $0x30] sm:$0xf]
        %v6725 = vld [vmem:[%s4 + $0x34] sm:$0xf]
        %v6726 = vld [vmem:[%s4 + $0x38] sm:$0xf]
        %v6727 = vld [vmem:[%s4 + $0x3c] sm:$0xf]
        %v6728 = vlaneseq
        %v6729 = vshrl.u32 %v6728, 7
        %v6730 = vsub.s32 3, %v6729
        %v6731 = vrot.slane %v281, %v6730
        %v6748 = vunpack.c.l.b16 %v6712
        %v6749 = vunpack.c.l.b16 %v6713
        %v6750 = vunpack.c.l.b16 %v6714
        %v6751 = vunpack.c.l.b16 %v6715
        %v6752 = vunpack.c.l.b16 %v6716
        %v6753 = vunpack.c.l.b16 %v6717
        %v6754 = vunpack.c.l.b16 %v6718
        %v6755 = vunpack.c.l.b16 %v6719
        %v6756 = vunpack.c.l.b16 %v6720
        %v6757 = vunpack.c.l.b16 %v6721
        %v6758 = vunpack.c.l.b16 %v6722
        %v6759 = vunpack.c.l.b16 %v6723
        %v6760 = vunpack.c.l.b16 %v6724
        %v6761 = vunpack.c.l.b16 %v6725
        %v6762 = vunpack.c.l.b16 %v6726
        %v6763 = vunpack.c.l.b16 %v6727
        %v6764 = vpack.c.b16 %v6749, %v6748
        %v6765 = vpack.c.b16 %v6751, %v6750
        %v6766 = vpack.c.b16 %v6753, %v6752
        %v6767 = vpack.c.b16 %v6755, %v6754
        %v6768 = vpack.c.b16 %v6757, %v6756
        %v6769 = vpack.c.b16 %v6759, %v6758
        %v6770 = vpack.c.b16 %v6761, %v6760
        %v6771 = vpack.c.b16 %v6763, %v6762
        %6780 = vmatprep.subr.bf16.mxu0 0
        %6781 = vmatpush1.bf16.msra.mxu0 %v6764
        %6782 = vmatprep.subr.bf16.mxu0 0
        %6783 = vmatpush1.bf16.msra.mxu0 %v6765
        %6784 = vmatprep.subr.bf16.mxu0 0
        %6785 = vmatpush1.bf16.msra.mxu0 %v6766
        %6786 = vmatprep.subr.bf16.mxu0 0
        %6787 = vmatpush1.bf16.msra.mxu0 %v6767
        %6788 = vmatprep.subr.bf16.mxu0 0
        %6789 = vmatpush1.bf16.msra.mxu0 %v6768
        %6790 = vmatprep.subr.bf16.mxu0 0
        %6791 = vmatpush1.bf16.msra.mxu0 %v6769
        %6792 = vmatprep.subr.bf16.mxu0 0
        %6793 = vmatpush1.bf16.msra.mxu0 %v6770
        %6794 = vmatprep.subr.bf16.mxu0 0
        %6795 = vmatpush1.bf16.msra.mxu0 %v6771
        %6796 = vmatprep.subr.bf16.mxu0 0
        %6797 = vmatpush1.bf16.msra.mxu0 0
        %6798 = vmatprep.subr.bf16.mxu0 0
        %6799 = vmatpush1.bf16.msra.mxu0 0
        %6800 = vmatprep.subr.bf16.mxu0 0
        %6801 = vmatpush1.bf16.msra.mxu0 0
        %6802 = vmatprep.subr.bf16.mxu0 0
        %6803 = vmatpush1.bf16.msra.mxu0 0
        %6804 = vmatprep.subr.bf16.mxu0 0
        %6805 = vmatpush1.bf16.msra.mxu0 0
        %6806 = vmatprep.subr.bf16.mxu0 0
        %6807 = vmatpush1.bf16.msra.mxu0 0
        %6808 = vmatprep.subr.bf16.mxu0 0
        %6809 = vmatpush1.bf16.msra.mxu0 0
        %6810 = vmatprep.subr.bf16.mxu0 0
        %6811 = vmatpush1.bf16.msra.mxu0 0
        %6812 = vmatprep.mubr.bf16.mxu0 0
        %6813 = vmatmul.mubr.bf16.gmra.mrb[0].mxu0 %v6696
        %v6814 = vpop.f32.mrb[0].mxu0
        %v6815 = vadd.f32 %v6731, %v6814
        %v6816 = vpop.f32.mrb[0].mxu0
        %v6817 = vpop.f32.mrb[0].mxu0
        %v6818 = vadd.f32 %v6731, %v6817
        %v6819 = vpop.f32.mrb[0].mxu0
        %6820 = vmatprep.mubr.bf16.mxu0 0
        %6821 = vmatmul.mubr.bf16.gmra.mrb[0].mxu0 %v6697
        %v6822 = vpop.f32.mrb[0].mxu0
        %v6823 = vadd.f32 %v6731, %v6822
        %v6824 = vpop.f32.mrb[0].mxu0
        %v6825 = vpop.f32.mrb[0].mxu0
        %v6826 = vadd.f32 %v6731, %v6825
        %v6827 = vpop.f32.mrb[0].mxu0
        %6828 = vmatprep.mubr.bf16.mxu0 0
        %6829 = vmatmul.mubr.bf16.gmra.mrb[0].mxu0 %v6698
        %v6830 = vpop.f32.mrb[0].mxu0
        %v6831 = vadd.f32 %v6731, %v6830
        %v6832 = vpop.f32.mrb[0].mxu0
        %v6833 = vpop.f32.mrb[0].mxu0
        %v6834 = vadd.f32 %v6731, %v6833
        %v6835 = vpop.f32.mrb[0].mxu0
        %6836 = vmatprep.mubr.bf16.mxu0 0
        %6837 = vmatmul.mubr.bf16.gmra.mrb[0].mxu0 %v6699
        %v6838 = vpop.f32.mrb[0].mxu0
        %v6839 = vadd.f32 %v6731, %v6838
        %v6840 = vpop.f32.mrb[0].mxu0
        %v6841 = vpop.f32.mrb[0].mxu0
        %v6842 = vadd.f32 %v6731, %v6841
        %v6843 = vpop.f32.mrb[0].mxu0
        %6844 = vmatprep.mubr.bf16.mxu0 0
        %6845 = vmatmul.mubr.bf16.gmra.mrb[0].mxu0 %v6700
        %v6846 = vpop.f32.mrb[0].mxu0
        %v6847 = vadd.f32 %v6731, %v6846
        %v6848 = vpop.f32.mrb[0].mxu0
        %v6849 = vpop.f32.mrb[0].mxu0
        %v6850 = vadd.f32 %v6731, %v6849
        %v6851 = vpop.f32.mrb[0].mxu0
        %6852 = vmatprep.mubr.bf16.mxu0 0
        %6853 = vmatmul.mubr.bf16.gmra.mrb[0].mxu0 %v6701
        %v6854 = vpop.f32.mrb[0].mxu0
        %v6855 = vadd.f32 %v6731, %v6854
        %v6856 = vpop.f32.mrb[0].mxu0
        %v6857 = vpop.f32.mrb[0].mxu0
        %v6858 = vadd.f32 %v6731, %v6857
        %v6859 = vpop.f32.mrb[0].mxu0
        %6860 = vmatprep.mubr.bf16.mxu0 0
        %6861 = vmatmul.mubr.bf16.gmra.mrb[0].mxu0 %v6702
        %v6862 = vpop.f32.mrb[0].mxu0
        %v6863 = vadd.f32 %v6731, %v6862
        %v6864 = vpop.f32.mrb[0].mxu0
        %v6865 = vpop.f32.mrb[0].mxu0
        %v6866 = vadd.f32 %v6731, %v6865
        %v6867 = vpop.f32.mrb[0].mxu0
        %6868 = vmatprep.mubr.bf16.mxu0 0
        %6869 = vmatmul.mubr.bf16.gmra.mrb[0].mxu0 %v6703
        %v6870 = vpop.f32.mrb[0].mxu0
        %v6871 = vadd.f32 %v6731, %v6870
        %v6872 = vpop.f32.mrb[0].mxu0
        %v6873 = vpop.f32.mrb[0].mxu0
        %v6874 = vadd.f32 %v6731, %v6873
        %v6875 = vpop.f32.mrb[0].mxu0
        %6876 = vmatprep.mubr.bf16.mxu0 0
        %6877 = vmatmul.mubr.bf16.gmra.mrb[0].mxu0 %v6704
        %v6878 = vpop.f32.mrb[0].mxu0
        %v6879 = vadd.f32 %v6731, %v6878
        %v6880 = vpop.f32.mrb[0].mxu0
        %v6881 = vpop.f32.mrb[0].mxu0
        %v6882 = vadd.f32 %v6731, %v6881
        %v6883 = vpop.f32.mrb[0].mxu0
        %6884 = vmatprep.mubr.bf16.mxu0 0
        %6885 = vmatmul.mubr.bf16.gmra.mrb[0].mxu0 %v6705
        %v6886 = vpop.f32.mrb[0].mxu0
        %v6887 = vadd.f32 %v6731, %v6886
        %v6888 = vpop.f32.mrb[0].mxu0
        %v6889 = vpop.f32.mrb[0].mxu0
        %v6890 = vadd.f32 %v6731, %v6889
        %v6891 = vpop.f32.mrb[0].mxu0
        %6892 = vmatprep.mubr.bf16.mxu0 0
        %6893 = vmatmul.mubr.bf16.gmra.mrb[0].mxu0 %v6706
        %v6894 = vpop.f32.mrb[0].mxu0
        %v6895 = vadd.f32 %v6731, %v6894
        %v6896 = vpop.f32.mrb[0].mxu0
        %v6897 = vpop.f32.mrb[0].mxu0
        %v6898 = vadd.f32 %v6731, %v6897
        %v6899 = vpop.f32.mrb[0].mxu0
        %6900 = vmatprep.mubr.bf16.mxu0 0
        %6901 = vmatmul.mubr.bf16.gmra.mrb[0].mxu0 %v6707
        %v6902 = vpop.f32.mrb[0].mxu0
        %v6903 = vadd.f32 %v6731, %v6902
        %v6904 = vpop.f32.mrb[0].mxu0
        %v6905 = vpop.f32.mrb[0].mxu0
        %v6906 = vadd.f32 %v6731, %v6905
        %v6907 = vpop.f32.mrb[0].mxu0
        %6908 = vmatprep.mubr.bf16.mxu0 0
        %6909 = vmatmul.mubr.bf16.gmra.mrb[0].mxu0 %v6708
        %v6910 = vpop.f32.mrb[0].mxu0
        %v6911 = vadd.f32 %v6731, %v6910
        %v6912 = vpop.f32.mrb[0].mxu0
        %v6913 = vpop.f32.mrb[0].mxu0
        %v6914 = vadd.f32 %v6731, %v6913
        %v6915 = vpop.f32.mrb[0].mxu0
        %6916 = vmatprep.mubr.bf16.mxu0 0
        %6917 = vmatmul.mubr.bf16.gmra.mrb[0].mxu0 %v6709
        %v6918 = vpop.f32.mrb[0].mxu0
        %v6919 = vadd.f32 %v6731, %v6918
        %v6920 = vpop.f32.mrb[0].mxu0
        %v6921 = vpop.f32.mrb[0].mxu0
        %v6922 = vadd.f32 %v6731, %v6921
        %v6923 = vpop.f32.mrb[0].mxu0
        %6924 = vmatprep.mubr.bf16.mxu0 0
        %6925 = vmatmul.mubr.bf16.gmra.mrb[0].mxu0 %v6710
        %v6926 = vpop.f32.mrb[0].mxu0
        %v6927 = vadd.f32 %v6731, %v6926
        %v6928 = vpop.f32.mrb[0].mxu0
        %v6929 = vpop.f32.mrb[0].mxu0
        %v6930 = vadd.f32 %v6731, %v6929
        %v6931 = vpop.f32.mrb[0].mxu0
        %6932 = vmatprep.mubr.bf16.mxu0 0
        %6933 = vmatmul.mubr.bf16.gmra.mrb[0].mxu0 %v6711
        %v6934 = vpop.f32.mrb[0].mxu0
        %v6935 = vadd.f32 %v6731, %v6934
        %v6936 = vpop.f32.mrb[0].mxu0
        %v6937 = vpop.f32.mrb[0].mxu0
        %v6938 = vadd.f32 %v6731, %v6937
        %v6939 = vpop.f32.mrb[0].mxu0
        %6940 = vdwg.mxu0
        %v6941 = vld [vmem:[#allocation2] sm:$0xff]
        %v6942 = vld [vmem:[#allocation2 + $0x8] sm:$0xff]
        %v6943 = vld [vmem:[#allocation2 + $0x10] sm:$0xff]
        %v6944 = vld [vmem:[#allocation2 + $0x18] sm:$0xff]
        %v6945 = vld [vmem:[#allocation2 + $0x20] sm:$0xff]
        %v6946 = vld [vmem:[#allocation2 + $0x28] sm:$0xff]
        %v6947 = vld [vmem:[#allocation2 + $0x30] sm:$0xff]
        %v6948 = vld [vmem:[#allocation2 + $0x38] sm:$0xff]
        %v6949 = vld [vmem:[#allocation2 + $0x40] sm:$0xff]
        %v6950 = vld [vmem:[#allocation2 + $0x48] sm:$0xff]
        %v6951 = vld [vmem:[#allocation2 + $0x50] sm:$0xff]
        %v6952 = vld [vmem:[#allocation2 + $0x58] sm:$0xff]
        %v6953 = vld [vmem:[#allocation2 + $0x60] sm:$0xff]
        %v6954 = vld [vmem:[#allocation2 + $0x68] sm:$0xff]
        %v6955 = vld [vmem:[#allocation2 + $0x70] sm:$0xff]
        %v6956 = vld [vmem:[#allocation2 + $0x78] sm:$0xff]
        %v6957 = vld [vmem:[#allocation2 + $0x80] sm:$0xff]
        %v6958 = vld [vmem:[#allocation2 + $0x88] sm:$0xff]
        %v6959 = vld [vmem:[#allocation2 + $0x90] sm:$0xff]
        %v6960 = vld [vmem:[#allocation2 + $0x98] sm:$0xff]
        %v6961 = vld [vmem:[#allocation2 + $0xa0] sm:$0xff]
        %v6962 = vld [vmem:[#allocation2 + $0xa8] sm:$0xff]
        %v6963 = vld [vmem:[#allocation2 + $0xb0] sm:$0xff]
        %v6964 = vld [vmem:[#allocation2 + $0xb8] sm:$0xff]
        %v6965 = vld [vmem:[#allocation2 + $0xc0] sm:$0xff]
        %v6966 = vld [vmem:[#allocation2 + $0xc8] sm:$0xff]
        %v6967 = vld [vmem:[#allocation2 + $0xd0] sm:$0xff]
        %v6968 = vld [vmem:[#allocation2 + $0xd8] sm:$0xff]
        %v6969 = vld [vmem:[#allocation2 + $0xe0] sm:$0xff]
        %v6970 = vld [vmem:[#allocation2 + $0xe8] sm:$0xff]
        %v6971 = vld [vmem:[#allocation2 + $0xf0] sm:$0xff]
        %v6972 = vld [vmem:[#allocation2 + $0xf8] sm:$0xff]
        %v6973 = vadd.f32 %v6941, %v6815
        %v6974 = vadd.f32 %v6942, %v6818
        %v6975 = vadd.f32 %v6943, %v6823
        %v6976 = vadd.f32 %v6944, %v6826
        %v6977 = vadd.f32 %v6945, %v6831
        %v6978 = vadd.f32 %v6946, %v6834
        %v6979 = vadd.f32 %v6947, %v6839
        %v6980 = vadd.f32 %v6948, %v6842
        %v6981 = vadd.f32 %v6949, %v6847
        %v6982 = vadd.f32 %v6950, %v6850
        %v6983 = vadd.f32 %v6951, %v6855
        %v6984 = vadd.f32 %v6952, %v6858
        %v6985 = vadd.f32 %v6953, %v6863
        %v6986 = vadd.f32 %v6954, %v6866
        %v6987 = vadd.f32 %v6955, %v6871
        %v6988 = vadd.f32 %v6956, %v6874
        %v6989 = vadd.f32 %v6957, %v6879
        %v6990 = vadd.f32 %v6958, %v6882
        %v6991 = vadd.f32 %v6959, %v6887
        %v6992 = vadd.f32 %v6960, %v6890
        %v6993 = vadd.f32 %v6961, %v6895
        %v6994 = vadd.f32 %v6962, %v6898
        %v6995 = vadd.f32 %v6963, %v6903
        %v6996 = vadd.f32 %v6964, %v6906
        %v6997 = vadd.f32 %v6965, %v6911
        %v6998 = vadd.f32 %v6966, %v6914
        %v6999 = vadd.f32 %v6967, %v6919
        %v7000 = vadd.f32 %v6968, %v6922
        %v7001 = vadd.f32 %v6969, %v6927
        %v7002 = vadd.f32 %v6970, %v6930
        %v7003 = vadd.f32 %v6971, %v6935
        %v7004 = vadd.f32 %v6972, %v6938
        %7005 = vadd.xlane.f32.xlu0 %v6973
        %v7006 = vpop.xlane.xlu0 %7005
        %7007 = vadd.xlane.f32.xlu0 %v6974
        %v7008 = vpop.xlane.xlu0 %7007
        %7009 = vadd.xlane.f32.xlu0 %v6975
        %v7010 = vpop.xlane.xlu0 %7009
        %7011 = vadd.xlane.f32.xlu0 %v6976
        %v7012 = vpop.xlane.xlu0 %7011
        %7013 = vadd.xlane.f32.xlu0 %v6977
        %v7014 = vpop.xlane.xlu0 %7013
        %7015 = vadd.xlane.f32.xlu0 %v6978
        %v7016 = vpop.xlane.xlu0 %7015
        %7017 = vadd.xlane.f32.xlu0 %v6979
        %v7018 = vpop.xlane.xlu0 %7017
        %7019 = vadd.xlane.f32.xlu0 %v6980
        %v7020 = vpop.xlane.xlu0 %7019
        %7021 = vadd.xlane.f32.xlu0 %v6981
        %v7022 = vpop.xlane.xlu0 %7021
        %7023 = vadd.xlane.f32.xlu0 %v6982
        %v7024 = vpop.xlane.xlu0 %7023
        %7025 = vadd.xlane.f32.xlu0 %v6983
        %v7026 = vpop.xlane.xlu0 %7025
        %7027 = vadd.xlane.f32.xlu0 %v6984
        %v7028 = vpop.xlane.xlu0 %7027
        %7029 = vadd.xlane.f32.xlu0 %v6985
        %v7030 = vpop.xlane.xlu0 %7029
        %7031 = vadd.xlane.f32.xlu0 %v6986
        %v7032 = vpop.xlane.xlu0 %7031
        %7033 = vadd.xlane.f32.xlu0 %v6987
        %v7034 = vpop.xlane.xlu0 %7033
        %7035 = vadd.xlane.f32.xlu0 %v6988
        %v7036 = vpop.xlane.xlu0 %7035
        %7037 = vadd.xlane.f32.xlu0 %v6989
        %v7038 = vpop.xlane.xlu0 %7037
        %7039 = vadd.xlane.f32.xlu0 %v6990
        %v7040 = vpop.xlane.xlu0 %7039
        %7041 = vadd.xlane.f32.xlu0 %v6991
        %v7042 = vpop.xlane.xlu0 %7041
        %7043 = vadd.xlane.f32.xlu0 %v6992
        %v7044 = vpop.xlane.xlu0 %7043
        %7045 = vadd.xlane.f32.xlu0 %v6993
        %v7046 = vpop.xlane.xlu0 %7045
        %7047 = vadd.xlane.f32.xlu0 %v6994
        %v7048 = vpop.xlane.xlu0 %7047
        %7049 = vadd.xlane.f32.xlu0 %v6995
        %v7050 = vpop.xlane.xlu0 %7049
        %7051 = vadd.xlane.f32.xlu0 %v6996
        %v7052 = vpop.xlane.xlu0 %7051
        %7053 = vadd.xlane.f32.xlu0 %v6997
        %v7054 = vpop.xlane.xlu0 %7053
        %7055 = vadd.xlane.f32.xlu0 %v6998
        %v7056 = vpop.xlane.xlu0 %7055
        %7057 = vadd.xlane.f32.xlu0 %v6999
        %v7058 = vpop.xlane.xlu0 %7057
        %7059 = vadd.xlane.f32.xlu0 %v7000
        %v7060 = vpop.xlane.xlu0 %7059
        %7061 = vadd.xlane.f32.xlu0 %v7001
        %v7062 = vpop.xlane.xlu0 %7061
        %7063 = vadd.xlane.f32.xlu0 %v7002
        %v7064 = vpop.xlane.xlu0 %7063
        %7065 = vadd.xlane.f32.xlu0 %v7003
        %v7066 = vpop.xlane.xlu0 %7065
        %7067 = vadd.xlane.f32.xlu0 %v7004
        %v7068 = vpop.xlane.xlu0 %7067
        %v7069 = vmul.f32 %v7006, %v712
        %v7070 = vmul.f32 %v7008, %v712
        %v7071 = vmul.f32 %v7010, %v712
        %v7072 = vmul.f32 %v7012, %v712
        %v7073 = vmul.f32 %v7014, %v712
        %v7074 = vmul.f32 %v7016, %v712
        %v7075 = vmul.f32 %v7018, %v712
        %v7076 = vmul.f32 %v7020, %v712
        %v7077 = vmul.f32 %v7022, %v712
        %v7078 = vmul.f32 %v7024, %v712
        %v7079 = vmul.f32 %v7026, %v712
        %v7080 = vmul.f32 %v7028, %v712
        %v7081 = vmul.f32 %v7030, %v712
        %v7082 = vmul.f32 %v7032, %v712
        %v7083 = vmul.f32 %v7034, %v712
        %v7084 = vmul.f32 %v7036, %v712
        %v7085 = vmul.f32 %v7038, %v712
        %v7086 = vmul.f32 %v7040, %v712
        %v7087 = vmul.f32 %v7042, %v712
        %v7088 = vmul.f32 %v7044, %v712
        %v7089 = vmul.f32 %v7046, %v712
        %v7090 = vmul.f32 %v7048, %v712
        %v7091 = vmul.f32 %v7050, %v712
        %v7092 = vmul.f32 %v7052, %v712
        %v7093 = vmul.f32 %v7054, %v712
        %v7094 = vmul.f32 %v7056, %v712
        %v7095 = vmul.f32 %v7058, %v712
        %v7096 = vmul.f32 %v7060, %v712
        %v7097 = vmul.f32 %v7062, %v712
        %v7098 = vmul.f32 %v7064, %v712
        %v7099 = vmul.f32 %v7066, %v712
        %v7100 = vmul.f32 %v7068, %v712
        %v7101 = vmul.f32 %v6973, %v6973
        %v7102 = vmul.f32 %v6974, %v6974
        %v7103 = vmul.f32 %v6975, %v6975
        %v7104 = vmul.f32 %v6976, %v6976
        %v7105 = vmul.f32 %v6977, %v6977
        %v7106 = vmul.f32 %v6978, %v6978
        %v7107 = vmul.f32 %v6979, %v6979
        %v7108 = vmul.f32 %v6980, %v6980
        %v7109 = vmul.f32 %v6981, %v6981
        %v7110 = vmul.f32 %v6982, %v6982
        %v7111 = vmul.f32 %v6983, %v6983
        %v7112 = vmul.f32 %v6984, %v6984
        %v7113 = vmul.f32 %v6985, %v6985
        %v7114 = vmul.f32 %v6986, %v6986
        %v7115 = vmul.f32 %v6987, %v6987
        %v7116 = vmul.f32 %v6988, %v6988
        %v7117 = vmul.f32 %v6989, %v6989
        %v7118 = vmul.f32 %v6990, %v6990
        %v7119 = vmul.f32 %v6991, %v6991
        %v7120 = vmul.f32 %v6992, %v6992
        %v7121 = vmul.f32 %v6993, %v6993
        %v7122 = vmul.f32 %v6994, %v6994
        %v7123 = vmul.f32 %v6995, %v6995
        %v7124 = vmul.f32 %v6996, %v6996
        %v7125 = vmul.f32 %v6997, %v6997
        %v7126 = vmul.f32 %v6998, %v6998
        %v7127 = vmul.f32 %v6999, %v6999
        %v7128 = vmul.f32 %v7000, %v7000
        %v7129 = vmul.f32 %v7001, %v7001
        %v7130 = vmul.f32 %v7002, %v7002
        %v7131 = vmul.f32 %v7003, %v7003
        %v7132 = vmul.f32 %v7004, %v7004
        %7133 = vadd.xlane.f32.xlu0 %v7101
        %v7134 = vpop.xlane.xlu0 %7133
        %7135 = vadd.xlane.f32.xlu0 %v7102
        %v7136 = vpop.xlane.xlu0 %7135
        %7137 = vadd.xlane.f32.xlu0 %v7103
        %v7138 = vpop.xlane.xlu0 %7137
        %7139 = vadd.xlane.f32.xlu0 %v7104
        %v7140 = vpop.xlane.xlu0 %7139
        %7141 = vadd.xlane.f32.xlu0 %v7105
        %v7142 = vpop.xlane.xlu0 %7141
        %7143 = vadd.xlane.f32.xlu0 %v7106
        %v7144 = vpop.xlane.xlu0 %7143
        %7145 = vadd.xlane.f32.xlu0 %v7107
        %v7146 = vpop.xlane.xlu0 %7145
        %7147 = vadd.xlane.f32.xlu0 %v7108
        %v7148 = vpop.xlane.xlu0 %7147
        %7149 = vadd.xlane.f32.xlu0 %v7109
        %v7150 = vpop.xlane.xlu0 %7149
        %7151 = vadd.xlane.f32.xlu0 %v7110
        %v7152 = vpop.xlane.xlu0 %7151
        %7153 = vadd.xlane.f32.xlu0 %v7111
        %v7154 = vpop.xlane.xlu0 %7153
        %7155 = vadd.xlane.f32.xlu0 %v7112
        %v7156 = vpop.xlane.xlu0 %7155
        %7157 = vadd.xlane.f32.xlu0 %v7113
        %v7158 = vpop.xlane.xlu0 %7157
        %7159 = vadd.xlane.f32.xlu0 %v7114
        %v7160 = vpop.xlane.xlu0 %7159
        %7161 = vadd.xlane.f32.xlu0 %v7115
        %v7162 = vpop.xlane.xlu0 %7161
        %7163 = vadd.xlane.f32.xlu0 %v7116
        %v7164 = vpop.xlane.xlu0 %7163
        %7165 = vadd.xlane.f32.xlu0 %v7117
        %v7166 = vpop.xlane.xlu0 %7165
        %7167 = vadd.xlane.f32.xlu0 %v7118
        %v7168 = vpop.xlane.xlu0 %7167
        %7169 = vadd.xlane.f32.xlu0 %v7119
        %v7170 = vpop.xlane.xlu0 %7169
        %7171 = vadd.xlane.f32.xlu0 %v7120
        %v7172 = vpop.xlane.xlu0 %7171
        %7173 = vadd.xlane.f32.xlu0 %v7121
        %v7174 = vpop.xlane.xlu0 %7173
        %7175 = vadd.xlane.f32.xlu0 %v7122
        %v7176 = vpop.xlane.xlu0 %7175
        %7177 = vadd.xlane.f32.xlu0 %v7123
        %v7178 = vpop.xlane.xlu0 %7177
        %7179 = vadd.xlane.f32.xlu0 %v7124
        %v7180 = vpop.xlane.xlu0 %7179
        %7181 = vadd.xlane.f32.xlu0 %v7125
        %v7182 = vpop.xlane.xlu0 %7181
        %7183 = vadd.xlane.f32.xlu0 %v7126
        %v7184 = vpop.xlane.xlu0 %7183
        %7185 = vadd.xlane.f32.xlu0 %v7127
        %v7186 = vpop.xlane.xlu0 %7185
        %7187 = vadd.xlane.f32.xlu0 %v7128
        %v7188 = vpop.xlane.xlu0 %7187
        %7189 = vadd.xlane.f32.xlu0 %v7129
        %v7190 = vpop.xlane.xlu0 %7189
        %7191 = vadd.xlane.f32.xlu0 %v7130
        %v7192 = vpop.xlane.xlu0 %7191
        %7193 = vadd.xlane.f32.xlu0 %v7131
        %v7194 = vpop.xlane.xlu0 %7193
        %7195 = vadd.xlane.f32.xlu0 %v7132
        %v7196 = vpop.xlane.xlu0 %7195
        %v7197 = vmul.f32 %v7134, %v712
        %v7198 = vmul.f32 %v7136, %v712
        %v7199 = vmul.f32 %v7138, %v712
        %v7200 = vmul.f32 %v7140, %v712
        %v7201 = vmul.f32 %v7142, %v712
        %v7202 = vmul.f32 %v7144, %v712
        %v7203 = vmul.f32 %v7146, %v712
        %v7204 = vmul.f32 %v7148, %v712
        %v7205 = vmul.f32 %v7150, %v712
        %v7206 = vmul.f32 %v7152, %v712
        %v7207 = vmul.f32 %v7154, %v712
        %v7208 = vmul.f32 %v7156, %v712
        %v7209 = vmul.f32 %v7158, %v712
        %v7210 = vmul.f32 %v7160, %v712
        %v7211 = vmul.f32 %v7162, %v712
        %v7212 = vmul.f32 %v7164, %v712
        %v7213 = vmul.f32 %v7166, %v712
        %v7214 = vmul.f32 %v7168, %v712
        %v7215 = vmul.f32 %v7170, %v712
        %v7216 = vmul.f32 %v7172, %v712
        %v7217 = vmul.f32 %v7174, %v712
        %v7218 = vmul.f32 %v7176, %v712
        %v7219 = vmul.f32 %v7178, %v712
        %v7220 = vmul.f32 %v7180, %v712
        %v7221 = vmul.f32 %v7182, %v712
        %v7222 = vmul.f32 %v7184, %v712
        %v7223 = vmul.f32 %v7186, %v712
        %v7224 = vmul.f32 %v7188, %v712
        %v7225 = vmul.f32 %v7190, %v712
        %v7226 = vmul.f32 %v7192, %v712
        %v7227 = vmul.f32 %v7194, %v712
        %v7228 = vmul.f32 %v7196, %v712
        %v7229 = vmul.f32 %v7069, %v7069
        %v7230 = vmul.f32 %v7070, %v7070
        %v7231 = vmul.f32 %v7071, %v7071
        %v7232 = vmul.f32 %v7072, %v7072
        %v7233 = vmul.f32 %v7073, %v7073
        %v7234 = vmul.f32 %v7074, %v7074
        %v7235 = vmul.f32 %v7075, %v7075
        %v7236 = vmul.f32 %v7076, %v7076
        %v7237 = vmul.f32 %v7077, %v7077
        %v7238 = vmul.f32 %v7078, %v7078
        %v7239 = vmul.f32 %v7079, %v7079
        %v7240 = vmul.f32 %v7080, %v7080
        %v7241 = vmul.f32 %v7081, %v7081
        %v7242 = vmul.f32 %v7082, %v7082
        %v7243 = vmul.f32 %v7083, %v7083
        %v7244 = vmul.f32 %v7084, %v7084
        %v7245 = vmul.f32 %v7085, %v7085
        %v7246 = vmul.f32 %v7086, %v7086
        %v7247 = vmul.f32 %v7087, %v7087
        %v7248 = vmul.f32 %v7088, %v7088
        %v7249 = vmul.f32 %v7089, %v7089
        %v7250 = vmul.f32 %v7090, %v7090
        %v7251 = vmul.f32 %v7091, %v7091
        %v7252 = vmul.f32 %v7092, %v7092
        %v7253 = vmul.f32 %v7093, %v7093
        %v7254 = vmul.f32 %v7094, %v7094
        %v7255 = vmul.f32 %v7095, %v7095
        %v7256 = vmul.f32 %v7096, %v7096
        %v7257 = vmul.f32 %v7097, %v7097
        %v7258 = vmul.f32 %v7098, %v7098
        %v7259 = vmul.f32 %v7099, %v7099
        %v7260 = vmul.f32 %v7100, %v7100
        %v7261 = vsub.f32 %v7197, %v7229
        %v7262 = vsub.f32 %v7198, %v7230
        %v7263 = vsub.f32 %v7199, %v7231
        %v7264 = vsub.f32 %v7200, %v7232
        %v7265 = vsub.f32 %v7201, %v7233
        %v7266 = vsub.f32 %v7202, %v7234
        %v7267 = vsub.f32 %v7203, %v7235
        %v7268 = vsub.f32 %v7204, %v7236
        %v7269 = vsub.f32 %v7205, %v7237
        %v7270 = vsub.f32 %v7206, %v7238
        %v7271 = vsub.f32 %v7207, %v7239
        %v7272 = vsub.f32 %v7208, %v7240
        %v7273 = vsub.f32 %v7209, %v7241
        %v7274 = vsub.f32 %v7210, %v7242
        %v7275 = vsub.f32 %v7211, %v7243
        %v7276 = vsub.f32 %v7212, %v7244
        %v7277 = vsub.f32 %v7213, %v7245
        %v7278 = vsub.f32 %v7214, %v7246
        %v7279 = vsub.f32 %v7215, %v7247
        %v7280 = vsub.f32 %v7216, %v7248
        %v7281 = vsub.f32 %v7217, %v7249
        %v7282 = vsub.f32 %v7218, %v7250
        %v7283 = vsub.f32 %v7219, %v7251
        %v7284 = vsub.f32 %v7220, %v7252
        %v7285 = vsub.f32 %v7221, %v7253
        %v7286 = vsub.f32 %v7222, %v7254
        %v7287 = vsub.f32 %v7223, %v7255
        %v7288 = vsub.f32 %v7224, %v7256
        %v7289 = vsub.f32 %v7225, %v7257
        %v7290 = vsub.f32 %v7226, %v7258
        %v7291 = vsub.f32 %v7227, %v7259
        %v7292 = vsub.f32 %v7228, %v7260
        %v7293 = vsub.f32 %v6973, %v7069
        %v7294 = vsub.f32 %v6974, %v7070
        %v7295 = vsub.f32 %v6975, %v7071
        %v7296 = vsub.f32 %v6976, %v7072
        %v7297 = vsub.f32 %v6977, %v7073
        %v7298 = vsub.f32 %v6978, %v7074
        %v7299 = vsub.f32 %v6979, %v7075
        %v7300 = vsub.f32 %v6980, %v7076
        %v7301 = vsub.f32 %v6981, %v7077
        %v7302 = vsub.f32 %v6982, %v7078
        %v7303 = vsub.f32 %v6983, %v7079
        %v7304 = vsub.f32 %v6984, %v7080
        %v7305 = vsub.f32 %v6985, %v7081
        %v7306 = vsub.f32 %v6986, %v7082
        %v7307 = vsub.f32 %v6987, %v7083
        %v7308 = vsub.f32 %v6988, %v7084
        %v7309 = vsub.f32 %v6989, %v7085
        %v7310 = vsub.f32 %v6990, %v7086
        %v7311 = vsub.f32 %v6991, %v7087
        %v7312 = vsub.f32 %v6992, %v7088
        %v7313 = vsub.f32 %v6993, %v7089
        %v7314 = vsub.f32 %v6994, %v7090
        %v7315 = vsub.f32 %v6995, %v7091
        %v7316 = vsub.f32 %v6996, %v7092
        %v7317 = vsub.f32 %v6997, %v7093
        %v7318 = vsub.f32 %v6998, %v7094
        %v7319 = vsub.f32 %v6999, %v7095
        %v7320 = vsub.f32 %v7000, %v7096
        %v7321 = vsub.f32 %v7001, %v7097
        %v7322 = vsub.f32 %v7002, %v7098
        %v7323 = vsub.f32 %v7003, %v7099
        %v7324 = vsub.f32 %v7004, %v7100
        %v7325 = vadd.f32 %v7261, 1e-05
        %v7326 = vadd.f32 %v7262, 1e-05
        %v7327 = vadd.f32 %v7263, 1e-05
        %v7328 = vadd.f32 %v7264, 1e-05
        %v7329 = vadd.f32 %v7265, 1e-05
        %v7330 = vadd.f32 %v7266, 1e-05
        %v7331 = vadd.f32 %v7267, 1e-05
        %v7332 = vadd.f32 %v7268, 1e-05
        %v7333 = vadd.f32 %v7269, 1e-05
        %v7334 = vadd.f32 %v7270, 1e-05
        %v7335 = vadd.f32 %v7271, 1e-05
        %v7336 = vadd.f32 %v7272, 1e-05
        %v7337 = vadd.f32 %v7273, 1e-05
        %v7338 = vadd.f32 %v7274, 1e-05
        %v7339 = vadd.f32 %v7275, 1e-05
        %v7340 = vadd.f32 %v7276, 1e-05
        %v7341 = vadd.f32 %v7277, 1e-05
        %v7342 = vadd.f32 %v7278, 1e-05
        %v7343 = vadd.f32 %v7279, 1e-05
        %v7344 = vadd.f32 %v7280, 1e-05
        %v7345 = vadd.f32 %v7281, 1e-05
        %v7346 = vadd.f32 %v7282, 1e-05
        %v7347 = vadd.f32 %v7283, 1e-05
        %v7348 = vadd.f32 %v7284, 1e-05
        %v7349 = vadd.f32 %v7285, 1e-05
        %v7350 = vadd.f32 %v7286, 1e-05
        %v7351 = vadd.f32 %v7287, 1e-05
        %v7352 = vadd.f32 %v7288, 1e-05
        %v7353 = vadd.f32 %v7289, 1e-05
        %v7354 = vadd.f32 %v7290, 1e-05
        %v7355 = vadd.f32 %v7291, 1e-05
        %v7356 = vadd.f32 %v7292, 1e-05
        %v7357 = vrsqrt.pop %v7325
        %v7358 = vrsqrt.pop %v7326
        %v7359 = vrsqrt.pop %v7327
        %v7360 = vrsqrt.pop %v7328
        %v7361 = vrsqrt.pop %v7329
        %v7362 = vrsqrt.pop %v7330
        %v7363 = vrsqrt.pop %v7331
        %v7364 = vrsqrt.pop %v7332
        %v7365 = vrsqrt.pop %v7333
        %v7366 = vrsqrt.pop %v7334
        %v7367 = vrsqrt.pop %v7335
        %v7368 = vrsqrt.pop %v7336
        %v7369 = vrsqrt.pop %v7337
        %v7370 = vrsqrt.pop %v7338
        %v7371 = vrsqrt.pop %v7339
        %v7372 = vrsqrt.pop %v7340
        %v7373 = vrsqrt.pop %v7341
        %v7374 = vrsqrt.pop %v7342
        %v7375 = vrsqrt.pop %v7343
        %v7376 = vrsqrt.pop %v7344
        %v7377 = vrsqrt.pop %v7345
        %v7378 = vrsqrt.pop %v7346
        %v7379 = vrsqrt.pop %v7347
        %v7380 = vrsqrt.pop %v7348
        %v7381 = vrsqrt.pop %v7349
        %v7382 = vrsqrt.pop %v7350
        %v7383 = vrsqrt.pop %v7351
        %v7384 = vrsqrt.pop %v7352
        %v7385 = vrsqrt.pop %v7353
        %v7386 = vrsqrt.pop %v7354
        %v7387 = vrsqrt.pop %v7355
        %v7388 = vrsqrt.pop %v7356
        %v7389 = vmul.f32 %v7293, %v7357
        %v7390 = vmul.f32 %v7294, %v7358
        %v7391 = vmul.f32 %v7295, %v7359
        %v7392 = vmul.f32 %v7296, %v7360
        %v7393 = vmul.f32 %v7297, %v7361
        %v7394 = vmul.f32 %v7298, %v7362
        %v7395 = vmul.f32 %v7299, %v7363
        %v7396 = vmul.f32 %v7300, %v7364
        %v7397 = vmul.f32 %v7301, %v7365
        %v7398 = vmul.f32 %v7302, %v7366
        %v7399 = vmul.f32 %v7303, %v7367
        %v7400 = vmul.f32 %v7304, %v7368
        %v7401 = vmul.f32 %v7305, %v7369
        %v7402 = vmul.f32 %v7306, %v7370
        %v7403 = vmul.f32 %v7307, %v7371
        %v7404 = vmul.f32 %v7308, %v7372
        %v7405 = vmul.f32 %v7309, %v7373
        %v7406 = vmul.f32 %v7310, %v7374
        %v7407 = vmul.f32 %v7311, %v7375
        %v7408 = vmul.f32 %v7312, %v7376
        %v7409 = vmul.f32 %v7313, %v7377
        %v7410 = vmul.f32 %v7314, %v7378
        %v7411 = vmul.f32 %v7315, %v7379
        %v7412 = vmul.f32 %v7316, %v7380
        %v7413 = vmul.f32 %v7317, %v7381
        %v7414 = vmul.f32 %v7318, %v7382
        %v7415 = vmul.f32 %v7319, %v7383
        %v7416 = vmul.f32 %v7320, %v7384
        %v7417 = vmul.f32 %v7321, %v7385
        %v7418 = vmul.f32 %v7322, %v7386
        %v7419 = vmul.f32 %v7323, %v7387
        %v7420 = vmul.f32 %v7324, %v7388
        %v7421 = vlaneseq
        %v7422 = vshrl.u32 %v7421, 7
        %v7423 = vsub.s32 4, %v7422
        %v7424 = vrot.slane %v281, %v7423
        %v7425 = vmul.f32 %v7389, %v7424
        %v7426 = vmul.f32 %v7390, %v7424
        %v7427 = vmul.f32 %v7391, %v7424
        %v7428 = vmul.f32 %v7392, %v7424
        %v7429 = vmul.f32 %v7393, %v7424
        %v7430 = vmul.f32 %v7394, %v7424
        %v7431 = vmul.f32 %v7395, %v7424
        %v7432 = vmul.f32 %v7396, %v7424
        %v7433 = vmul.f32 %v7397, %v7424
        %v7434 = vmul.f32 %v7398, %v7424
        %v7435 = vmul.f32 %v7399, %v7424
        %v7436 = vmul.f32 %v7400, %v7424
        %v7437 = vmul.f32 %v7401, %v7424
        %v7438 = vmul.f32 %v7402, %v7424
        %v7439 = vmul.f32 %v7403, %v7424
        %v7440 = vmul.f32 %v7404, %v7424
        %v7441 = vmul.f32 %v7405, %v7424
        %v7442 = vmul.f32 %v7406, %v7424
        %v7443 = vmul.f32 %v7407, %v7424
        %v7444 = vmul.f32 %v7408, %v7424
        %v7445 = vmul.f32 %v7409, %v7424
        %v7446 = vmul.f32 %v7410, %v7424
        %v7447 = vmul.f32 %v7411, %v7424
        %v7448 = vmul.f32 %v7412, %v7424
        %v7449 = vmul.f32 %v7413, %v7424
        %v7450 = vmul.f32 %v7414, %v7424
        %v7451 = vmul.f32 %v7415, %v7424
        %v7452 = vmul.f32 %v7416, %v7424
        %v7453 = vmul.f32 %v7417, %v7424
        %v7454 = vmul.f32 %v7418, %v7424
        %v7455 = vmul.f32 %v7419, %v7424
        %v7456 = vmul.f32 %v7420, %v7424
        %v7457 = vlaneseq
        %v7458 = vshrl.u32 %v7457, 7
        %v7459 = vsub.s32 5, %v7458
        %v7460 = vrot.slane %v281, %v7459
        %v7461 = vadd.f32 %v7425, %v7460
        %v7462 = vadd.f32 %v7426, %v7460
        %v7463 = vadd.f32 %v7427, %v7460
        %v7464 = vadd.f32 %v7428, %v7460
        %v7465 = vadd.f32 %v7429, %v7460
        %v7466 = vadd.f32 %v7430, %v7460
        %v7467 = vadd.f32 %v7431, %v7460
        %v7468 = vadd.f32 %v7432, %v7460
        %v7469 = vadd.f32 %v7433, %v7460
        %v7470 = vadd.f32 %v7434, %v7460
        %v7471 = vadd.f32 %v7435, %v7460
        %v7472 = vadd.f32 %v7436, %v7460
        %v7473 = vadd.f32 %v7437, %v7460
        %v7474 = vadd.f32 %v7438, %v7460
        %v7475 = vadd.f32 %v7439, %v7460
        %v7476 = vadd.f32 %v7440, %v7460
        %v7477 = vadd.f32 %v7441, %v7460
        %v7478 = vadd.f32 %v7442, %v7460
        %v7479 = vadd.f32 %v7443, %v7460
        %v7480 = vadd.f32 %v7444, %v7460
        %v7481 = vadd.f32 %v7445, %v7460
        %v7482 = vadd.f32 %v7446, %v7460
        %v7483 = vadd.f32 %v7447, %v7460
        %v7484 = vadd.f32 %v7448, %v7460
        %v7485 = vadd.f32 %v7449, %v7460
        %v7486 = vadd.f32 %v7450, %v7460
        %v7487 = vadd.f32 %v7451, %v7460
        %v7488 = vadd.f32 %v7452, %v7460
        %v7489 = vadd.f32 %v7453, %v7460
        %v7490 = vadd.f32 %v7454, %v7460
        %v7491 = vadd.f32 %v7455, %v7460
        %v7492 = vadd.f32 %v7456, %v7460
        %7493 = vst [vmem:[%s272] sm:$0xff] %v7461
        %7494 = vst [vmem:[%s272 + $0x8] sm:$0xff] %v7462
        %7495 = vst [vmem:[%s272 + $0x10] sm:$0xff] %v7463
        %7496 = vst [vmem:[%s272 + $0x18] sm:$0xff] %v7464
        %7497 = vst [vmem:[%s272 + $0x20] sm:$0xff] %v7465
        %7498 = vst [vmem:[%s272 + $0x28] sm:$0xff] %v7466
        %7499 = vst [vmem:[%s272 + $0x30] sm:$0xff] %v7467
        %7500 = vst [vmem:[%s272 + $0x38] sm:$0xff] %v7468
        %7501 = vst [vmem:[%s272 + $0x40] sm:$0xff] %v7469
        %7502 = vst [vmem:[%s272 + $0x48] sm:$0xff] %v7470
        %7503 = vst [vmem:[%s272 + $0x50] sm:$0xff] %v7471
        %7504 = vst [vmem:[%s272 + $0x58] sm:$0xff] %v7472
        %7505 = vst [vmem:[%s272 + $0x60] sm:$0xff] %v7473
        %7506 = vst [vmem:[%s272 + $0x68] sm:$0xff] %v7474
        %7507 = vst [vmem:[%s272 + $0x70] sm:$0xff] %v7475
        %7508 = vst [vmem:[%s272 + $0x78] sm:$0xff] %v7476
        %7509 = vst [vmem:[%s272 + $0x80] sm:$0xff] %v7477
        %7510 = vst [vmem:[%s272 + $0x88] sm:$0xff] %v7478
        %7511 = vst [vmem:[%s272 + $0x90] sm:$0xff] %v7479
        %7512 = vst [vmem:[%s272 + $0x98] sm:$0xff] %v7480
        %7513 = vst [vmem:[%s272 + $0xa0] sm:$0xff] %v7481
        %7514 = vst [vmem:[%s272 + $0xa8] sm:$0xff] %v7482
        %7515 = vst [vmem:[%s272 + $0xb0] sm:$0xff] %v7483
        %7516 = vst [vmem:[%s272 + $0xb8] sm:$0xff] %v7484
        %7517 = vst [vmem:[%s272 + $0xc0] sm:$0xff] %v7485
        %7518 = vst [vmem:[%s272 + $0xc8] sm:$0xff] %v7486
        %7519 = vst [vmem:[%s272 + $0xd0] sm:$0xff] %v7487
        %7520 = vst [vmem:[%s272 + $0xd8] sm:$0xff] %v7488
        %7521 = vst [vmem:[%s272 + $0xe0] sm:$0xff] %v7489
        %7522 = vst [vmem:[%s272 + $0xe8] sm:$0xff] %v7490
        %7523 = vst [vmem:[%s272 + $0xf0] sm:$0xff] %v7491
        %7524 = vst [vmem:[%s272 + $0xf8] sm:$0xff] %v7492
        %s7525 = sand.u32 %s181, 1
        %s7526 = scalar_lea.sflag [#allocation6], %s7525
        %s7527 = sand.u32 %s181, 1
        %s7528 = smul.addr %s7527, 256
        %s7529 = scalar_lea.vmem [#allocation5], %s7528
        // Predicated region
        $region49: #{tpu_custom_call.1} parent=47 // pred_check
          %p7530 = pneg %p191
        $region50: #{tpu_custom_call.1} parent=47 // pred_check_branch
          %7532 = sbr.rel (%p7530) target = $region52
        $region51: #{tpu_custom_call.1} parent=47 // pred_region
          %s7533 = smul.u32 32, %s21
          %s7535 = ssub.s32 4096, 4096
          %7536 = vsyncadd %s7526, %s7535
          %s7537 = smul.addr %s7533, 128
          %s7538 = scalar_lea.hbm %s7, %s7537
          %s7539 = sshll.u32 %s7529, 4
          %s7540 = int_to_ptr.vmem [resolvable:$true] %s7539
          %7545 = dma.vmem_to_hbm [thread:$0]  %s7540, 4096, %s7538, %s7526, 128, 128, 8
        $region52: #{tpu_custom_call.1} parent=47 // pred_fallthru
          _
      $region48: #{tpu_custom_call.1} parent=5 // pred_fallthru
        _
      %p7546 = scmp.le.s32.totalorder 2, %s16
      // Predicated region
      $region53: #{tpu_custom_call.1} parent=5 // pred_check
        %p7547 = pneg %p7546
      $region54: #{tpu_custom_call.1} parent=5 // pred_check_branch
        %7549 = sbr.rel (%p7547) target = $region56
      $region55: #{tpu_custom_call.1} parent=5 // pred_region
        %s7550 = ssub.s32 %s16, 2
        // Predicated region
        $region57: #{tpu_custom_call.1} parent=55 // pred_check
          %p7551 = pneg %p197
        $region58: #{tpu_custom_call.1} parent=55 // pred_check_branch
          %7553 = sbr.rel (%p7551) target = $region60
        $region59: #{tpu_custom_call.1} parent=55 // pred_region
          %s7554 = sand.u32 %s182, 1
          %s7555 = scalar_lea.sflag [#allocation6], %s7554
          %s7556 = sand.u32 %s182, 1
          %s7557 = smul.addr %s7556, 256
          %s7558 = scalar_lea.vmem [#allocation5], %s7557
          %7559 = dma.done %s7555, 4096
        $region60: #{tpu_custom_call.1} parent=55 // pred_fallthru
          _
      $region56: #{tpu_custom_call.1} parent=5 // pred_fallthru
        _
    $region6: #{tpu_custom_call.1} parent=1 // loop_footer
      %s20 = sadd.s32 1, %s16
    $region7: #{tpu_custom_call.1} parent=1 // loop_footer_branch
      %15 = sbr.rel target = $region3
    $region8: #{tpu_custom_call.1} parent=1 // loop_exit
      _
    %7560 = vsyncpa [#allocation6], 1
    %s7561 = scalar_lea.sflag [#allocation6], 1
    %7562 = vsyncpa %s7561, 1

</llo_original>
